<compile_context>
chip_gen: v7x
topology: tpu7x:2x2x1
jax: 0.10.0
libtpu: 0.0.40
codegen_flags: <defaults>
</compile_context>

<pallas_src>
import math

import jax
import jax.numpy as jnp
from jax.experimental import pallas as pl
from jax.experimental.pallas import tpu as pltpu

# --- model hyper-parameters (small, consistent with the module) -------------
S = 8            # sequence length
B = 2            # batch
D_MODEL = 32     # d_model
NHEAD = 4
DHEAD = D_MODEL // NHEAD
D_FF = 64        # dim_feedforward
NUM_LAYERS = 2
LN_EPS = 1e-5

HB = NHEAD * B   # fused (head, batch) attention batch axis, n = h*B + b
N_ROWS = B * S   # batch folded into rows for projections / FFN / LayerNorm


def _layernorm(x, gamma, beta):
    mu = jnp.mean(x, axis=-1, keepdims=True)
    var = jnp.mean((x - mu) ** 2, axis=-1, keepdims=True)
    return (x - mu) * jax.lax.rsqrt(var + LN_EPS) * gamma + beta


# ---------------------------------------------------------------------------
# Fused Pallas kernel: all encoder layers + optional final LayerNorm.
# Weight stacks carry a leading layer axis; per-layer slice is a static index.
# ---------------------------------------------------------------------------
def make_encoder_kernel(num_layers, use_final_norm):
    def kernel(x_ref, wq_ref, wk_ref, wv_ref, bq_ref, bk_ref, bv_ref,
               wo_ref, bo_ref, w1_ref, b1_ref, w2_ref, b2_ref,
               g1_ref, beta1_ref, g2_ref, beta2_ref, gf_ref, bf_ref,
               y_ref, attn_ref):
        inv_h = 1.0 / NHEAD
        x = x_ref[...].reshape(N_ROWS, D_MODEL)            # (B*S, D) rows

        for l in range(num_layers):                         # static unroll
            # ---- multi-head self-attention, heads batched over n = h*B + b ----
            x3 = x.reshape(B, S, D_MODEL)
            x_hb = jnp.broadcast_to(
                x3[None], (NHEAD, B, S, D_MODEL)).reshape(HB, S, D_MODEL)

            # scale 1/sqrt(Dh) already folded into wq/bq at prep time
            q = jnp.einsum('nsd,nde->nse', x_hb, wq_ref[l],
                           preferred_element_type=jnp.float32) + bq_ref[l]
            k = jnp.einsum('nsd,nde->nse', x_hb, wk_ref[l],
                           preferred_element_type=jnp.float32) + bk_ref[l]
            v = jnp.einsum('nsd,nde->nse', x_hb, wv_ref[l],
                           preferred_element_type=jnp.float32) + bv_ref[l]

            s = jnp.einsum('nqe,nke->nqk', q, k,
                           preferred_element_type=jnp.float32)          # (HB,S,S)
            s = s - jnp.max(s, axis=-1, keepdims=True)
            e = jnp.exp(s)
            p = e * pl.reciprocal(jnp.sum(e, axis=-1, keepdims=True),
                                  approx=True)

            # head-averaged attention weights for this layer
            attn_ref[l] = jnp.sum(p.reshape(NHEAD, B, S, S), axis=0) * inv_h

            ctx = jnp.einsum('nqk,nke->nqe', p, v,
                             preferred_element_type=jnp.float32)        # (HB,S,Dh)
            out_h = jnp.einsum('nse,ned->nsd', ctx, wo_ref[l],
                               preferred_element_type=jnp.float32)      # (HB,S,D)
            attn_out = jnp.sum(out_h.reshape(NHEAD, B, S, D_MODEL),
                               axis=0).reshape(N_ROWS, D_MODEL) + bo_ref[l]

            # residual + LayerNorm1 (dropout == identity in eval)
            h1 = _layernorm(x + attn_out, g1_ref[l], beta1_ref[l])

            # ---- feed-forward: linear -> relu -> linear (batch-folded rows) ----
            ff = jnp.dot(h1, w1_ref[l],
                         preferred_element_type=jnp.float32) + b1_ref[l]
            ff = jnp.maximum(ff, 0.0)
            ff = jnp.dot(ff, w2_ref[l],
                         preferred_element_type=jnp.float32) + b2_ref[l]

            # residual + LayerNorm2
            x = _layernorm(h1 + ff, g2_ref[l], beta2_ref[l])

        if use_final_norm:
            x = _layernorm(x, gf_ref[...], bf_ref[...])

        y_ref[...] = x.reshape(B, S, D_MODEL)

    return kernel


# ---------------------------------------------------------------------------
# Parameter preparation (outside the kernel, done once): split Q/K/V/O weights
# per head, fold the attention scale into Q, replicate per batch so the kernel
# only does standard single-batch-dim batched matmuls, stack across layers.
# ---------------------------------------------------------------------------
def prepare_params(layer_params, final_norm_params):
    scale = 1.0 / math.sqrt(DHEAD)

    def per_layer(p):
        wqkv, bqkv = p["wqkv"], p["bqkv"]

        def w_heads(w):                       # (D, D) -> (H, D, Dh)
            return jnp.transpose(w.reshape(D_MODEL, NHEAD, DHEAD), (1, 0, 2))

        def b_heads(b):                       # (1, D) -> (H, 1, Dh)
            return b.reshape(NHEAD, DHEAD)[:, None, :]

        def rep_batch(a):                     # (H, ...) -> (H*B, ...), n = h*B + b
            return jnp.broadcast_to(
                a[:, None], (NHEAD, B) + a.shape[1:]
            ).reshape((HB,) + a.shape[1:])

        wq = rep_batch(w_heads(wqkv[:, :D_MODEL]) * scale)
        wk = rep_batch(w_heads(wqkv[:, D_MODEL:2 * D_MODEL]))
        wv = rep_batch(w_heads(wqkv[:, 2 * D_MODEL:]))
        bq = rep_batch(b_heads(bqkv[:, :D_MODEL]) * scale)
        bk = rep_batch(b_heads(bqkv[:, D_MODEL:2 * D_MODEL]))
        bv = rep_batch(b_heads(bqkv[:, 2 * D_MODEL:]))
        wo = rep_batch(p["wo"].reshape(NHEAD, DHEAD, D_MODEL))
        return (wq, wk, wv, bq, bk, bv, wo, p["bo"], p["w1"], p["b1"],
                p["w2"], p["b2"], p["g1"], p["beta1"], p["g2"], p["beta2"])

    per = [per_layer(p) for p in layer_params]
    stacked = [jnp.stack(ts, axis=0) for ts in zip(*per)]   # leading layer axis

    use_final = final_norm_params is not None
    if use_final:
        gf, bf = final_norm_params["g"], final_norm_params["b"]
    else:
        gf = jnp.ones((1, D_MODEL), jnp.float32)
        bf = jnp.zeros((1, D_MODEL), jnp.float32)
    return stacked + [gf, bf], use_final


def _full_spec(shape):
    nd = len(shape)
    return pl.BlockSpec(shape, lambda i, _nd=nd: (0,) * _nd)


def transformer_encoder(src_sbd, layer_params, final_norm_params):
    """src_sbd: (S, B, D) like PyTorch. Returns (output (S, B, D), [attn...])."""
    x = jnp.transpose(src_sbd, (1, 0, 2))                   # (B, S, D) layout
    packed, use_final = prepare_params(layer_params, final_norm_params)
    num_layers = len(layer_params)
    kernel = make_encoder_kernel(num_layers, use_final)

    args = [x] + packed
    y, attn_all = pl.pallas_call(
        kernel,
        out_shape=(jax.ShapeDtypeStruct((B, S, D_MODEL), jnp.float32),
                   jax.ShapeDtypeStruct((num_layers, B, S, S), jnp.float32)),
        grid_spec=pltpu.PrefetchScalarGridSpec(
            num_scalar_prefetch=0,
            grid=(1,),
            in_specs=[_full_spec(a.shape) for a in args],
            out_specs=[_full_spec((B, S, D_MODEL)),
                       _full_spec((num_layers, B, S, S))],
        ),
        compiler_params=pltpu.CompilerParams(
            dimension_semantics=("arbitrary",)),
    )(*args)

    all_weights = [attn_all[l] for l in range(num_layers)]
    return jnp.transpose(y, (1, 0, 2)), all_weights


# ---------------------------------------------------------------------------
# Pure-JAX reference (same math, original packed params) for correctness.
# ---------------------------------------------------------------------------
def _ref_layer(x, p):
    qkv = x @ p["wqkv"] + p["bqkv"]
    q, k, v = qkv[..., :D_MODEL], qkv[..., D_MODEL:2 * D_MODEL], qkv[..., 2 * D_MODEL:]
    scale = 1.0 / math.sqrt(DHEAD)
    attn_sum = jnp.zeros((x.shape[0], S, S), jnp.float32)
    heads = []
    for h in range(NHEAD):
        sl = slice(h * DHEAD, (h + 1) * DHEAD)
        sc = jnp.einsum("bqd,bkd->bqk", q[..., sl], k[..., sl]) * scale
        p_ = jax.nn.softmax(sc, axis=-1)
        attn_sum = attn_sum + p_
        heads.append(jnp.einsum("bqk,bkd->bqd", p_, v[..., sl]))
    ctx = jnp.concatenate(heads, axis=-1)
    attn_out = ctx @ p["wo"] + p["bo"]
    h1 = _layernorm(x + attn_out, p["g1"], p["beta1"])
    ff = jnp.maximum(h1 @ p["w1"] + p["b1"], 0.0) @ p["w2"] + p["b2"]
    return _layernorm(h1 + ff, p["g2"], p["beta2"]), attn_sum / NHEAD


def _ref_encoder(src_sbd, layer_params, final_norm_params):
    x = jnp.transpose(src_sbd, (1, 0, 2))
    all_w = []
    for p in layer_params:
        x, a = _ref_layer(x, p)
        all_w.append(a)
    if final_norm_params is not None:
        x = _layernorm(x, final_norm_params["g"], final_norm_params["b"])
    return jnp.transpose(x, (1, 0, 2)), all_w


# ---------------------------------------------------------------------------
# Deterministic parameter init (shapes from nn.TransformerEncoderLayer).
# ---------------------------------------------------------------------------
def init_layer_params(key):
    ks = jax.random.split(key, 8)
    s = 0.05
    f32 = jnp.float32
    return dict(
        wqkv=jax.random.normal(ks[0], (D_MODEL, 3 * D_MODEL), f32) * s,
        bqkv=jax.random.normal(ks[1], (1, 3 * D_MODEL), f32) * 0.01,
        wo=jax.random.normal(ks[2], (D_MODEL, D_MODEL), f32) * s,
        bo=jax.random.normal(ks[3], (1, D_MODEL), f32) * 0.01,
        w1=jax.random.normal(ks[4], (D_MODEL, D_FF), f32) * s,
        b1=jax.random.normal(ks[5], (1, D_FF), f32) * 0.01,
        w2=jax.random.normal(ks[6], (D_FF, D_MODEL), f32) * s,
        b2=jax.random.normal(ks[7], (1, D_MODEL), f32) * 0.01,
        g1=jnp.ones((1, D_MODEL), f32),
        beta1=jnp.zeros((1, D_MODEL), f32),
        g2=jnp.ones((1, D_MODEL), f32),
        beta2=jnp.zeros((1, D_MODEL), f32),
    )


if __name__ == "__main__":
    root = jax.random.PRNGKey(0)
    k_src, *layer_keys = jax.random.split(root, NUM_LAYERS + 1)

    src = jax.random.normal(k_src, (S, B, D_MODEL), jnp.float32)   # (S, B, D)
    layer_params = [init_layer_params(k) for k in layer_keys]
    final_norm = dict(g=jnp.ones((1, D_MODEL), jnp.float32),
                      b=jnp.zeros((1, D_MODEL), jnp.float32))

    out, all_weights = transformer_encoder(src, layer_params, final_norm)
    out = jax.block_until_ready(out)
    all_weights = [jax.block_until_ready(w) for w in all_weights]

    # validate against pure-JAX reference (tolerance covers approx reciprocal)
    ref_out, ref_w = _ref_encoder(src, layer_params, final_norm)
    assert out.shape == (S, B, D_MODEL)
    assert all(w.shape == (B, S, S) for w in all_weights)
    assert float(jnp.max(jnp.abs(out - ref_out))) < 2e-3
    for w, rw in zip(all_weights, ref_w):
        assert float(jnp.max(jnp.abs(w - rw))) < 1e-3

    print("KERNEL_OK")
</pallas_src>

<mosaic_0001>
module attributes {stable_mosaic.version = 11 : i64} {
  func.func @kernel(%arg0: i32, %arg1: memref<2x8x32xf32, #tpu.memory_space<vmem>>, %arg2: memref<2x8x32x8xf32, #tpu.memory_space<vmem>>, %arg3: memref<2x8x32x8xf32, #tpu.memory_space<vmem>>, %arg4: memref<2x8x32x8xf32, #tpu.memory_space<vmem>>, %arg5: memref<2x8x1x8xf32, #tpu.memory_space<vmem>>, %arg6: memref<2x8x1x8xf32, #tpu.memory_space<vmem>>, %arg7: memref<2x8x1x8xf32, #tpu.memory_space<vmem>>, %arg8: memref<2x8x8x32xf32, #tpu.memory_space<vmem>>, %arg9: memref<2x1x32xf32, #tpu.memory_space<vmem>>, %arg10: memref<2x32x64xf32, #tpu.memory_space<vmem>>, %arg11: memref<2x1x64xf32, #tpu.memory_space<vmem>>, %arg12: memref<2x64x32xf32, #tpu.memory_space<vmem>>, %arg13: memref<2x1x32xf32, #tpu.memory_space<vmem>>, %arg14: memref<2x1x32xf32, #tpu.memory_space<vmem>>, %arg15: memref<2x1x32xf32, #tpu.memory_space<vmem>>, %arg16: memref<2x1x32xf32, #tpu.memory_space<vmem>>, %arg17: memref<2x1x32xf32, #tpu.memory_space<vmem>>, %arg18: memref<1x32xf32, #tpu.memory_space<vmem>>, %arg19: memref<1x32xf32, #tpu.memory_space<vmem>>, %arg20: memref<2x8x32xf32, #tpu.memory_space<vmem>>, %arg21: memref<2x2x8x8xf32, #tpu.memory_space<vmem>>) attributes {dimension_semantics = [#tpu.dimension_semantics<arbitrary>], iteration_bounds = array<i64: 1>, scalar_prefetch = 0 : i64, scratch_operands = 0 : i64, tpu.core_type = #tpu.core_type<tc>, window_params = [{pipeline_mode = #tpu.pipeline_mode<synchronous>, transform_indices = @transform_0, window_bounds = array<i64: 2, 8, 32>}, {pipeline_mode = #tpu.pipeline_mode<synchronous>, transform_indices = @transform_1, window_bounds = array<i64: 2, 8, 32, 8>}, {pipeline_mode = #tpu.pipeline_mode<synchronous>, transform_indices = @transform_2, window_bounds = array<i64: 2, 8, 32, 8>}, {pipeline_mode = #tpu.pipeline_mode<synchronous>, transform_indices = @transform_3, window_bounds = array<i64: 2, 8, 32, 8>}, {pipeline_mode = #tpu.pipeline_mode<synchronous>, transform_indices = @transform_4, window_bounds = array<i64: 2, 8, 1, 8>}, {pipeline_mode = #tpu.pipeline_mode<synchronous>, transform_indices = @transform_5, window_bounds = array<i64: 2, 8, 1, 8>}, {pipeline_mode = #tpu.pipeline_mode<synchronous>, transform_indices = @transform_6, window_bounds = array<i64: 2, 8, 1, 8>}, {pipeline_mode = #tpu.pipeline_mode<synchronous>, transform_indices = @transform_7, window_bounds = array<i64: 2, 8, 8, 32>}, {pipeline_mode = #tpu.pipeline_mode<synchronous>, transform_indices = @transform_8, window_bounds = array<i64: 2, 1, 32>}, {pipeline_mode = #tpu.pipeline_mode<synchronous>, transform_indices = @transform_9, window_bounds = array<i64: 2, 32, 64>}, {pipeline_mode = #tpu.pipeline_mode<synchronous>, transform_indices = @transform_10, window_bounds = array<i64: 2, 1, 64>}, {pipeline_mode = #tpu.pipeline_mode<synchronous>, transform_indices = @transform_11, window_bounds = array<i64: 2, 64, 32>}, {pipeline_mode = #tpu.pipeline_mode<synchronous>, transform_indices = @transform_12, window_bounds = array<i64: 2, 1, 32>}, {pipeline_mode = #tpu.pipeline_mode<synchronous>, transform_indices = @transform_13, window_bounds = array<i64: 2, 1, 32>}, {pipeline_mode = #tpu.pipeline_mode<synchronous>, transform_indices = @transform_14, window_bounds = array<i64: 2, 1, 32>}, {pipeline_mode = #tpu.pipeline_mode<synchronous>, transform_indices = @transform_15, window_bounds = array<i64: 2, 1, 32>}, {pipeline_mode = #tpu.pipeline_mode<synchronous>, transform_indices = @transform_16, window_bounds = array<i64: 2, 1, 32>}, {pipeline_mode = #tpu.pipeline_mode<synchronous>, transform_indices = @transform_17, window_bounds = array<i64: 1, 32>}, {pipeline_mode = #tpu.pipeline_mode<synchronous>, transform_indices = @transform_18, window_bounds = array<i64: 1, 32>}, {pipeline_mode = #tpu.pipeline_mode<synchronous>, transform_indices = @transform_19, window_bounds = array<i64: 2, 8, 32>}, {pipeline_mode = #tpu.pipeline_mode<synchronous>, transform_indices = @transform_20, window_bounds = array<i64: 2, 2, 8, 8>}]} {
    %c0 = arith.constant 0 : index
    %c0_0 = arith.constant 0 : index
    %c0_1 = arith.constant 0 : index
    %0 = vector.load %arg1[%c0, %c0_0, %c0_1] : memref<2x8x32xf32, #tpu.memory_space<vmem>>, vector<2x8x32xf32>
    %1 = vector.shape_cast %0 : vector<2x8x32xf32> to vector<16x32xf32>
    %2 = vector.shape_cast %1 : vector<16x32xf32> to vector<2x8x32xf32>
    %3 = vector.shape_cast %2 : vector<2x8x32xf32> to vector<1x2x8x32xf32>
    %4 = vector.shape_cast %3 : vector<1x2x8x32xf32> to vector<1x2x8x32xf32>
    %5 = vector.broadcast %4 : vector<1x2x8x32xf32> to vector<4x2x8x32xf32>
    %6 = vector.shape_cast %5 : vector<4x2x8x32xf32> to vector<8x8x32xf32>
    %c0_2 = arith.constant 0 : index
    %c0_3 = arith.constant 0 : index
    %c0_4 = arith.constant 0 : index
    %c0_5 = arith.constant 0 : index
    %7 = vector.load %arg2[%c0_2, %c0_3, %c0_4, %c0_5] : memref<2x8x32x8xf32, #tpu.memory_space<vmem>>, vector<1x8x32x8xf32>
    %8 = vector.shape_cast %7 : vector<1x8x32x8xf32> to vector<8x32x8xf32>
    "tpu.trace_start"() <{level = 10 : i32, message = "nsd,nde->nse"}> : () -> ()
    %cst = arith.constant dense<0.000000e+00> : vector<8x8x8xf32>
    %9 = tpu.matmul %6, %8, %cst {dimension_numbers = #tpu.dot_dimension_numbers<[2], [1], [1], [2], [0, 0, 0, 1, 1, 2], [0], [0]>} : vector<8x8x32xf32>, vector<8x32x8xf32>, vector<8x8x8xf32> -> vector<8x8x8xf32>
    "tpu.trace_stop"() : () -> ()
    %c0_6 = arith.constant 0 : index
    %c0_7 = arith.constant 0 : index
    %c0_8 = arith.constant 0 : index
    %c0_9 = arith.constant 0 : index
    %10 = vector.load %arg5[%c0_6, %c0_7, %c0_8, %c0_9] : memref<2x8x1x8xf32, #tpu.memory_space<vmem>>, vector<1x8x1x8xf32>
    %11 = vector.shape_cast %10 : vector<1x8x1x8xf32> to vector<8x1x8xf32>
    %12 = vector.broadcast %11 : vector<8x1x8xf32> to vector<8x8x8xf32>
    %13 = arith.addf %9, %12 : vector<8x8x8xf32>
    %c0_10 = arith.constant 0 : index
    %c0_11 = arith.constant 0 : index
    %c0_12 = arith.constant 0 : index
    %c0_13 = arith.constant 0 : index
    %14 = vector.load %arg3[%c0_10, %c0_11, %c0_12, %c0_13] : memref<2x8x32x8xf32, #tpu.memory_space<vmem>>, vector<1x8x32x8xf32>
    %15 = vector.shape_cast %14 : vector<1x8x32x8xf32> to vector<8x32x8xf32>
    "tpu.trace_start"() <{level = 10 : i32, message = "nsd,nde->nse"}> : () -> ()
    %cst_14 = arith.constant dense<0.000000e+00> : vector<8x8x8xf32>
    %16 = tpu.matmul %6, %15, %cst_14 {dimension_numbers = #tpu.dot_dimension_numbers<[2], [1], [1], [2], [0, 0, 0, 1, 1, 2], [0], [0]>} : vector<8x8x32xf32>, vector<8x32x8xf32>, vector<8x8x8xf32> -> vector<8x8x8xf32>
    "tpu.trace_stop"() : () -> ()
    %c0_15 = arith.constant 0 : index
    %c0_16 = arith.constant 0 : index
    %c0_17 = arith.constant 0 : index
    %c0_18 = arith.constant 0 : index
    %17 = vector.load %arg6[%c0_15, %c0_16, %c0_17, %c0_18] : memref<2x8x1x8xf32, #tpu.memory_space<vmem>>, vector<1x8x1x8xf32>
    %18 = vector.shape_cast %17 : vector<1x8x1x8xf32> to vector<8x1x8xf32>
    %19 = vector.broadcast %18 : vector<8x1x8xf32> to vector<8x8x8xf32>
    %20 = arith.addf %16, %19 : vector<8x8x8xf32>
    %c0_19 = arith.constant 0 : index
    %c0_20 = arith.constant 0 : index
    %c0_21 = arith.constant 0 : index
    %c0_22 = arith.constant 0 : index
    %21 = vector.load %arg4[%c0_19, %c0_20, %c0_21, %c0_22] : memref<2x8x32x8xf32, #tpu.memory_space<vmem>>, vector<1x8x32x8xf32>
    %22 = vector.shape_cast %21 : vector<1x8x32x8xf32> to vector<8x32x8xf32>
    "tpu.trace_start"() <{level = 10 : i32, message = "nsd,nde->nse"}> : () -> ()
    %cst_23 = arith.constant dense<0.000000e+00> : vector<8x8x8xf32>
    %23 = tpu.matmul %6, %22, %cst_23 {dimension_numbers = #tpu.dot_dimension_numbers<[2], [1], [1], [2], [0, 0, 0, 1, 1, 2], [0], [0]>} : vector<8x8x32xf32>, vector<8x32x8xf32>, vector<8x8x8xf32> -> vector<8x8x8xf32>
    "tpu.trace_stop"() : () -> ()
    %c0_24 = arith.constant 0 : index
    %c0_25 = arith.constant 0 : index
    %c0_26 = arith.constant 0 : index
    %c0_27 = arith.constant 0 : index
    %24 = vector.load %arg7[%c0_24, %c0_25, %c0_26, %c0_27] : memref<2x8x1x8xf32, #tpu.memory_space<vmem>>, vector<1x8x1x8xf32>
    %25 = vector.shape_cast %24 : vector<1x8x1x8xf32> to vector<8x1x8xf32>
    %26 = vector.broadcast %25 : vector<8x1x8xf32> to vector<8x8x8xf32>
    %27 = arith.addf %23, %26 : vector<8x8x8xf32>
    "tpu.trace_start"() <{level = 10 : i32, message = "nqe,nke->nqk"}> : () -> ()
    %cst_28 = arith.constant dense<0.000000e+00> : vector<8x8x8xf32>
    %28 = tpu.matmul %13, %20, %cst_28 {dimension_numbers = #tpu.dot_dimension_numbers<[2], [2], [1], [1], [0, 0, 0, 1, 1, 1], [0], [0]>} : vector<8x8x8xf32>, vector<8x8x8xf32>, vector<8x8x8xf32> -> vector<8x8x8xf32>
    "tpu.trace_stop"() : () -> ()
    %cst_29 = arith.constant dense<0xFF800000> : vector<8x8xf32>
    %29 = vector.multi_reduction <maximumf>, %28, %cst_29 [2] : vector<8x8x8xf32> to vector<8x8xf32>
    %30 = vector.shape_cast %29 : vector<8x8xf32> to vector<8x8x1xf32>
    %31 = vector.broadcast %30 : vector<8x8x1xf32> to vector<8x8x8xf32>
    %32 = arith.subf %28, %31 : vector<8x8x8xf32>
    %33 = math.exp %32 : vector<8x8x8xf32>
    %cst_30 = arith.constant dense<0.000000e+00> : vector<8x8xf32>
    %34 = vector.multi_reduction <add>, %33, %cst_30 [2] : vector<8x8x8xf32> to vector<8x8xf32>
    %35 = vector.shape_cast %34 : vector<8x8xf32> to vector<8x8x1xf32>
    %36 = tpu.reciprocal %35 {approx = true} : vector<8x8x1xf32> -> vector<8x8x1xf32>
    %37 = vector.broadcast %36 : vector<8x8x1xf32> to vector<8x8x8xf32>
    %38 = arith.mulf %33, %37 : vector<8x8x8xf32>
    %39 = vector.shape_cast %38 : vector<8x8x8xf32> to vector<4x2x8x8xf32>
    %cst_31 = arith.constant dense<0.000000e+00> : vector<2x8x8xf32>
    %40 = vector.multi_reduction <add>, %39, %cst_31 [0] : vector<4x2x8x8xf32> to vector<2x8x8xf32>
    %cst_32 = arith.constant 2.500000e-01 : f32
    %41 = vector.broadcast %cst_32 : f32 to vector<2x8x8xf32>
    %42 = arith.mulf %40, %41 : vector<2x8x8xf32>
    %c0_33 = arith.constant 0 : index
    %c0_34 = arith.constant 0 : index
    %c0_35 = arith.constant 0 : index
    %c0_36 = arith.constant 0 : index
    %43 = vector.load %arg21[%c0_33, %c0_34, %c0_35, %c0_36] : memref<2x2x8x8xf32, #tpu.memory_space<vmem>>, vector<1x2x8x8xf32>
    %44 = vector.shape_cast %43 : vector<1x2x8x8xf32> to vector<2x8x8xf32>
    %45 = vector.shape_cast %42 : vector<2x8x8xf32> to vector<1x2x8x8xf32>
    tpu.vector_store %arg21[%c0_33, %c0_34, %c0_35, %c0_36], %45 {strides = array<i32>} : memref<2x2x8x8xf32, #tpu.memory_space<vmem>>, vector<1x2x8x8xf32>,
    "tpu.trace_start"() <{level = 10 : i32, message = "nqk,nke->nqe"}> : () -> ()
    %cst_37 = arith.constant dense<0.000000e+00> : vector<8x8x8xf32>
    %46 = tpu.matmul %38, %27, %cst_37 {dimension_numbers = #tpu.dot_dimension_numbers<[2], [1], [1], [2], [0, 0, 0, 1, 1, 2], [0], [0]>} : vector<8x8x8xf32>, vector<8x8x8xf32>, vector<8x8x8xf32> -> vector<8x8x8xf32>
    "tpu.trace_stop"() : () -> ()
    %c0_38 = arith.constant 0 : index
    %c0_39 = arith.constant 0 : index
    %c0_40 = arith.constant 0 : index
    %c0_41 = arith.constant 0 : index
    %47 = vector.load %arg8[%c0_38, %c0_39, %c0_40, %c0_41] : memref<2x8x8x32xf32, #tpu.memory_space<vmem>>, vector<1x8x8x32xf32>
    %48 = vector.shape_cast %47 : vector<1x8x8x32xf32> to vector<8x8x32xf32>
    "tpu.trace_start"() <{level = 10 : i32, message = "nse,ned->nsd"}> : () -> ()
    %cst_42 = arith.constant dense<0.000000e+00> : vector<8x8x32xf32>
    %49 = tpu.matmul %46, %48, %cst_42 {dimension_numbers = #tpu.dot_dimension_numbers<[2], [1], [1], [2], [0, 0, 0, 1, 1, 2], [0], [0]>} : vector<8x8x8xf32>, vector<8x8x32xf32>, vector<8x8x32xf32> -> vector<8x8x32xf32>
    "tpu.trace_stop"() : () -> ()
    %50 = vector.shape_cast %49 : vector<8x8x32xf32> to vector<4x2x8x32xf32>
    %cst_43 = arith.constant dense<0.000000e+00> : vector<2x8x32xf32>
    %51 = vector.multi_reduction <add>, %50, %cst_43 [0] : vector<4x2x8x32xf32> to vector<2x8x32xf32>
    %52 = vector.shape_cast %51 : vector<2x8x32xf32> to vector<16x32xf32>
    %c0_44 = arith.constant 0 : index
    %c0_45 = arith.constant 0 : index
    %c0_46 = arith.constant 0 : index
    %53 = vector.load %arg9[%c0_44, %c0_45, %c0_46] : memref<2x1x32xf32, #tpu.memory_space<vmem>>, vector<1x1x32xf32>
    %54 = vector.shape_cast %53 : vector<1x1x32xf32> to vector<1x32xf32>
    %55 = vector.broadcast %54 : vector<1x32xf32> to vector<16x32xf32>
    %56 = arith.addf %52, %55 : vector<16x32xf32>
    %57 = arith.addf %1, %56 : vector<16x32xf32>
    %c0_47 = arith.constant 0 : index
    %c0_48 = arith.constant 0 : index
    %c0_49 = arith.constant 0 : index
    %58 = vector.load %arg14[%c0_47, %c0_48, %c0_49] : memref<2x1x32xf32, #tpu.memory_space<vmem>>, vector<1x1x32xf32>
    %59 = vector.shape_cast %58 : vector<1x1x32xf32> to vector<1x32xf32>
    %c0_50 = arith.constant 0 : index
    %c0_51 = arith.constant 0 : index
    %c0_52 = arith.constant 0 : index
    %60 = vector.load %arg15[%c0_50, %c0_51, %c0_52] : memref<2x1x32xf32, #tpu.memory_space<vmem>>, vector<1x1x32xf32>
    %61 = vector.shape_cast %60 : vector<1x1x32xf32> to vector<1x32xf32>
    %cst_53 = arith.constant dense<0.000000e+00> : vector<16xf32>
    %62 = vector.multi_reduction <add>, %57, %cst_53 [1] : vector<16x32xf32> to vector<16xf32>
    %63 = vector.shape_cast %62 : vector<16xf32> to vector<16x1xf32>
    %cst_54 = arith.constant 3.200000e+01 : f32
    %64 = vector.broadcast %cst_54 : f32 to vector<16x1xf32>
    %65 = arith.divf %63, %64 : vector<16x1xf32>
    %66 = vector.broadcast %65 : vector<16x1xf32> to vector<16x32xf32>
    %67 = arith.subf %57, %66 : vector<16x32xf32>
    %68 = arith.mulf %67, %67 : vector<16x32xf32>
    %cst_55 = arith.constant dense<0.000000e+00> : vector<16xf32>
    %69 = vector.multi_reduction <add>, %68, %cst_55 [1] : vector<16x32xf32> to vector<16xf32>
    %70 = vector.shape_cast %69 : vector<16xf32> to vector<16x1xf32>
    %cst_56 = arith.constant 3.200000e+01 : f32
    %71 = vector.broadcast %cst_56 : f32 to vector<16x1xf32>
    %72 = arith.divf %70, %71 : vector<16x1xf32>
    %73 = vector.broadcast %65 : vector<16x1xf32> to vector<16x32xf32>
    %74 = arith.subf %57, %73 : vector<16x32xf32>
    %cst_57 = arith.constant 9.99999974E-6 : f32
    %75 = vector.broadcast %cst_57 : f32 to vector<16x1xf32>
    %76 = arith.addf %72, %75 : vector<16x1xf32>
    %77 = math.rsqrt %76 : vector<16x1xf32>
    %78 = vector.broadcast %77 : vector<16x1xf32> to vector<16x32xf32>
    %79 = arith.mulf %74, %78 : vector<16x32xf32>
    %80 = vector.broadcast %59 : vector<1x32xf32> to vector<16x32xf32>
    %81 = arith.mulf %79, %80 : vector<16x32xf32>
    %82 = vector.broadcast %61 : vector<1x32xf32> to vector<16x32xf32>
    %83 = arith.addf %81, %82 : vector<16x32xf32>
    %c0_58 = arith.constant 0 : index
    %c0_59 = arith.constant 0 : index
    %c0_60 = arith.constant 0 : index
    %84 = vector.load %arg10[%c0_58, %c0_59, %c0_60] : memref<2x32x64xf32, #tpu.memory_space<vmem>>, vector<1x32x64xf32>
    %85 = vector.shape_cast %84 : vector<1x32x64xf32> to vector<32x64xf32>
    %cst_61 = arith.constant dense<0.000000e+00> : vector<16x64xf32>
    %86 = tpu.matmul %83, %85, %cst_61 {dimension_numbers = #tpu.dot_dimension_numbers<[1], [0], [0], [1], [0, 0, 1, 1], [], []>} : vector<16x32xf32>, vector<32x64xf32>, vector<16x64xf32> -> vector<16x64xf32>
    %c0_62 = arith.constant 0 : index
    %c0_63 = arith.constant 0 : index
    %c0_64 = arith.constant 0 : index
    %87 = vector.load %arg11[%c0_62, %c0_63, %c0_64] : memref<2x1x64xf32, #tpu.memory_space<vmem>>, vector<1x1x64xf32>
    %88 = vector.shape_cast %87 : vector<1x1x64xf32> to vector<1x64xf32>
    %89 = vector.broadcast %88 : vector<1x64xf32> to vector<16x64xf32>
    %90 = arith.addf %86, %89 : vector<16x64xf32>
    %cst_65 = arith.constant 0.000000e+00 : f32
    %91 = vector.broadcast %cst_65 : f32 to vector<16x64xf32>
    %92 = arith.maximumf %90, %91 : vector<16x64xf32>
    %c0_66 = arith.constant 0 : index
    %c0_67 = arith.constant 0 : index
    %c0_68 = arith.constant 0 : index
    %93 = vector.load %arg12[%c0_66, %c0_67, %c0_68] : memref<2x64x32xf32, #tpu.memory_space<vmem>>, vector<1x64x32xf32>
    %94 = vector.shape_cast %93 : vector<1x64x32xf32> to vector<64x32xf32>
    %cst_69 = arith.constant dense<0.000000e+00> : vector<16x32xf32>
    %95 = tpu.matmul %92, %94, %cst_69 {dimension_numbers = #tpu.dot_dimension_numbers<[1], [0], [0], [1], [0, 0, 1, 1], [], []>} : vector<16x64xf32>, vector<64x32xf32>, vector<16x32xf32> -> vector<16x32xf32>
    %c0_70 = arith.constant 0 : index
    %c0_71 = arith.constant 0 : index
    %c0_72 = arith.constant 0 : index
    %96 = vector.load %arg13[%c0_70, %c0_71, %c0_72] : memref<2x1x32xf32, #tpu.memory_space<vmem>>, vector<1x1x32xf32>
    %97 = vector.shape_cast %96 : vector<1x1x32xf32> to vector<1x32xf32>
    %98 = vector.broadcast %97 : vector<1x32xf32> to vector<16x32xf32>
    %99 = arith.addf %95, %98 : vector<16x32xf32>
    %100 = arith.addf %83, %99 : vector<16x32xf32>
    %c0_73 = arith.constant 0 : index
    %c0_74 = arith.constant 0 : index
    %c0_75 = arith.constant 0 : index
    %101 = vector.load %arg16[%c0_73, %c0_74, %c0_75] : memref<2x1x32xf32, #tpu.memory_space<vmem>>, vector<1x1x32xf32>
    %102 = vector.shape_cast %101 : vector<1x1x32xf32> to vector<1x32xf32>
    %c0_76 = arith.constant 0 : index
    %c0_77 = arith.constant 0 : index
    %c0_78 = arith.constant 0 : index
    %103 = vector.load %arg17[%c0_76, %c0_77, %c0_78] : memref<2x1x32xf32, #tpu.memory_space<vmem>>, vector<1x1x32xf32>
    %104 = vector.shape_cast %103 : vector<1x1x32xf32> to vector<1x32xf32>
    %cst_79 = arith.constant dense<0.000000e+00> : vector<16xf32>
    %105 = vector.multi_reduction <add>, %100, %cst_79 [1] : vector<16x32xf32> to vector<16xf32>
    %106 = vector.shape_cast %105 : vector<16xf32> to vector<16x1xf32>
    %cst_80 = arith.constant 3.200000e+01 : f32
    %107 = vector.broadcast %cst_80 : f32 to vector<16x1xf32>
    %108 = arith.divf %106, %107 : vector<16x1xf32>
    %109 = vector.broadcast %108 : vector<16x1xf32> to vector<16x32xf32>
    %110 = arith.subf %100, %109 : vector<16x32xf32>
    %111 = arith.mulf %110, %110 : vector<16x32xf32>
    %cst_81 = arith.constant dense<0.000000e+00> : vector<16xf32>
    %112 = vector.multi_reduction <add>, %111, %cst_81 [1] : vector<16x32xf32> to vector<16xf32>
    %113 = vector.shape_cast %112 : vector<16xf32> to vector<16x1xf32>
    %cst_82 = arith.constant 3.200000e+01 : f32
    %114 = vector.broadcast %cst_82 : f32 to vector<16x1xf32>
    %115 = arith.divf %113, %114 : vector<16x1xf32>
    %116 = vector.broadcast %108 : vector<16x1xf32> to vector<16x32xf32>
    %117 = arith.subf %100, %116 : vector<16x32xf32>
    %cst_83 = arith.constant 9.99999974E-6 : f32
    %118 = vector.broadcast %cst_83 : f32 to vector<16x1xf32>
    %119 = arith.addf %115, %118 : vector<16x1xf32>
    %120 = math.rsqrt %119 : vector<16x1xf32>
    %121 = vector.broadcast %120 : vector<16x1xf32> to vector<16x32xf32>
    %122 = arith.mulf %117, %121 : vector<16x32xf32>
    %123 = vector.broadcast %102 : vector<1x32xf32> to vector<16x32xf32>
    %124 = arith.mulf %122, %123 : vector<16x32xf32>
    %125 = vector.broadcast %104 : vector<1x32xf32> to vector<16x32xf32>
    %126 = arith.addf %124, %125 : vector<16x32xf32>
    %127 = vector.shape_cast %126 : vector<16x32xf32> to vector<2x8x32xf32>
    %128 = vector.shape_cast %127 : vector<2x8x32xf32> to vector<1x2x8x32xf32>
    %129 = vector.shape_cast %128 : vector<1x2x8x32xf32> to vector<1x2x8x32xf32>
    %130 = vector.broadcast %129 : vector<1x2x8x32xf32> to vector<4x2x8x32xf32>
    %131 = vector.shape_cast %130 : vector<4x2x8x32xf32> to vector<8x8x32xf32>
    %c1 = arith.constant 1 : index
    %c0_84 = arith.constant 0 : index
    %c0_85 = arith.constant 0 : index
    %c0_86 = arith.constant 0 : index
    %132 = vector.load %arg2[%c1, %c0_84, %c0_85, %c0_86] : memref<2x8x32x8xf32, #tpu.memory_space<vmem>>, vector<1x8x32x8xf32>
    %133 = vector.shape_cast %132 : vector<1x8x32x8xf32> to vector<8x32x8xf32>
    "tpu.trace_start"() <{level = 10 : i32, message = "nsd,nde->nse"}> : () -> ()
    %cst_87 = arith.constant dense<0.000000e+00> : vector<8x8x8xf32>
    %134 = tpu.matmul %131, %133, %cst_87 {dimension_numbers = #tpu.dot_dimension_numbers<[2], [1], [1], [2], [0, 0, 0, 1, 1, 2], [0], [0]>} : vector<8x8x32xf32>, vector<8x32x8xf32>, vector<8x8x8xf32> -> vector<8x8x8xf32>
    "tpu.trace_stop"() : () -> ()
    %c1_88 = arith.constant 1 : index
    %c0_89 = arith.constant 0 : index
    %c0_90 = arith.constant 0 : index
    %c0_91 = arith.constant 0 : index
    %135 = vector.load %arg5[%c1_88, %c0_89, %c0_90, %c0_91] : memref<2x8x1x8xf32, #tpu.memory_space<vmem>>, vector<1x8x1x8xf32>
    %136 = vector.shape_cast %135 : vector<1x8x1x8xf32> to vector<8x1x8xf32>
    %137 = vector.broadcast %136 : vector<8x1x8xf32> to vector<8x8x8xf32>
    %138 = arith.addf %134, %137 : vector<8x8x8xf32>
    %c1_92 = arith.constant 1 : index
    %c0_93 = arith.constant 0 : index
    %c0_94 = arith.constant 0 : index
    %c0_95 = arith.constant 0 : index
    %139 = vector.load %arg3[%c1_92, %c0_93, %c0_94, %c0_95] : memref<2x8x32x8xf32, #tpu.memory_space<vmem>>, vector<1x8x32x8xf32>
    %140 = vector.shape_cast %139 : vector<1x8x32x8xf32> to vector<8x32x8xf32>
    "tpu.trace_start"() <{level = 10 : i32, message = "nsd,nde->nse"}> : () -> ()
    %cst_96 = arith.constant dense<0.000000e+00> : vector<8x8x8xf32>
    %141 = tpu.matmul %131, %140, %cst_96 {dimension_numbers = #tpu.dot_dimension_numbers<[2], [1], [1], [2], [0, 0, 0, 1, 1, 2], [0], [0]>} : vector<8x8x32xf32>, vector<8x32x8xf32>, vector<8x8x8xf32> -> vector<8x8x8xf32>
    "tpu.trace_stop"() : () -> ()
    %c1_97 = arith.constant 1 : index
    %c0_98 = arith.constant 0 : index
    %c0_99 = arith.constant 0 : index
    %c0_100 = arith.constant 0 : index
    %142 = vector.load %arg6[%c1_97, %c0_98, %c0_99, %c0_100] : memref<2x8x1x8xf32, #tpu.memory_space<vmem>>, vector<1x8x1x8xf32>
    %143 = vector.shape_cast %142 : vector<1x8x1x8xf32> to vector<8x1x8xf32>
    %144 = vector.broadcast %143 : vector<8x1x8xf32> to vector<8x8x8xf32>
    %145 = arith.addf %141, %144 : vector<8x8x8xf32>
    %c1_101 = arith.constant 1 : index
    %c0_102 = arith.constant 0 : index
    %c0_103 = arith.constant 0 : index
    %c0_104 = arith.constant 0 : index
    %146 = vector.load %arg4[%c1_101, %c0_102, %c0_103, %c0_104] : memref<2x8x32x8xf32, #tpu.memory_space<vmem>>, vector<1x8x32x8xf32>
    %147 = vector.shape_cast %146 : vector<1x8x32x8xf32> to vector<8x32x8xf32>
    "tpu.trace_start"() <{level = 10 : i32, message = "nsd,nde->nse"}> : () -> ()
    %cst_105 = arith.constant dense<0.000000e+00> : vector<8x8x8xf32>
    %148 = tpu.matmul %131, %147, %cst_105 {dimension_numbers = #tpu.dot_dimension_numbers<[2], [1], [1], [2], [0, 0, 0, 1, 1, 2], [0], [0]>} : vector<8x8x32xf32>, vector<8x32x8xf32>, vector<8x8x8xf32> -> vector<8x8x8xf32>
    "tpu.trace_stop"() : () -> ()
    %c1_106 = arith.constant 1 : index
    %c0_107 = arith.constant 0 : index
    %c0_108 = arith.constant 0 : index
    %c0_109 = arith.constant 0 : index
    %149 = vector.load %arg7[%c1_106, %c0_107, %c0_108, %c0_109] : memref<2x8x1x8xf32, #tpu.memory_space<vmem>>, vector<1x8x1x8xf32>
    %150 = vector.shape_cast %149 : vector<1x8x1x8xf32> to vector<8x1x8xf32>
    %151 = vector.broadcast %150 : vector<8x1x8xf32> to vector<8x8x8xf32>
    %152 = arith.addf %148, %151 : vector<8x8x8xf32>
    "tpu.trace_start"() <{level = 10 : i32, message = "nqe,nke->nqk"}> : () -> ()
    %cst_110 = arith.constant dense<0.000000e+00> : vector<8x8x8xf32>
    %153 = tpu.matmul %138, %145, %cst_110 {dimension_numbers = #tpu.dot_dimension_numbers<[2], [2], [1], [1], [0, 0, 0, 1, 1, 1], [0], [0]>} : vector<8x8x8xf32>, vector<8x8x8xf32>, vector<8x8x8xf32> -> vector<8x8x8xf32>
    "tpu.trace_stop"() : () -> ()
    %cst_111 = arith.constant dense<0xFF800000> : vector<8x8xf32>
    %154 = vector.multi_reduction <maximumf>, %153, %cst_111 [2] : vector<8x8x8xf32> to vector<8x8xf32>
    %155 = vector.shape_cast %154 : vector<8x8xf32> to vector<8x8x1xf32>
    %156 = vector.broadcast %155 : vector<8x8x1xf32> to vector<8x8x8xf32>
    %157 = arith.subf %153, %156 : vector<8x8x8xf32>
    %158 = math.exp %157 : vector<8x8x8xf32>
    %cst_112 = arith.constant dense<0.000000e+00> : vector<8x8xf32>
    %159 = vector.multi_reduction <add>, %158, %cst_112 [2] : vector<8x8x8xf32> to vector<8x8xf32>
    %160 = vector.shape_cast %159 : vector<8x8xf32> to vector<8x8x1xf32>
    %161 = tpu.reciprocal %160 {approx = true} : vector<8x8x1xf32> -> vector<8x8x1xf32>
    %162 = vector.broadcast %161 : vector<8x8x1xf32> to vector<8x8x8xf32>
    %163 = arith.mulf %158, %162 : vector<8x8x8xf32>
    %164 = vector.shape_cast %163 : vector<8x8x8xf32> to vector<4x2x8x8xf32>
    %cst_113 = arith.constant dense<0.000000e+00> : vector<2x8x8xf32>
    %165 = vector.multi_reduction <add>, %164, %cst_113 [0] : vector<4x2x8x8xf32> to vector<2x8x8xf32>
    %cst_114 = arith.constant 2.500000e-01 : f32
    %166 = vector.broadcast %cst_114 : f32 to vector<2x8x8xf32>
    %167 = arith.mulf %165, %166 : vector<2x8x8xf32>
    %c1_115 = arith.constant 1 : index
    %c0_116 = arith.constant 0 : index
    %c0_117 = arith.constant 0 : index
    %c0_118 = arith.constant 0 : index
    %168 = vector.load %arg21[%c1_115, %c0_116, %c0_117, %c0_118] : memref<2x2x8x8xf32, #tpu.memory_space<vmem>>, vector<1x2x8x8xf32>
    %169 = vector.shape_cast %168 : vector<1x2x8x8xf32> to vector<2x8x8xf32>
    %170 = vector.shape_cast %167 : vector<2x8x8xf32> to vector<1x2x8x8xf32>
    tpu.vector_store %arg21[%c1_115, %c0_116, %c0_117, %c0_118], %170 {strides = array<i32>} : memref<2x2x8x8xf32, #tpu.memory_space<vmem>>, vector<1x2x8x8xf32>,
    "tpu.trace_start"() <{level = 10 : i32, message = "nqk,nke->nqe"}> : () -> ()
    %cst_119 = arith.constant dense<0.000000e+00> : vector<8x8x8xf32>
    %171 = tpu.matmul %163, %152, %cst_119 {dimension_numbers = #tpu.dot_dimension_numbers<[2], [1], [1], [2], [0, 0, 0, 1, 1, 2], [0], [0]>} : vector<8x8x8xf32>, vector<8x8x8xf32>, vector<8x8x8xf32> -> vector<8x8x8xf32>
    "tpu.trace_stop"() : () -> ()
    %c1_120 = arith.constant 1 : index
    %c0_121 = arith.constant 0 : index
    %c0_122 = arith.constant 0 : index
    %c0_123 = arith.constant 0 : index
    %172 = vector.load %arg8[%c1_120, %c0_121, %c0_122, %c0_123] : memref<2x8x8x32xf32, #tpu.memory_space<vmem>>, vector<1x8x8x32xf32>
    %173 = vector.shape_cast %172 : vector<1x8x8x32xf32> to vector<8x8x32xf32>
    "tpu.trace_start"() <{level = 10 : i32, message = "nse,ned->nsd"}> : () -> ()
    %cst_124 = arith.constant dense<0.000000e+00> : vector<8x8x32xf32>
    %174 = tpu.matmul %171, %173, %cst_124 {dimension_numbers = #tpu.dot_dimension_numbers<[2], [1], [1], [2], [0, 0, 0, 1, 1, 2], [0], [0]>} : vector<8x8x8xf32>, vector<8x8x32xf32>, vector<8x8x32xf32> -> vector<8x8x32xf32>
    "tpu.trace_stop"() : () -> ()
    %175 = vector.shape_cast %174 : vector<8x8x32xf32> to vector<4x2x8x32xf32>
    %cst_125 = arith.constant dense<0.000000e+00> : vector<2x8x32xf32>
    %176 = vector.multi_reduction <add>, %175, %cst_125 [0] : vector<4x2x8x32xf32> to vector<2x8x32xf32>
    %177 = vector.shape_cast %176 : vector<2x8x32xf32> to vector<16x32xf32>
    %c1_126 = arith.constant 1 : index
    %c0_127 = arith.constant 0 : index
    %c0_128 = arith.constant 0 : index
    %178 = vector.load %arg9[%c1_126, %c0_127, %c0_128] : memref<2x1x32xf32, #tpu.memory_space<vmem>>, vector<1x1x32xf32>
    %179 = vector.shape_cast %178 : vector<1x1x32xf32> to vector<1x32xf32>
    %180 = vector.broadcast %179 : vector<1x32xf32> to vector<16x32xf32>
    %181 = arith.addf %177, %180 : vector<16x32xf32>
    %182 = arith.addf %126, %181 : vector<16x32xf32>
    %c1_129 = arith.constant 1 : index
    %c0_130 = arith.constant 0 : index
    %c0_131 = arith.constant 0 : index
    %183 = vector.load %arg14[%c1_129, %c0_130, %c0_131] : memref<2x1x32xf32, #tpu.memory_space<vmem>>, vector<1x1x32xf32>
    %184 = vector.shape_cast %183 : vector<1x1x32xf32> to vector<1x32xf32>
    %c1_132 = arith.constant 1 : index
    %c0_133 = arith.constant 0 : index
    %c0_134 = arith.constant 0 : index
    %185 = vector.load %arg15[%c1_132, %c0_133, %c0_134] : memref<2x1x32xf32, #tpu.memory_space<vmem>>, vector<1x1x32xf32>
    %186 = vector.shape_cast %185 : vector<1x1x32xf32> to vector<1x32xf32>
    %cst_135 = arith.constant dense<0.000000e+00> : vector<16xf32>
    %187 = vector.multi_reduction <add>, %182, %cst_135 [1] : vector<16x32xf32> to vector<16xf32>
    %188 = vector.shape_cast %187 : vector<16xf32> to vector<16x1xf32>
    %cst_136 = arith.constant 3.200000e+01 : f32
    %189 = vector.broadcast %cst_136 : f32 to vector<16x1xf32>
    %190 = arith.divf %188, %189 : vector<16x1xf32>
    %191 = vector.broadcast %190 : vector<16x1xf32> to vector<16x32xf32>
    %192 = arith.subf %182, %191 : vector<16x32xf32>
    %193 = arith.mulf %192, %192 : vector<16x32xf32>
    %cst_137 = arith.constant dense<0.000000e+00> : vector<16xf32>
    %194 = vector.multi_reduction <add>, %193, %cst_137 [1] : vector<16x32xf32> to vector<16xf32>
    %195 = vector.shape_cast %194 : vector<16xf32> to vector<16x1xf32>
    %cst_138 = arith.constant 3.200000e+01 : f32
    %196 = vector.broadcast %cst_138 : f32 to vector<16x1xf32>
    %197 = arith.divf %195, %196 : vector<16x1xf32>
    %198 = vector.broadcast %190 : vector<16x1xf32> to vector<16x32xf32>
    %199 = arith.subf %182, %198 : vector<16x32xf32>
    %cst_139 = arith.constant 9.99999974E-6 : f32
    %200 = vector.broadcast %cst_139 : f32 to vector<16x1xf32>
    %201 = arith.addf %197, %200 : vector<16x1xf32>
    %202 = math.rsqrt %201 : vector<16x1xf32>
    %203 = vector.broadcast %202 : vector<16x1xf32> to vector<16x32xf32>
    %204 = arith.mulf %199, %203 : vector<16x32xf32>
    %205 = vector.broadcast %184 : vector<1x32xf32> to vector<16x32xf32>
    %206 = arith.mulf %204, %205 : vector<16x32xf32>
    %207 = vector.broadcast %186 : vector<1x32xf32> to vector<16x32xf32>
    %208 = arith.addf %206, %207 : vector<16x32xf32>
    %c1_140 = arith.constant 1 : index
    %c0_141 = arith.constant 0 : index
    %c0_142 = arith.constant 0 : index
    %209 = vector.load %arg10[%c1_140, %c0_141, %c0_142] : memref<2x32x64xf32, #tpu.memory_space<vmem>>, vector<1x32x64xf32>
    %210 = vector.shape_cast %209 : vector<1x32x64xf32> to vector<32x64xf32>
    %cst_143 = arith.constant dense<0.000000e+00> : vector<16x64xf32>
    %211 = tpu.matmul %208, %210, %cst_143 {dimension_numbers = #tpu.dot_dimension_numbers<[1], [0], [0], [1], [0, 0, 1, 1], [], []>} : vector<16x32xf32>, vector<32x64xf32>, vector<16x64xf32> -> vector<16x64xf32>
    %c1_144 = arith.constant 1 : index
    %c0_145 = arith.constant 0 : index
    %c0_146 = arith.constant 0 : index
    %212 = vector.load %arg11[%c1_144, %c0_145, %c0_146] : memref<2x1x64xf32, #tpu.memory_space<vmem>>, vector<1x1x64xf32>
    %213 = vector.shape_cast %212 : vector<1x1x64xf32> to vector<1x64xf32>
    %214 = vector.broadcast %213 : vector<1x64xf32> to vector<16x64xf32>
    %215 = arith.addf %211, %214 : vector<16x64xf32>
    %cst_147 = arith.constant 0.000000e+00 : f32
    %216 = vector.broadcast %cst_147 : f32 to vector<16x64xf32>
    %217 = arith.maximumf %215, %216 : vector<16x64xf32>
    %c1_148 = arith.constant 1 : index
    %c0_149 = arith.constant 0 : index
    %c0_150 = arith.constant 0 : index
    %218 = vector.load %arg12[%c1_148, %c0_149, %c0_150] : memref<2x64x32xf32, #tpu.memory_space<vmem>>, vector<1x64x32xf32>
    %219 = vector.shape_cast %218 : vector<1x64x32xf32> to vector<64x32xf32>
    %cst_151 = arith.constant dense<0.000000e+00> : vector<16x32xf32>
    %220 = tpu.matmul %217, %219, %cst_151 {dimension_numbers = #tpu.dot_dimension_numbers<[1], [0], [0], [1], [0, 0, 1, 1], [], []>} : vector<16x64xf32>, vector<64x32xf32>, vector<16x32xf32> -> vector<16x32xf32>
    %c1_152 = arith.constant 1 : index
    %c0_153 = arith.constant 0 : index
    %c0_154 = arith.constant 0 : index
    %221 = vector.load %arg13[%c1_152, %c0_153, %c0_154] : memref<2x1x32xf32, #tpu.memory_space<vmem>>, vector<1x1x32xf32>
    %222 = vector.shape_cast %221 : vector<1x1x32xf32> to vector<1x32xf32>
    %223 = vector.broadcast %222 : vector<1x32xf32> to vector<16x32xf32>
    %224 = arith.addf %220, %223 : vector<16x32xf32>
    %225 = arith.addf %208, %224 : vector<16x32xf32>
    %c1_155 = arith.constant 1 : index
    %c0_156 = arith.constant 0 : index
    %c0_157 = arith.constant 0 : index
    %226 = vector.load %arg16[%c1_155, %c0_156, %c0_157] : memref<2x1x32xf32, #tpu.memory_space<vmem>>, vector<1x1x32xf32>
    %227 = vector.shape_cast %226 : vector<1x1x32xf32> to vector<1x32xf32>
    %c1_158 = arith.constant 1 : index
    %c0_159 = arith.constant 0 : index
    %c0_160 = arith.constant 0 : index
    %228 = vector.load %arg17[%c1_158, %c0_159, %c0_160] : memref<2x1x32xf32, #tpu.memory_space<vmem>>, vector<1x1x32xf32>
    %229 = vector.shape_cast %228 : vector<1x1x32xf32> to vector<1x32xf32>
    %cst_161 = arith.constant dense<0.000000e+00> : vector<16xf32>
    %230 = vector.multi_reduction <add>, %225, %cst_161 [1] : vector<16x32xf32> to vector<16xf32>
    %231 = vector.shape_cast %230 : vector<16xf32> to vector<16x1xf32>
    %cst_162 = arith.constant 3.200000e+01 : f32
    %232 = vector.broadcast %cst_162 : f32 to vector<16x1xf32>
    %233 = arith.divf %231, %232 : vector<16x1xf32>
    %234 = vector.broadcast %233 : vector<16x1xf32> to vector<16x32xf32>
    %235 = arith.subf %225, %234 : vector<16x32xf32>
    %236 = arith.mulf %235, %235 : vector<16x32xf32>
    %cst_163 = arith.constant dense<0.000000e+00> : vector<16xf32>
    %237 = vector.multi_reduction <add>, %236, %cst_163 [1] : vector<16x32xf32> to vector<16xf32>
    %238 = vector.shape_cast %237 : vector<16xf32> to vector<16x1xf32>
    %cst_164 = arith.constant 3.200000e+01 : f32
    %239 = vector.broadcast %cst_164 : f32 to vector<16x1xf32>
    %240 = arith.divf %238, %239 : vector<16x1xf32>
    %241 = vector.broadcast %233 : vector<16x1xf32> to vector<16x32xf32>
    %242 = arith.subf %225, %241 : vector<16x32xf32>
    %cst_165 = arith.constant 9.99999974E-6 : f32
    %243 = vector.broadcast %cst_165 : f32 to vector<16x1xf32>
    %244 = arith.addf %240, %243 : vector<16x1xf32>
    %245 = math.rsqrt %244 : vector<16x1xf32>
    %246 = vector.broadcast %245 : vector<16x1xf32> to vector<16x32xf32>
    %247 = arith.mulf %242, %246 : vector<16x32xf32>
    %248 = vector.broadcast %227 : vector<1x32xf32> to vector<16x32xf32>
    %249 = arith.mulf %247, %248 : vector<16x32xf32>
    %250 = vector.broadcast %229 : vector<1x32xf32> to vector<16x32xf32>
    %251 = arith.addf %249, %250 : vector<16x32xf32>
    %c0_166 = arith.constant 0 : index
    %c0_167 = arith.constant 0 : index
    %252 = vector.load %arg18[%c0_166, %c0_167] : memref<1x32xf32, #tpu.memory_space<vmem>>, vector<1x32xf32>
    %c0_168 = arith.constant 0 : index
    %c0_169 = arith.constant 0 : index
    %253 = vector.load %arg19[%c0_168, %c0_169] : memref<1x32xf32, #tpu.memory_space<vmem>>, vector<1x32xf32>
    %cst_170 = arith.constant dense<0.000000e+00> : vector<16xf32>
    %254 = vector.multi_reduction <add>, %251, %cst_170 [1] : vector<16x32xf32> to vector<16xf32>
    %255 = vector.shape_cast %254 : vector<16xf32> to vector<16x1xf32>
    %cst_171 = arith.constant 3.200000e+01 : f32
    %256 = vector.broadcast %cst_171 : f32 to vector<16x1xf32>
    %257 = arith.divf %255, %256 : vector<16x1xf32>
    %258 = vector.broadcast %257 : vector<16x1xf32> to vector<16x32xf32>
    %259 = arith.subf %251, %258 : vector<16x32xf32>
    %260 = arith.mulf %259, %259 : vector<16x32xf32>
    %cst_172 = arith.constant dense<0.000000e+00> : vector<16xf32>
    %261 = vector.multi_reduction <add>, %260, %cst_172 [1] : vector<16x32xf32> to vector<16xf32>
    %262 = vector.shape_cast %261 : vector<16xf32> to vector<16x1xf32>
    %cst_173 = arith.constant 3.200000e+01 : f32
    %263 = vector.broadcast %cst_173 : f32 to vector<16x1xf32>
    %264 = arith.divf %262, %263 : vector<16x1xf32>
    %265 = vector.broadcast %257 : vector<16x1xf32> to vector<16x32xf32>
    %266 = arith.subf %251, %265 : vector<16x32xf32>
    %cst_174 = arith.constant 9.99999974E-6 : f32
    %267 = vector.broadcast %cst_174 : f32 to vector<16x1xf32>
    %268 = arith.addf %264, %267 : vector<16x1xf32>
    %269 = math.rsqrt %268 : vector<16x1xf32>
    %270 = vector.broadcast %269 : vector<16x1xf32> to vector<16x32xf32>
    %271 = arith.mulf %266, %270 : vector<16x32xf32>
    %272 = vector.broadcast %252 : vector<1x32xf32> to vector<16x32xf32>
    %273 = arith.mulf %271, %272 : vector<16x32xf32>
    %274 = vector.broadcast %253 : vector<1x32xf32> to vector<16x32xf32>
    %275 = arith.addf %273, %274 : vector<16x32xf32>
    %276 = vector.shape_cast %275 : vector<16x32xf32> to vector<2x8x32xf32>
    %c0_175 = arith.constant 0 : index
    %c0_176 = arith.constant 0 : index
    %c0_177 = arith.constant 0 : index
    %277 = vector.load %arg20[%c0_175, %c0_176, %c0_177] : memref<2x8x32xf32, #tpu.memory_space<vmem>>, vector<2x8x32xf32>
    tpu.vector_store %arg20[%c0_175, %c0_176, %c0_177], %276 {strides = array<i32>} : memref<2x8x32xf32, #tpu.memory_space<vmem>>, vector<2x8x32xf32>,
    return
  }
  func.func @transform_0(%arg0: i32) -> (i32, i32, i32) {
    %c0_i32 = arith.constant 0 : i32
    %c0_i32_0 = arith.constant 0 : i32
    %c0_i32_1 = arith.constant 0 : i32
    %c0_i32_2 = arith.constant 0 : i32
    return %c0_i32, %c0_i32_0, %c0_i32_1 : i32, i32, i32
  }
  func.func @transform_1(%arg0: i32) -> (i32, i32, i32, i32) {
    %c0_i32 = arith.constant 0 : i32
    %c0_i32_0 = arith.constant 0 : i32
    %c0_i32_1 = arith.constant 0 : i32
    %c0_i32_2 = arith.constant 0 : i32
    %c0_i32_3 = arith.constant 0 : i32
    return %c0_i32, %c0_i32_0, %c0_i32_1, %c0_i32_2 : i32, i32, i32, i32
  }
  func.func @transform_2(%arg0: i32) -> (i32, i32, i32, i32) {
    %c0_i32 = arith.constant 0 : i32
    %c0_i32_0 = arith.constant 0 : i32
    %c0_i32_1 = arith.constant 0 : i32
    %c0_i32_2 = arith.constant 0 : i32
    %c0_i32_3 = arith.constant 0 : i32
    return %c0_i32, %c0_i32_0, %c0_i32_1, %c0_i32_2 : i32, i32, i32, i32
  }
  func.func @transform_3(%arg0: i32) -> (i32, i32, i32, i32) {
    %c0_i32 = arith.constant 0 : i32
    %c0_i32_0 = arith.constant 0 : i32
    %c0_i32_1 = arith.constant 0 : i32
    %c0_i32_2 = arith.constant 0 : i32
    %c0_i32_3 = arith.constant 0 : i32
    return %c0_i32, %c0_i32_0, %c0_i32_1, %c0_i32_2 : i32, i32, i32, i32
  }
  func.func @transform_4(%arg0: i32) -> (i32, i32, i32, i32) {
    %c0_i32 = arith.constant 0 : i32
    %c0_i32_0 = arith.constant 0 : i32
    %c0_i32_1 = arith.constant 0 : i32
    %c0_i32_2 = arith.constant 0 : i32
    %c0_i32_3 = arith.constant 0 : i32
    return %c0_i32, %c0_i32_0, %c0_i32_1, %c0_i32_2 : i32, i32, i32, i32
  }
  func.func @transform_5(%arg0: i32) -> (i32, i32, i32, i32) {
    %c0_i32 = arith.constant 0 : i32
    %c0_i32_0 = arith.constant 0 : i32
    %c0_i32_1 = arith.constant 0 : i32
    %c0_i32_2 = arith.constant 0 : i32
    %c0_i32_3 = arith.constant 0 : i32
    return %c0_i32, %c0_i32_0, %c0_i32_1, %c0_i32_2 : i32, i32, i32, i32
  }
  func.func @transform_6(%arg0: i32) -> (i32, i32, i32, i32) {
    %c0_i32 = arith.constant 0 : i32
    %c0_i32_0 = arith.constant 0 : i32
    %c0_i32_1 = arith.constant 0 : i32
    %c0_i32_2 = arith.constant 0 : i32
    %c0_i32_3 = arith.constant 0 : i32
    return %c0_i32, %c0_i32_0, %c0_i32_1, %c0_i32_2 : i32, i32, i32, i32
  }
  func.func @transform_7(%arg0: i32) -> (i32, i32, i32, i32) {
    %c0_i32 = arith.constant 0 : i32
    %c0_i32_0 = arith.constant 0 : i32
    %c0_i32_1 = arith.constant 0 : i32
    %c0_i32_2 = arith.constant 0 : i32
    %c0_i32_3 = arith.constant 0 : i32
    return %c0_i32, %c0_i32_0, %c0_i32_1, %c0_i32_2 : i32, i32, i32, i32
  }
  func.func @transform_8(%arg0: i32) -> (i32, i32, i32) {
    %c0_i32 = arith.constant 0 : i32
    %c0_i32_0 = arith.constant 0 : i32
    %c0_i32_1 = arith.constant 0 : i32
    %c0_i32_2 = arith.constant 0 : i32
    return %c0_i32, %c0_i32_0, %c0_i32_1 : i32, i32, i32
  }
  func.func @transform_9(%arg0: i32) -> (i32, i32, i32) {
    %c0_i32 = arith.constant 0 : i32
    %c0_i32_0 = arith.constant 0 : i32
    %c0_i32_1 = arith.constant 0 : i32
    %c0_i32_2 = arith.constant 0 : i32
    return %c0_i32, %c0_i32_0, %c0_i32_1 : i32, i32, i32
  }
  func.func @transform_10(%arg0: i32) -> (i32, i32, i32) {
    %c0_i32 = arith.constant 0 : i32
    %c0_i32_0 = arith.constant 0 : i32
    %c0_i32_1 = arith.constant 0 : i32
    %c0_i32_2 = arith.constant 0 : i32
    return %c0_i32, %c0_i32_0, %c0_i32_1 : i32, i32, i32
  }
  func.func @transform_11(%arg0: i32) -> (i32, i32, i32) {
    %c0_i32 = arith.constant 0 : i32
    %c0_i32_0 = arith.constant 0 : i32
    %c0_i32_1 = arith.constant 0 : i32
    %c0_i32_2 = arith.constant 0 : i32
    return %c0_i32, %c0_i32_0, %c0_i32_1 : i32, i32, i32
  }
  func.func @transform_12(%arg0: i32) -> (i32, i32, i32) {
    %c0_i32 = arith.constant 0 : i32
    %c0_i32_0 = arith.constant 0 : i32
    %c0_i32_1 = arith.constant 0 : i32
    %c0_i32_2 = arith.constant 0 : i32
    return %c0_i32, %c0_i32_0, %c0_i32_1 : i32, i32, i32
  }
  func.func @transform_13(%arg0: i32) -> (i32, i32, i32) {
    %c0_i32 = arith.constant 0 : i32
    %c0_i32_0 = arith.constant 0 : i32
    %c0_i32_1 = arith.constant 0 : i32
    %c0_i32_2 = arith.constant 0 : i32
    return %c0_i32, %c0_i32_0, %c0_i32_1 : i32, i32, i32
  }
  func.func @transform_14(%arg0: i32) -> (i32, i32, i32) {
    %c0_i32 = arith.constant 0 : i32
    %c0_i32_0 = arith.constant 0 : i32
    %c0_i32_1 = arith.constant 0 : i32
    %c0_i32_2 = arith.constant 0 : i32
    return %c0_i32, %c0_i32_0, %c0_i32_1 : i32, i32, i32
  }
  func.func @transform_15(%arg0: i32) -> (i32, i32, i32) {
    %c0_i32 = arith.constant 0 : i32
    %c0_i32_0 = arith.constant 0 : i32
    %c0_i32_1 = arith.constant 0 : i32
    %c0_i32_2 = arith.constant 0 : i32
    return %c0_i32, %c0_i32_0, %c0_i32_1 : i32, i32, i32
  }
  func.func @transform_16(%arg0: i32) -> (i32, i32, i32) {
    %c0_i32 = arith.constant 0 : i32
    %c0_i32_0 = arith.constant 0 : i32
    %c0_i32_1 = arith.constant 0 : i32
    %c0_i32_2 = arith.constant 0 : i32
    return %c0_i32, %c0_i32_0, %c0_i32_1 : i32, i32, i32
  }
  func.func @transform_17(%arg0: i32) -> (i32, i32) {
    %c0_i32 = arith.constant 0 : i32
    %c0_i32_0 = arith.constant 0 : i32
    %c0_i32_1 = arith.constant 0 : i32
    return %c0_i32, %c0_i32_0 : i32, i32
  }
  func.func @transform_18(%arg0: i32) -> (i32, i32) {
    %c0_i32 = arith.constant 0 : i32
    %c0_i32_0 = arith.constant 0 : i32
    %c0_i32_1 = arith.constant 0 : i32
    return %c0_i32, %c0_i32_0 : i32, i32
  }
  func.func @transform_19(%arg0: i32) -> (i32, i32, i32) {
    %c0_i32 = arith.constant 0 : i32
    %c0_i32_0 = arith.constant 0 : i32
    %c0_i32_1 = arith.constant 0 : i32
    %c0_i32_2 = arith.constant 0 : i32
    return %c0_i32, %c0_i32_0, %c0_i32_1 : i32, i32, i32
  }
  func.func @transform_20(%arg0: i32) -> (i32, i32, i32, i32) {
    %c0_i32 = arith.constant 0 : i32
    %c0_i32_0 = arith.constant 0 : i32
    %c0_i32_1 = arith.constant 0 : i32
    %c0_i32_2 = arith.constant 0 : i32
    %c0_i32_3 = arith.constant 0 : i32
    return %c0_i32, %c0_i32_0, %c0_i32_1, %c0_i32_2 : i32, i32, i32, i32
  }
}

</mosaic_0001>

<llo_original>
// kernel: tpu_custom_call.1
$region0: #{tpu_custom_call.1}
  #allocation0 [shape = 'u32[]', space=smem, size = 0x4, offset = 0x4, fixed_abs, tag = 'smem constant byte address 0x4 - core index']
  #allocation1 [shape = 'u32[144,128]{1,0:T(1,128)}', space=vmem, size = 0x12000, scoped, tag = 'internal scratch']
  %s0 = inlined_call_operand.vmem [shape: f32[2,8,32], index: 0, kind: input, shape index: {}]
  %s1 = inlined_call_operand.vmem [shape: f32[2,8,32,8], index: 1, kind: input, shape index: {}]
  %s2 = inlined_call_operand.vmem [shape: f32[2,8,32,8], index: 2, kind: input, shape index: {}]
  %s3 = inlined_call_operand.vmem [shape: f32[2,8,32,8], index: 3, kind: input, shape index: {}]
  %s4 = inlined_call_operand.vmem [shape: f32[2,8,1,8], index: 4, kind: input, shape index: {}]
  %s5 = inlined_call_operand.vmem [shape: f32[2,8,1,8], index: 5, kind: input, shape index: {}]
  %s6 = inlined_call_operand.vmem [shape: f32[2,8,1,8], index: 6, kind: input, shape index: {}]
  %s7 = inlined_call_operand.vmem [shape: f32[2,8,8,32], index: 7, kind: input, shape index: {}]
  %s8 = inlined_call_operand.vmem [shape: f32[2,1,32], index: 8, kind: input, shape index: {}]
  %s9 = inlined_call_operand.vmem [shape: f32[2,32,64], index: 9, kind: input, shape index: {}]
  %s10 = inlined_call_operand.vmem [shape: f32[2,1,64], index: 10, kind: input, shape index: {}]
  %s11 = inlined_call_operand.vmem [shape: f32[2,64,32], index: 11, kind: input, shape index: {}]
  %s12 = inlined_call_operand.vmem [shape: f32[2,1,32], index: 12, kind: input, shape index: {}]
  %s13 = inlined_call_operand.vmem [shape: f32[2,1,32], index: 13, kind: input, shape index: {}]
  %s14 = inlined_call_operand.vmem [shape: f32[2,1,32], index: 14, kind: input, shape index: {}]
  %s15 = inlined_call_operand.vmem [shape: f32[2,1,32], index: 15, kind: input, shape index: {}]
  %s16 = inlined_call_operand.vmem [shape: f32[2,1,32], index: 16, kind: input, shape index: {}]
  %s17 = inlined_call_operand.vmem [shape: f32[1,32], index: 17, kind: input, shape index: {}]
  %s18 = inlined_call_operand.vmem [shape: f32[1,32], index: 18, kind: input, shape index: {}]
  %s19 = inlined_call_operand.hbm [shape: f32[2,8,32], index: 19, kind: output, shape index: {0}]
  %s20 = inlined_call_operand.hbm [shape: f32[2,2,8,8], index: 20, kind: output, shape index: {1}]
  %21 = xla_tuple %s19, %s20
  %s22 = sld [smem:[#allocation0]]
  $region94: #{tpu_custom_call.1} parent=0
    _
  %s24 = ssub.s32 1, %s22
  %s25 = scalar_select 0, %s24, %s22
  $region1: #{tpu_custom_call.1} parent=0
    #allocation2 [shape = 'u8[8192]{0}', space=vmem, size = 0x2000, scoped, tag = 'output window, operand 0, single buffered']
    #allocation3 [shape = 's32[1]{0}', space=sflag, size = 0x4, scoped, tag = 'scoped memory for tpu_custom_call.1']
    #allocation4 [shape = 'u8[16384]{0}', space=vmem, size = 0x4000, scoped, tag = 'output window, operand 1, single buffered']
    #allocation5 [shape = 's32[1]{0}', space=sflag, size = 0x4, scoped, tag = 'scoped memory for tpu_custom_call.1']
    %26 = vsyncpa [#allocation3], 0
    %27 = vsyncpa [#allocation5], 0
    // Predicated region
    $region2: #{tpu_custom_call.1} parent=1 // pred_check
      _
    $region3: #{tpu_custom_call.1} parent=1 // pred_check_branch
      %29 = sbr.rel (0) target = $region5
    $region4: #{tpu_custom_call.1} parent=1 // pred_region
      _
    $region5: #{tpu_custom_call.1} parent=1 // pred_fallthru
      _
    // Predicated region
    $region6: #{tpu_custom_call.1} parent=1 // pred_check
      _
    $region7: #{tpu_custom_call.1} parent=1 // pred_check_branch
      %31 = sbr.rel (0) target = $region9
    $region8: #{tpu_custom_call.1} parent=1 // pred_region
      _
    $region9: #{tpu_custom_call.1} parent=1 // pred_fallthru
      _
    // Predicated region
    $region10: #{tpu_custom_call.1} parent=1 // pred_check
      _
    $region11: #{tpu_custom_call.1} parent=1 // pred_check_branch
      %33 = sbr.rel (0) target = $region13
    $region12: #{tpu_custom_call.1} parent=1 // pred_region
      _
    $region13: #{tpu_custom_call.1} parent=1 // pred_fallthru
      _
    // Predicated region
    $region14: #{tpu_custom_call.1} parent=1 // pred_check
      _
    $region15: #{tpu_custom_call.1} parent=1 // pred_check_branch
      %35 = sbr.rel (0) target = $region17
    $region16: #{tpu_custom_call.1} parent=1 // pred_region
      _
    $region17: #{tpu_custom_call.1} parent=1 // pred_fallthru
      _
    // Predicated region
    $region18: #{tpu_custom_call.1} parent=1 // pred_check
      _
    $region19: #{tpu_custom_call.1} parent=1 // pred_check_branch
      %37 = sbr.rel (0) target = $region21
    $region20: #{tpu_custom_call.1} parent=1 // pred_region
      _
    $region21: #{tpu_custom_call.1} parent=1 // pred_fallthru
      _
    // Predicated region
    $region22: #{tpu_custom_call.1} parent=1 // pred_check
      _
    $region23: #{tpu_custom_call.1} parent=1 // pred_check_branch
      %39 = sbr.rel (0) target = $region25
    $region24: #{tpu_custom_call.1} parent=1 // pred_region
      _
    $region25: #{tpu_custom_call.1} parent=1 // pred_fallthru
      _
    // Predicated region
    $region26: #{tpu_custom_call.1} parent=1 // pred_check
      _
    $region27: #{tpu_custom_call.1} parent=1 // pred_check_branch
      %41 = sbr.rel (0) target = $region29
    $region28: #{tpu_custom_call.1} parent=1 // pred_region
      _
    $region29: #{tpu_custom_call.1} parent=1 // pred_fallthru
      _
    // Predicated region
    $region30: #{tpu_custom_call.1} parent=1 // pred_check
      _
    $region31: #{tpu_custom_call.1} parent=1 // pred_check_branch
      %43 = sbr.rel (0) target = $region33
    $region32: #{tpu_custom_call.1} parent=1 // pred_region
      _
    $region33: #{tpu_custom_call.1} parent=1 // pred_fallthru
      _
    // Predicated region
    $region34: #{tpu_custom_call.1} parent=1 // pred_check
      _
    $region35: #{tpu_custom_call.1} parent=1 // pred_check_branch
      %45 = sbr.rel (0) target = $region37
    $region36: #{tpu_custom_call.1} parent=1 // pred_region
      _
    $region37: #{tpu_custom_call.1} parent=1 // pred_fallthru
      _
    // Predicated region
    $region38: #{tpu_custom_call.1} parent=1 // pred_check
      _
    $region39: #{tpu_custom_call.1} parent=1 // pred_check_branch
      %47 = sbr.rel (0) target = $region41
    $region40: #{tpu_custom_call.1} parent=1 // pred_region
      _
    $region41: #{tpu_custom_call.1} parent=1 // pred_fallthru
      _
    // Predicated region
    $region42: #{tpu_custom_call.1} parent=1 // pred_check
      _
    $region43: #{tpu_custom_call.1} parent=1 // pred_check_branch
      %49 = sbr.rel (0) target = $region45
    $region44: #{tpu_custom_call.1} parent=1 // pred_region
      _
    $region45: #{tpu_custom_call.1} parent=1 // pred_fallthru
      _
    // Predicated region
    $region46: #{tpu_custom_call.1} parent=1 // pred_check
      _
    $region47: #{tpu_custom_call.1} parent=1 // pred_check_branch
      %51 = sbr.rel (0) target = $region49
    $region48: #{tpu_custom_call.1} parent=1 // pred_region
      _
    $region49: #{tpu_custom_call.1} parent=1 // pred_fallthru
      _
    // Predicated region
    $region50: #{tpu_custom_call.1} parent=1 // pred_check
      _
    $region51: #{tpu_custom_call.1} parent=1 // pred_check_branch
      %53 = sbr.rel (0) target = $region53
    $region52: #{tpu_custom_call.1} parent=1 // pred_region
      _
    $region53: #{tpu_custom_call.1} parent=1 // pred_fallthru
      _
    // Predicated region
    $region54: #{tpu_custom_call.1} parent=1 // pred_check
      _
    $region55: #{tpu_custom_call.1} parent=1 // pred_check_branch
      %55 = sbr.rel (0) target = $region57
    $region56: #{tpu_custom_call.1} parent=1 // pred_region
      _
    $region57: #{tpu_custom_call.1} parent=1 // pred_fallthru
      _
    // Predicated region
    $region58: #{tpu_custom_call.1} parent=1 // pred_check
      _
    $region59: #{tpu_custom_call.1} parent=1 // pred_check_branch
      %57 = sbr.rel (0) target = $region61
    $region60: #{tpu_custom_call.1} parent=1 // pred_region
      _
    $region61: #{tpu_custom_call.1} parent=1 // pred_fallthru
      _
    // Predicated region
    $region62: #{tpu_custom_call.1} parent=1 // pred_check
      _
    $region63: #{tpu_custom_call.1} parent=1 // pred_check_branch
      %59 = sbr.rel (0) target = $region65
    $region64: #{tpu_custom_call.1} parent=1 // pred_region
      _
    $region65: #{tpu_custom_call.1} parent=1 // pred_fallthru
      _
    // Predicated region
    $region66: #{tpu_custom_call.1} parent=1 // pred_check
      _
    $region67: #{tpu_custom_call.1} parent=1 // pred_check_branch
      %61 = sbr.rel (0) target = $region69
    $region68: #{tpu_custom_call.1} parent=1 // pred_region
      _
    $region69: #{tpu_custom_call.1} parent=1 // pred_fallthru
      _
    // Predicated region
    $region70: #{tpu_custom_call.1} parent=1 // pred_check
      _
    $region71: #{tpu_custom_call.1} parent=1 // pred_check_branch
      %63 = sbr.rel (0) target = $region73
    $region72: #{tpu_custom_call.1} parent=1 // pred_region
      _
    $region73: #{tpu_custom_call.1} parent=1 // pred_fallthru
      _
    // Predicated region
    $region74: #{tpu_custom_call.1} parent=1 // pred_check
      _
    $region75: #{tpu_custom_call.1} parent=1 // pred_check_branch
      %65 = sbr.rel (0) target = $region77
    $region76: #{tpu_custom_call.1} parent=1 // pred_region
      _
    $region77: #{tpu_custom_call.1} parent=1 // pred_fallthru
      _
    %v66 = vld [vmem:[%s0] sm:$0xff]
    %v67 = vld [vmem:[%s0 + $0x8] sm:$0xff]
    %v68 = vld [vmem:[%s1] sm:$0xff]
    %v69 = vld [vmem:[%s1 + $0x8] sm:$0xff]
    %v70 = vld [vmem:[%s1 + $0x10] sm:$0xff]
    %v71 = vld [vmem:[%s1 + $0x18] sm:$0xff]
    %v72 = vld [vmem:[%s1 + $0x20] sm:$0xff]
    %v73 = vld [vmem:[%s1 + $0x28] sm:$0xff]
    %v74 = vld [vmem:[%s1 + $0x30] sm:$0xff]
    %v75 = vld [vmem:[%s1 + $0x38] sm:$0xff]
    %v76 = vld [vmem:[%s1 + $0x40] sm:$0xff]
    %v77 = vld [vmem:[%s1 + $0x48] sm:$0xff]
    %v78 = vld [vmem:[%s1 + $0x50] sm:$0xff]
    %v79 = vld [vmem:[%s1 + $0x58] sm:$0xff]
    %v80 = vld [vmem:[%s1 + $0x60] sm:$0xff]
    %v81 = vld [vmem:[%s1 + $0x68] sm:$0xff]
    %v82 = vld [vmem:[%s1 + $0x70] sm:$0xff]
    %v83 = vld [vmem:[%s1 + $0x78] sm:$0xff]
    %v84 = vld [vmem:[%s1 + $0x80] sm:$0xff]
    %v85 = vld [vmem:[%s1 + $0x88] sm:$0xff]
    %v86 = vld [vmem:[%s1 + $0x90] sm:$0xff]
    %v87 = vld [vmem:[%s1 + $0x98] sm:$0xff]
    %v88 = vld [vmem:[%s1 + $0xa0] sm:$0xff]
    %v89 = vld [vmem:[%s1 + $0xa8] sm:$0xff]
    %v90 = vld [vmem:[%s1 + $0xb0] sm:$0xff]
    %v91 = vld [vmem:[%s1 + $0xb8] sm:$0xff]
    %v92 = vld [vmem:[%s1 + $0xc0] sm:$0xff]
    %v93 = vld [vmem:[%s1 + $0xc8] sm:$0xff]
    %v94 = vld [vmem:[%s1 + $0xd0] sm:$0xff]
    %v95 = vld [vmem:[%s1 + $0xd8] sm:$0xff]
    %v96 = vld [vmem:[%s1 + $0xe0] sm:$0xff]
    %v97 = vld [vmem:[%s1 + $0xe8] sm:$0xff]
    %v98 = vld [vmem:[%s1 + $0xf0] sm:$0xff]
    %v99 = vld [vmem:[%s1 + $0xf8] sm:$0xff]
    %v100 = vld [vmem:[%s4] sm:$0x1]
    %v101 = vld [vmem:[%s4 + $0x1] sm:$0x1]
    %v102 = vld [vmem:[%s4 + $0x2] sm:$0x1]
    %v103 = vld [vmem:[%s4 + $0x3] sm:$0x1]
    %v104 = vld [vmem:[%s4 + $0x4] sm:$0x1]
    %v105 = vld [vmem:[%s4 + $0x5] sm:$0x1]
    %v106 = vld [vmem:[%s4 + $0x6] sm:$0x1]
    %v107 = vld [vmem:[%s4 + $0x7] sm:$0x1]
    %v116 = vlaneseq
    %v117 = vshrl.u32 %v116, 7
    %v118 = vsub.s32 0, %v117
    %v119 = vrot.slane %v100, %v118
    %v120 = vlaneseq
    %v121 = vshrl.u32 %v120, 7
    %v122 = vsub.s32 0, %v121
    %v123 = vrot.slane %v101, %v122
    %v124 = vlaneseq
    %v125 = vshrl.u32 %v124, 7
    %v126 = vsub.s32 0, %v125
    %v127 = vrot.slane %v102, %v126
    %v128 = vlaneseq
    %v129 = vshrl.u32 %v128, 7
    %v130 = vsub.s32 0, %v129
    %v131 = vrot.slane %v103, %v130
    %v132 = vlaneseq
    %v133 = vshrl.u32 %v132, 7
    %v134 = vsub.s32 0, %v133
    %v135 = vrot.slane %v104, %v134
    %v136 = vlaneseq
    %v137 = vshrl.u32 %v136, 7
    %v138 = vsub.s32 0, %v137
    %v139 = vrot.slane %v105, %v138
    %v140 = vlaneseq
    %v141 = vshrl.u32 %v140, 7
    %v142 = vsub.s32 0, %v141
    %v143 = vrot.slane %v106, %v142
    %v144 = vlaneseq
    %v145 = vshrl.u32 %v144, 7
    %v146 = vsub.s32 0, %v145
    %v147 = vrot.slane %v107, %v146
    %vm156 = vcmask 261120
    %v158 = vsel %vm156, %v66, 0
    %160 = vmatprep.subr.mxu0 0.0
    %161 = vmatpush1.msra.mxu0 %v68
    %162 = vmatprep.subr.mxu0 0.0
    %163 = vmatpush1.msra.mxu0 %v69
    %164 = vmatprep.subr.mxu0 0.0
    %165 = vmatpush1.msra.mxu0 %v70
    %166 = vmatprep.subr.mxu0 0.0
    %167 = vmatpush1.msra.mxu0 %v71
    %168 = vmatprep.subr.mxu0 0.0
    %169 = vmatpush1.msra.mxu0 0.0
    %170 = vmatprep.subr.mxu0 0.0
    %171 = vmatpush1.msra.mxu0 0.0
    %172 = vmatprep.subr.mxu0 0.0
    %173 = vmatpush1.msra.mxu0 0.0
    %174 = vmatprep.subr.mxu0 0.0
    %175 = vmatpush1.msra.mxu0 0.0
    %176 = vmatprep.subr.mxu0 0.0
    %177 = vmatpush1.msra.mxu0 0.0
    %178 = vmatprep.subr.mxu0 0.0
    %179 = vmatpush1.msra.mxu0 0.0
    %180 = vmatprep.subr.mxu0 0.0
    %181 = vmatpush1.msra.mxu0 0.0
    %182 = vmatprep.subr.mxu0 0.0
    %183 = vmatpush1.msra.mxu0 0.0
    %184 = vmatprep.subr.mxu0 0.0
    %185 = vmatpush1.msra.mxu0 0.0
    %186 = vmatprep.subr.mxu0 0.0
    %187 = vmatpush1.msra.mxu0 0.0
    %188 = vmatprep.subr.mxu0 0.0
    %189 = vmatpush1.msra.mxu0 0.0
    %190 = vmatprep.subr.mxu0 0.0
    %191 = vmatpush1.msra.mxu0 0.0
    %192 = vmatprep.subr.mxu0 0.0
    %193 = vmatpush1.msra.mxu0 0.0
    %194 = vmatprep.subr.mxu0 0.0
    %195 = vmatpush1.msra.mxu0 0.0
    %196 = vmatprep.subr.mxu0 0.0
    %197 = vmatpush1.msra.mxu0 0.0
    %198 = vmatprep.subr.mxu0 0.0
    %199 = vmatpush1.msra.mxu0 0.0
    %200 = vmatprep.subr.mxu0 0.0
    %201 = vmatpush1.msra.mxu0 0.0
    %202 = vmatprep.subr.mxu0 0.0
    %203 = vmatpush1.msra.mxu0 0.0
    %204 = vmatprep.subr.mxu0 0.0
    %205 = vmatpush1.msra.mxu0 0.0
    %206 = vmatprep.subr.mxu0 0.0
    %207 = vmatpush1.msra.mxu0 0.0
    %208 = vmatprep.subr.mxu0 0.0
    %209 = vmatpush1.msra.mxu0 0.0
    %210 = vmatprep.subr.mxu0 0.0
    %211 = vmatpush1.msra.mxu0 0.0
    %212 = vmatprep.subr.mxu0 0.0
    %213 = vmatpush1.msra.mxu0 0.0
    %214 = vmatprep.subr.mxu0 0.0
    %215 = vmatpush1.msra.mxu0 0.0
    %216 = vmatprep.subr.mxu0 0.0
    %217 = vmatpush1.msra.mxu0 0.0
    %218 = vmatprep.subr.mxu0 0.0
    %219 = vmatpush1.msra.mxu0 0.0
    %220 = vmatprep.subr.mxu0 0.0
    %221 = vmatpush1.msra.mxu0 0.0
    %222 = vmatprep.subr.mxu0 0.0
    %223 = vmatpush1.msra.mxu0 0.0
    %224 = vmatprep.mubr.f32.mxu0 0.0
    %225 = vmatmul.mubr.f32.gmra.mrb[0].mxu0 %v158
    %v226 = vpop.f32.mrb[0].mxu0
    %v227 = vadd.f32 %v119, %v226
    %v228 = vpop.f32.mrb[0].mxu0
    %229 = vdwg.mxu0
    %v231 = vsel %vm156, %v67, 0
    %233 = vmatprep.subr.mxu0 0.0
    %234 = vmatpush1.msra.mxu0 %v72
    %235 = vmatprep.subr.mxu0 0.0
    %236 = vmatpush1.msra.mxu0 %v73
    %237 = vmatprep.subr.mxu0 0.0
    %238 = vmatpush1.msra.mxu0 %v74
    %239 = vmatprep.subr.mxu0 0.0
    %240 = vmatpush1.msra.mxu0 %v75
    %241 = vmatprep.subr.mxu0 0.0
    %242 = vmatpush1.msra.mxu0 0.0
    %243 = vmatprep.subr.mxu0 0.0
    %244 = vmatpush1.msra.mxu0 0.0
    %245 = vmatprep.subr.mxu0 0.0
    %246 = vmatpush1.msra.mxu0 0.0
    %247 = vmatprep.subr.mxu0 0.0
    %248 = vmatpush1.msra.mxu0 0.0
    %249 = vmatprep.subr.mxu0 0.0
    %250 = vmatpush1.msra.mxu0 0.0
    %251 = vmatprep.subr.mxu0 0.0
    %252 = vmatpush1.msra.mxu0 0.0
    %253 = vmatprep.subr.mxu0 0.0
    %254 = vmatpush1.msra.mxu0 0.0
    %255 = vmatprep.subr.mxu0 0.0
    %256 = vmatpush1.msra.mxu0 0.0
    %257 = vmatprep.subr.mxu0 0.0
    %258 = vmatpush1.msra.mxu0 0.0
    %259 = vmatprep.subr.mxu0 0.0
    %260 = vmatpush1.msra.mxu0 0.0
    %261 = vmatprep.subr.mxu0 0.0
    %262 = vmatpush1.msra.mxu0 0.0
    %263 = vmatprep.subr.mxu0 0.0
    %264 = vmatpush1.msra.mxu0 0.0
    %265 = vmatprep.subr.mxu0 0.0
    %266 = vmatpush1.msra.mxu0 0.0
    %267 = vmatprep.subr.mxu0 0.0
    %268 = vmatpush1.msra.mxu0 0.0
    %269 = vmatprep.subr.mxu0 0.0
    %270 = vmatpush1.msra.mxu0 0.0
    %271 = vmatprep.subr.mxu0 0.0
    %272 = vmatpush1.msra.mxu0 0.0
    %273 = vmatprep.subr.mxu0 0.0
    %274 = vmatpush1.msra.mxu0 0.0
    %275 = vmatprep.subr.mxu0 0.0
    %276 = vmatpush1.msra.mxu0 0.0
    %277 = vmatprep.subr.mxu0 0.0
    %278 = vmatpush1.msra.mxu0 0.0
    %279 = vmatprep.subr.mxu0 0.0
    %280 = vmatpush1.msra.mxu0 0.0
    %281 = vmatprep.subr.mxu0 0.0
    %282 = vmatpush1.msra.mxu0 0.0
    %283 = vmatprep.subr.mxu0 0.0
    %284 = vmatpush1.msra.mxu0 0.0
    %285 = vmatprep.subr.mxu0 0.0
    %286 = vmatpush1.msra.mxu0 0.0
    %287 = vmatprep.subr.mxu0 0.0
    %288 = vmatpush1.msra.mxu0 0.0
    %289 = vmatprep.subr.mxu0 0.0
    %290 = vmatpush1.msra.mxu0 0.0
    %291 = vmatprep.subr.mxu0 0.0
    %292 = vmatpush1.msra.mxu0 0.0
    %293 = vmatprep.subr.mxu0 0.0
    %294 = vmatpush1.msra.mxu0 0.0
    %295 = vmatprep.subr.mxu0 0.0
    %296 = vmatpush1.msra.mxu0 0.0
    %297 = vmatprep.mubr.f32.mxu0 0.0
    %298 = vmatmul.mubr.f32.gmra.mrb[0].mxu0 %v231
    %v299 = vpop.f32.mrb[0].mxu0
    %v300 = vadd.f32 %v123, %v299
    %v301 = vpop.f32.mrb[0].mxu0
    %302 = vdwg.mxu0
    %303 = vmatprep.subr.mxu0 0.0
    %304 = vmatpush1.msra.mxu0 %v76
    %305 = vmatprep.subr.mxu0 0.0
    %306 = vmatpush1.msra.mxu0 %v77
    %307 = vmatprep.subr.mxu0 0.0
    %308 = vmatpush1.msra.mxu0 %v78
    %309 = vmatprep.subr.mxu0 0.0
    %310 = vmatpush1.msra.mxu0 %v79
    %311 = vmatprep.subr.mxu0 0.0
    %312 = vmatpush1.msra.mxu0 0.0
    %313 = vmatprep.subr.mxu0 0.0
    %314 = vmatpush1.msra.mxu0 0.0
    %315 = vmatprep.subr.mxu0 0.0
    %316 = vmatpush1.msra.mxu0 0.0
    %317 = vmatprep.subr.mxu0 0.0
    %318 = vmatpush1.msra.mxu0 0.0
    %319 = vmatprep.subr.mxu0 0.0
    %320 = vmatpush1.msra.mxu0 0.0
    %321 = vmatprep.subr.mxu0 0.0
    %322 = vmatpush1.msra.mxu0 0.0
    %323 = vmatprep.subr.mxu0 0.0
    %324 = vmatpush1.msra.mxu0 0.0
    %325 = vmatprep.subr.mxu0 0.0
    %326 = vmatpush1.msra.mxu0 0.0
    %327 = vmatprep.subr.mxu0 0.0
    %328 = vmatpush1.msra.mxu0 0.0
    %329 = vmatprep.subr.mxu0 0.0
    %330 = vmatpush1.msra.mxu0 0.0
    %331 = vmatprep.subr.mxu0 0.0
    %332 = vmatpush1.msra.mxu0 0.0
    %333 = vmatprep.subr.mxu0 0.0
    %334 = vmatpush1.msra.mxu0 0.0
    %335 = vmatprep.subr.mxu0 0.0
    %336 = vmatpush1.msra.mxu0 0.0
    %337 = vmatprep.subr.mxu0 0.0
    %338 = vmatpush1.msra.mxu0 0.0
    %339 = vmatprep.subr.mxu0 0.0
    %340 = vmatpush1.msra.mxu0 0.0
    %341 = vmatprep.subr.mxu0 0.0
    %342 = vmatpush1.msra.mxu0 0.0
    %343 = vmatprep.subr.mxu0 0.0
    %344 = vmatpush1.msra.mxu0 0.0
    %345 = vmatprep.subr.mxu0 0.0
    %346 = vmatpush1.msra.mxu0 0.0
    %347 = vmatprep.subr.mxu0 0.0
    %348 = vmatpush1.msra.mxu0 0.0
    %349 = vmatprep.subr.mxu0 0.0
    %350 = vmatpush1.msra.mxu0 0.0
    %351 = vmatprep.subr.mxu0 0.0
    %352 = vmatpush1.msra.mxu0 0.0
    %353 = vmatprep.subr.mxu0 0.0
    %354 = vmatpush1.msra.mxu0 0.0
    %355 = vmatprep.subr.mxu0 0.0
    %356 = vmatpush1.msra.mxu0 0.0
    %357 = vmatprep.subr.mxu0 0.0
    %358 = vmatpush1.msra.mxu0 0.0
    %359 = vmatprep.subr.mxu0 0.0
    %360 = vmatpush1.msra.mxu0 0.0
    %361 = vmatprep.subr.mxu0 0.0
    %362 = vmatpush1.msra.mxu0 0.0
    %363 = vmatprep.subr.mxu0 0.0
    %364 = vmatpush1.msra.mxu0 0.0
    %365 = vmatprep.subr.mxu0 0.0
    %366 = vmatpush1.msra.mxu0 0.0
    %367 = vmatprep.mubr.f32.mxu0 0.0
    %368 = vmatmul.mubr.f32.gmra.mrb[0].mxu0 %v158
    %v369 = vpop.f32.mrb[0].mxu0
    %v370 = vadd.f32 %v127, %v369
    %v371 = vpop.f32.mrb[0].mxu0
    %372 = vdwg.mxu0
    %373 = vmatprep.subr.mxu0 0.0
    %374 = vmatpush1.msra.mxu0 %v80
    %375 = vmatprep.subr.mxu0 0.0
    %376 = vmatpush1.msra.mxu0 %v81
    %377 = vmatprep.subr.mxu0 0.0
    %378 = vmatpush1.msra.mxu0 %v82
    %379 = vmatprep.subr.mxu0 0.0
    %380 = vmatpush1.msra.mxu0 %v83
    %381 = vmatprep.subr.mxu0 0.0
    %382 = vmatpush1.msra.mxu0 0.0
    %383 = vmatprep.subr.mxu0 0.0
    %384 = vmatpush1.msra.mxu0 0.0
    %385 = vmatprep.subr.mxu0 0.0
    %386 = vmatpush1.msra.mxu0 0.0
    %387 = vmatprep.subr.mxu0 0.0
    %388 = vmatpush1.msra.mxu0 0.0
    %389 = vmatprep.subr.mxu0 0.0
    %390 = vmatpush1.msra.mxu0 0.0
    %391 = vmatprep.subr.mxu0 0.0
    %392 = vmatpush1.msra.mxu0 0.0
    %393 = vmatprep.subr.mxu0 0.0
    %394 = vmatpush1.msra.mxu0 0.0
    %395 = vmatprep.subr.mxu0 0.0
    %396 = vmatpush1.msra.mxu0 0.0
    %397 = vmatprep.subr.mxu0 0.0
    %398 = vmatpush1.msra.mxu0 0.0
    %399 = vmatprep.subr.mxu0 0.0
    %400 = vmatpush1.msra.mxu0 0.0
    %401 = vmatprep.subr.mxu0 0.0
    %402 = vmatpush1.msra.mxu0 0.0
    %403 = vmatprep.subr.mxu0 0.0
    %404 = vmatpush1.msra.mxu0 0.0
    %405 = vmatprep.subr.mxu0 0.0
    %406 = vmatpush1.msra.mxu0 0.0
    %407 = vmatprep.subr.mxu0 0.0
    %408 = vmatpush1.msra.mxu0 0.0
    %409 = vmatprep.subr.mxu0 0.0
    %410 = vmatpush1.msra.mxu0 0.0
    %411 = vmatprep.subr.mxu0 0.0
    %412 = vmatpush1.msra.mxu0 0.0
    %413 = vmatprep.subr.mxu0 0.0
    %414 = vmatpush1.msra.mxu0 0.0
    %415 = vmatprep.subr.mxu0 0.0
    %416 = vmatpush1.msra.mxu0 0.0
    %417 = vmatprep.subr.mxu0 0.0
    %418 = vmatpush1.msra.mxu0 0.0
    %419 = vmatprep.subr.mxu0 0.0
    %420 = vmatpush1.msra.mxu0 0.0
    %421 = vmatprep.subr.mxu0 0.0
    %422 = vmatpush1.msra.mxu0 0.0
    %423 = vmatprep.subr.mxu0 0.0
    %424 = vmatpush1.msra.mxu0 0.0
    %425 = vmatprep.subr.mxu0 0.0
    %426 = vmatpush1.msra.mxu0 0.0
    %427 = vmatprep.subr.mxu0 0.0
    %428 = vmatpush1.msra.mxu0 0.0
    %429 = vmatprep.subr.mxu0 0.0
    %430 = vmatpush1.msra.mxu0 0.0
    %431 = vmatprep.subr.mxu0 0.0
    %432 = vmatpush1.msra.mxu0 0.0
    %433 = vmatprep.subr.mxu0 0.0
    %434 = vmatpush1.msra.mxu0 0.0
    %435 = vmatprep.subr.mxu0 0.0
    %436 = vmatpush1.msra.mxu0 0.0
    %437 = vmatprep.mubr.f32.mxu0 0.0
    %438 = vmatmul.mubr.f32.gmra.mrb[0].mxu0 %v231
    %v439 = vpop.f32.mrb[0].mxu0
    %v440 = vadd.f32 %v131, %v439
    %v441 = vpop.f32.mrb[0].mxu0
    %442 = vdwg.mxu0
    %443 = vmatprep.subr.mxu0 0.0
    %444 = vmatpush1.msra.mxu0 %v84
    %445 = vmatprep.subr.mxu0 0.0
    %446 = vmatpush1.msra.mxu0 %v85
    %447 = vmatprep.subr.mxu0 0.0
    %448 = vmatpush1.msra.mxu0 %v86
    %449 = vmatprep.subr.mxu0 0.0
    %450 = vmatpush1.msra.mxu0 %v87
    %451 = vmatprep.subr.mxu0 0.0
    %452 = vmatpush1.msra.mxu0 0.0
    %453 = vmatprep.subr.mxu0 0.0
    %454 = vmatpush1.msra.mxu0 0.0
    %455 = vmatprep.subr.mxu0 0.0
    %456 = vmatpush1.msra.mxu0 0.0
    %457 = vmatprep.subr.mxu0 0.0
    %458 = vmatpush1.msra.mxu0 0.0
    %459 = vmatprep.subr.mxu0 0.0
    %460 = vmatpush1.msra.mxu0 0.0
    %461 = vmatprep.subr.mxu0 0.0
    %462 = vmatpush1.msra.mxu0 0.0
    %463 = vmatprep.subr.mxu0 0.0
    %464 = vmatpush1.msra.mxu0 0.0
    %465 = vmatprep.subr.mxu0 0.0
    %466 = vmatpush1.msra.mxu0 0.0
    %467 = vmatprep.subr.mxu0 0.0
    %468 = vmatpush1.msra.mxu0 0.0
    %469 = vmatprep.subr.mxu0 0.0
    %470 = vmatpush1.msra.mxu0 0.0
    %471 = vmatprep.subr.mxu0 0.0
    %472 = vmatpush1.msra.mxu0 0.0
    %473 = vmatprep.subr.mxu0 0.0
    %474 = vmatpush1.msra.mxu0 0.0
    %475 = vmatprep.subr.mxu0 0.0
    %476 = vmatpush1.msra.mxu0 0.0
    %477 = vmatprep.subr.mxu0 0.0
    %478 = vmatpush1.msra.mxu0 0.0
    %479 = vmatprep.subr.mxu0 0.0
    %480 = vmatpush1.msra.mxu0 0.0
    %481 = vmatprep.subr.mxu0 0.0
    %482 = vmatpush1.msra.mxu0 0.0
    %483 = vmatprep.subr.mxu0 0.0
    %484 = vmatpush1.msra.mxu0 0.0
    %485 = vmatprep.subr.mxu0 0.0
    %486 = vmatpush1.msra.mxu0 0.0
    %487 = vmatprep.subr.mxu0 0.0
    %488 = vmatpush1.msra.mxu0 0.0
    %489 = vmatprep.subr.mxu0 0.0
    %490 = vmatpush1.msra.mxu0 0.0
    %491 = vmatprep.subr.mxu0 0.0
    %492 = vmatpush1.msra.mxu0 0.0
    %493 = vmatprep.subr.mxu0 0.0
    %494 = vmatpush1.msra.mxu0 0.0
    %495 = vmatprep.subr.mxu0 0.0
    %496 = vmatpush1.msra.mxu0 0.0
    %497 = vmatprep.subr.mxu0 0.0
    %498 = vmatpush1.msra.mxu0 0.0
    %499 = vmatprep.subr.mxu0 0.0
    %500 = vmatpush1.msra.mxu0 0.0
    %501 = vmatprep.subr.mxu0 0.0
    %502 = vmatpush1.msra.mxu0 0.0
    %503 = vmatprep.subr.mxu0 0.0
    %504 = vmatpush1.msra.mxu0 0.0
    %505 = vmatprep.subr.mxu0 0.0
    %506 = vmatpush1.msra.mxu0 0.0
    %507 = vmatprep.mubr.f32.mxu0 0.0
    %508 = vmatmul.mubr.f32.gmra.mrb[0].mxu0 %v158
    %v509 = vpop.f32.mrb[0].mxu0
    %v510 = vadd.f32 %v135, %v509
    %v511 = vpop.f32.mrb[0].mxu0
    %512 = vdwg.mxu0
    %513 = vmatprep.subr.mxu0 0.0
    %514 = vmatpush1.msra.mxu0 %v88
    %515 = vmatprep.subr.mxu0 0.0
    %516 = vmatpush1.msra.mxu0 %v89
    %517 = vmatprep.subr.mxu0 0.0
    %518 = vmatpush1.msra.mxu0 %v90
    %519 = vmatprep.subr.mxu0 0.0
    %520 = vmatpush1.msra.mxu0 %v91
    %521 = vmatprep.subr.mxu0 0.0
    %522 = vmatpush1.msra.mxu0 0.0
    %523 = vmatprep.subr.mxu0 0.0
    %524 = vmatpush1.msra.mxu0 0.0
    %525 = vmatprep.subr.mxu0 0.0
    %526 = vmatpush1.msra.mxu0 0.0
    %527 = vmatprep.subr.mxu0 0.0
    %528 = vmatpush1.msra.mxu0 0.0
    %529 = vmatprep.subr.mxu0 0.0
    %530 = vmatpush1.msra.mxu0 0.0
    %531 = vmatprep.subr.mxu0 0.0
    %532 = vmatpush1.msra.mxu0 0.0
    %533 = vmatprep.subr.mxu0 0.0
    %534 = vmatpush1.msra.mxu0 0.0
    %535 = vmatprep.subr.mxu0 0.0
    %536 = vmatpush1.msra.mxu0 0.0
    %537 = vmatprep.subr.mxu0 0.0
    %538 = vmatpush1.msra.mxu0 0.0
    %539 = vmatprep.subr.mxu0 0.0
    %540 = vmatpush1.msra.mxu0 0.0
    %541 = vmatprep.subr.mxu0 0.0
    %542 = vmatpush1.msra.mxu0 0.0
    %543 = vmatprep.subr.mxu0 0.0
    %544 = vmatpush1.msra.mxu0 0.0
    %545 = vmatprep.subr.mxu0 0.0
    %546 = vmatpush1.msra.mxu0 0.0
    %547 = vmatprep.subr.mxu0 0.0
    %548 = vmatpush1.msra.mxu0 0.0
    %549 = vmatprep.subr.mxu0 0.0
    %550 = vmatpush1.msra.mxu0 0.0
    %551 = vmatprep.subr.mxu0 0.0
    %552 = vmatpush1.msra.mxu0 0.0
    %553 = vmatprep.subr.mxu0 0.0
    %554 = vmatpush1.msra.mxu0 0.0
    %555 = vmatprep.subr.mxu0 0.0
    %556 = vmatpush1.msra.mxu0 0.0
    %557 = vmatprep.subr.mxu0 0.0
    %558 = vmatpush1.msra.mxu0 0.0
    %559 = vmatprep.subr.mxu0 0.0
    %560 = vmatpush1.msra.mxu0 0.0
    %561 = vmatprep.subr.mxu0 0.0
    %562 = vmatpush1.msra.mxu0 0.0
    %563 = vmatprep.subr.mxu0 0.0
    %564 = vmatpush1.msra.mxu0 0.0
    %565 = vmatprep.subr.mxu0 0.0
    %566 = vmatpush1.msra.mxu0 0.0
    %567 = vmatprep.subr.mxu0 0.0
    %568 = vmatpush1.msra.mxu0 0.0
    %569 = vmatprep.subr.mxu0 0.0
    %570 = vmatpush1.msra.mxu0 0.0
    %571 = vmatprep.subr.mxu0 0.0
    %572 = vmatpush1.msra.mxu0 0.0
    %573 = vmatprep.subr.mxu0 0.0
    %574 = vmatpush1.msra.mxu0 0.0
    %575 = vmatprep.subr.mxu0 0.0
    %576 = vmatpush1.msra.mxu0 0.0
    %577 = vmatprep.mubr.f32.mxu0 0.0
    %578 = vmatmul.mubr.f32.gmra.mrb[0].mxu0 %v231
    %v579 = vpop.f32.mrb[0].mxu0
    %v580 = vadd.f32 %v139, %v579
    %v581 = vpop.f32.mrb[0].mxu0
    %582 = vdwg.mxu0
    %583 = vmatprep.subr.mxu0 0.0
    %584 = vmatpush1.msra.mxu0 %v92
    %585 = vmatprep.subr.mxu0 0.0
    %586 = vmatpush1.msra.mxu0 %v93
    %587 = vmatprep.subr.mxu0 0.0
    %588 = vmatpush1.msra.mxu0 %v94
    %589 = vmatprep.subr.mxu0 0.0
    %590 = vmatpush1.msra.mxu0 %v95
    %591 = vmatprep.subr.mxu0 0.0
    %592 = vmatpush1.msra.mxu0 0.0
    %593 = vmatprep.subr.mxu0 0.0
    %594 = vmatpush1.msra.mxu0 0.0
    %595 = vmatprep.subr.mxu0 0.0
    %596 = vmatpush1.msra.mxu0 0.0
    %597 = vmatprep.subr.mxu0 0.0
    %598 = vmatpush1.msra.mxu0 0.0
    %599 = vmatprep.subr.mxu0 0.0
    %600 = vmatpush1.msra.mxu0 0.0
    %601 = vmatprep.subr.mxu0 0.0
    %602 = vmatpush1.msra.mxu0 0.0
    %603 = vmatprep.subr.mxu0 0.0
    %604 = vmatpush1.msra.mxu0 0.0
    %605 = vmatprep.subr.mxu0 0.0
    %606 = vmatpush1.msra.mxu0 0.0
    %607 = vmatprep.subr.mxu0 0.0
    %608 = vmatpush1.msra.mxu0 0.0
    %609 = vmatprep.subr.mxu0 0.0
    %610 = vmatpush1.msra.mxu0 0.0
    %611 = vmatprep.subr.mxu0 0.0
    %612 = vmatpush1.msra.mxu0 0.0
    %613 = vmatprep.subr.mxu0 0.0
    %614 = vmatpush1.msra.mxu0 0.0
    %615 = vmatprep.subr.mxu0 0.0
    %616 = vmatpush1.msra.mxu0 0.0
    %617 = vmatprep.subr.mxu0 0.0
    %618 = vmatpush1.msra.mxu0 0.0
    %619 = vmatprep.subr.mxu0 0.0
    %620 = vmatpush1.msra.mxu0 0.0
    %621 = vmatprep.subr.mxu0 0.0
    %622 = vmatpush1.msra.mxu0 0.0
    %623 = vmatprep.subr.mxu0 0.0
    %624 = vmatpush1.msra.mxu0 0.0
    %625 = vmatprep.subr.mxu0 0.0
    %626 = vmatpush1.msra.mxu0 0.0
    %627 = vmatprep.subr.mxu0 0.0
    %628 = vmatpush1.msra.mxu0 0.0
    %629 = vmatprep.subr.mxu0 0.0
    %630 = vmatpush1.msra.mxu0 0.0
    %631 = vmatprep.subr.mxu0 0.0
    %632 = vmatpush1.msra.mxu0 0.0
    %633 = vmatprep.subr.mxu0 0.0
    %634 = vmatpush1.msra.mxu0 0.0
    %635 = vmatprep.subr.mxu0 0.0
    %636 = vmatpush1.msra.mxu0 0.0
    %637 = vmatprep.subr.mxu0 0.0
    %638 = vmatpush1.msra.mxu0 0.0
    %639 = vmatprep.subr.mxu0 0.0
    %640 = vmatpush1.msra.mxu0 0.0
    %641 = vmatprep.subr.mxu0 0.0
    %642 = vmatpush1.msra.mxu0 0.0
    %643 = vmatprep.subr.mxu0 0.0
    %644 = vmatpush1.msra.mxu0 0.0
    %645 = vmatprep.subr.mxu0 0.0
    %646 = vmatpush1.msra.mxu0 0.0
    %647 = vmatprep.mubr.f32.mxu0 0.0
    %648 = vmatmul.mubr.f32.gmra.mrb[0].mxu0 %v158
    %v649 = vpop.f32.mrb[0].mxu0
    %v650 = vadd.f32 %v143, %v649
    %v651 = vpop.f32.mrb[0].mxu0
    %652 = vdwg.mxu0
    %653 = vmatprep.subr.mxu0 0.0
    %654 = vmatpush1.msra.mxu0 %v96
    %655 = vmatprep.subr.mxu0 0.0
    %656 = vmatpush1.msra.mxu0 %v97
    %657 = vmatprep.subr.mxu0 0.0
    %658 = vmatpush1.msra.mxu0 %v98
    %659 = vmatprep.subr.mxu0 0.0
    %660 = vmatpush1.msra.mxu0 %v99
    %661 = vmatprep.subr.mxu0 0.0
    %662 = vmatpush1.msra.mxu0 0.0
    %663 = vmatprep.subr.mxu0 0.0
    %664 = vmatpush1.msra.mxu0 0.0
    %665 = vmatprep.subr.mxu0 0.0
    %666 = vmatpush1.msra.mxu0 0.0
    %667 = vmatprep.subr.mxu0 0.0
    %668 = vmatpush1.msra.mxu0 0.0
    %669 = vmatprep.subr.mxu0 0.0
    %670 = vmatpush1.msra.mxu0 0.0
    %671 = vmatprep.subr.mxu0 0.0
    %672 = vmatpush1.msra.mxu0 0.0
    %673 = vmatprep.subr.mxu0 0.0
    %674 = vmatpush1.msra.mxu0 0.0
    %675 = vmatprep.subr.mxu0 0.0
    %676 = vmatpush1.msra.mxu0 0.0
    %677 = vmatprep.subr.mxu0 0.0
    %678 = vmatpush1.msra.mxu0 0.0
    %679 = vmatprep.subr.mxu0 0.0
    %680 = vmatpush1.msra.mxu0 0.0
    %681 = vmatprep.subr.mxu0 0.0
    %682 = vmatpush1.msra.mxu0 0.0
    %683 = vmatprep.subr.mxu0 0.0
    %684 = vmatpush1.msra.mxu0 0.0
    %685 = vmatprep.subr.mxu0 0.0
    %686 = vmatpush1.msra.mxu0 0.0
    %687 = vmatprep.subr.mxu0 0.0
    %688 = vmatpush1.msra.mxu0 0.0
    %689 = vmatprep.subr.mxu0 0.0
    %690 = vmatpush1.msra.mxu0 0.0
    %691 = vmatprep.subr.mxu0 0.0
    %692 = vmatpush1.msra.mxu0 0.0
    %693 = vmatprep.subr.mxu0 0.0
    %694 = vmatpush1.msra.mxu0 0.0
    %695 = vmatprep.subr.mxu0 0.0
    %696 = vmatpush1.msra.mxu0 0.0
    %697 = vmatprep.subr.mxu0 0.0
    %698 = vmatpush1.msra.mxu0 0.0
    %699 = vmatprep.subr.mxu0 0.0
    %700 = vmatpush1.msra.mxu0 0.0
    %701 = vmatprep.subr.mxu0 0.0
    %702 = vmatpush1.msra.mxu0 0.0
    %703 = vmatprep.subr.mxu0 0.0
    %704 = vmatpush1.msra.mxu0 0.0
    %705 = vmatprep.subr.mxu0 0.0
    %706 = vmatpush1.msra.mxu0 0.0
    %707 = vmatprep.subr.mxu0 0.0
    %708 = vmatpush1.msra.mxu0 0.0
    %709 = vmatprep.subr.mxu0 0.0
    %710 = vmatpush1.msra.mxu0 0.0
    %711 = vmatprep.subr.mxu0 0.0
    %712 = vmatpush1.msra.mxu0 0.0
    %713 = vmatprep.subr.mxu0 0.0
    %714 = vmatpush1.msra.mxu0 0.0
    %715 = vmatprep.subr.mxu0 0.0
    %716 = vmatpush1.msra.mxu0 0.0
    %717 = vmatprep.mubr.f32.mxu0 0.0
    %718 = vmatmul.mubr.f32.gmra.mrb[0].mxu0 %v231
    %v719 = vpop.f32.mrb[0].mxu0
    %v720 = vadd.f32 %v147, %v719
    %v721 = vpop.f32.mrb[0].mxu0
    %722 = vdwg.mxu0
    %v723 = vld [vmem:[%s2] sm:$0xff]
    %v724 = vld [vmem:[%s2 + $0x8] sm:$0xff]
    %v725 = vld [vmem:[%s2 + $0x10] sm:$0xff]
    %v726 = vld [vmem:[%s2 + $0x18] sm:$0xff]
    %v727 = vld [vmem:[%s2 + $0x20] sm:$0xff]
    %v728 = vld [vmem:[%s2 + $0x28] sm:$0xff]
    %v729 = vld [vmem:[%s2 + $0x30] sm:$0xff]
    %v730 = vld [vmem:[%s2 + $0x38] sm:$0xff]
    %v731 = vld [vmem:[%s2 + $0x40] sm:$0xff]
    %v732 = vld [vmem:[%s2 + $0x48] sm:$0xff]
    %v733 = vld [vmem:[%s2 + $0x50] sm:$0xff]
    %v734 = vld [vmem:[%s2 + $0x58] sm:$0xff]
    %v735 = vld [vmem:[%s2 + $0x60] sm:$0xff]
    %v736 = vld [vmem:[%s2 + $0x68] sm:$0xff]
    %v737 = vld [vmem:[%s2 + $0x70] sm:$0xff]
    %v738 = vld [vmem:[%s2 + $0x78] sm:$0xff]
    %v739 = vld [vmem:[%s2 + $0x80] sm:$0xff]
    %v740 = vld [vmem:[%s2 + $0x88] sm:$0xff]
    %v741 = vld [vmem:[%s2 + $0x90] sm:$0xff]
    %v742 = vld [vmem:[%s2 + $0x98] sm:$0xff]
    %v743 = vld [vmem:[%s2 + $0xa0] sm:$0xff]
    %v744 = vld [vmem:[%s2 + $0xa8] sm:$0xff]
    %v745 = vld [vmem:[%s2 + $0xb0] sm:$0xff]
    %v746 = vld [vmem:[%s2 + $0xb8] sm:$0xff]
    %v747 = vld [vmem:[%s2 + $0xc0] sm:$0xff]
    %v748 = vld [vmem:[%s2 + $0xc8] sm:$0xff]
    %v749 = vld [vmem:[%s2 + $0xd0] sm:$0xff]
    %v750 = vld [vmem:[%s2 + $0xd8] sm:$0xff]
    %v751 = vld [vmem:[%s2 + $0xe0] sm:$0xff]
    %v752 = vld [vmem:[%s2 + $0xe8] sm:$0xff]
    %v753 = vld [vmem:[%s2 + $0xf0] sm:$0xff]
    %v754 = vld [vmem:[%s2 + $0xf8] sm:$0xff]
    %v755 = vld [vmem:[%s5] sm:$0x1]
    %v756 = vld [vmem:[%s5 + $0x1] sm:$0x1]
    %v757 = vld [vmem:[%s5 + $0x2] sm:$0x1]
    %v758 = vld [vmem:[%s5 + $0x3] sm:$0x1]
    %v759 = vld [vmem:[%s5 + $0x4] sm:$0x1]
    %v760 = vld [vmem:[%s5 + $0x5] sm:$0x1]
    %v761 = vld [vmem:[%s5 + $0x6] sm:$0x1]
    %v762 = vld [vmem:[%s5 + $0x7] sm:$0x1]
    %v771 = vlaneseq
    %v772 = vshrl.u32 %v771, 7
    %v773 = vsub.s32 0, %v772
    %v774 = vrot.slane %v755, %v773
    %v775 = vlaneseq
    %v776 = vshrl.u32 %v775, 7
    %v777 = vsub.s32 0, %v776
    %v778 = vrot.slane %v756, %v777
    %v779 = vlaneseq
    %v780 = vshrl.u32 %v779, 7
    %v781 = vsub.s32 0, %v780
    %v782 = vrot.slane %v757, %v781
    %v783 = vlaneseq
    %v784 = vshrl.u32 %v783, 7
    %v785 = vsub.s32 0, %v784
    %v786 = vrot.slane %v758, %v785
    %v787 = vlaneseq
    %v788 = vshrl.u32 %v787, 7
    %v789 = vsub.s32 0, %v788
    %v790 = vrot.slane %v759, %v789
    %v791 = vlaneseq
    %v792 = vshrl.u32 %v791, 7
    %v793 = vsub.s32 0, %v792
    %v794 = vrot.slane %v760, %v793
    %v795 = vlaneseq
    %v796 = vshrl.u32 %v795, 7
    %v797 = vsub.s32 0, %v796
    %v798 = vrot.slane %v761, %v797
    %v799 = vlaneseq
    %v800 = vshrl.u32 %v799, 7
    %v801 = vsub.s32 0, %v800
    %v802 = vrot.slane %v762, %v801
    %811 = vmatprep.subr.mxu0 0.0
    %812 = vmatpush1.msra.mxu0 %v723
    %813 = vmatprep.subr.mxu0 0.0
    %814 = vmatpush1.msra.mxu0 %v724
    %815 = vmatprep.subr.mxu0 0.0
    %816 = vmatpush1.msra.mxu0 %v725
    %817 = vmatprep.subr.mxu0 0.0
    %818 = vmatpush1.msra.mxu0 %v726
    %819 = vmatprep.subr.mxu0 0.0
    %820 = vmatpush1.msra.mxu0 0.0
    %821 = vmatprep.subr.mxu0 0.0
    %822 = vmatpush1.msra.mxu0 0.0
    %823 = vmatprep.subr.mxu0 0.0
    %824 = vmatpush1.msra.mxu0 0.0
    %825 = vmatprep.subr.mxu0 0.0
    %826 = vmatpush1.msra.mxu0 0.0
    %827 = vmatprep.subr.mxu0 0.0
    %828 = vmatpush1.msra.mxu0 0.0
    %829 = vmatprep.subr.mxu0 0.0
    %830 = vmatpush1.msra.mxu0 0.0
    %831 = vmatprep.subr.mxu0 0.0
    %832 = vmatpush1.msra.mxu0 0.0
    %833 = vmatprep.subr.mxu0 0.0
    %834 = vmatpush1.msra.mxu0 0.0
    %835 = vmatprep.subr.mxu0 0.0
    %836 = vmatpush1.msra.mxu0 0.0
    %837 = vmatprep.subr.mxu0 0.0
    %838 = vmatpush1.msra.mxu0 0.0
    %839 = vmatprep.subr.mxu0 0.0
    %840 = vmatpush1.msra.mxu0 0.0
    %841 = vmatprep.subr.mxu0 0.0
    %842 = vmatpush1.msra.mxu0 0.0
    %843 = vmatprep.subr.mxu0 0.0
    %844 = vmatpush1.msra.mxu0 0.0
    %845 = vmatprep.subr.mxu0 0.0
    %846 = vmatpush1.msra.mxu0 0.0
    %847 = vmatprep.subr.mxu0 0.0
    %848 = vmatpush1.msra.mxu0 0.0
    %849 = vmatprep.subr.mxu0 0.0
    %850 = vmatpush1.msra.mxu0 0.0
    %851 = vmatprep.subr.mxu0 0.0
    %852 = vmatpush1.msra.mxu0 0.0
    %853 = vmatprep.subr.mxu0 0.0
    %854 = vmatpush1.msra.mxu0 0.0
    %855 = vmatprep.subr.mxu0 0.0
    %856 = vmatpush1.msra.mxu0 0.0
    %857 = vmatprep.subr.mxu0 0.0
    %858 = vmatpush1.msra.mxu0 0.0
    %859 = vmatprep.subr.mxu0 0.0
    %860 = vmatpush1.msra.mxu0 0.0
    %861 = vmatprep.subr.mxu0 0.0
    %862 = vmatpush1.msra.mxu0 0.0
    %863 = vmatprep.subr.mxu0 0.0
    %864 = vmatpush1.msra.mxu0 0.0
    %865 = vmatprep.subr.mxu0 0.0
    %866 = vmatpush1.msra.mxu0 0.0
    %867 = vmatprep.subr.mxu0 0.0
    %868 = vmatpush1.msra.mxu0 0.0
    %869 = vmatprep.subr.mxu0 0.0
    %870 = vmatpush1.msra.mxu0 0.0
    %871 = vmatprep.subr.mxu0 0.0
    %872 = vmatpush1.msra.mxu0 0.0
    %873 = vmatprep.subr.mxu0 0.0
    %874 = vmatpush1.msra.mxu0 0.0
    %875 = vmatprep.mubr.f32.mxu0 0.0
    %876 = vmatmul.mubr.f32.gmra.mrb[0].mxu0 %v158
    %v877 = vpop.f32.mrb[0].mxu0
    %v878 = vadd.f32 %v774, %v877
    %v879 = vpop.f32.mrb[0].mxu0
    %880 = vdwg.mxu0
    %881 = vmatprep.subr.mxu0 0.0
    %882 = vmatpush1.msra.mxu0 %v727
    %883 = vmatprep.subr.mxu0 0.0
    %884 = vmatpush1.msra.mxu0 %v728
    %885 = vmatprep.subr.mxu0 0.0
    %886 = vmatpush1.msra.mxu0 %v729
    %887 = vmatprep.subr.mxu0 0.0
    %888 = vmatpush1.msra.mxu0 %v730
    %889 = vmatprep.subr.mxu0 0.0
    %890 = vmatpush1.msra.mxu0 0.0
    %891 = vmatprep.subr.mxu0 0.0
    %892 = vmatpush1.msra.mxu0 0.0
    %893 = vmatprep.subr.mxu0 0.0
    %894 = vmatpush1.msra.mxu0 0.0
    %895 = vmatprep.subr.mxu0 0.0
    %896 = vmatpush1.msra.mxu0 0.0
    %897 = vmatprep.subr.mxu0 0.0
    %898 = vmatpush1.msra.mxu0 0.0
    %899 = vmatprep.subr.mxu0 0.0
    %900 = vmatpush1.msra.mxu0 0.0
    %901 = vmatprep.subr.mxu0 0.0
    %902 = vmatpush1.msra.mxu0 0.0
    %903 = vmatprep.subr.mxu0 0.0
    %904 = vmatpush1.msra.mxu0 0.0
    %905 = vmatprep.subr.mxu0 0.0
    %906 = vmatpush1.msra.mxu0 0.0
    %907 = vmatprep.subr.mxu0 0.0
    %908 = vmatpush1.msra.mxu0 0.0
    %909 = vmatprep.subr.mxu0 0.0
    %910 = vmatpush1.msra.mxu0 0.0
    %911 = vmatprep.subr.mxu0 0.0
    %912 = vmatpush1.msra.mxu0 0.0
    %913 = vmatprep.subr.mxu0 0.0
    %914 = vmatpush1.msra.mxu0 0.0
    %915 = vmatprep.subr.mxu0 0.0
    %916 = vmatpush1.msra.mxu0 0.0
    %917 = vmatprep.subr.mxu0 0.0
    %918 = vmatpush1.msra.mxu0 0.0
    %919 = vmatprep.subr.mxu0 0.0
    %920 = vmatpush1.msra.mxu0 0.0
    %921 = vmatprep.subr.mxu0 0.0
    %922 = vmatpush1.msra.mxu0 0.0
    %923 = vmatprep.subr.mxu0 0.0
    %924 = vmatpush1.msra.mxu0 0.0
    %925 = vmatprep.subr.mxu0 0.0
    %926 = vmatpush1.msra.mxu0 0.0
    %927 = vmatprep.subr.mxu0 0.0
    %928 = vmatpush1.msra.mxu0 0.0
    %929 = vmatprep.subr.mxu0 0.0
    %930 = vmatpush1.msra.mxu0 0.0
    %931 = vmatprep.subr.mxu0 0.0
    %932 = vmatpush1.msra.mxu0 0.0
    %933 = vmatprep.subr.mxu0 0.0
    %934 = vmatpush1.msra.mxu0 0.0
    %935 = vmatprep.subr.mxu0 0.0
    %936 = vmatpush1.msra.mxu0 0.0
    %937 = vmatprep.subr.mxu0 0.0
    %938 = vmatpush1.msra.mxu0 0.0
    %939 = vmatprep.subr.mxu0 0.0
    %940 = vmatpush1.msra.mxu0 0.0
    %941 = vmatprep.subr.mxu0 0.0
    %942 = vmatpush1.msra.mxu0 0.0
    %943 = vmatprep.subr.mxu0 0.0
    %944 = vmatpush1.msra.mxu0 0.0
    %945 = vmatprep.mubr.f32.mxu0 0.0
    %946 = vmatmul.mubr.f32.gmra.mrb[0].mxu0 %v231
    %v947 = vpop.f32.mrb[0].mxu0
    %v948 = vadd.f32 %v778, %v947
    %v949 = vpop.f32.mrb[0].mxu0
    %950 = vdwg.mxu0
    %951 = vmatprep.subr.mxu0 0.0
    %952 = vmatpush1.msra.mxu0 %v731
    %953 = vmatprep.subr.mxu0 0.0
    %954 = vmatpush1.msra.mxu0 %v732
    %955 = vmatprep.subr.mxu0 0.0
    %956 = vmatpush1.msra.mxu0 %v733
    %957 = vmatprep.subr.mxu0 0.0
    %958 = vmatpush1.msra.mxu0 %v734
    %959 = vmatprep.subr.mxu0 0.0
    %960 = vmatpush1.msra.mxu0 0.0
    %961 = vmatprep.subr.mxu0 0.0
    %962 = vmatpush1.msra.mxu0 0.0
    %963 = vmatprep.subr.mxu0 0.0
    %964 = vmatpush1.msra.mxu0 0.0
    %965 = vmatprep.subr.mxu0 0.0
    %966 = vmatpush1.msra.mxu0 0.0
    %967 = vmatprep.subr.mxu0 0.0
    %968 = vmatpush1.msra.mxu0 0.0
    %969 = vmatprep.subr.mxu0 0.0
    %970 = vmatpush1.msra.mxu0 0.0
    %971 = vmatprep.subr.mxu0 0.0
    %972 = vmatpush1.msra.mxu0 0.0
    %973 = vmatprep.subr.mxu0 0.0
    %974 = vmatpush1.msra.mxu0 0.0
    %975 = vmatprep.subr.mxu0 0.0
    %976 = vmatpush1.msra.mxu0 0.0
    %977 = vmatprep.subr.mxu0 0.0
    %978 = vmatpush1.msra.mxu0 0.0
    %979 = vmatprep.subr.mxu0 0.0
    %980 = vmatpush1.msra.mxu0 0.0
    %981 = vmatprep.subr.mxu0 0.0
    %982 = vmatpush1.msra.mxu0 0.0
    %983 = vmatprep.subr.mxu0 0.0
    %984 = vmatpush1.msra.mxu0 0.0
    %985 = vmatprep.subr.mxu0 0.0
    %986 = vmatpush1.msra.mxu0 0.0
    %987 = vmatprep.subr.mxu0 0.0
    %988 = vmatpush1.msra.mxu0 0.0
    %989 = vmatprep.subr.mxu0 0.0
    %990 = vmatpush1.msra.mxu0 0.0
    %991 = vmatprep.subr.mxu0 0.0
    %992 = vmatpush1.msra.mxu0 0.0
    %993 = vmatprep.subr.mxu0 0.0
    %994 = vmatpush1.msra.mxu0 0.0
    %995 = vmatprep.subr.mxu0 0.0
    %996 = vmatpush1.msra.mxu0 0.0
    %997 = vmatprep.subr.mxu0 0.0
    %998 = vmatpush1.msra.mxu0 0.0
    %999 = vmatprep.subr.mxu0 0.0
    %1000 = vmatpush1.msra.mxu0 0.0
    %1001 = vmatprep.subr.mxu0 0.0
    %1002 = vmatpush1.msra.mxu0 0.0
    %1003 = vmatprep.subr.mxu0 0.0
    %1004 = vmatpush1.msra.mxu0 0.0
    %1005 = vmatprep.subr.mxu0 0.0
    %1006 = vmatpush1.msra.mxu0 0.0
    %1007 = vmatprep.subr.mxu0 0.0
    %1008 = vmatpush1.msra.mxu0 0.0
    %1009 = vmatprep.subr.mxu0 0.0
    %1010 = vmatpush1.msra.mxu0 0.0
    %1011 = vmatprep.subr.mxu0 0.0
    %1012 = vmatpush1.msra.mxu0 0.0
    %1013 = vmatprep.subr.mxu0 0.0
    %1014 = vmatpush1.msra.mxu0 0.0
    %1015 = vmatprep.mubr.f32.mxu0 0.0
    %1016 = vmatmul.mubr.f32.gmra.mrb[0].mxu0 %v158
    %v1017 = vpop.f32.mrb[0].mxu0
    %v1018 = vadd.f32 %v782, %v1017
    %v1019 = vpop.f32.mrb[0].mxu0
    %1020 = vdwg.mxu0
    %1021 = vmatprep.subr.mxu0 0.0
    %1022 = vmatpush1.msra.mxu0 %v735
    %1023 = vmatprep.subr.mxu0 0.0
    %1024 = vmatpush1.msra.mxu0 %v736
    %1025 = vmatprep.subr.mxu0 0.0
    %1026 = vmatpush1.msra.mxu0 %v737
    %1027 = vmatprep.subr.mxu0 0.0
    %1028 = vmatpush1.msra.mxu0 %v738
    %1029 = vmatprep.subr.mxu0 0.0
    %1030 = vmatpush1.msra.mxu0 0.0
    %1031 = vmatprep.subr.mxu0 0.0
    %1032 = vmatpush1.msra.mxu0 0.0
    %1033 = vmatprep.subr.mxu0 0.0
    %1034 = vmatpush1.msra.mxu0 0.0
    %1035 = vmatprep.subr.mxu0 0.0
    %1036 = vmatpush1.msra.mxu0 0.0
    %1037 = vmatprep.subr.mxu0 0.0
    %1038 = vmatpush1.msra.mxu0 0.0
    %1039 = vmatprep.subr.mxu0 0.0
    %1040 = vmatpush1.msra.mxu0 0.0
    %1041 = vmatprep.subr.mxu0 0.0
    %1042 = vmatpush1.msra.mxu0 0.0
    %1043 = vmatprep.subr.mxu0 0.0
    %1044 = vmatpush1.msra.mxu0 0.0
    %1045 = vmatprep.subr.mxu0 0.0
    %1046 = vmatpush1.msra.mxu0 0.0
    %1047 = vmatprep.subr.mxu0 0.0
    %1048 = vmatpush1.msra.mxu0 0.0
    %1049 = vmatprep.subr.mxu0 0.0
    %1050 = vmatpush1.msra.mxu0 0.0
    %1051 = vmatprep.subr.mxu0 0.0
    %1052 = vmatpush1.msra.mxu0 0.0
    %1053 = vmatprep.subr.mxu0 0.0
    %1054 = vmatpush1.msra.mxu0 0.0
    %1055 = vmatprep.subr.mxu0 0.0
    %1056 = vmatpush1.msra.mxu0 0.0
    %1057 = vmatprep.subr.mxu0 0.0
    %1058 = vmatpush1.msra.mxu0 0.0
    %1059 = vmatprep.subr.mxu0 0.0
    %1060 = vmatpush1.msra.mxu0 0.0
    %1061 = vmatprep.subr.mxu0 0.0
    %1062 = vmatpush1.msra.mxu0 0.0
    %1063 = vmatprep.subr.mxu0 0.0
    %1064 = vmatpush1.msra.mxu0 0.0
    %1065 = vmatprep.subr.mxu0 0.0
    %1066 = vmatpush1.msra.mxu0 0.0
    %1067 = vmatprep.subr.mxu0 0.0
    %1068 = vmatpush1.msra.mxu0 0.0
    %1069 = vmatprep.subr.mxu0 0.0
    %1070 = vmatpush1.msra.mxu0 0.0
    %1071 = vmatprep.subr.mxu0 0.0
    %1072 = vmatpush1.msra.mxu0 0.0
    %1073 = vmatprep.subr.mxu0 0.0
    %1074 = vmatpush1.msra.mxu0 0.0
    %1075 = vmatprep.subr.mxu0 0.0
    %1076 = vmatpush1.msra.mxu0 0.0
    %1077 = vmatprep.subr.mxu0 0.0
    %1078 = vmatpush1.msra.mxu0 0.0
    %1079 = vmatprep.subr.mxu0 0.0
    %1080 = vmatpush1.msra.mxu0 0.0
    %1081 = vmatprep.subr.mxu0 0.0
    %1082 = vmatpush1.msra.mxu0 0.0
    %1083 = vmatprep.subr.mxu0 0.0
    %1084 = vmatpush1.msra.mxu0 0.0
    %1085 = vmatprep.mubr.f32.mxu0 0.0
    %1086 = vmatmul.mubr.f32.gmra.mrb[0].mxu0 %v231
    %v1087 = vpop.f32.mrb[0].mxu0
    %v1088 = vadd.f32 %v786, %v1087
    %v1089 = vpop.f32.mrb[0].mxu0
    %1090 = vdwg.mxu0
    %1091 = vmatprep.subr.mxu0 0.0
    %1092 = vmatpush1.msra.mxu0 %v739
    %1093 = vmatprep.subr.mxu0 0.0
    %1094 = vmatpush1.msra.mxu0 %v740
    %1095 = vmatprep.subr.mxu0 0.0
    %1096 = vmatpush1.msra.mxu0 %v741
    %1097 = vmatprep.subr.mxu0 0.0
    %1098 = vmatpush1.msra.mxu0 %v742
    %1099 = vmatprep.subr.mxu0 0.0
    %1100 = vmatpush1.msra.mxu0 0.0
    %1101 = vmatprep.subr.mxu0 0.0
    %1102 = vmatpush1.msra.mxu0 0.0
    %1103 = vmatprep.subr.mxu0 0.0
    %1104 = vmatpush1.msra.mxu0 0.0
    %1105 = vmatprep.subr.mxu0 0.0
    %1106 = vmatpush1.msra.mxu0 0.0
    %1107 = vmatprep.subr.mxu0 0.0
    %1108 = vmatpush1.msra.mxu0 0.0
    %1109 = vmatprep.subr.mxu0 0.0
    %1110 = vmatpush1.msra.mxu0 0.0
    %1111 = vmatprep.subr.mxu0 0.0
    %1112 = vmatpush1.msra.mxu0 0.0
    %1113 = vmatprep.subr.mxu0 0.0
    %1114 = vmatpush1.msra.mxu0 0.0
    %1115 = vmatprep.subr.mxu0 0.0
    %1116 = vmatpush1.msra.mxu0 0.0
    %1117 = vmatprep.subr.mxu0 0.0
    %1118 = vmatpush1.msra.mxu0 0.0
    %1119 = vmatprep.subr.mxu0 0.0
    %1120 = vmatpush1.msra.mxu0 0.0
    %1121 = vmatprep.subr.mxu0 0.0
    %1122 = vmatpush1.msra.mxu0 0.0
    %1123 = vmatprep.subr.mxu0 0.0
    %1124 = vmatpush1.msra.mxu0 0.0
    %1125 = vmatprep.subr.mxu0 0.0
    %1126 = vmatpush1.msra.mxu0 0.0
    %1127 = vmatprep.subr.mxu0 0.0
    %1128 = vmatpush1.msra.mxu0 0.0
    %1129 = vmatprep.subr.mxu0 0.0
    %1130 = vmatpush1.msra.mxu0 0.0
    %1131 = vmatprep.subr.mxu0 0.0
    %1132 = vmatpush1.msra.mxu0 0.0
    %1133 = vmatprep.subr.mxu0 0.0
    %1134 = vmatpush1.msra.mxu0 0.0
    %1135 = vmatprep.subr.mxu0 0.0
    %1136 = vmatpush1.msra.mxu0 0.0
    %1137 = vmatprep.subr.mxu0 0.0
    %1138 = vmatpush1.msra.mxu0 0.0
    %1139 = vmatprep.subr.mxu0 0.0
    %1140 = vmatpush1.msra.mxu0 0.0
    %1141 = vmatprep.subr.mxu0 0.0
    %1142 = vmatpush1.msra.mxu0 0.0
    %1143 = vmatprep.subr.mxu0 0.0
    %1144 = vmatpush1.msra.mxu0 0.0
    %1145 = vmatprep.subr.mxu0 0.0
    %1146 = vmatpush1.msra.mxu0 0.0
    %1147 = vmatprep.subr.mxu0 0.0
    %1148 = vmatpush1.msra.mxu0 0.0
    %1149 = vmatprep.subr.mxu0 0.0
    %1150 = vmatpush1.msra.mxu0 0.0
    %1151 = vmatprep.subr.mxu0 0.0
    %1152 = vmatpush1.msra.mxu0 0.0
    %1153 = vmatprep.subr.mxu0 0.0
    %1154 = vmatpush1.msra.mxu0 0.0
    %1155 = vmatprep.mubr.f32.mxu0 0.0
    %1156 = vmatmul.mubr.f32.gmra.mrb[0].mxu0 %v158
    %v1157 = vpop.f32.mrb[0].mxu0
    %v1158 = vadd.f32 %v790, %v1157
    %v1159 = vpop.f32.mrb[0].mxu0
    %1160 = vdwg.mxu0
    %1161 = vmatprep.subr.mxu0 0.0
    %1162 = vmatpush1.msra.mxu0 %v743
    %1163 = vmatprep.subr.mxu0 0.0
    %1164 = vmatpush1.msra.mxu0 %v744
    %1165 = vmatprep.subr.mxu0 0.0
    %1166 = vmatpush1.msra.mxu0 %v745
    %1167 = vmatprep.subr.mxu0 0.0
    %1168 = vmatpush1.msra.mxu0 %v746
    %1169 = vmatprep.subr.mxu0 0.0
    %1170 = vmatpush1.msra.mxu0 0.0
    %1171 = vmatprep.subr.mxu0 0.0
    %1172 = vmatpush1.msra.mxu0 0.0
    %1173 = vmatprep.subr.mxu0 0.0
    %1174 = vmatpush1.msra.mxu0 0.0
    %1175 = vmatprep.subr.mxu0 0.0
    %1176 = vmatpush1.msra.mxu0 0.0
    %1177 = vmatprep.subr.mxu0 0.0
    %1178 = vmatpush1.msra.mxu0 0.0
    %1179 = vmatprep.subr.mxu0 0.0
    %1180 = vmatpush1.msra.mxu0 0.0
    %1181 = vmatprep.subr.mxu0 0.0
    %1182 = vmatpush1.msra.mxu0 0.0
    %1183 = vmatprep.subr.mxu0 0.0
    %1184 = vmatpush1.msra.mxu0 0.0
    %1185 = vmatprep.subr.mxu0 0.0
    %1186 = vmatpush1.msra.mxu0 0.0
    %1187 = vmatprep.subr.mxu0 0.0
    %1188 = vmatpush1.msra.mxu0 0.0
    %1189 = vmatprep.subr.mxu0 0.0
    %1190 = vmatpush1.msra.mxu0 0.0
    %1191 = vmatprep.subr.mxu0 0.0
    %1192 = vmatpush1.msra.mxu0 0.0
    %1193 = vmatprep.subr.mxu0 0.0
    %1194 = vmatpush1.msra.mxu0 0.0
    %1195 = vmatprep.subr.mxu0 0.0
    %1196 = vmatpush1.msra.mxu0 0.0
    %1197 = vmatprep.subr.mxu0 0.0
    %1198 = vmatpush1.msra.mxu0 0.0
    %1199 = vmatprep.subr.mxu0 0.0
    %1200 = vmatpush1.msra.mxu0 0.0
    %1201 = vmatprep.subr.mxu0 0.0
    %1202 = vmatpush1.msra.mxu0 0.0
    %1203 = vmatprep.subr.mxu0 0.0
    %1204 = vmatpush1.msra.mxu0 0.0
    %1205 = vmatprep.subr.mxu0 0.0
    %1206 = vmatpush1.msra.mxu0 0.0
    %1207 = vmatprep.subr.mxu0 0.0
    %1208 = vmatpush1.msra.mxu0 0.0
    %1209 = vmatprep.subr.mxu0 0.0
    %1210 = vmatpush1.msra.mxu0 0.0
    %1211 = vmatprep.subr.mxu0 0.0
    %1212 = vmatpush1.msra.mxu0 0.0
    %1213 = vmatprep.subr.mxu0 0.0
    %1214 = vmatpush1.msra.mxu0 0.0
    %1215 = vmatprep.subr.mxu0 0.0
    %1216 = vmatpush1.msra.mxu0 0.0
    %1217 = vmatprep.subr.mxu0 0.0
    %1218 = vmatpush1.msra.mxu0 0.0
    %1219 = vmatprep.subr.mxu0 0.0
    %1220 = vmatpush1.msra.mxu0 0.0
    %1221 = vmatprep.subr.mxu0 0.0
    %1222 = vmatpush1.msra.mxu0 0.0
    %1223 = vmatprep.subr.mxu0 0.0
    %1224 = vmatpush1.msra.mxu0 0.0
    %1225 = vmatprep.mubr.f32.mxu0 0.0
    %1226 = vmatmul.mubr.f32.gmra.mrb[0].mxu0 %v231
    %v1227 = vpop.f32.mrb[0].mxu0
    %v1228 = vadd.f32 %v794, %v1227
    %v1229 = vpop.f32.mrb[0].mxu0
    %1230 = vdwg.mxu0
    %1231 = vmatprep.subr.mxu0 0.0
    %1232 = vmatpush1.msra.mxu0 %v747
    %1233 = vmatprep.subr.mxu0 0.0
    %1234 = vmatpush1.msra.mxu0 %v748
    %1235 = vmatprep.subr.mxu0 0.0
    %1236 = vmatpush1.msra.mxu0 %v749
    %1237 = vmatprep.subr.mxu0 0.0
    %1238 = vmatpush1.msra.mxu0 %v750
    %1239 = vmatprep.subr.mxu0 0.0
    %1240 = vmatpush1.msra.mxu0 0.0
    %1241 = vmatprep.subr.mxu0 0.0
    %1242 = vmatpush1.msra.mxu0 0.0
    %1243 = vmatprep.subr.mxu0 0.0
    %1244 = vmatpush1.msra.mxu0 0.0
    %1245 = vmatprep.subr.mxu0 0.0
    %1246 = vmatpush1.msra.mxu0 0.0
    %1247 = vmatprep.subr.mxu0 0.0
    %1248 = vmatpush1.msra.mxu0 0.0
    %1249 = vmatprep.subr.mxu0 0.0
    %1250 = vmatpush1.msra.mxu0 0.0
    %1251 = vmatprep.subr.mxu0 0.0
    %1252 = vmatpush1.msra.mxu0 0.0
    %1253 = vmatprep.subr.mxu0 0.0
    %1254 = vmatpush1.msra.mxu0 0.0
    %1255 = vmatprep.subr.mxu0 0.0
    %1256 = vmatpush1.msra.mxu0 0.0
    %1257 = vmatprep.subr.mxu0 0.0
    %1258 = vmatpush1.msra.mxu0 0.0
    %1259 = vmatprep.subr.mxu0 0.0
    %1260 = vmatpush1.msra.mxu0 0.0
    %1261 = vmatprep.subr.mxu0 0.0
    %1262 = vmatpush1.msra.mxu0 0.0
    %1263 = vmatprep.subr.mxu0 0.0
    %1264 = vmatpush1.msra.mxu0 0.0
    %1265 = vmatprep.subr.mxu0 0.0
    %1266 = vmatpush1.msra.mxu0 0.0
    %1267 = vmatprep.subr.mxu0 0.0
    %1268 = vmatpush1.msra.mxu0 0.0
    %1269 = vmatprep.subr.mxu0 0.0
    %1270 = vmatpush1.msra.mxu0 0.0
    %1271 = vmatprep.subr.mxu0 0.0
    %1272 = vmatpush1.msra.mxu0 0.0
    %1273 = vmatprep.subr.mxu0 0.0
    %1274 = vmatpush1.msra.mxu0 0.0
    %1275 = vmatprep.subr.mxu0 0.0
    %1276 = vmatpush1.msra.mxu0 0.0
    %1277 = vmatprep.subr.mxu0 0.0
    %1278 = vmatpush1.msra.mxu0 0.0
    %1279 = vmatprep.subr.mxu0 0.0
    %1280 = vmatpush1.msra.mxu0 0.0
    %1281 = vmatprep.subr.mxu0 0.0
    %1282 = vmatpush1.msra.mxu0 0.0
    %1283 = vmatprep.subr.mxu0 0.0
    %1284 = vmatpush1.msra.mxu0 0.0
    %1285 = vmatprep.subr.mxu0 0.0
    %1286 = vmatpush1.msra.mxu0 0.0
    %1287 = vmatprep.subr.mxu0 0.0
    %1288 = vmatpush1.msra.mxu0 0.0
    %1289 = vmatprep.subr.mxu0 0.0
    %1290 = vmatpush1.msra.mxu0 0.0
    %1291 = vmatprep.subr.mxu0 0.0
    %1292 = vmatpush1.msra.mxu0 0.0
    %1293 = vmatprep.subr.mxu0 0.0
    %1294 = vmatpush1.msra.mxu0 0.0
    %1295 = vmatprep.mubr.f32.mxu0 0.0
    %1296 = vmatmul.mubr.f32.gmra.mrb[0].mxu0 %v158
    %v1297 = vpop.f32.mrb[0].mxu0
    %v1298 = vadd.f32 %v798, %v1297
    %v1299 = vpop.f32.mrb[0].mxu0
    %1300 = vdwg.mxu0
    %1301 = vmatprep.subr.mxu0 0.0
    %1302 = vmatpush1.msra.mxu0 %v751
    %1303 = vmatprep.subr.mxu0 0.0
    %1304 = vmatpush1.msra.mxu0 %v752
    %1305 = vmatprep.subr.mxu0 0.0
    %1306 = vmatpush1.msra.mxu0 %v753
    %1307 = vmatprep.subr.mxu0 0.0
    %1308 = vmatpush1.msra.mxu0 %v754
    %1309 = vmatprep.subr.mxu0 0.0
    %1310 = vmatpush1.msra.mxu0 0.0
    %1311 = vmatprep.subr.mxu0 0.0
    %1312 = vmatpush1.msra.mxu0 0.0
    %1313 = vmatprep.subr.mxu0 0.0
    %1314 = vmatpush1.msra.mxu0 0.0
    %1315 = vmatprep.subr.mxu0 0.0
    %1316 = vmatpush1.msra.mxu0 0.0
    %1317 = vmatprep.subr.mxu0 0.0
    %1318 = vmatpush1.msra.mxu0 0.0
    %1319 = vmatprep.subr.mxu0 0.0
    %1320 = vmatpush1.msra.mxu0 0.0
    %1321 = vmatprep.subr.mxu0 0.0
    %1322 = vmatpush1.msra.mxu0 0.0
    %1323 = vmatprep.subr.mxu0 0.0
    %1324 = vmatpush1.msra.mxu0 0.0
    %1325 = vmatprep.subr.mxu0 0.0
    %1326 = vmatpush1.msra.mxu0 0.0
    %1327 = vmatprep.subr.mxu0 0.0
    %1328 = vmatpush1.msra.mxu0 0.0
    %1329 = vmatprep.subr.mxu0 0.0
    %1330 = vmatpush1.msra.mxu0 0.0
    %1331 = vmatprep.subr.mxu0 0.0
    %1332 = vmatpush1.msra.mxu0 0.0
    %1333 = vmatprep.subr.mxu0 0.0
    %1334 = vmatpush1.msra.mxu0 0.0
    %1335 = vmatprep.subr.mxu0 0.0
    %1336 = vmatpush1.msra.mxu0 0.0
    %1337 = vmatprep.subr.mxu0 0.0
    %1338 = vmatpush1.msra.mxu0 0.0
    %1339 = vmatprep.subr.mxu0 0.0
    %1340 = vmatpush1.msra.mxu0 0.0
    %1341 = vmatprep.subr.mxu0 0.0
    %1342 = vmatpush1.msra.mxu0 0.0
    %1343 = vmatprep.subr.mxu0 0.0
    %1344 = vmatpush1.msra.mxu0 0.0
    %1345 = vmatprep.subr.mxu0 0.0
    %1346 = vmatpush1.msra.mxu0 0.0
    %1347 = vmatprep.subr.mxu0 0.0
    %1348 = vmatpush1.msra.mxu0 0.0
    %1349 = vmatprep.subr.mxu0 0.0
    %1350 = vmatpush1.msra.mxu0 0.0
    %1351 = vmatprep.subr.mxu0 0.0
    %1352 = vmatpush1.msra.mxu0 0.0
    %1353 = vmatprep.subr.mxu0 0.0
    %1354 = vmatpush1.msra.mxu0 0.0
    %1355 = vmatprep.subr.mxu0 0.0
    %1356 = vmatpush1.msra.mxu0 0.0
    %1357 = vmatprep.subr.mxu0 0.0
    %1358 = vmatpush1.msra.mxu0 0.0
    %1359 = vmatprep.subr.mxu0 0.0
    %1360 = vmatpush1.msra.mxu0 0.0
    %1361 = vmatprep.subr.mxu0 0.0
    %1362 = vmatpush1.msra.mxu0 0.0
    %1363 = vmatprep.subr.mxu0 0.0
    %1364 = vmatpush1.msra.mxu0 0.0
    %1365 = vmatprep.mubr.f32.mxu0 0.0
    %1366 = vmatmul.mubr.f32.gmra.mrb[0].mxu0 %v231
    %v1367 = vpop.f32.mrb[0].mxu0
    %v1368 = vadd.f32 %v802, %v1367
    %v1369 = vpop.f32.mrb[0].mxu0
    %1370 = vdwg.mxu0
    %v1371 = vld [vmem:[%s3] sm:$0xff]
    %v1372 = vld [vmem:[%s3 + $0x8] sm:$0xff]
    %v1373 = vld [vmem:[%s3 + $0x10] sm:$0xff]
    %v1374 = vld [vmem:[%s3 + $0x18] sm:$0xff]
    %v1375 = vld [vmem:[%s3 + $0x20] sm:$0xff]
    %v1376 = vld [vmem:[%s3 + $0x28] sm:$0xff]
    %v1377 = vld [vmem:[%s3 + $0x30] sm:$0xff]
    %v1378 = vld [vmem:[%s3 + $0x38] sm:$0xff]
    %v1379 = vld [vmem:[%s3 + $0x40] sm:$0xff]
    %v1380 = vld [vmem:[%s3 + $0x48] sm:$0xff]
    %v1381 = vld [vmem:[%s3 + $0x50] sm:$0xff]
    %v1382 = vld [vmem:[%s3 + $0x58] sm:$0xff]
    %v1383 = vld [vmem:[%s3 + $0x60] sm:$0xff]
    %v1384 = vld [vmem:[%s3 + $0x68] sm:$0xff]
    %v1385 = vld [vmem:[%s3 + $0x70] sm:$0xff]
    %v1386 = vld [vmem:[%s3 + $0x78] sm:$0xff]
    %v1387 = vld [vmem:[%s3 + $0x80] sm:$0xff]
    %v1388 = vld [vmem:[%s3 + $0x88] sm:$0xff]
    %v1389 = vld [vmem:[%s3 + $0x90] sm:$0xff]
    %v1390 = vld [vmem:[%s3 + $0x98] sm:$0xff]
    %v1391 = vld [vmem:[%s3 + $0xa0] sm:$0xff]
    %v1392 = vld [vmem:[%s3 + $0xa8] sm:$0xff]
    %v1393 = vld [vmem:[%s3 + $0xb0] sm:$0xff]
    %v1394 = vld [vmem:[%s3 + $0xb8] sm:$0xff]
    %v1395 = vld [vmem:[%s3 + $0xc0] sm:$0xff]
    %v1396 = vld [vmem:[%s3 + $0xc8] sm:$0xff]
    %v1397 = vld [vmem:[%s3 + $0xd0] sm:$0xff]
    %v1398 = vld [vmem:[%s3 + $0xd8] sm:$0xff]
    %v1399 = vld [vmem:[%s3 + $0xe0] sm:$0xff]
    %v1400 = vld [vmem:[%s3 + $0xe8] sm:$0xff]
    %v1401 = vld [vmem:[%s3 + $0xf0] sm:$0xff]
    %v1402 = vld [vmem:[%s3 + $0xf8] sm:$0xff]
    %v1403 = vld [vmem:[%s6] sm:$0x1]
    %v1404 = vld [vmem:[%s6 + $0x1] sm:$0x1]
    %v1405 = vld [vmem:[%s6 + $0x2] sm:$0x1]
    %v1406 = vld [vmem:[%s6 + $0x3] sm:$0x1]
    %v1407 = vld [vmem:[%s6 + $0x4] sm:$0x1]
    %v1408 = vld [vmem:[%s6 + $0x5] sm:$0x1]
    %v1409 = vld [vmem:[%s6 + $0x6] sm:$0x1]
    %v1410 = vld [vmem:[%s6 + $0x7] sm:$0x1]
    %v1419 = vlaneseq
    %v1420 = vshrl.u32 %v1419, 7
    %v1421 = vsub.s32 0, %v1420
    %v1422 = vrot.slane %v1403, %v1421
    %v1423 = vlaneseq
    %v1424 = vshrl.u32 %v1423, 7
    %v1425 = vsub.s32 0, %v1424
    %v1426 = vrot.slane %v1404, %v1425
    %v1427 = vlaneseq
    %v1428 = vshrl.u32 %v1427, 7
    %v1429 = vsub.s32 0, %v1428
    %v1430 = vrot.slane %v1405, %v1429
    %v1431 = vlaneseq
    %v1432 = vshrl.u32 %v1431, 7
    %v1433 = vsub.s32 0, %v1432
    %v1434 = vrot.slane %v1406, %v1433
    %v1435 = vlaneseq
    %v1436 = vshrl.u32 %v1435, 7
    %v1437 = vsub.s32 0, %v1436
    %v1438 = vrot.slane %v1407, %v1437
    %v1439 = vlaneseq
    %v1440 = vshrl.u32 %v1439, 7
    %v1441 = vsub.s32 0, %v1440
    %v1442 = vrot.slane %v1408, %v1441
    %v1443 = vlaneseq
    %v1444 = vshrl.u32 %v1443, 7
    %v1445 = vsub.s32 0, %v1444
    %v1446 = vrot.slane %v1409, %v1445
    %v1447 = vlaneseq
    %v1448 = vshrl.u32 %v1447, 7
    %v1449 = vsub.s32 0, %v1448
    %v1450 = vrot.slane %v1410, %v1449
    %1459 = vmatprep.subr.mxu0 0.0
    %1460 = vmatpush1.msra.mxu0 %v1371
    %1461 = vmatprep.subr.mxu0 0.0
    %1462 = vmatpush1.msra.mxu0 %v1372
    %1463 = vmatprep.subr.mxu0 0.0
    %1464 = vmatpush1.msra.mxu0 %v1373
    %1465 = vmatprep.subr.mxu0 0.0
    %1466 = vmatpush1.msra.mxu0 %v1374
    %1467 = vmatprep.subr.mxu0 0.0
    %1468 = vmatpush1.msra.mxu0 0.0
    %1469 = vmatprep.subr.mxu0 0.0
    %1470 = vmatpush1.msra.mxu0 0.0
    %1471 = vmatprep.subr.mxu0 0.0
    %1472 = vmatpush1.msra.mxu0 0.0
    %1473 = vmatprep.subr.mxu0 0.0
    %1474 = vmatpush1.msra.mxu0 0.0
    %1475 = vmatprep.subr.mxu0 0.0
    %1476 = vmatpush1.msra.mxu0 0.0
    %1477 = vmatprep.subr.mxu0 0.0
    %1478 = vmatpush1.msra.mxu0 0.0
    %1479 = vmatprep.subr.mxu0 0.0
    %1480 = vmatpush1.msra.mxu0 0.0
    %1481 = vmatprep.subr.mxu0 0.0
    %1482 = vmatpush1.msra.mxu0 0.0
    %1483 = vmatprep.subr.mxu0 0.0
    %1484 = vmatpush1.msra.mxu0 0.0
    %1485 = vmatprep.subr.mxu0 0.0
    %1486 = vmatpush1.msra.mxu0 0.0
    %1487 = vmatprep.subr.mxu0 0.0
    %1488 = vmatpush1.msra.mxu0 0.0
    %1489 = vmatprep.subr.mxu0 0.0
    %1490 = vmatpush1.msra.mxu0 0.0
    %1491 = vmatprep.subr.mxu0 0.0
    %1492 = vmatpush1.msra.mxu0 0.0
    %1493 = vmatprep.subr.mxu0 0.0
    %1494 = vmatpush1.msra.mxu0 0.0
    %1495 = vmatprep.subr.mxu0 0.0
    %1496 = vmatpush1.msra.mxu0 0.0
    %1497 = vmatprep.subr.mxu0 0.0
    %1498 = vmatpush1.msra.mxu0 0.0
    %1499 = vmatprep.subr.mxu0 0.0
    %1500 = vmatpush1.msra.mxu0 0.0
    %1501 = vmatprep.subr.mxu0 0.0
    %1502 = vmatpush1.msra.mxu0 0.0
    %1503 = vmatprep.subr.mxu0 0.0
    %1504 = vmatpush1.msra.mxu0 0.0
    %1505 = vmatprep.subr.mxu0 0.0
    %1506 = vmatpush1.msra.mxu0 0.0
    %1507 = vmatprep.subr.mxu0 0.0
    %1508 = vmatpush1.msra.mxu0 0.0
    %1509 = vmatprep.subr.mxu0 0.0
    %1510 = vmatpush1.msra.mxu0 0.0
    %1511 = vmatprep.subr.mxu0 0.0
    %1512 = vmatpush1.msra.mxu0 0.0
    %1513 = vmatprep.subr.mxu0 0.0
    %1514 = vmatpush1.msra.mxu0 0.0
    %1515 = vmatprep.subr.mxu0 0.0
    %1516 = vmatpush1.msra.mxu0 0.0
    %1517 = vmatprep.subr.mxu0 0.0
    %1518 = vmatpush1.msra.mxu0 0.0
    %1519 = vmatprep.subr.mxu0 0.0
    %1520 = vmatpush1.msra.mxu0 0.0
    %1521 = vmatprep.subr.mxu0 0.0
    %1522 = vmatpush1.msra.mxu0 0.0
    %1523 = vmatprep.mubr.f32.mxu0 0.0
    %1524 = vmatmul.mubr.f32.gmra.mrb[0].mxu0 %v158
    %v1525 = vpop.f32.mrb[0].mxu0
    %v1526 = vadd.f32 %v1422, %v1525
    %v1527 = vpop.f32.mrb[0].mxu0
    %1528 = vdwg.mxu0
    %1529 = vmatprep.subr.mxu0 0.0
    %1530 = vmatpush1.msra.mxu0 %v1375
    %1531 = vmatprep.subr.mxu0 0.0
    %1532 = vmatpush1.msra.mxu0 %v1376
    %1533 = vmatprep.subr.mxu0 0.0
    %1534 = vmatpush1.msra.mxu0 %v1377
    %1535 = vmatprep.subr.mxu0 0.0
    %1536 = vmatpush1.msra.mxu0 %v1378
    %1537 = vmatprep.subr.mxu0 0.0
    %1538 = vmatpush1.msra.mxu0 0.0
    %1539 = vmatprep.subr.mxu0 0.0
    %1540 = vmatpush1.msra.mxu0 0.0
    %1541 = vmatprep.subr.mxu0 0.0
    %1542 = vmatpush1.msra.mxu0 0.0
    %1543 = vmatprep.subr.mxu0 0.0
    %1544 = vmatpush1.msra.mxu0 0.0
    %1545 = vmatprep.subr.mxu0 0.0
    %1546 = vmatpush1.msra.mxu0 0.0
    %1547 = vmatprep.subr.mxu0 0.0
    %1548 = vmatpush1.msra.mxu0 0.0
    %1549 = vmatprep.subr.mxu0 0.0
    %1550 = vmatpush1.msra.mxu0 0.0
    %1551 = vmatprep.subr.mxu0 0.0
    %1552 = vmatpush1.msra.mxu0 0.0
    %1553 = vmatprep.subr.mxu0 0.0
    %1554 = vmatpush1.msra.mxu0 0.0
    %1555 = vmatprep.subr.mxu0 0.0
    %1556 = vmatpush1.msra.mxu0 0.0
    %1557 = vmatprep.subr.mxu0 0.0
    %1558 = vmatpush1.msra.mxu0 0.0
    %1559 = vmatprep.subr.mxu0 0.0
    %1560 = vmatpush1.msra.mxu0 0.0
    %1561 = vmatprep.subr.mxu0 0.0
    %1562 = vmatpush1.msra.mxu0 0.0
    %1563 = vmatprep.subr.mxu0 0.0
    %1564 = vmatpush1.msra.mxu0 0.0
    %1565 = vmatprep.subr.mxu0 0.0
    %1566 = vmatpush1.msra.mxu0 0.0
    %1567 = vmatprep.subr.mxu0 0.0
    %1568 = vmatpush1.msra.mxu0 0.0
    %1569 = vmatprep.subr.mxu0 0.0
    %1570 = vmatpush1.msra.mxu0 0.0
    %1571 = vmatprep.subr.mxu0 0.0
    %1572 = vmatpush1.msra.mxu0 0.0
    %1573 = vmatprep.subr.mxu0 0.0
    %1574 = vmatpush1.msra.mxu0 0.0
    %1575 = vmatprep.subr.mxu0 0.0
    %1576 = vmatpush1.msra.mxu0 0.0
    %1577 = vmatprep.subr.mxu0 0.0
    %1578 = vmatpush1.msra.mxu0 0.0
    %1579 = vmatprep.subr.mxu0 0.0
    %1580 = vmatpush1.msra.mxu0 0.0
    %1581 = vmatprep.subr.mxu0 0.0
    %1582 = vmatpush1.msra.mxu0 0.0
    %1583 = vmatprep.subr.mxu0 0.0
    %1584 = vmatpush1.msra.mxu0 0.0
    %1585 = vmatprep.subr.mxu0 0.0
    %1586 = vmatpush1.msra.mxu0 0.0
    %1587 = vmatprep.subr.mxu0 0.0
    %1588 = vmatpush1.msra.mxu0 0.0
    %1589 = vmatprep.subr.mxu0 0.0
    %1590 = vmatpush1.msra.mxu0 0.0
    %1591 = vmatprep.subr.mxu0 0.0
    %1592 = vmatpush1.msra.mxu0 0.0
    %1593 = vmatprep.mubr.f32.mxu0 0.0
    %1594 = vmatmul.mubr.f32.gmra.mrb[0].mxu0 %v231
    %v1595 = vpop.f32.mrb[0].mxu0
    %v1596 = vadd.f32 %v1426, %v1595
    %v1597 = vpop.f32.mrb[0].mxu0
    %1598 = vdwg.mxu0
    %1599 = vmatprep.subr.mxu0 0.0
    %1600 = vmatpush1.msra.mxu0 %v1379
    %1601 = vmatprep.subr.mxu0 0.0
    %1602 = vmatpush1.msra.mxu0 %v1380
    %1603 = vmatprep.subr.mxu0 0.0
    %1604 = vmatpush1.msra.mxu0 %v1381
    %1605 = vmatprep.subr.mxu0 0.0
    %1606 = vmatpush1.msra.mxu0 %v1382
    %1607 = vmatprep.subr.mxu0 0.0
    %1608 = vmatpush1.msra.mxu0 0.0
    %1609 = vmatprep.subr.mxu0 0.0
    %1610 = vmatpush1.msra.mxu0 0.0
    %1611 = vmatprep.subr.mxu0 0.0
    %1612 = vmatpush1.msra.mxu0 0.0
    %1613 = vmatprep.subr.mxu0 0.0
    %1614 = vmatpush1.msra.mxu0 0.0
    %1615 = vmatprep.subr.mxu0 0.0
    %1616 = vmatpush1.msra.mxu0 0.0
    %1617 = vmatprep.subr.mxu0 0.0
    %1618 = vmatpush1.msra.mxu0 0.0
    %1619 = vmatprep.subr.mxu0 0.0
    %1620 = vmatpush1.msra.mxu0 0.0
    %1621 = vmatprep.subr.mxu0 0.0
    %1622 = vmatpush1.msra.mxu0 0.0
    %1623 = vmatprep.subr.mxu0 0.0
    %1624 = vmatpush1.msra.mxu0 0.0
    %1625 = vmatprep.subr.mxu0 0.0
    %1626 = vmatpush1.msra.mxu0 0.0
    %1627 = vmatprep.subr.mxu0 0.0
    %1628 = vmatpush1.msra.mxu0 0.0
    %1629 = vmatprep.subr.mxu0 0.0
    %1630 = vmatpush1.msra.mxu0 0.0
    %1631 = vmatprep.subr.mxu0 0.0
    %1632 = vmatpush1.msra.mxu0 0.0
    %1633 = vmatprep.subr.mxu0 0.0
    %1634 = vmatpush1.msra.mxu0 0.0
    %1635 = vmatprep.subr.mxu0 0.0
    %1636 = vmatpush1.msra.mxu0 0.0
    %1637 = vmatprep.subr.mxu0 0.0
    %1638 = vmatpush1.msra.mxu0 0.0
    %1639 = vmatprep.subr.mxu0 0.0
    %1640 = vmatpush1.msra.mxu0 0.0
    %1641 = vmatprep.subr.mxu0 0.0
    %1642 = vmatpush1.msra.mxu0 0.0
    %1643 = vmatprep.subr.mxu0 0.0
    %1644 = vmatpush1.msra.mxu0 0.0
    %1645 = vmatprep.subr.mxu0 0.0
    %1646 = vmatpush1.msra.mxu0 0.0
    %1647 = vmatprep.subr.mxu0 0.0
    %1648 = vmatpush1.msra.mxu0 0.0
    %1649 = vmatprep.subr.mxu0 0.0
    %1650 = vmatpush1.msra.mxu0 0.0
    %1651 = vmatprep.subr.mxu0 0.0
    %1652 = vmatpush1.msra.mxu0 0.0
    %1653 = vmatprep.subr.mxu0 0.0
    %1654 = vmatpush1.msra.mxu0 0.0
    %1655 = vmatprep.subr.mxu0 0.0
    %1656 = vmatpush1.msra.mxu0 0.0
    %1657 = vmatprep.subr.mxu0 0.0
    %1658 = vmatpush1.msra.mxu0 0.0
    %1659 = vmatprep.subr.mxu0 0.0
    %1660 = vmatpush1.msra.mxu0 0.0
    %1661 = vmatprep.subr.mxu0 0.0
    %1662 = vmatpush1.msra.mxu0 0.0
    %1663 = vmatprep.mubr.f32.mxu0 0.0
    %1664 = vmatmul.mubr.f32.gmra.mrb[0].mxu0 %v158
    %v1665 = vpop.f32.mrb[0].mxu0
    %v1666 = vadd.f32 %v1430, %v1665
    %v1667 = vpop.f32.mrb[0].mxu0
    %1668 = vdwg.mxu0
    %1669 = vmatprep.subr.mxu0 0.0
    %1670 = vmatpush1.msra.mxu0 %v1383
    %1671 = vmatprep.subr.mxu0 0.0
    %1672 = vmatpush1.msra.mxu0 %v1384
    %1673 = vmatprep.subr.mxu0 0.0
    %1674 = vmatpush1.msra.mxu0 %v1385
    %1675 = vmatprep.subr.mxu0 0.0
    %1676 = vmatpush1.msra.mxu0 %v1386
    %1677 = vmatprep.subr.mxu0 0.0
    %1678 = vmatpush1.msra.mxu0 0.0
    %1679 = vmatprep.subr.mxu0 0.0
    %1680 = vmatpush1.msra.mxu0 0.0
    %1681 = vmatprep.subr.mxu0 0.0
    %1682 = vmatpush1.msra.mxu0 0.0
    %1683 = vmatprep.subr.mxu0 0.0
    %1684 = vmatpush1.msra.mxu0 0.0
    %1685 = vmatprep.subr.mxu0 0.0
    %1686 = vmatpush1.msra.mxu0 0.0
    %1687 = vmatprep.subr.mxu0 0.0
    %1688 = vmatpush1.msra.mxu0 0.0
    %1689 = vmatprep.subr.mxu0 0.0
    %1690 = vmatpush1.msra.mxu0 0.0
    %1691 = vmatprep.subr.mxu0 0.0
    %1692 = vmatpush1.msra.mxu0 0.0
    %1693 = vmatprep.subr.mxu0 0.0
    %1694 = vmatpush1.msra.mxu0 0.0
    %1695 = vmatprep.subr.mxu0 0.0
    %1696 = vmatpush1.msra.mxu0 0.0
    %1697 = vmatprep.subr.mxu0 0.0
    %1698 = vmatpush1.msra.mxu0 0.0
    %1699 = vmatprep.subr.mxu0 0.0
    %1700 = vmatpush1.msra.mxu0 0.0
    %1701 = vmatprep.subr.mxu0 0.0
    %1702 = vmatpush1.msra.mxu0 0.0
    %1703 = vmatprep.subr.mxu0 0.0
    %1704 = vmatpush1.msra.mxu0 0.0
    %1705 = vmatprep.subr.mxu0 0.0
    %1706 = vmatpush1.msra.mxu0 0.0
    %1707 = vmatprep.subr.mxu0 0.0
    %1708 = vmatpush1.msra.mxu0 0.0
    %1709 = vmatprep.subr.mxu0 0.0
    %1710 = vmatpush1.msra.mxu0 0.0
    %1711 = vmatprep.subr.mxu0 0.0
    %1712 = vmatpush1.msra.mxu0 0.0
    %1713 = vmatprep.subr.mxu0 0.0
    %1714 = vmatpush1.msra.mxu0 0.0
    %1715 = vmatprep.subr.mxu0 0.0
    %1716 = vmatpush1.msra.mxu0 0.0
    %1717 = vmatprep.subr.mxu0 0.0
    %1718 = vmatpush1.msra.mxu0 0.0
    %1719 = vmatprep.subr.mxu0 0.0
    %1720 = vmatpush1.msra.mxu0 0.0
    %1721 = vmatprep.subr.mxu0 0.0
    %1722 = vmatpush1.msra.mxu0 0.0
    %1723 = vmatprep.subr.mxu0 0.0
    %1724 = vmatpush1.msra.mxu0 0.0
    %1725 = vmatprep.subr.mxu0 0.0
    %1726 = vmatpush1.msra.mxu0 0.0
    %1727 = vmatprep.subr.mxu0 0.0
    %1728 = vmatpush1.msra.mxu0 0.0
    %1729 = vmatprep.subr.mxu0 0.0
    %1730 = vmatpush1.msra.mxu0 0.0
    %1731 = vmatprep.subr.mxu0 0.0
    %1732 = vmatpush1.msra.mxu0 0.0
    %1733 = vmatprep.mubr.f32.mxu0 0.0
    %1734 = vmatmul.mubr.f32.gmra.mrb[0].mxu0 %v231
    %v1735 = vpop.f32.mrb[0].mxu0
    %v1736 = vadd.f32 %v1434, %v1735
    %v1737 = vpop.f32.mrb[0].mxu0
    %1738 = vdwg.mxu0
    %1739 = vmatprep.subr.mxu0 0.0
    %1740 = vmatpush1.msra.mxu0 %v1387
    %1741 = vmatprep.subr.mxu0 0.0
    %1742 = vmatpush1.msra.mxu0 %v1388
    %1743 = vmatprep.subr.mxu0 0.0
    %1744 = vmatpush1.msra.mxu0 %v1389
    %1745 = vmatprep.subr.mxu0 0.0
    %1746 = vmatpush1.msra.mxu0 %v1390
    %1747 = vmatprep.subr.mxu0 0.0
    %1748 = vmatpush1.msra.mxu0 0.0
    %1749 = vmatprep.subr.mxu0 0.0
    %1750 = vmatpush1.msra.mxu0 0.0
    %1751 = vmatprep.subr.mxu0 0.0
    %1752 = vmatpush1.msra.mxu0 0.0
    %1753 = vmatprep.subr.mxu0 0.0
    %1754 = vmatpush1.msra.mxu0 0.0
    %1755 = vmatprep.subr.mxu0 0.0
    %1756 = vmatpush1.msra.mxu0 0.0
    %1757 = vmatprep.subr.mxu0 0.0
    %1758 = vmatpush1.msra.mxu0 0.0
    %1759 = vmatprep.subr.mxu0 0.0
    %1760 = vmatpush1.msra.mxu0 0.0
    %1761 = vmatprep.subr.mxu0 0.0
    %1762 = vmatpush1.msra.mxu0 0.0
    %1763 = vmatprep.subr.mxu0 0.0
    %1764 = vmatpush1.msra.mxu0 0.0
    %1765 = vmatprep.subr.mxu0 0.0
    %1766 = vmatpush1.msra.mxu0 0.0
    %1767 = vmatprep.subr.mxu0 0.0
    %1768 = vmatpush1.msra.mxu0 0.0
    %1769 = vmatprep.subr.mxu0 0.0
    %1770 = vmatpush1.msra.mxu0 0.0
    %1771 = vmatprep.subr.mxu0 0.0
    %1772 = vmatpush1.msra.mxu0 0.0
    %1773 = vmatprep.subr.mxu0 0.0
    %1774 = vmatpush1.msra.mxu0 0.0
    %1775 = vmatprep.subr.mxu0 0.0
    %1776 = vmatpush1.msra.mxu0 0.0
    %1777 = vmatprep.subr.mxu0 0.0
    %1778 = vmatpush1.msra.mxu0 0.0
    %1779 = vmatprep.subr.mxu0 0.0
    %1780 = vmatpush1.msra.mxu0 0.0
    %1781 = vmatprep.subr.mxu0 0.0
    %1782 = vmatpush1.msra.mxu0 0.0
    %1783 = vmatprep.subr.mxu0 0.0
    %1784 = vmatpush1.msra.mxu0 0.0
    %1785 = vmatprep.subr.mxu0 0.0
    %1786 = vmatpush1.msra.mxu0 0.0
    %1787 = vmatprep.subr.mxu0 0.0
    %1788 = vmatpush1.msra.mxu0 0.0
    %1789 = vmatprep.subr.mxu0 0.0
    %1790 = vmatpush1.msra.mxu0 0.0
    %1791 = vmatprep.subr.mxu0 0.0
    %1792 = vmatpush1.msra.mxu0 0.0
    %1793 = vmatprep.subr.mxu0 0.0
    %1794 = vmatpush1.msra.mxu0 0.0
    %1795 = vmatprep.subr.mxu0 0.0
    %1796 = vmatpush1.msra.mxu0 0.0
    %1797 = vmatprep.subr.mxu0 0.0
    %1798 = vmatpush1.msra.mxu0 0.0
    %1799 = vmatprep.subr.mxu0 0.0
    %1800 = vmatpush1.msra.mxu0 0.0
    %1801 = vmatprep.subr.mxu0 0.0
    %1802 = vmatpush1.msra.mxu0 0.0
    %1803 = vmatprep.mubr.f32.mxu0 0.0
    %1804 = vmatmul.mubr.f32.gmra.mrb[0].mxu0 %v158
    %v1805 = vpop.f32.mrb[0].mxu0
    %v1806 = vadd.f32 %v1438, %v1805
    %v1807 = vpop.f32.mrb[0].mxu0
    %1808 = vdwg.mxu0
    %1809 = vmatprep.subr.mxu0 0.0
    %1810 = vmatpush1.msra.mxu0 %v1391
    %1811 = vmatprep.subr.mxu0 0.0
    %1812 = vmatpush1.msra.mxu0 %v1392
    %1813 = vmatprep.subr.mxu0 0.0
    %1814 = vmatpush1.msra.mxu0 %v1393
    %1815 = vmatprep.subr.mxu0 0.0
    %1816 = vmatpush1.msra.mxu0 %v1394
    %1817 = vmatprep.subr.mxu0 0.0
    %1818 = vmatpush1.msra.mxu0 0.0
    %1819 = vmatprep.subr.mxu0 0.0
    %1820 = vmatpush1.msra.mxu0 0.0
    %1821 = vmatprep.subr.mxu0 0.0
    %1822 = vmatpush1.msra.mxu0 0.0
    %1823 = vmatprep.subr.mxu0 0.0
    %1824 = vmatpush1.msra.mxu0 0.0
    %1825 = vmatprep.subr.mxu0 0.0
    %1826 = vmatpush1.msra.mxu0 0.0
    %1827 = vmatprep.subr.mxu0 0.0
    %1828 = vmatpush1.msra.mxu0 0.0
    %1829 = vmatprep.subr.mxu0 0.0
    %1830 = vmatpush1.msra.mxu0 0.0
    %1831 = vmatprep.subr.mxu0 0.0
    %1832 = vmatpush1.msra.mxu0 0.0
    %1833 = vmatprep.subr.mxu0 0.0
    %1834 = vmatpush1.msra.mxu0 0.0
    %1835 = vmatprep.subr.mxu0 0.0
    %1836 = vmatpush1.msra.mxu0 0.0
    %1837 = vmatprep.subr.mxu0 0.0
    %1838 = vmatpush1.msra.mxu0 0.0
    %1839 = vmatprep.subr.mxu0 0.0
    %1840 = vmatpush1.msra.mxu0 0.0
    %1841 = vmatprep.subr.mxu0 0.0
    %1842 = vmatpush1.msra.mxu0 0.0
    %1843 = vmatprep.subr.mxu0 0.0
    %1844 = vmatpush1.msra.mxu0 0.0
    %1845 = vmatprep.subr.mxu0 0.0
    %1846 = vmatpush1.msra.mxu0 0.0
    %1847 = vmatprep.subr.mxu0 0.0
    %1848 = vmatpush1.msra.mxu0 0.0
    %1849 = vmatprep.subr.mxu0 0.0
    %1850 = vmatpush1.msra.mxu0 0.0
    %1851 = vmatprep.subr.mxu0 0.0
    %1852 = vmatpush1.msra.mxu0 0.0
    %1853 = vmatprep.subr.mxu0 0.0
    %1854 = vmatpush1.msra.mxu0 0.0
    %1855 = vmatprep.subr.mxu0 0.0
    %1856 = vmatpush1.msra.mxu0 0.0
    %1857 = vmatprep.subr.mxu0 0.0
    %1858 = vmatpush1.msra.mxu0 0.0
    %1859 = vmatprep.subr.mxu0 0.0
    %1860 = vmatpush1.msra.mxu0 0.0
    %1861 = vmatprep.subr.mxu0 0.0
    %1862 = vmatpush1.msra.mxu0 0.0
    %1863 = vmatprep.subr.mxu0 0.0
    %1864 = vmatpush1.msra.mxu0 0.0
    %1865 = vmatprep.subr.mxu0 0.0
    %1866 = vmatpush1.msra.mxu0 0.0
    %1867 = vmatprep.subr.mxu0 0.0
    %1868 = vmatpush1.msra.mxu0 0.0
    %1869 = vmatprep.subr.mxu0 0.0
    %1870 = vmatpush1.msra.mxu0 0.0
    %1871 = vmatprep.subr.mxu0 0.0
    %1872 = vmatpush1.msra.mxu0 0.0
    %1873 = vmatprep.mubr.f32.mxu0 0.0
    %1874 = vmatmul.mubr.f32.gmra.mrb[0].mxu0 %v231
    %v1875 = vpop.f32.mrb[0].mxu0
    %v1876 = vadd.f32 %v1442, %v1875
    %v1877 = vpop.f32.mrb[0].mxu0
    %1878 = vdwg.mxu0
    %1879 = vmatprep.subr.mxu0 0.0
    %1880 = vmatpush1.msra.mxu0 %v1395
    %1881 = vmatprep.subr.mxu0 0.0
    %1882 = vmatpush1.msra.mxu0 %v1396
    %1883 = vmatprep.subr.mxu0 0.0
    %1884 = vmatpush1.msra.mxu0 %v1397
    %1885 = vmatprep.subr.mxu0 0.0
    %1886 = vmatpush1.msra.mxu0 %v1398
    %1887 = vmatprep.subr.mxu0 0.0
    %1888 = vmatpush1.msra.mxu0 0.0
    %1889 = vmatprep.subr.mxu0 0.0
    %1890 = vmatpush1.msra.mxu0 0.0
    %1891 = vmatprep.subr.mxu0 0.0
    %1892 = vmatpush1.msra.mxu0 0.0
    %1893 = vmatprep.subr.mxu0 0.0
    %1894 = vmatpush1.msra.mxu0 0.0
    %1895 = vmatprep.subr.mxu0 0.0
    %1896 = vmatpush1.msra.mxu0 0.0
    %1897 = vmatprep.subr.mxu0 0.0
    %1898 = vmatpush1.msra.mxu0 0.0
    %1899 = vmatprep.subr.mxu0 0.0
    %1900 = vmatpush1.msra.mxu0 0.0
    %1901 = vmatprep.subr.mxu0 0.0
    %1902 = vmatpush1.msra.mxu0 0.0
    %1903 = vmatprep.subr.mxu0 0.0
    %1904 = vmatpush1.msra.mxu0 0.0
    %1905 = vmatprep.subr.mxu0 0.0
    %1906 = vmatpush1.msra.mxu0 0.0
    %1907 = vmatprep.subr.mxu0 0.0
    %1908 = vmatpush1.msra.mxu0 0.0
    %1909 = vmatprep.subr.mxu0 0.0
    %1910 = vmatpush1.msra.mxu0 0.0
    %1911 = vmatprep.subr.mxu0 0.0
    %1912 = vmatpush1.msra.mxu0 0.0
    %1913 = vmatprep.subr.mxu0 0.0
    %1914 = vmatpush1.msra.mxu0 0.0
    %1915 = vmatprep.subr.mxu0 0.0
    %1916 = vmatpush1.msra.mxu0 0.0
    %1917 = vmatprep.subr.mxu0 0.0
    %1918 = vmatpush1.msra.mxu0 0.0
    %1919 = vmatprep.subr.mxu0 0.0
    %1920 = vmatpush1.msra.mxu0 0.0
    %1921 = vmatprep.subr.mxu0 0.0
    %1922 = vmatpush1.msra.mxu0 0.0
    %1923 = vmatprep.subr.mxu0 0.0
    %1924 = vmatpush1.msra.mxu0 0.0
    %1925 = vmatprep.subr.mxu0 0.0
    %1926 = vmatpush1.msra.mxu0 0.0
    %1927 = vmatprep.subr.mxu0 0.0
    %1928 = vmatpush1.msra.mxu0 0.0
    %1929 = vmatprep.subr.mxu0 0.0
    %1930 = vmatpush1.msra.mxu0 0.0
    %1931 = vmatprep.subr.mxu0 0.0
    %1932 = vmatpush1.msra.mxu0 0.0
    %1933 = vmatprep.subr.mxu0 0.0
    %1934 = vmatpush1.msra.mxu0 0.0
    %1935 = vmatprep.subr.mxu0 0.0
    %1936 = vmatpush1.msra.mxu0 0.0
    %1937 = vmatprep.subr.mxu0 0.0
    %1938 = vmatpush1.msra.mxu0 0.0
    %1939 = vmatprep.subr.mxu0 0.0
    %1940 = vmatpush1.msra.mxu0 0.0
    %1941 = vmatprep.subr.mxu0 0.0
    %1942 = vmatpush1.msra.mxu0 0.0
    %1943 = vmatprep.mubr.f32.mxu0 0.0
    %1944 = vmatmul.mubr.f32.gmra.mrb[0].mxu0 %v158
    %v1945 = vpop.f32.mrb[0].mxu0
    %v1946 = vadd.f32 %v1446, %v1945
    %v1947 = vpop.f32.mrb[0].mxu0
    %1948 = vdwg.mxu0
    %1949 = vmatprep.subr.mxu0 0.0
    %1950 = vmatpush1.msra.mxu0 %v1399
    %1951 = vmatprep.subr.mxu0 0.0
    %1952 = vmatpush1.msra.mxu0 %v1400
    %1953 = vmatprep.subr.mxu0 0.0
    %1954 = vmatpush1.msra.mxu0 %v1401
    %1955 = vmatprep.subr.mxu0 0.0
    %1956 = vmatpush1.msra.mxu0 %v1402
    %1957 = vmatprep.subr.mxu0 0.0
    %1958 = vmatpush1.msra.mxu0 0.0
    %1959 = vmatprep.subr.mxu0 0.0
    %1960 = vmatpush1.msra.mxu0 0.0
    %1961 = vmatprep.subr.mxu0 0.0
    %1962 = vmatpush1.msra.mxu0 0.0
    %1963 = vmatprep.subr.mxu0 0.0
    %1964 = vmatpush1.msra.mxu0 0.0
    %1965 = vmatprep.subr.mxu0 0.0
    %1966 = vmatpush1.msra.mxu0 0.0
    %1967 = vmatprep.subr.mxu0 0.0
    %1968 = vmatpush1.msra.mxu0 0.0
    %1969 = vmatprep.subr.mxu0 0.0
    %1970 = vmatpush1.msra.mxu0 0.0
    %1971 = vmatprep.subr.mxu0 0.0
    %1972 = vmatpush1.msra.mxu0 0.0
    %1973 = vmatprep.subr.mxu0 0.0
    %1974 = vmatpush1.msra.mxu0 0.0
    %1975 = vmatprep.subr.mxu0 0.0
    %1976 = vmatpush1.msra.mxu0 0.0
    %1977 = vmatprep.subr.mxu0 0.0
    %1978 = vmatpush1.msra.mxu0 0.0
    %1979 = vmatprep.subr.mxu0 0.0
    %1980 = vmatpush1.msra.mxu0 0.0
    %1981 = vmatprep.subr.mxu0 0.0
    %1982 = vmatpush1.msra.mxu0 0.0
    %1983 = vmatprep.subr.mxu0 0.0
    %1984 = vmatpush1.msra.mxu0 0.0
    %1985 = vmatprep.subr.mxu0 0.0
    %1986 = vmatpush1.msra.mxu0 0.0
    %1987 = vmatprep.subr.mxu0 0.0
    %1988 = vmatpush1.msra.mxu0 0.0
    %1989 = vmatprep.subr.mxu0 0.0
    %1990 = vmatpush1.msra.mxu0 0.0
    %1991 = vmatprep.subr.mxu0 0.0
    %1992 = vmatpush1.msra.mxu0 0.0
    %1993 = vmatprep.subr.mxu0 0.0
    %1994 = vmatpush1.msra.mxu0 0.0
    %1995 = vmatprep.subr.mxu0 0.0
    %1996 = vmatpush1.msra.mxu0 0.0
    %1997 = vmatprep.subr.mxu0 0.0
    %1998 = vmatpush1.msra.mxu0 0.0
    %1999 = vmatprep.subr.mxu0 0.0
    %2000 = vmatpush1.msra.mxu0 0.0
    %2001 = vmatprep.subr.mxu0 0.0
    %2002 = vmatpush1.msra.mxu0 0.0
    %2003 = vmatprep.subr.mxu0 0.0
    %2004 = vmatpush1.msra.mxu0 0.0
    %2005 = vmatprep.subr.mxu0 0.0
    %2006 = vmatpush1.msra.mxu0 0.0
    %2007 = vmatprep.subr.mxu0 0.0
    %2008 = vmatpush1.msra.mxu0 0.0
    %2009 = vmatprep.subr.mxu0 0.0
    %2010 = vmatpush1.msra.mxu0 0.0
    %2011 = vmatprep.subr.mxu0 0.0
    %2012 = vmatpush1.msra.mxu0 0.0
    %2013 = vmatprep.mubr.f32.mxu0 0.0
    %2014 = vmatmul.mubr.f32.gmra.mrb[0].mxu0 %v231
    %v2015 = vpop.f32.mrb[0].mxu0
    %v2016 = vadd.f32 %v1450, %v2015
    %v2017 = vpop.f32.mrb[0].mxu0
    %2018 = vdwg.mxu0
    %vm2019 = vcmask 64512
    %v2021 = vsel %vm2019, %v227, 0
    %v2024 = vsel %vm2019, %v878, 0
    %2026 = vmatprep.subr.mxu0 0.0
    %2027 = vmatpush1.xpose.msra.mxu0 %v2024
    %2028 = vmatprep.subr.mxu0 0.0
    %2029 = vmatpush1.xpose.msra.mxu0 0.0
    %2030 = vmatprep.subr.mxu0 0.0
    %2031 = vmatpush1.xpose.msra.mxu0 0.0
    %2032 = vmatprep.subr.mxu0 0.0
    %2033 = vmatpush1.xpose.msra.mxu0 0.0
    %2034 = vmatprep.subr.mxu0 0.0
    %2035 = vmatpush1.xpose.msra.mxu0 0.0
    %2036 = vmatprep.subr.mxu0 0.0
    %2037 = vmatpush1.xpose.msra.mxu0 0.0
    %2038 = vmatprep.subr.mxu0 0.0
    %2039 = vmatpush1.xpose.msra.mxu0 0.0
    %2040 = vmatprep.subr.mxu0 0.0
    %2041 = vmatpush1.xpose.msra.mxu0 0.0
    %2042 = vmatprep.subr.mxu0 0.0
    %2043 = vmatpush1.xpose.msra.mxu0 0.0
    %2044 = vmatprep.subr.mxu0 0.0
    %2045 = vmatpush1.xpose.msra.mxu0 0.0
    %2046 = vmatprep.subr.mxu0 0.0
    %2047 = vmatpush1.xpose.msra.mxu0 0.0
    %2048 = vmatprep.subr.mxu0 0.0
    %2049 = vmatpush1.xpose.msra.mxu0 0.0
    %2050 = vmatprep.subr.mxu0 0.0
    %2051 = vmatpush1.xpose.msra.mxu0 0.0
    %2052 = vmatprep.subr.mxu0 0.0
    %2053 = vmatpush1.xpose.msra.mxu0 0.0
    %2054 = vmatprep.subr.mxu0 0.0
    %2055 = vmatpush1.xpose.msra.mxu0 0.0
    %2056 = vmatprep.subr.mxu0 0.0
    %2057 = vmatpush1.xpose.msra.mxu0 0.0
    %2058 = vmatprep.subr.mxu0 0.0
    %2059 = vmatpush1.xpose.msra.mxu0 0.0
    %2060 = vmatprep.subr.mxu0 0.0
    %2061 = vmatpush1.xpose.msra.mxu0 0.0
    %2062 = vmatprep.subr.mxu0 0.0
    %2063 = vmatpush1.xpose.msra.mxu0 0.0
    %2064 = vmatprep.subr.mxu0 0.0
    %2065 = vmatpush1.xpose.msra.mxu0 0.0
    %2066 = vmatprep.subr.mxu0 0.0
    %2067 = vmatpush1.xpose.msra.mxu0 0.0
    %2068 = vmatprep.subr.mxu0 0.0
    %2069 = vmatpush1.xpose.msra.mxu0 0.0
    %2070 = vmatprep.subr.mxu0 0.0
    %2071 = vmatpush1.xpose.msra.mxu0 0.0
    %2072 = vmatprep.subr.mxu0 0.0
    %2073 = vmatpush1.xpose.msra.mxu0 0.0
    %2074 = vmatprep.subr.mxu0 0.0
    %2075 = vmatpush1.xpose.msra.mxu0 0.0
    %2076 = vmatprep.subr.mxu0 0.0
    %2077 = vmatpush1.xpose.msra.mxu0 0.0
    %2078 = vmatprep.subr.mxu0 0.0
    %2079 = vmatpush1.xpose.msra.mxu0 0.0
    %2080 = vmatprep.subr.mxu0 0.0
    %2081 = vmatpush1.xpose.msra.mxu0 0.0
    %2082 = vmatprep.subr.mxu0 0.0
    %2083 = vmatpush1.xpose.msra.mxu0 0.0
    %2084 = vmatprep.subr.mxu0 0.0
    %2085 = vmatpush1.xpose.msra.mxu0 0.0
    %2086 = vmatprep.subr.mxu0 0.0
    %2087 = vmatpush1.xpose.msra.mxu0 0.0
    %2088 = vmatprep.subr.mxu0 0.0
    %2089 = vmatpush1.xpose.msra.mxu0 0.0
    %2090 = vmatprep.mubr.f32.mxu0 0.0
    %2091 = vmatmul.mubr.f32.gmra.mrb[0].mxu0 %v2021
    %v2092 = vpop.f32.mrb[0].mxu0
    %v2093 = vadd.f32 0.0, %v2092
    %v2094 = vpop.f32.mrb[0].mxu0
    %2095 = vdwg.mxu0
    %v2097 = vsel %vm2019, %v300, 0
    %v2100 = vsel %vm2019, %v948, 0
    %2102 = vmatprep.subr.mxu0 0.0
    %2103 = vmatpush1.xpose.msra.mxu0 %v2100
    %2104 = vmatprep.subr.mxu0 0.0
    %2105 = vmatpush1.xpose.msra.mxu0 0.0
    %2106 = vmatprep.subr.mxu0 0.0
    %2107 = vmatpush1.xpose.msra.mxu0 0.0
    %2108 = vmatprep.subr.mxu0 0.0
    %2109 = vmatpush1.xpose.msra.mxu0 0.0
    %2110 = vmatprep.subr.mxu0 0.0
    %2111 = vmatpush1.xpose.msra.mxu0 0.0
    %2112 = vmatprep.subr.mxu0 0.0
    %2113 = vmatpush1.xpose.msra.mxu0 0.0
    %2114 = vmatprep.subr.mxu0 0.0
    %2115 = vmatpush1.xpose.msra.mxu0 0.0
    %2116 = vmatprep.subr.mxu0 0.0
    %2117 = vmatpush1.xpose.msra.mxu0 0.0
    %2118 = vmatprep.subr.mxu0 0.0
    %2119 = vmatpush1.xpose.msra.mxu0 0.0
    %2120 = vmatprep.subr.mxu0 0.0
    %2121 = vmatpush1.xpose.msra.mxu0 0.0
    %2122 = vmatprep.subr.mxu0 0.0
    %2123 = vmatpush1.xpose.msra.mxu0 0.0
    %2124 = vmatprep.subr.mxu0 0.0
    %2125 = vmatpush1.xpose.msra.mxu0 0.0
    %2126 = vmatprep.subr.mxu0 0.0
    %2127 = vmatpush1.xpose.msra.mxu0 0.0
    %2128 = vmatprep.subr.mxu0 0.0
    %2129 = vmatpush1.xpose.msra.mxu0 0.0
    %2130 = vmatprep.subr.mxu0 0.0
    %2131 = vmatpush1.xpose.msra.mxu0 0.0
    %2132 = vmatprep.subr.mxu0 0.0
    %2133 = vmatpush1.xpose.msra.mxu0 0.0
    %2134 = vmatprep.subr.mxu0 0.0
    %2135 = vmatpush1.xpose.msra.mxu0 0.0
    %2136 = vmatprep.subr.mxu0 0.0
    %2137 = vmatpush1.xpose.msra.mxu0 0.0
    %2138 = vmatprep.subr.mxu0 0.0
    %2139 = vmatpush1.xpose.msra.mxu0 0.0
    %2140 = vmatprep.subr.mxu0 0.0
    %2141 = vmatpush1.xpose.msra.mxu0 0.0
    %2142 = vmatprep.subr.mxu0 0.0
    %2143 = vmatpush1.xpose.msra.mxu0 0.0
    %2144 = vmatprep.subr.mxu0 0.0
    %2145 = vmatpush1.xpose.msra.mxu0 0.0
    %2146 = vmatprep.subr.mxu0 0.0
    %2147 = vmatpush1.xpose.msra.mxu0 0.0
    %2148 = vmatprep.subr.mxu0 0.0
    %2149 = vmatpush1.xpose.msra.mxu0 0.0
    %2150 = vmatprep.subr.mxu0 0.0
    %2151 = vmatpush1.xpose.msra.mxu0 0.0
    %2152 = vmatprep.subr.mxu0 0.0
    %2153 = vmatpush1.xpose.msra.mxu0 0.0
    %2154 = vmatprep.subr.mxu0 0.0
    %2155 = vmatpush1.xpose.msra.mxu0 0.0
    %2156 = vmatprep.subr.mxu0 0.0
    %2157 = vmatpush1.xpose.msra.mxu0 0.0
    %2158 = vmatprep.subr.mxu0 0.0
    %2159 = vmatpush1.xpose.msra.mxu0 0.0
    %2160 = vmatprep.subr.mxu0 0.0
    %2161 = vmatpush1.xpose.msra.mxu0 0.0
    %2162 = vmatprep.subr.mxu0 0.0
    %2163 = vmatpush1.xpose.msra.mxu0 0.0
    %2164 = vmatprep.subr.mxu0 0.0
    %2165 = vmatpush1.xpose.msra.mxu0 0.0
    %2166 = vmatprep.mubr.f32.mxu0 0.0
    %2167 = vmatmul.mubr.f32.gmra.mrb[0].mxu0 %v2097
    %v2168 = vpop.f32.mrb[0].mxu0
    %v2169 = vadd.f32 0.0, %v2168
    %v2170 = vpop.f32.mrb[0].mxu0
    %2171 = vdwg.mxu0
    %v2173 = vsel %vm2019, %v370, 0
    %v2176 = vsel %vm2019, %v1018, 0
    %2178 = vmatprep.subr.mxu0 0.0
    %2179 = vmatpush1.xpose.msra.mxu0 %v2176
    %2180 = vmatprep.subr.mxu0 0.0
    %2181 = vmatpush1.xpose.msra.mxu0 0.0
    %2182 = vmatprep.subr.mxu0 0.0
    %2183 = vmatpush1.xpose.msra.mxu0 0.0
    %2184 = vmatprep.subr.mxu0 0.0
    %2185 = vmatpush1.xpose.msra.mxu0 0.0
    %2186 = vmatprep.subr.mxu0 0.0
    %2187 = vmatpush1.xpose.msra.mxu0 0.0
    %2188 = vmatprep.subr.mxu0 0.0
    %2189 = vmatpush1.xpose.msra.mxu0 0.0
    %2190 = vmatprep.subr.mxu0 0.0
    %2191 = vmatpush1.xpose.msra.mxu0 0.0
    %2192 = vmatprep.subr.mxu0 0.0
    %2193 = vmatpush1.xpose.msra.mxu0 0.0
    %2194 = vmatprep.subr.mxu0 0.0
    %2195 = vmatpush1.xpose.msra.mxu0 0.0
    %2196 = vmatprep.subr.mxu0 0.0
    %2197 = vmatpush1.xpose.msra.mxu0 0.0
    %2198 = vmatprep.subr.mxu0 0.0
    %2199 = vmatpush1.xpose.msra.mxu0 0.0
    %2200 = vmatprep.subr.mxu0 0.0
    %2201 = vmatpush1.xpose.msra.mxu0 0.0
    %2202 = vmatprep.subr.mxu0 0.0
    %2203 = vmatpush1.xpose.msra.mxu0 0.0
    %2204 = vmatprep.subr.mxu0 0.0
    %2205 = vmatpush1.xpose.msra.mxu0 0.0
    %2206 = vmatprep.subr.mxu0 0.0
    %2207 = vmatpush1.xpose.msra.mxu0 0.0
    %2208 = vmatprep.subr.mxu0 0.0
    %2209 = vmatpush1.xpose.msra.mxu0 0.0
    %2210 = vmatprep.subr.mxu0 0.0
    %2211 = vmatpush1.xpose.msra.mxu0 0.0
    %2212 = vmatprep.subr.mxu0 0.0
    %2213 = vmatpush1.xpose.msra.mxu0 0.0
    %2214 = vmatprep.subr.mxu0 0.0
    %2215 = vmatpush1.xpose.msra.mxu0 0.0
    %2216 = vmatprep.subr.mxu0 0.0
    %2217 = vmatpush1.xpose.msra.mxu0 0.0
    %2218 = vmatprep.subr.mxu0 0.0
    %2219 = vmatpush1.xpose.msra.mxu0 0.0
    %2220 = vmatprep.subr.mxu0 0.0
    %2221 = vmatpush1.xpose.msra.mxu0 0.0
    %2222 = vmatprep.subr.mxu0 0.0
    %2223 = vmatpush1.xpose.msra.mxu0 0.0
    %2224 = vmatprep.subr.mxu0 0.0
    %2225 = vmatpush1.xpose.msra.mxu0 0.0
    %2226 = vmatprep.subr.mxu0 0.0
    %2227 = vmatpush1.xpose.msra.mxu0 0.0
    %2228 = vmatprep.subr.mxu0 0.0
    %2229 = vmatpush1.xpose.msra.mxu0 0.0
    %2230 = vmatprep.subr.mxu0 0.0
    %2231 = vmatpush1.xpose.msra.mxu0 0.0
    %2232 = vmatprep.subr.mxu0 0.0
    %2233 = vmatpush1.xpose.msra.mxu0 0.0
    %2234 = vmatprep.subr.mxu0 0.0
    %2235 = vmatpush1.xpose.msra.mxu0 0.0
    %2236 = vmatprep.subr.mxu0 0.0
    %2237 = vmatpush1.xpose.msra.mxu0 0.0
    %2238 = vmatprep.subr.mxu0 0.0
    %2239 = vmatpush1.xpose.msra.mxu0 0.0
    %2240 = vmatprep.subr.mxu0 0.0
    %2241 = vmatpush1.xpose.msra.mxu0 0.0
    %2242 = vmatprep.mubr.f32.mxu0 0.0
    %2243 = vmatmul.mubr.f32.gmra.mrb[0].mxu0 %v2173
    %v2244 = vpop.f32.mrb[0].mxu0
    %v2245 = vadd.f32 0.0, %v2244
    %v2246 = vpop.f32.mrb[0].mxu0
    %2247 = vdwg.mxu0
    %v2249 = vsel %vm2019, %v440, 0
    %v2252 = vsel %vm2019, %v1088, 0
    %2254 = vmatprep.subr.mxu0 0.0
    %2255 = vmatpush1.xpose.msra.mxu0 %v2252
    %2256 = vmatprep.subr.mxu0 0.0
    %2257 = vmatpush1.xpose.msra.mxu0 0.0
    %2258 = vmatprep.subr.mxu0 0.0
    %2259 = vmatpush1.xpose.msra.mxu0 0.0
    %2260 = vmatprep.subr.mxu0 0.0
    %2261 = vmatpush1.xpose.msra.mxu0 0.0
    %2262 = vmatprep.subr.mxu0 0.0
    %2263 = vmatpush1.xpose.msra.mxu0 0.0
    %2264 = vmatprep.subr.mxu0 0.0
    %2265 = vmatpush1.xpose.msra.mxu0 0.0
    %2266 = vmatprep.subr.mxu0 0.0
    %2267 = vmatpush1.xpose.msra.mxu0 0.0
    %2268 = vmatprep.subr.mxu0 0.0
    %2269 = vmatpush1.xpose.msra.mxu0 0.0
    %2270 = vmatprep.subr.mxu0 0.0
    %2271 = vmatpush1.xpose.msra.mxu0 0.0
    %2272 = vmatprep.subr.mxu0 0.0
    %2273 = vmatpush1.xpose.msra.mxu0 0.0
    %2274 = vmatprep.subr.mxu0 0.0
    %2275 = vmatpush1.xpose.msra.mxu0 0.0
    %2276 = vmatprep.subr.mxu0 0.0
    %2277 = vmatpush1.xpose.msra.mxu0 0.0
    %2278 = vmatprep.subr.mxu0 0.0
    %2279 = vmatpush1.xpose.msra.mxu0 0.0
    %2280 = vmatprep.subr.mxu0 0.0
    %2281 = vmatpush1.xpose.msra.mxu0 0.0
    %2282 = vmatprep.subr.mxu0 0.0
    %2283 = vmatpush1.xpose.msra.mxu0 0.0
    %2284 = vmatprep.subr.mxu0 0.0
    %2285 = vmatpush1.xpose.msra.mxu0 0.0
    %2286 = vmatprep.subr.mxu0 0.0
    %2287 = vmatpush1.xpose.msra.mxu0 0.0
    %2288 = vmatprep.subr.mxu0 0.0
    %2289 = vmatpush1.xpose.msra.mxu0 0.0
    %2290 = vmatprep.subr.mxu0 0.0
    %2291 = vmatpush1.xpose.msra.mxu0 0.0
    %2292 = vmatprep.subr.mxu0 0.0
    %2293 = vmatpush1.xpose.msra.mxu0 0.0
    %2294 = vmatprep.subr.mxu0 0.0
    %2295 = vmatpush1.xpose.msra.mxu0 0.0
    %2296 = vmatprep.subr.mxu0 0.0
    %2297 = vmatpush1.xpose.msra.mxu0 0.0
    %2298 = vmatprep.subr.mxu0 0.0
    %2299 = vmatpush1.xpose.msra.mxu0 0.0
    %2300 = vmatprep.subr.mxu0 0.0
    %2301 = vmatpush1.xpose.msra.mxu0 0.0
    %2302 = vmatprep.subr.mxu0 0.0
    %2303 = vmatpush1.xpose.msra.mxu0 0.0
    %2304 = vmatprep.subr.mxu0 0.0
    %2305 = vmatpush1.xpose.msra.mxu0 0.0
    %2306 = vmatprep.subr.mxu0 0.0
    %2307 = vmatpush1.xpose.msra.mxu0 0.0
    %2308 = vmatprep.subr.mxu0 0.0
    %2309 = vmatpush1.xpose.msra.mxu0 0.0
    %2310 = vmatprep.subr.mxu0 0.0
    %2311 = vmatpush1.xpose.msra.mxu0 0.0
    %2312 = vmatprep.subr.mxu0 0.0
    %2313 = vmatpush1.xpose.msra.mxu0 0.0
    %2314 = vmatprep.subr.mxu0 0.0
    %2315 = vmatpush1.xpose.msra.mxu0 0.0
    %2316 = vmatprep.subr.mxu0 0.0
    %2317 = vmatpush1.xpose.msra.mxu0 0.0
    %2318 = vmatprep.mubr.f32.mxu0 0.0
    %2319 = vmatmul.mubr.f32.gmra.mrb[0].mxu0 %v2249
    %v2320 = vpop.f32.mrb[0].mxu0
    %v2321 = vadd.f32 0.0, %v2320
    %v2322 = vpop.f32.mrb[0].mxu0
    %2323 = vdwg.mxu0
    %v2325 = vsel %vm2019, %v510, 0
    %v2328 = vsel %vm2019, %v1158, 0
    %2330 = vmatprep.subr.mxu0 0.0
    %2331 = vmatpush1.xpose.msra.mxu0 %v2328
    %2332 = vmatprep.subr.mxu0 0.0
    %2333 = vmatpush1.xpose.msra.mxu0 0.0
    %2334 = vmatprep.subr.mxu0 0.0
    %2335 = vmatpush1.xpose.msra.mxu0 0.0
    %2336 = vmatprep.subr.mxu0 0.0
    %2337 = vmatpush1.xpose.msra.mxu0 0.0
    %2338 = vmatprep.subr.mxu0 0.0
    %2339 = vmatpush1.xpose.msra.mxu0 0.0
    %2340 = vmatprep.subr.mxu0 0.0
    %2341 = vmatpush1.xpose.msra.mxu0 0.0
    %2342 = vmatprep.subr.mxu0 0.0
    %2343 = vmatpush1.xpose.msra.mxu0 0.0
    %2344 = vmatprep.subr.mxu0 0.0
    %2345 = vmatpush1.xpose.msra.mxu0 0.0
    %2346 = vmatprep.subr.mxu0 0.0
    %2347 = vmatpush1.xpose.msra.mxu0 0.0
    %2348 = vmatprep.subr.mxu0 0.0
    %2349 = vmatpush1.xpose.msra.mxu0 0.0
    %2350 = vmatprep.subr.mxu0 0.0
    %2351 = vmatpush1.xpose.msra.mxu0 0.0
    %2352 = vmatprep.subr.mxu0 0.0
    %2353 = vmatpush1.xpose.msra.mxu0 0.0
    %2354 = vmatprep.subr.mxu0 0.0
    %2355 = vmatpush1.xpose.msra.mxu0 0.0
    %2356 = vmatprep.subr.mxu0 0.0
    %2357 = vmatpush1.xpose.msra.mxu0 0.0
    %2358 = vmatprep.subr.mxu0 0.0
    %2359 = vmatpush1.xpose.msra.mxu0 0.0
    %2360 = vmatprep.subr.mxu0 0.0
    %2361 = vmatpush1.xpose.msra.mxu0 0.0
    %2362 = vmatprep.subr.mxu0 0.0
    %2363 = vmatpush1.xpose.msra.mxu0 0.0
    %2364 = vmatprep.subr.mxu0 0.0
    %2365 = vmatpush1.xpose.msra.mxu0 0.0
    %2366 = vmatprep.subr.mxu0 0.0
    %2367 = vmatpush1.xpose.msra.mxu0 0.0
    %2368 = vmatprep.subr.mxu0 0.0
    %2369 = vmatpush1.xpose.msra.mxu0 0.0
    %2370 = vmatprep.subr.mxu0 0.0
    %2371 = vmatpush1.xpose.msra.mxu0 0.0
    %2372 = vmatprep.subr.mxu0 0.0
    %2373 = vmatpush1.xpose.msra.mxu0 0.0
    %2374 = vmatprep.subr.mxu0 0.0
    %2375 = vmatpush1.xpose.msra.mxu0 0.0
    %2376 = vmatprep.subr.mxu0 0.0
    %2377 = vmatpush1.xpose.msra.mxu0 0.0
    %2378 = vmatprep.subr.mxu0 0.0
    %2379 = vmatpush1.xpose.msra.mxu0 0.0
    %2380 = vmatprep.subr.mxu0 0.0
    %2381 = vmatpush1.xpose.msra.mxu0 0.0
    %2382 = vmatprep.subr.mxu0 0.0
    %2383 = vmatpush1.xpose.msra.mxu0 0.0
    %2384 = vmatprep.subr.mxu0 0.0
    %2385 = vmatpush1.xpose.msra.mxu0 0.0
    %2386 = vmatprep.subr.mxu0 0.0
    %2387 = vmatpush1.xpose.msra.mxu0 0.0
    %2388 = vmatprep.subr.mxu0 0.0
    %2389 = vmatpush1.xpose.msra.mxu0 0.0
    %2390 = vmatprep.subr.mxu0 0.0
    %2391 = vmatpush1.xpose.msra.mxu0 0.0
    %2392 = vmatprep.subr.mxu0 0.0
    %2393 = vmatpush1.xpose.msra.mxu0 0.0
    %2394 = vmatprep.mubr.f32.mxu0 0.0
    %2395 = vmatmul.mubr.f32.gmra.mrb[0].mxu0 %v2325
    %v2396 = vpop.f32.mrb[0].mxu0
    %v2397 = vadd.f32 0.0, %v2396
    %v2398 = vpop.f32.mrb[0].mxu0
    %2399 = vdwg.mxu0
    %v2401 = vsel %vm2019, %v580, 0
    %v2404 = vsel %vm2019, %v1228, 0
    %2406 = vmatprep.subr.mxu0 0.0
    %2407 = vmatpush1.xpose.msra.mxu0 %v2404
    %2408 = vmatprep.subr.mxu0 0.0
    %2409 = vmatpush1.xpose.msra.mxu0 0.0
    %2410 = vmatprep.subr.mxu0 0.0
    %2411 = vmatpush1.xpose.msra.mxu0 0.0
    %2412 = vmatprep.subr.mxu0 0.0
    %2413 = vmatpush1.xpose.msra.mxu0 0.0
    %2414 = vmatprep.subr.mxu0 0.0
    %2415 = vmatpush1.xpose.msra.mxu0 0.0
    %2416 = vmatprep.subr.mxu0 0.0
    %2417 = vmatpush1.xpose.msra.mxu0 0.0
    %2418 = vmatprep.subr.mxu0 0.0
    %2419 = vmatpush1.xpose.msra.mxu0 0.0
    %2420 = vmatprep.subr.mxu0 0.0
    %2421 = vmatpush1.xpose.msra.mxu0 0.0
    %2422 = vmatprep.subr.mxu0 0.0
    %2423 = vmatpush1.xpose.msra.mxu0 0.0
    %2424 = vmatprep.subr.mxu0 0.0
    %2425 = vmatpush1.xpose.msra.mxu0 0.0
    %2426 = vmatprep.subr.mxu0 0.0
    %2427 = vmatpush1.xpose.msra.mxu0 0.0
    %2428 = vmatprep.subr.mxu0 0.0
    %2429 = vmatpush1.xpose.msra.mxu0 0.0
    %2430 = vmatprep.subr.mxu0 0.0
    %2431 = vmatpush1.xpose.msra.mxu0 0.0
    %2432 = vmatprep.subr.mxu0 0.0
    %2433 = vmatpush1.xpose.msra.mxu0 0.0
    %2434 = vmatprep.subr.mxu0 0.0
    %2435 = vmatpush1.xpose.msra.mxu0 0.0
    %2436 = vmatprep.subr.mxu0 0.0
    %2437 = vmatpush1.xpose.msra.mxu0 0.0
    %2438 = vmatprep.subr.mxu0 0.0
    %2439 = vmatpush1.xpose.msra.mxu0 0.0
    %2440 = vmatprep.subr.mxu0 0.0
    %2441 = vmatpush1.xpose.msra.mxu0 0.0
    %2442 = vmatprep.subr.mxu0 0.0
    %2443 = vmatpush1.xpose.msra.mxu0 0.0
    %2444 = vmatprep.subr.mxu0 0.0
    %2445 = vmatpush1.xpose.msra.mxu0 0.0
    %2446 = vmatprep.subr.mxu0 0.0
    %2447 = vmatpush1.xpose.msra.mxu0 0.0
    %2448 = vmatprep.subr.mxu0 0.0
    %2449 = vmatpush1.xpose.msra.mxu0 0.0
    %2450 = vmatprep.subr.mxu0 0.0
    %2451 = vmatpush1.xpose.msra.mxu0 0.0
    %2452 = vmatprep.subr.mxu0 0.0
    %2453 = vmatpush1.xpose.msra.mxu0 0.0
    %2454 = vmatprep.subr.mxu0 0.0
    %2455 = vmatpush1.xpose.msra.mxu0 0.0
    %2456 = vmatprep.subr.mxu0 0.0
    %2457 = vmatpush1.xpose.msra.mxu0 0.0
    %2458 = vmatprep.subr.mxu0 0.0
    %2459 = vmatpush1.xpose.msra.mxu0 0.0
    %2460 = vmatprep.subr.mxu0 0.0
    %2461 = vmatpush1.xpose.msra.mxu0 0.0
    %2462 = vmatprep.subr.mxu0 0.0
    %2463 = vmatpush1.xpose.msra.mxu0 0.0
    %2464 = vmatprep.subr.mxu0 0.0
    %2465 = vmatpush1.xpose.msra.mxu0 0.0
    %2466 = vmatprep.subr.mxu0 0.0
    %2467 = vmatpush1.xpose.msra.mxu0 0.0
    %2468 = vmatprep.subr.mxu0 0.0
    %2469 = vmatpush1.xpose.msra.mxu0 0.0
    %2470 = vmatprep.mubr.f32.mxu0 0.0
    %2471 = vmatmul.mubr.f32.gmra.mrb[0].mxu0 %v2401
    %v2472 = vpop.f32.mrb[0].mxu0
    %v2473 = vadd.f32 0.0, %v2472
    %v2474 = vpop.f32.mrb[0].mxu0
    %2475 = vdwg.mxu0
    %v2477 = vsel %vm2019, %v650, 0
    %v2480 = vsel %vm2019, %v1298, 0
    %2482 = vmatprep.subr.mxu0 0.0
    %2483 = vmatpush1.xpose.msra.mxu0 %v2480
    %2484 = vmatprep.subr.mxu0 0.0
    %2485 = vmatpush1.xpose.msra.mxu0 0.0
    %2486 = vmatprep.subr.mxu0 0.0
    %2487 = vmatpush1.xpose.msra.mxu0 0.0
    %2488 = vmatprep.subr.mxu0 0.0
    %2489 = vmatpush1.xpose.msra.mxu0 0.0
    %2490 = vmatprep.subr.mxu0 0.0
    %2491 = vmatpush1.xpose.msra.mxu0 0.0
    %2492 = vmatprep.subr.mxu0 0.0
    %2493 = vmatpush1.xpose.msra.mxu0 0.0
    %2494 = vmatprep.subr.mxu0 0.0
    %2495 = vmatpush1.xpose.msra.mxu0 0.0
    %2496 = vmatprep.subr.mxu0 0.0
    %2497 = vmatpush1.xpose.msra.mxu0 0.0
    %2498 = vmatprep.subr.mxu0 0.0
    %2499 = vmatpush1.xpose.msra.mxu0 0.0
    %2500 = vmatprep.subr.mxu0 0.0
    %2501 = vmatpush1.xpose.msra.mxu0 0.0
    %2502 = vmatprep.subr.mxu0 0.0
    %2503 = vmatpush1.xpose.msra.mxu0 0.0
    %2504 = vmatprep.subr.mxu0 0.0
    %2505 = vmatpush1.xpose.msra.mxu0 0.0
    %2506 = vmatprep.subr.mxu0 0.0
    %2507 = vmatpush1.xpose.msra.mxu0 0.0
    %2508 = vmatprep.subr.mxu0 0.0
    %2509 = vmatpush1.xpose.msra.mxu0 0.0
    %2510 = vmatprep.subr.mxu0 0.0
    %2511 = vmatpush1.xpose.msra.mxu0 0.0
    %2512 = vmatprep.subr.mxu0 0.0
    %2513 = vmatpush1.xpose.msra.mxu0 0.0
    %2514 = vmatprep.subr.mxu0 0.0
    %2515 = vmatpush1.xpose.msra.mxu0 0.0
    %2516 = vmatprep.subr.mxu0 0.0
    %2517 = vmatpush1.xpose.msra.mxu0 0.0
    %2518 = vmatprep.subr.mxu0 0.0
    %2519 = vmatpush1.xpose.msra.mxu0 0.0
    %2520 = vmatprep.subr.mxu0 0.0
    %2521 = vmatpush1.xpose.msra.mxu0 0.0
    %2522 = vmatprep.subr.mxu0 0.0
    %2523 = vmatpush1.xpose.msra.mxu0 0.0
    %2524 = vmatprep.subr.mxu0 0.0
    %2525 = vmatpush1.xpose.msra.mxu0 0.0
    %2526 = vmatprep.subr.mxu0 0.0
    %2527 = vmatpush1.xpose.msra.mxu0 0.0
    %2528 = vmatprep.subr.mxu0 0.0
    %2529 = vmatpush1.xpose.msra.mxu0 0.0
    %2530 = vmatprep.subr.mxu0 0.0
    %2531 = vmatpush1.xpose.msra.mxu0 0.0
    %2532 = vmatprep.subr.mxu0 0.0
    %2533 = vmatpush1.xpose.msra.mxu0 0.0
    %2534 = vmatprep.subr.mxu0 0.0
    %2535 = vmatpush1.xpose.msra.mxu0 0.0
    %2536 = vmatprep.subr.mxu0 0.0
    %2537 = vmatpush1.xpose.msra.mxu0 0.0
    %2538 = vmatprep.subr.mxu0 0.0
    %2539 = vmatpush1.xpose.msra.mxu0 0.0
    %2540 = vmatprep.subr.mxu0 0.0
    %2541 = vmatpush1.xpose.msra.mxu0 0.0
    %2542 = vmatprep.subr.mxu0 0.0
    %2543 = vmatpush1.xpose.msra.mxu0 0.0
    %2544 = vmatprep.subr.mxu0 0.0
    %2545 = vmatpush1.xpose.msra.mxu0 0.0
    %2546 = vmatprep.mubr.f32.mxu0 0.0
    %2547 = vmatmul.mubr.f32.gmra.mrb[0].mxu0 %v2477
    %v2548 = vpop.f32.mrb[0].mxu0
    %v2549 = vadd.f32 0.0, %v2548
    %v2550 = vpop.f32.mrb[0].mxu0
    %2551 = vdwg.mxu0
    %v2553 = vsel %vm2019, %v720, 0
    %v2556 = vsel %vm2019, %v1368, 0
    %2558 = vmatprep.subr.mxu0 0.0
    %2559 = vmatpush1.xpose.msra.mxu0 %v2556
    %2560 = vmatprep.subr.mxu0 0.0
    %2561 = vmatpush1.xpose.msra.mxu0 0.0
    %2562 = vmatprep.subr.mxu0 0.0
    %2563 = vmatpush1.xpose.msra.mxu0 0.0
    %2564 = vmatprep.subr.mxu0 0.0
    %2565 = vmatpush1.xpose.msra.mxu0 0.0
    %2566 = vmatprep.subr.mxu0 0.0
    %2567 = vmatpush1.xpose.msra.mxu0 0.0
    %2568 = vmatprep.subr.mxu0 0.0
    %2569 = vmatpush1.xpose.msra.mxu0 0.0
    %2570 = vmatprep.subr.mxu0 0.0
    %2571 = vmatpush1.xpose.msra.mxu0 0.0
    %2572 = vmatprep.subr.mxu0 0.0
    %2573 = vmatpush1.xpose.msra.mxu0 0.0
    %2574 = vmatprep.subr.mxu0 0.0
    %2575 = vmatpush1.xpose.msra.mxu0 0.0
    %2576 = vmatprep.subr.mxu0 0.0
    %2577 = vmatpush1.xpose.msra.mxu0 0.0
    %2578 = vmatprep.subr.mxu0 0.0
    %2579 = vmatpush1.xpose.msra.mxu0 0.0
    %2580 = vmatprep.subr.mxu0 0.0
    %2581 = vmatpush1.xpose.msra.mxu0 0.0
    %2582 = vmatprep.subr.mxu0 0.0
    %2583 = vmatpush1.xpose.msra.mxu0 0.0
    %2584 = vmatprep.subr.mxu0 0.0
    %2585 = vmatpush1.xpose.msra.mxu0 0.0
    %2586 = vmatprep.subr.mxu0 0.0
    %2587 = vmatpush1.xpose.msra.mxu0 0.0
    %2588 = vmatprep.subr.mxu0 0.0
    %2589 = vmatpush1.xpose.msra.mxu0 0.0
    %2590 = vmatprep.subr.mxu0 0.0
    %2591 = vmatpush1.xpose.msra.mxu0 0.0
    %2592 = vmatprep.subr.mxu0 0.0
    %2593 = vmatpush1.xpose.msra.mxu0 0.0
    %2594 = vmatprep.subr.mxu0 0.0
    %2595 = vmatpush1.xpose.msra.mxu0 0.0
    %2596 = vmatprep.subr.mxu0 0.0
    %2597 = vmatpush1.xpose.msra.mxu0 0.0
    %2598 = vmatprep.subr.mxu0 0.0
    %2599 = vmatpush1.xpose.msra.mxu0 0.0
    %2600 = vmatprep.subr.mxu0 0.0
    %2601 = vmatpush1.xpose.msra.mxu0 0.0
    %2602 = vmatprep.subr.mxu0 0.0
    %2603 = vmatpush1.xpose.msra.mxu0 0.0
    %2604 = vmatprep.subr.mxu0 0.0
    %2605 = vmatpush1.xpose.msra.mxu0 0.0
    %2606 = vmatprep.subr.mxu0 0.0
    %2607 = vmatpush1.xpose.msra.mxu0 0.0
    %2608 = vmatprep.subr.mxu0 0.0
    %2609 = vmatpush1.xpose.msra.mxu0 0.0
    %2610 = vmatprep.subr.mxu0 0.0
    %2611 = vmatpush1.xpose.msra.mxu0 0.0
    %2612 = vmatprep.subr.mxu0 0.0
    %2613 = vmatpush1.xpose.msra.mxu0 0.0
    %2614 = vmatprep.subr.mxu0 0.0
    %2615 = vmatpush1.xpose.msra.mxu0 0.0
    %2616 = vmatprep.subr.mxu0 0.0
    %2617 = vmatpush1.xpose.msra.mxu0 0.0
    %2618 = vmatprep.subr.mxu0 0.0
    %2619 = vmatpush1.xpose.msra.mxu0 0.0
    %2620 = vmatprep.subr.mxu0 0.0
    %2621 = vmatpush1.xpose.msra.mxu0 0.0
    %2622 = vmatprep.mubr.f32.mxu0 0.0
    %2623 = vmatmul.mubr.f32.gmra.mrb[0].mxu0 %v2553
    %v2624 = vpop.f32.mrb[0].mxu0
    %v2625 = vadd.f32 0.0, %v2624
    %v2626 = vpop.f32.mrb[0].mxu0
    %2627 = vdwg.mxu0
    %v2628 = vsel %vm2019, %v2093, -inf
    %2629 = vmax.xlane.f32.xlu0 %v2628
    %v2630 = vpop.xlane.xlu0 %2629
    %v2631 = vsel %vm2019, %v2169, -inf
    %2632 = vmax.xlane.f32.xlu0 %v2631
    %v2633 = vpop.xlane.xlu0 %2632
    %v2634 = vsel %vm2019, %v2245, -inf
    %2635 = vmax.xlane.f32.xlu0 %v2634
    %v2636 = vpop.xlane.xlu0 %2635
    %v2637 = vsel %vm2019, %v2321, -inf
    %2638 = vmax.xlane.f32.xlu0 %v2637
    %v2639 = vpop.xlane.xlu0 %2638
    %v2640 = vsel %vm2019, %v2397, -inf
    %2641 = vmax.xlane.f32.xlu0 %v2640
    %v2642 = vpop.xlane.xlu0 %2641
    %v2643 = vsel %vm2019, %v2473, -inf
    %2644 = vmax.xlane.f32.xlu0 %v2643
    %v2645 = vpop.xlane.xlu0 %2644
    %v2646 = vsel %vm2019, %v2549, -inf
    %2647 = vmax.xlane.f32.xlu0 %v2646
    %v2648 = vpop.xlane.xlu0 %2647
    %v2649 = vsel %vm2019, %v2625, -inf
    %2650 = vmax.xlane.f32.xlu0 %v2649
    %v2651 = vpop.xlane.xlu0 %2650
    %v2652 = vsub.f32 %v2093, %v2630
    %v2653 = vsub.f32 %v2169, %v2633
    %v2654 = vsub.f32 %v2245, %v2636
    %v2655 = vsub.f32 %v2321, %v2639
    %v2656 = vsub.f32 %v2397, %v2642
    %v2657 = vsub.f32 %v2473, %v2645
    %v2658 = vsub.f32 %v2549, %v2648
    %v2659 = vsub.f32 %v2625, %v2651
    %v2660 = vmul.f32 %v2652, 1.442695
    %v2661 = vpow.pop %v2660
    %v2662 = vmul.f32 %v2653, 1.442695
    %v2663 = vpow.pop %v2662
    %v2664 = vmul.f32 %v2654, 1.442695
    %v2665 = vpow.pop %v2664
    %v2666 = vmul.f32 %v2655, 1.442695
    %v2667 = vpow.pop %v2666
    %v2668 = vmul.f32 %v2656, 1.442695
    %v2669 = vpow.pop %v2668
    %v2670 = vmul.f32 %v2657, 1.442695
    %v2671 = vpow.pop %v2670
    %v2672 = vmul.f32 %v2658, 1.442695
    %v2673 = vpow.pop %v2672
    %v2674 = vmul.f32 %v2659, 1.442695
    %v2675 = vpow.pop %v2674
    %v2676 = vsel %vm2019, %v2661, 0.0
    %2677 = vadd.xlane.f32.xlu0 %v2676
    %v2678 = vpop.xlane.xlu0 %2677
    %v2679 = vsel %vm2019, %v2663, 0.0
    %2680 = vadd.xlane.f32.xlu0 %v2679
    %v2681 = vpop.xlane.xlu0 %2680
    %v2682 = vsel %vm2019, %v2665, 0.0
    %2683 = vadd.xlane.f32.xlu0 %v2682
    %v2684 = vpop.xlane.xlu0 %2683
    %v2685 = vsel %vm2019, %v2667, 0.0
    %2686 = vadd.xlane.f32.xlu0 %v2685
    %v2687 = vpop.xlane.xlu0 %2686
    %v2688 = vsel %vm2019, %v2669, 0.0
    %2689 = vadd.xlane.f32.xlu0 %v2688
    %v2690 = vpop.xlane.xlu0 %2689
    %v2691 = vsel %vm2019, %v2671, 0.0
    %2692 = vadd.xlane.f32.xlu0 %v2691
    %v2693 = vpop.xlane.xlu0 %2692
    %v2694 = vsel %vm2019, %v2673, 0.0
    %2695 = vadd.xlane.f32.xlu0 %v2694
    %v2696 = vpop.xlane.xlu0 %2695
    %v2697 = vsel %vm2019, %v2675, 0.0
    %2698 = vadd.xlane.f32.xlu0 %v2697
    %v2699 = vpop.xlane.xlu0 %2698
    %v2700 = vrcp.pop %v2678
    %v2701 = vrcp.pop %v2681
    %v2702 = vrcp.pop %v2684
    %v2703 = vrcp.pop %v2687
    %v2704 = vrcp.pop %v2690
    %v2705 = vrcp.pop %v2693
    %v2706 = vrcp.pop %v2696
    %v2707 = vrcp.pop %v2699
    %v2708 = vmul.f32 %v2661, %v2700
    %v2709 = vmul.f32 %v2663, %v2701
    %v2710 = vmul.f32 %v2665, %v2702
    %v2711 = vmul.f32 %v2667, %v2703
    %v2712 = vmul.f32 %v2669, %v2704
    %v2713 = vmul.f32 %v2671, %v2705
    %v2714 = vmul.f32 %v2673, %v2706
    %v2715 = vmul.f32 %v2675, %v2707
    %v2716 = vsel %vm2019, %v2708, 0.0
    %v2717 = vsel %vm2019, %v2710, 0.0
    %v2718 = vadd.f32 %v2716, %v2717
    %v2719 = vsel %vm2019, %v2712, 0.0
    %v2720 = vadd.f32 %v2718, %v2719
    %v2721 = vsel %vm2019, %v2714, 0.0
    %v2722 = vadd.f32 %v2720, %v2721
    %v2723 = vsel %vm2019, %v2709, 0.0
    %v2724 = vsel %vm2019, %v2711, 0.0
    %v2725 = vadd.f32 %v2723, %v2724
    %v2726 = vsel %vm2019, %v2713, 0.0
    %v2727 = vadd.f32 %v2725, %v2726
    %v2728 = vsel %vm2019, %v2715, 0.0
    %v2729 = vadd.f32 %v2727, %v2728
    %v2730 = vmul.f32 %v2722, 0.25
    %v2731 = vmul.f32 %v2729, 0.25
    %2732 = vst.msk [vmem:[#allocation4] sm:$0xff] %vm2019, %v2730
    %2733 = vst.msk [vmem:[#allocation4 + $0x8] sm:$0xff] %vm2019, %v2731
    %v2735 = vsel %vm2019, %v2708, 0
    %2737 = vmatprep.subr.mxu0 0.0
    %2738 = vmatpush1.msra.mxu0 %v1526
    %2739 = vmatprep.subr.mxu0 0.0
    %2740 = vmatpush1.msra.mxu0 0.0
    %2741 = vmatprep.subr.mxu0 0.0
    %2742 = vmatpush1.msra.mxu0 0.0
    %2743 = vmatprep.subr.mxu0 0.0
    %2744 = vmatpush1.msra.mxu0 0.0
    %2745 = vmatprep.subr.mxu0 0.0
    %2746 = vmatpush1.msra.mxu0 0.0
    %2747 = vmatprep.subr.mxu0 0.0
    %2748 = vmatpush1.msra.mxu0 0.0
    %2749 = vmatprep.subr.mxu0 0.0
    %2750 = vmatpush1.msra.mxu0 0.0
    %2751 = vmatprep.subr.mxu0 0.0
    %2752 = vmatpush1.msra.mxu0 0.0
    %2753 = vmatprep.subr.mxu0 0.0
    %2754 = vmatpush1.msra.mxu0 0.0
    %2755 = vmatprep.subr.mxu0 0.0
    %2756 = vmatpush1.msra.mxu0 0.0
    %2757 = vmatprep.subr.mxu0 0.0
    %2758 = vmatpush1.msra.mxu0 0.0
    %2759 = vmatprep.subr.mxu0 0.0
    %2760 = vmatpush1.msra.mxu0 0.0
    %2761 = vmatprep.subr.mxu0 0.0
    %2762 = vmatpush1.msra.mxu0 0.0
    %2763 = vmatprep.subr.mxu0 0.0
    %2764 = vmatpush1.msra.mxu0 0.0
    %2765 = vmatprep.subr.mxu0 0.0
    %2766 = vmatpush1.msra.mxu0 0.0
    %2767 = vmatprep.subr.mxu0 0.0
    %2768 = vmatpush1.msra.mxu0 0.0
    %2769 = vmatprep.subr.mxu0 0.0
    %2770 = vmatpush1.msra.mxu0 0.0
    %2771 = vmatprep.subr.mxu0 0.0
    %2772 = vmatpush1.msra.mxu0 0.0
    %2773 = vmatprep.subr.mxu0 0.0
    %2774 = vmatpush1.msra.mxu0 0.0
    %2775 = vmatprep.subr.mxu0 0.0
    %2776 = vmatpush1.msra.mxu0 0.0
    %2777 = vmatprep.subr.mxu0 0.0
    %2778 = vmatpush1.msra.mxu0 0.0
    %2779 = vmatprep.subr.mxu0 0.0
    %2780 = vmatpush1.msra.mxu0 0.0
    %2781 = vmatprep.subr.mxu0 0.0
    %2782 = vmatpush1.msra.mxu0 0.0
    %2783 = vmatprep.subr.mxu0 0.0
    %2784 = vmatpush1.msra.mxu0 0.0
    %2785 = vmatprep.subr.mxu0 0.0
    %2786 = vmatpush1.msra.mxu0 0.0
    %2787 = vmatprep.subr.mxu0 0.0
    %2788 = vmatpush1.msra.mxu0 0.0
    %2789 = vmatprep.subr.mxu0 0.0
    %2790 = vmatpush1.msra.mxu0 0.0
    %2791 = vmatprep.subr.mxu0 0.0
    %2792 = vmatpush1.msra.mxu0 0.0
    %2793 = vmatprep.subr.mxu0 0.0
    %2794 = vmatpush1.msra.mxu0 0.0
    %2795 = vmatprep.subr.mxu0 0.0
    %2796 = vmatpush1.msra.mxu0 0.0
    %2797 = vmatprep.subr.mxu0 0.0
    %2798 = vmatpush1.msra.mxu0 0.0
    %2799 = vmatprep.subr.mxu0 0.0
    %2800 = vmatpush1.msra.mxu0 0.0
    %2801 = vmatprep.mubr.f32.mxu0 0.0
    %2802 = vmatmul.mubr.f32.gmra.mrb[0].mxu0 %v2735
    %v2803 = vpop.f32.mrb[0].mxu0
    %v2804 = vadd.f32 0.0, %v2803
    %v2805 = vpop.f32.mrb[0].mxu0
    %2806 = vdwg.mxu0
    %v2808 = vsel %vm2019, %v2709, 0
    %2810 = vmatprep.subr.mxu0 0.0
    %2811 = vmatpush1.msra.mxu0 %v1596
    %2812 = vmatprep.subr.mxu0 0.0
    %2813 = vmatpush1.msra.mxu0 0.0
    %2814 = vmatprep.subr.mxu0 0.0
    %2815 = vmatpush1.msra.mxu0 0.0
    %2816 = vmatprep.subr.mxu0 0.0
    %2817 = vmatpush1.msra.mxu0 0.0
    %2818 = vmatprep.subr.mxu0 0.0
    %2819 = vmatpush1.msra.mxu0 0.0
    %2820 = vmatprep.subr.mxu0 0.0
    %2821 = vmatpush1.msra.mxu0 0.0
    %2822 = vmatprep.subr.mxu0 0.0
    %2823 = vmatpush1.msra.mxu0 0.0
    %2824 = vmatprep.subr.mxu0 0.0
    %2825 = vmatpush1.msra.mxu0 0.0
    %2826 = vmatprep.subr.mxu0 0.0
    %2827 = vmatpush1.msra.mxu0 0.0
    %2828 = vmatprep.subr.mxu0 0.0
    %2829 = vmatpush1.msra.mxu0 0.0
    %2830 = vmatprep.subr.mxu0 0.0
    %2831 = vmatpush1.msra.mxu0 0.0
    %2832 = vmatprep.subr.mxu0 0.0
    %2833 = vmatpush1.msra.mxu0 0.0
    %2834 = vmatprep.subr.mxu0 0.0
    %2835 = vmatpush1.msra.mxu0 0.0
    %2836 = vmatprep.subr.mxu0 0.0
    %2837 = vmatpush1.msra.mxu0 0.0
    %2838 = vmatprep.subr.mxu0 0.0
    %2839 = vmatpush1.msra.mxu0 0.0
    %2840 = vmatprep.subr.mxu0 0.0
    %2841 = vmatpush1.msra.mxu0 0.0
    %2842 = vmatprep.subr.mxu0 0.0
    %2843 = vmatpush1.msra.mxu0 0.0
    %2844 = vmatprep.subr.mxu0 0.0
    %2845 = vmatpush1.msra.mxu0 0.0
    %2846 = vmatprep.subr.mxu0 0.0
    %2847 = vmatpush1.msra.mxu0 0.0
    %2848 = vmatprep.subr.mxu0 0.0
    %2849 = vmatpush1.msra.mxu0 0.0
    %2850 = vmatprep.subr.mxu0 0.0
    %2851 = vmatpush1.msra.mxu0 0.0
    %2852 = vmatprep.subr.mxu0 0.0
    %2853 = vmatpush1.msra.mxu0 0.0
    %2854 = vmatprep.subr.mxu0 0.0
    %2855 = vmatpush1.msra.mxu0 0.0
    %2856 = vmatprep.subr.mxu0 0.0
    %2857 = vmatpush1.msra.mxu0 0.0
    %2858 = vmatprep.subr.mxu0 0.0
    %2859 = vmatpush1.msra.mxu0 0.0
    %2860 = vmatprep.subr.mxu0 0.0
    %2861 = vmatpush1.msra.mxu0 0.0
    %2862 = vmatprep.subr.mxu0 0.0
    %2863 = vmatpush1.msra.mxu0 0.0
    %2864 = vmatprep.subr.mxu0 0.0
    %2865 = vmatpush1.msra.mxu0 0.0
    %2866 = vmatprep.subr.mxu0 0.0
    %2867 = vmatpush1.msra.mxu0 0.0
    %2868 = vmatprep.subr.mxu0 0.0
    %2869 = vmatpush1.msra.mxu0 0.0
    %2870 = vmatprep.subr.mxu0 0.0
    %2871 = vmatpush1.msra.mxu0 0.0
    %2872 = vmatprep.subr.mxu0 0.0
    %2873 = vmatpush1.msra.mxu0 0.0
    %2874 = vmatprep.mubr.f32.mxu0 0.0
    %2875 = vmatmul.mubr.f32.gmra.mrb[0].mxu0 %v2808
    %v2876 = vpop.f32.mrb[0].mxu0
    %v2877 = vadd.f32 0.0, %v2876
    %v2878 = vpop.f32.mrb[0].mxu0
    %2879 = vdwg.mxu0
    %v2881 = vsel %vm2019, %v2710, 0
    %2883 = vmatprep.subr.mxu0 0.0
    %2884 = vmatpush1.msra.mxu0 %v1666
    %2885 = vmatprep.subr.mxu0 0.0
    %2886 = vmatpush1.msra.mxu0 0.0
    %2887 = vmatprep.subr.mxu0 0.0
    %2888 = vmatpush1.msra.mxu0 0.0
    %2889 = vmatprep.subr.mxu0 0.0
    %2890 = vmatpush1.msra.mxu0 0.0
    %2891 = vmatprep.subr.mxu0 0.0
    %2892 = vmatpush1.msra.mxu0 0.0
    %2893 = vmatprep.subr.mxu0 0.0
    %2894 = vmatpush1.msra.mxu0 0.0
    %2895 = vmatprep.subr.mxu0 0.0
    %2896 = vmatpush1.msra.mxu0 0.0
    %2897 = vmatprep.subr.mxu0 0.0
    %2898 = vmatpush1.msra.mxu0 0.0
    %2899 = vmatprep.subr.mxu0 0.0
    %2900 = vmatpush1.msra.mxu0 0.0
    %2901 = vmatprep.subr.mxu0 0.0
    %2902 = vmatpush1.msra.mxu0 0.0
    %2903 = vmatprep.subr.mxu0 0.0
    %2904 = vmatpush1.msra.mxu0 0.0
    %2905 = vmatprep.subr.mxu0 0.0
    %2906 = vmatpush1.msra.mxu0 0.0
    %2907 = vmatprep.subr.mxu0 0.0
    %2908 = vmatpush1.msra.mxu0 0.0
    %2909 = vmatprep.subr.mxu0 0.0
    %2910 = vmatpush1.msra.mxu0 0.0
    %2911 = vmatprep.subr.mxu0 0.0
    %2912 = vmatpush1.msra.mxu0 0.0
    %2913 = vmatprep.subr.mxu0 0.0
    %2914 = vmatpush1.msra.mxu0 0.0
    %2915 = vmatprep.subr.mxu0 0.0
    %2916 = vmatpush1.msra.mxu0 0.0
    %2917 = vmatprep.subr.mxu0 0.0
    %2918 = vmatpush1.msra.mxu0 0.0
    %2919 = vmatprep.subr.mxu0 0.0
    %2920 = vmatpush1.msra.mxu0 0.0
    %2921 = vmatprep.subr.mxu0 0.0
    %2922 = vmatpush1.msra.mxu0 0.0
    %2923 = vmatprep.subr.mxu0 0.0
    %2924 = vmatpush1.msra.mxu0 0.0
    %2925 = vmatprep.subr.mxu0 0.0
    %2926 = vmatpush1.msra.mxu0 0.0
    %2927 = vmatprep.subr.mxu0 0.0
    %2928 = vmatpush1.msra.mxu0 0.0
    %2929 = vmatprep.subr.mxu0 0.0
    %2930 = vmatpush1.msra.mxu0 0.0
    %2931 = vmatprep.subr.mxu0 0.0
    %2932 = vmatpush1.msra.mxu0 0.0
    %2933 = vmatprep.subr.mxu0 0.0
    %2934 = vmatpush1.msra.mxu0 0.0
    %2935 = vmatprep.subr.mxu0 0.0
    %2936 = vmatpush1.msra.mxu0 0.0
    %2937 = vmatprep.subr.mxu0 0.0
    %2938 = vmatpush1.msra.mxu0 0.0
    %2939 = vmatprep.subr.mxu0 0.0
    %2940 = vmatpush1.msra.mxu0 0.0
    %2941 = vmatprep.subr.mxu0 0.0
    %2942 = vmatpush1.msra.mxu0 0.0
    %2943 = vmatprep.subr.mxu0 0.0
    %2944 = vmatpush1.msra.mxu0 0.0
    %2945 = vmatprep.subr.mxu0 0.0
    %2946 = vmatpush1.msra.mxu0 0.0
    %2947 = vmatprep.mubr.f32.mxu0 0.0
    %2948 = vmatmul.mubr.f32.gmra.mrb[0].mxu0 %v2881
    %v2949 = vpop.f32.mrb[0].mxu0
    %v2950 = vadd.f32 0.0, %v2949
    %v2951 = vpop.f32.mrb[0].mxu0
    %2952 = vdwg.mxu0
    %v2954 = vsel %vm2019, %v2711, 0
    %2956 = vmatprep.subr.mxu0 0.0
    %2957 = vmatpush1.msra.mxu0 %v1736
    %2958 = vmatprep.subr.mxu0 0.0
    %2959 = vmatpush1.msra.mxu0 0.0
    %2960 = vmatprep.subr.mxu0 0.0
    %2961 = vmatpush1.msra.mxu0 0.0
    %2962 = vmatprep.subr.mxu0 0.0
    %2963 = vmatpush1.msra.mxu0 0.0
    %2964 = vmatprep.subr.mxu0 0.0
    %2965 = vmatpush1.msra.mxu0 0.0
    %2966 = vmatprep.subr.mxu0 0.0
    %2967 = vmatpush1.msra.mxu0 0.0
    %2968 = vmatprep.subr.mxu0 0.0
    %2969 = vmatpush1.msra.mxu0 0.0
    %2970 = vmatprep.subr.mxu0 0.0
    %2971 = vmatpush1.msra.mxu0 0.0
    %2972 = vmatprep.subr.mxu0 0.0
    %2973 = vmatpush1.msra.mxu0 0.0
    %2974 = vmatprep.subr.mxu0 0.0
    %2975 = vmatpush1.msra.mxu0 0.0
    %2976 = vmatprep.subr.mxu0 0.0
    %2977 = vmatpush1.msra.mxu0 0.0
    %2978 = vmatprep.subr.mxu0 0.0
    %2979 = vmatpush1.msra.mxu0 0.0
    %2980 = vmatprep.subr.mxu0 0.0
    %2981 = vmatpush1.msra.mxu0 0.0
    %2982 = vmatprep.subr.mxu0 0.0
    %2983 = vmatpush1.msra.mxu0 0.0
    %2984 = vmatprep.subr.mxu0 0.0
    %2985 = vmatpush1.msra.mxu0 0.0
    %2986 = vmatprep.subr.mxu0 0.0
    %2987 = vmatpush1.msra.mxu0 0.0
    %2988 = vmatprep.subr.mxu0 0.0
    %2989 = vmatpush1.msra.mxu0 0.0
    %2990 = vmatprep.subr.mxu0 0.0
    %2991 = vmatpush1.msra.mxu0 0.0
    %2992 = vmatprep.subr.mxu0 0.0
    %2993 = vmatpush1.msra.mxu0 0.0
    %2994 = vmatprep.subr.mxu0 0.0
    %2995 = vmatpush1.msra.mxu0 0.0
    %2996 = vmatprep.subr.mxu0 0.0
    %2997 = vmatpush1.msra.mxu0 0.0
    %2998 = vmatprep.subr.mxu0 0.0
    %2999 = vmatpush1.msra.mxu0 0.0
    %3000 = vmatprep.subr.mxu0 0.0
    %3001 = vmatpush1.msra.mxu0 0.0
    %3002 = vmatprep.subr.mxu0 0.0
    %3003 = vmatpush1.msra.mxu0 0.0
    %3004 = vmatprep.subr.mxu0 0.0
    %3005 = vmatpush1.msra.mxu0 0.0
    %3006 = vmatprep.subr.mxu0 0.0
    %3007 = vmatpush1.msra.mxu0 0.0
    %3008 = vmatprep.subr.mxu0 0.0
    %3009 = vmatpush1.msra.mxu0 0.0
    %3010 = vmatprep.subr.mxu0 0.0
    %3011 = vmatpush1.msra.mxu0 0.0
    %3012 = vmatprep.subr.mxu0 0.0
    %3013 = vmatpush1.msra.mxu0 0.0
    %3014 = vmatprep.subr.mxu0 0.0
    %3015 = vmatpush1.msra.mxu0 0.0
    %3016 = vmatprep.subr.mxu0 0.0
    %3017 = vmatpush1.msra.mxu0 0.0
    %3018 = vmatprep.subr.mxu0 0.0
    %3019 = vmatpush1.msra.mxu0 0.0
    %3020 = vmatprep.mubr.f32.mxu0 0.0
    %3021 = vmatmul.mubr.f32.gmra.mrb[0].mxu0 %v2954
    %v3022 = vpop.f32.mrb[0].mxu0
    %v3023 = vadd.f32 0.0, %v3022
    %v3024 = vpop.f32.mrb[0].mxu0
    %3025 = vdwg.mxu0
    %v3027 = vsel %vm2019, %v2712, 0
    %3029 = vmatprep.subr.mxu0 0.0
    %3030 = vmatpush1.msra.mxu0 %v1806
    %3031 = vmatprep.subr.mxu0 0.0
    %3032 = vmatpush1.msra.mxu0 0.0
    %3033 = vmatprep.subr.mxu0 0.0
    %3034 = vmatpush1.msra.mxu0 0.0
    %3035 = vmatprep.subr.mxu0 0.0
    %3036 = vmatpush1.msra.mxu0 0.0
    %3037 = vmatprep.subr.mxu0 0.0
    %3038 = vmatpush1.msra.mxu0 0.0
    %3039 = vmatprep.subr.mxu0 0.0
    %3040 = vmatpush1.msra.mxu0 0.0
    %3041 = vmatprep.subr.mxu0 0.0
    %3042 = vmatpush1.msra.mxu0 0.0
    %3043 = vmatprep.subr.mxu0 0.0
    %3044 = vmatpush1.msra.mxu0 0.0
    %3045 = vmatprep.subr.mxu0 0.0
    %3046 = vmatpush1.msra.mxu0 0.0
    %3047 = vmatprep.subr.mxu0 0.0
    %3048 = vmatpush1.msra.mxu0 0.0
    %3049 = vmatprep.subr.mxu0 0.0
    %3050 = vmatpush1.msra.mxu0 0.0
    %3051 = vmatprep.subr.mxu0 0.0
    %3052 = vmatpush1.msra.mxu0 0.0
    %3053 = vmatprep.subr.mxu0 0.0
    %3054 = vmatpush1.msra.mxu0 0.0
    %3055 = vmatprep.subr.mxu0 0.0
    %3056 = vmatpush1.msra.mxu0 0.0
    %3057 = vmatprep.subr.mxu0 0.0
    %3058 = vmatpush1.msra.mxu0 0.0
    %3059 = vmatprep.subr.mxu0 0.0
    %3060 = vmatpush1.msra.mxu0 0.0
    %3061 = vmatprep.subr.mxu0 0.0
    %3062 = vmatpush1.msra.mxu0 0.0
    %3063 = vmatprep.subr.mxu0 0.0
    %3064 = vmatpush1.msra.mxu0 0.0
    %3065 = vmatprep.subr.mxu0 0.0
    %3066 = vmatpush1.msra.mxu0 0.0
    %3067 = vmatprep.subr.mxu0 0.0
    %3068 = vmatpush1.msra.mxu0 0.0
    %3069 = vmatprep.subr.mxu0 0.0
    %3070 = vmatpush1.msra.mxu0 0.0
    %3071 = vmatprep.subr.mxu0 0.0
    %3072 = vmatpush1.msra.mxu0 0.0
    %3073 = vmatprep.subr.mxu0 0.0
    %3074 = vmatpush1.msra.mxu0 0.0
    %3075 = vmatprep.subr.mxu0 0.0
    %3076 = vmatpush1.msra.mxu0 0.0
    %3077 = vmatprep.subr.mxu0 0.0
    %3078 = vmatpush1.msra.mxu0 0.0
    %3079 = vmatprep.subr.mxu0 0.0
    %3080 = vmatpush1.msra.mxu0 0.0
    %3081 = vmatprep.subr.mxu0 0.0
    %3082 = vmatpush1.msra.mxu0 0.0
    %3083 = vmatprep.subr.mxu0 0.0
    %3084 = vmatpush1.msra.mxu0 0.0
    %3085 = vmatprep.subr.mxu0 0.0
    %3086 = vmatpush1.msra.mxu0 0.0
    %3087 = vmatprep.subr.mxu0 0.0
    %3088 = vmatpush1.msra.mxu0 0.0
    %3089 = vmatprep.subr.mxu0 0.0
    %3090 = vmatpush1.msra.mxu0 0.0
    %3091 = vmatprep.subr.mxu0 0.0
    %3092 = vmatpush1.msra.mxu0 0.0
    %3093 = vmatprep.mubr.f32.mxu0 0.0
    %3094 = vmatmul.mubr.f32.gmra.mrb[0].mxu0 %v3027
    %v3095 = vpop.f32.mrb[0].mxu0
    %v3096 = vadd.f32 0.0, %v3095
    %v3097 = vpop.f32.mrb[0].mxu0
    %3098 = vdwg.mxu0
    %v3100 = vsel %vm2019, %v2713, 0
    %3102 = vmatprep.subr.mxu0 0.0
    %3103 = vmatpush1.msra.mxu0 %v1876
    %3104 = vmatprep.subr.mxu0 0.0
    %3105 = vmatpush1.msra.mxu0 0.0
    %3106 = vmatprep.subr.mxu0 0.0
    %3107 = vmatpush1.msra.mxu0 0.0
    %3108 = vmatprep.subr.mxu0 0.0
    %3109 = vmatpush1.msra.mxu0 0.0
    %3110 = vmatprep.subr.mxu0 0.0
    %3111 = vmatpush1.msra.mxu0 0.0
    %3112 = vmatprep.subr.mxu0 0.0
    %3113 = vmatpush1.msra.mxu0 0.0
    %3114 = vmatprep.subr.mxu0 0.0
    %3115 = vmatpush1.msra.mxu0 0.0
    %3116 = vmatprep.subr.mxu0 0.0
    %3117 = vmatpush1.msra.mxu0 0.0
    %3118 = vmatprep.subr.mxu0 0.0
    %3119 = vmatpush1.msra.mxu0 0.0
    %3120 = vmatprep.subr.mxu0 0.0
    %3121 = vmatpush1.msra.mxu0 0.0
    %3122 = vmatprep.subr.mxu0 0.0
    %3123 = vmatpush1.msra.mxu0 0.0
    %3124 = vmatprep.subr.mxu0 0.0
    %3125 = vmatpush1.msra.mxu0 0.0
    %3126 = vmatprep.subr.mxu0 0.0
    %3127 = vmatpush1.msra.mxu0 0.0
    %3128 = vmatprep.subr.mxu0 0.0
    %3129 = vmatpush1.msra.mxu0 0.0
    %3130 = vmatprep.subr.mxu0 0.0
    %3131 = vmatpush1.msra.mxu0 0.0
    %3132 = vmatprep.subr.mxu0 0.0
    %3133 = vmatpush1.msra.mxu0 0.0
    %3134 = vmatprep.subr.mxu0 0.0
    %3135 = vmatpush1.msra.mxu0 0.0
    %3136 = vmatprep.subr.mxu0 0.0
    %3137 = vmatpush1.msra.mxu0 0.0
    %3138 = vmatprep.subr.mxu0 0.0
    %3139 = vmatpush1.msra.mxu0 0.0
    %3140 = vmatprep.subr.mxu0 0.0
    %3141 = vmatpush1.msra.mxu0 0.0
    %3142 = vmatprep.subr.mxu0 0.0
    %3143 = vmatpush1.msra.mxu0 0.0
    %3144 = vmatprep.subr.mxu0 0.0
    %3145 = vmatpush1.msra.mxu0 0.0
    %3146 = vmatprep.subr.mxu0 0.0
    %3147 = vmatpush1.msra.mxu0 0.0
    %3148 = vmatprep.subr.mxu0 0.0
    %3149 = vmatpush1.msra.mxu0 0.0
    %3150 = vmatprep.subr.mxu0 0.0
    %3151 = vmatpush1.msra.mxu0 0.0
    %3152 = vmatprep.subr.mxu0 0.0
    %3153 = vmatpush1.msra.mxu0 0.0
    %3154 = vmatprep.subr.mxu0 0.0
    %3155 = vmatpush1.msra.mxu0 0.0
    %3156 = vmatprep.subr.mxu0 0.0
    %3157 = vmatpush1.msra.mxu0 0.0
    %3158 = vmatprep.subr.mxu0 0.0
    %3159 = vmatpush1.msra.mxu0 0.0
    %3160 = vmatprep.subr.mxu0 0.0
    %3161 = vmatpush1.msra.mxu0 0.0
    %3162 = vmatprep.subr.mxu0 0.0
    %3163 = vmatpush1.msra.mxu0 0.0
    %3164 = vmatprep.subr.mxu0 0.0
    %3165 = vmatpush1.msra.mxu0 0.0
    %3166 = vmatprep.mubr.f32.mxu0 0.0
    %3167 = vmatmul.mubr.f32.gmra.mrb[0].mxu0 %v3100
    %v3168 = vpop.f32.mrb[0].mxu0
    %v3169 = vadd.f32 0.0, %v3168
    %v3170 = vpop.f32.mrb[0].mxu0
    %3171 = vdwg.mxu0
    %v3173 = vsel %vm2019, %v2714, 0
    %3175 = vmatprep.subr.mxu0 0.0
    %3176 = vmatpush1.msra.mxu0 %v1946
    %3177 = vmatprep.subr.mxu0 0.0
    %3178 = vmatpush1.msra.mxu0 0.0
    %3179 = vmatprep.subr.mxu0 0.0
    %3180 = vmatpush1.msra.mxu0 0.0
    %3181 = vmatprep.subr.mxu0 0.0
    %3182 = vmatpush1.msra.mxu0 0.0
    %3183 = vmatprep.subr.mxu0 0.0
    %3184 = vmatpush1.msra.mxu0 0.0
    %3185 = vmatprep.subr.mxu0 0.0
    %3186 = vmatpush1.msra.mxu0 0.0
    %3187 = vmatprep.subr.mxu0 0.0
    %3188 = vmatpush1.msra.mxu0 0.0
    %3189 = vmatprep.subr.mxu0 0.0
    %3190 = vmatpush1.msra.mxu0 0.0
    %3191 = vmatprep.subr.mxu0 0.0
    %3192 = vmatpush1.msra.mxu0 0.0
    %3193 = vmatprep.subr.mxu0 0.0
    %3194 = vmatpush1.msra.mxu0 0.0
    %3195 = vmatprep.subr.mxu0 0.0
    %3196 = vmatpush1.msra.mxu0 0.0
    %3197 = vmatprep.subr.mxu0 0.0
    %3198 = vmatpush1.msra.mxu0 0.0
    %3199 = vmatprep.subr.mxu0 0.0
    %3200 = vmatpush1.msra.mxu0 0.0
    %3201 = vmatprep.subr.mxu0 0.0
    %3202 = vmatpush1.msra.mxu0 0.0
    %3203 = vmatprep.subr.mxu0 0.0
    %3204 = vmatpush1.msra.mxu0 0.0
    %3205 = vmatprep.subr.mxu0 0.0
    %3206 = vmatpush1.msra.mxu0 0.0
    %3207 = vmatprep.subr.mxu0 0.0
    %3208 = vmatpush1.msra.mxu0 0.0
    %3209 = vmatprep.subr.mxu0 0.0
    %3210 = vmatpush1.msra.mxu0 0.0
    %3211 = vmatprep.subr.mxu0 0.0
    %3212 = vmatpush1.msra.mxu0 0.0
    %3213 = vmatprep.subr.mxu0 0.0
    %3214 = vmatpush1.msra.mxu0 0.0
    %3215 = vmatprep.subr.mxu0 0.0
    %3216 = vmatpush1.msra.mxu0 0.0
    %3217 = vmatprep.subr.mxu0 0.0
    %3218 = vmatpush1.msra.mxu0 0.0
    %3219 = vmatprep.subr.mxu0 0.0
    %3220 = vmatpush1.msra.mxu0 0.0
    %3221 = vmatprep.subr.mxu0 0.0
    %3222 = vmatpush1.msra.mxu0 0.0
    %3223 = vmatprep.subr.mxu0 0.0
    %3224 = vmatpush1.msra.mxu0 0.0
    %3225 = vmatprep.subr.mxu0 0.0
    %3226 = vmatpush1.msra.mxu0 0.0
    %3227 = vmatprep.subr.mxu0 0.0
    %3228 = vmatpush1.msra.mxu0 0.0
    %3229 = vmatprep.subr.mxu0 0.0
    %3230 = vmatpush1.msra.mxu0 0.0
    %3231 = vmatprep.subr.mxu0 0.0
    %3232 = vmatpush1.msra.mxu0 0.0
    %3233 = vmatprep.subr.mxu0 0.0
    %3234 = vmatpush1.msra.mxu0 0.0
    %3235 = vmatprep.subr.mxu0 0.0
    %3236 = vmatpush1.msra.mxu0 0.0
    %3237 = vmatprep.subr.mxu0 0.0
    %3238 = vmatpush1.msra.mxu0 0.0
    %3239 = vmatprep.mubr.f32.mxu0 0.0
    %3240 = vmatmul.mubr.f32.gmra.mrb[0].mxu0 %v3173
    %v3241 = vpop.f32.mrb[0].mxu0
    %v3242 = vadd.f32 0.0, %v3241
    %v3243 = vpop.f32.mrb[0].mxu0
    %3244 = vdwg.mxu0
    %v3246 = vsel %vm2019, %v2715, 0
    %3248 = vmatprep.subr.mxu0 0.0
    %3249 = vmatpush1.msra.mxu0 %v2016
    %3250 = vmatprep.subr.mxu0 0.0
    %3251 = vmatpush1.msra.mxu0 0.0
    %3252 = vmatprep.subr.mxu0 0.0
    %3253 = vmatpush1.msra.mxu0 0.0
    %3254 = vmatprep.subr.mxu0 0.0
    %3255 = vmatpush1.msra.mxu0 0.0
    %3256 = vmatprep.subr.mxu0 0.0
    %3257 = vmatpush1.msra.mxu0 0.0
    %3258 = vmatprep.subr.mxu0 0.0
    %3259 = vmatpush1.msra.mxu0 0.0
    %3260 = vmatprep.subr.mxu0 0.0
    %3261 = vmatpush1.msra.mxu0 0.0
    %3262 = vmatprep.subr.mxu0 0.0
    %3263 = vmatpush1.msra.mxu0 0.0
    %3264 = vmatprep.subr.mxu0 0.0
    %3265 = vmatpush1.msra.mxu0 0.0
    %3266 = vmatprep.subr.mxu0 0.0
    %3267 = vmatpush1.msra.mxu0 0.0
    %3268 = vmatprep.subr.mxu0 0.0
    %3269 = vmatpush1.msra.mxu0 0.0
    %3270 = vmatprep.subr.mxu0 0.0
    %3271 = vmatpush1.msra.mxu0 0.0
    %3272 = vmatprep.subr.mxu0 0.0
    %3273 = vmatpush1.msra.mxu0 0.0
    %3274 = vmatprep.subr.mxu0 0.0
    %3275 = vmatpush1.msra.mxu0 0.0
    %3276 = vmatprep.subr.mxu0 0.0
    %3277 = vmatpush1.msra.mxu0 0.0
    %3278 = vmatprep.subr.mxu0 0.0
    %3279 = vmatpush1.msra.mxu0 0.0
    %3280 = vmatprep.subr.mxu0 0.0
    %3281 = vmatpush1.msra.mxu0 0.0
    %3282 = vmatprep.subr.mxu0 0.0
    %3283 = vmatpush1.msra.mxu0 0.0
    %3284 = vmatprep.subr.mxu0 0.0
    %3285 = vmatpush1.msra.mxu0 0.0
    %3286 = vmatprep.subr.mxu0 0.0
    %3287 = vmatpush1.msra.mxu0 0.0
    %3288 = vmatprep.subr.mxu0 0.0
    %3289 = vmatpush1.msra.mxu0 0.0
    %3290 = vmatprep.subr.mxu0 0.0
    %3291 = vmatpush1.msra.mxu0 0.0
    %3292 = vmatprep.subr.mxu0 0.0
    %3293 = vmatpush1.msra.mxu0 0.0
    %3294 = vmatprep.subr.mxu0 0.0
    %3295 = vmatpush1.msra.mxu0 0.0
    %3296 = vmatprep.subr.mxu0 0.0
    %3297 = vmatpush1.msra.mxu0 0.0
    %3298 = vmatprep.subr.mxu0 0.0
    %3299 = vmatpush1.msra.mxu0 0.0
    %3300 = vmatprep.subr.mxu0 0.0
    %3301 = vmatpush1.msra.mxu0 0.0
    %3302 = vmatprep.subr.mxu0 0.0
    %3303 = vmatpush1.msra.mxu0 0.0
    %3304 = vmatprep.subr.mxu0 0.0
    %3305 = vmatpush1.msra.mxu0 0.0
    %3306 = vmatprep.subr.mxu0 0.0
    %3307 = vmatpush1.msra.mxu0 0.0
    %3308 = vmatprep.subr.mxu0 0.0
    %3309 = vmatpush1.msra.mxu0 0.0
    %3310 = vmatprep.subr.mxu0 0.0
    %3311 = vmatpush1.msra.mxu0 0.0
    %3312 = vmatprep.mubr.f32.mxu0 0.0
    %3313 = vmatmul.mubr.f32.gmra.mrb[0].mxu0 %v3246
    %v3314 = vpop.f32.mrb[0].mxu0
    %v3315 = vadd.f32 0.0, %v3314
    %v3316 = vpop.f32.mrb[0].mxu0
    %3317 = vdwg.mxu0
    %v3318 = vld [vmem:[%s7] sm:$0xff]
    %v3319 = vld [vmem:[%s7 + $0x8] sm:$0xff]
    %v3320 = vld [vmem:[%s7 + $0x10] sm:$0xff]
    %v3321 = vld [vmem:[%s7 + $0x18] sm:$0xff]
    %v3322 = vld [vmem:[%s7 + $0x20] sm:$0xff]
    %v3323 = vld [vmem:[%s7 + $0x28] sm:$0xff]
    %v3324 = vld [vmem:[%s7 + $0x30] sm:$0xff]
    %v3325 = vld [vmem:[%s7 + $0x38] sm:$0xff]
    %v3327 = vsel %vm2019, %v2804, 0
    %3329 = vmatprep.subr.mxu0 0.0
    %3330 = vmatpush1.msra.mxu0 %v3318
    %3331 = vmatprep.subr.mxu0 0.0
    %3332 = vmatpush1.msra.mxu0 0.0
    %3333 = vmatprep.subr.mxu0 0.0
    %3334 = vmatpush1.msra.mxu0 0.0
    %3335 = vmatprep.subr.mxu0 0.0
    %3336 = vmatpush1.msra.mxu0 0.0
    %3337 = vmatprep.subr.mxu0 0.0
    %3338 = vmatpush1.msra.mxu0 0.0
    %3339 = vmatprep.subr.mxu0 0.0
    %3340 = vmatpush1.msra.mxu0 0.0
    %3341 = vmatprep.subr.mxu0 0.0
    %3342 = vmatpush1.msra.mxu0 0.0
    %3343 = vmatprep.subr.mxu0 0.0
    %3344 = vmatpush1.msra.mxu0 0.0
    %3345 = vmatprep.subr.mxu0 0.0
    %3346 = vmatpush1.msra.mxu0 0.0
    %3347 = vmatprep.subr.mxu0 0.0
    %3348 = vmatpush1.msra.mxu0 0.0
    %3349 = vmatprep.subr.mxu0 0.0
    %3350 = vmatpush1.msra.mxu0 0.0
    %3351 = vmatprep.subr.mxu0 0.0
    %3352 = vmatpush1.msra.mxu0 0.0
    %3353 = vmatprep.subr.mxu0 0.0
    %3354 = vmatpush1.msra.mxu0 0.0
    %3355 = vmatprep.subr.mxu0 0.0
    %3356 = vmatpush1.msra.mxu0 0.0
    %3357 = vmatprep.subr.mxu0 0.0
    %3358 = vmatpush1.msra.mxu0 0.0
    %3359 = vmatprep.subr.mxu0 0.0
    %3360 = vmatpush1.msra.mxu0 0.0
    %3361 = vmatprep.subr.mxu0 0.0
    %3362 = vmatpush1.msra.mxu0 0.0
    %3363 = vmatprep.subr.mxu0 0.0
    %3364 = vmatpush1.msra.mxu0 0.0
    %3365 = vmatprep.subr.mxu0 0.0
    %3366 = vmatpush1.msra.mxu0 0.0
    %3367 = vmatprep.subr.mxu0 0.0
    %3368 = vmatpush1.msra.mxu0 0.0
    %3369 = vmatprep.subr.mxu0 0.0
    %3370 = vmatpush1.msra.mxu0 0.0
    %3371 = vmatprep.subr.mxu0 0.0
    %3372 = vmatpush1.msra.mxu0 0.0
    %3373 = vmatprep.subr.mxu0 0.0
    %3374 = vmatpush1.msra.mxu0 0.0
    %3375 = vmatprep.subr.mxu0 0.0
    %3376 = vmatpush1.msra.mxu0 0.0
    %3377 = vmatprep.subr.mxu0 0.0
    %3378 = vmatpush1.msra.mxu0 0.0
    %3379 = vmatprep.subr.mxu0 0.0
    %3380 = vmatpush1.msra.mxu0 0.0
    %3381 = vmatprep.subr.mxu0 0.0
    %3382 = vmatpush1.msra.mxu0 0.0
    %3383 = vmatprep.subr.mxu0 0.0
    %3384 = vmatpush1.msra.mxu0 0.0
    %3385 = vmatprep.subr.mxu0 0.0
    %3386 = vmatpush1.msra.mxu0 0.0
    %3387 = vmatprep.subr.mxu0 0.0
    %3388 = vmatpush1.msra.mxu0 0.0
    %3389 = vmatprep.subr.mxu0 0.0
    %3390 = vmatpush1.msra.mxu0 0.0
    %3391 = vmatprep.subr.mxu0 0.0
    %3392 = vmatpush1.msra.mxu0 0.0
    %3393 = vmatprep.mubr.f32.mxu0 0.0
    %3394 = vmatmul.mubr.f32.gmra.mrb[0].mxu0 %v3327
    %v3395 = vpop.f32.mrb[0].mxu0
    %v3396 = vadd.f32 0.0, %v3395
    %v3397 = vpop.f32.mrb[0].mxu0
    %3398 = vdwg.mxu0
    %v3400 = vsel %vm2019, %v2877, 0
    %3402 = vmatprep.subr.mxu0 0.0
    %3403 = vmatpush1.msra.mxu0 %v3319
    %3404 = vmatprep.subr.mxu0 0.0
    %3405 = vmatpush1.msra.mxu0 0.0
    %3406 = vmatprep.subr.mxu0 0.0
    %3407 = vmatpush1.msra.mxu0 0.0
    %3408 = vmatprep.subr.mxu0 0.0
    %3409 = vmatpush1.msra.mxu0 0.0
    %3410 = vmatprep.subr.mxu0 0.0
    %3411 = vmatpush1.msra.mxu0 0.0
    %3412 = vmatprep.subr.mxu0 0.0
    %3413 = vmatpush1.msra.mxu0 0.0
    %3414 = vmatprep.subr.mxu0 0.0
    %3415 = vmatpush1.msra.mxu0 0.0
    %3416 = vmatprep.subr.mxu0 0.0
    %3417 = vmatpush1.msra.mxu0 0.0
    %3418 = vmatprep.subr.mxu0 0.0
    %3419 = vmatpush1.msra.mxu0 0.0
    %3420 = vmatprep.subr.mxu0 0.0
    %3421 = vmatpush1.msra.mxu0 0.0
    %3422 = vmatprep.subr.mxu0 0.0
    %3423 = vmatpush1.msra.mxu0 0.0
    %3424 = vmatprep.subr.mxu0 0.0
    %3425 = vmatpush1.msra.mxu0 0.0
    %3426 = vmatprep.subr.mxu0 0.0
    %3427 = vmatpush1.msra.mxu0 0.0
    %3428 = vmatprep.subr.mxu0 0.0
    %3429 = vmatpush1.msra.mxu0 0.0
    %3430 = vmatprep.subr.mxu0 0.0
    %3431 = vmatpush1.msra.mxu0 0.0
    %3432 = vmatprep.subr.mxu0 0.0
    %3433 = vmatpush1.msra.mxu0 0.0
    %3434 = vmatprep.subr.mxu0 0.0
    %3435 = vmatpush1.msra.mxu0 0.0
    %3436 = vmatprep.subr.mxu0 0.0
    %3437 = vmatpush1.msra.mxu0 0.0
    %3438 = vmatprep.subr.mxu0 0.0
    %3439 = vmatpush1.msra.mxu0 0.0
    %3440 = vmatprep.subr.mxu0 0.0
    %3441 = vmatpush1.msra.mxu0 0.0
    %3442 = vmatprep.subr.mxu0 0.0
    %3443 = vmatpush1.msra.mxu0 0.0
    %3444 = vmatprep.subr.mxu0 0.0
    %3445 = vmatpush1.msra.mxu0 0.0
    %3446 = vmatprep.subr.mxu0 0.0
    %3447 = vmatpush1.msra.mxu0 0.0
    %3448 = vmatprep.subr.mxu0 0.0
    %3449 = vmatpush1.msra.mxu0 0.0
    %3450 = vmatprep.subr.mxu0 0.0
    %3451 = vmatpush1.msra.mxu0 0.0
    %3452 = vmatprep.subr.mxu0 0.0
    %3453 = vmatpush1.msra.mxu0 0.0
    %3454 = vmatprep.subr.mxu0 0.0
    %3455 = vmatpush1.msra.mxu0 0.0
    %3456 = vmatprep.subr.mxu0 0.0
    %3457 = vmatpush1.msra.mxu0 0.0
    %3458 = vmatprep.subr.mxu0 0.0
    %3459 = vmatpush1.msra.mxu0 0.0
    %3460 = vmatprep.subr.mxu0 0.0
    %3461 = vmatpush1.msra.mxu0 0.0
    %3462 = vmatprep.subr.mxu0 0.0
    %3463 = vmatpush1.msra.mxu0 0.0
    %3464 = vmatprep.subr.mxu0 0.0
    %3465 = vmatpush1.msra.mxu0 0.0
    %3466 = vmatprep.mubr.f32.mxu0 0.0
    %3467 = vmatmul.mubr.f32.gmra.mrb[0].mxu0 %v3400
    %v3468 = vpop.f32.mrb[0].mxu0
    %v3469 = vadd.f32 0.0, %v3468
    %v3470 = vpop.f32.mrb[0].mxu0
    %3471 = vdwg.mxu0
    %v3473 = vsel %vm2019, %v2950, 0
    %3475 = vmatprep.subr.mxu0 0.0
    %3476 = vmatpush1.msra.mxu0 %v3320
    %3477 = vmatprep.subr.mxu0 0.0
    %3478 = vmatpush1.msra.mxu0 0.0
    %3479 = vmatprep.subr.mxu0 0.0
    %3480 = vmatpush1.msra.mxu0 0.0
    %3481 = vmatprep.subr.mxu0 0.0
    %3482 = vmatpush1.msra.mxu0 0.0
    %3483 = vmatprep.subr.mxu0 0.0
    %3484 = vmatpush1.msra.mxu0 0.0
    %3485 = vmatprep.subr.mxu0 0.0
    %3486 = vmatpush1.msra.mxu0 0.0
    %3487 = vmatprep.subr.mxu0 0.0
    %3488 = vmatpush1.msra.mxu0 0.0
    %3489 = vmatprep.subr.mxu0 0.0
    %3490 = vmatpush1.msra.mxu0 0.0
    %3491 = vmatprep.subr.mxu0 0.0
    %3492 = vmatpush1.msra.mxu0 0.0
    %3493 = vmatprep.subr.mxu0 0.0
    %3494 = vmatpush1.msra.mxu0 0.0
    %3495 = vmatprep.subr.mxu0 0.0
    %3496 = vmatpush1.msra.mxu0 0.0
    %3497 = vmatprep.subr.mxu0 0.0
    %3498 = vmatpush1.msra.mxu0 0.0
    %3499 = vmatprep.subr.mxu0 0.0
    %3500 = vmatpush1.msra.mxu0 0.0
    %3501 = vmatprep.subr.mxu0 0.0
    %3502 = vmatpush1.msra.mxu0 0.0
    %3503 = vmatprep.subr.mxu0 0.0
    %3504 = vmatpush1.msra.mxu0 0.0
    %3505 = vmatprep.subr.mxu0 0.0
    %3506 = vmatpush1.msra.mxu0 0.0
    %3507 = vmatprep.subr.mxu0 0.0
    %3508 = vmatpush1.msra.mxu0 0.0
    %3509 = vmatprep.subr.mxu0 0.0
    %3510 = vmatpush1.msra.mxu0 0.0
    %3511 = vmatprep.subr.mxu0 0.0
    %3512 = vmatpush1.msra.mxu0 0.0
    %3513 = vmatprep.subr.mxu0 0.0
    %3514 = vmatpush1.msra.mxu0 0.0
    %3515 = vmatprep.subr.mxu0 0.0
    %3516 = vmatpush1.msra.mxu0 0.0
    %3517 = vmatprep.subr.mxu0 0.0
    %3518 = vmatpush1.msra.mxu0 0.0
    %3519 = vmatprep.subr.mxu0 0.0
    %3520 = vmatpush1.msra.mxu0 0.0
    %3521 = vmatprep.subr.mxu0 0.0
    %3522 = vmatpush1.msra.mxu0 0.0
    %3523 = vmatprep.subr.mxu0 0.0
    %3524 = vmatpush1.msra.mxu0 0.0
    %3525 = vmatprep.subr.mxu0 0.0
    %3526 = vmatpush1.msra.mxu0 0.0
    %3527 = vmatprep.subr.mxu0 0.0
    %3528 = vmatpush1.msra.mxu0 0.0
    %3529 = vmatprep.subr.mxu0 0.0
    %3530 = vmatpush1.msra.mxu0 0.0
    %3531 = vmatprep.subr.mxu0 0.0
    %3532 = vmatpush1.msra.mxu0 0.0
    %3533 = vmatprep.subr.mxu0 0.0
    %3534 = vmatpush1.msra.mxu0 0.0
    %3535 = vmatprep.subr.mxu0 0.0
    %3536 = vmatpush1.msra.mxu0 0.0
    %3537 = vmatprep.subr.mxu0 0.0
    %3538 = vmatpush1.msra.mxu0 0.0
    %3539 = vmatprep.mubr.f32.mxu0 0.0
    %3540 = vmatmul.mubr.f32.gmra.mrb[0].mxu0 %v3473
    %v3541 = vpop.f32.mrb[0].mxu0
    %v3542 = vadd.f32 0.0, %v3541
    %v3543 = vpop.f32.mrb[0].mxu0
    %3544 = vdwg.mxu0
    %v3546 = vsel %vm2019, %v3023, 0
    %3548 = vmatprep.subr.mxu0 0.0
    %3549 = vmatpush1.msra.mxu0 %v3321
    %3550 = vmatprep.subr.mxu0 0.0
    %3551 = vmatpush1.msra.mxu0 0.0
    %3552 = vmatprep.subr.mxu0 0.0
    %3553 = vmatpush1.msra.mxu0 0.0
    %3554 = vmatprep.subr.mxu0 0.0
    %3555 = vmatpush1.msra.mxu0 0.0
    %3556 = vmatprep.subr.mxu0 0.0
    %3557 = vmatpush1.msra.mxu0 0.0
    %3558 = vmatprep.subr.mxu0 0.0
    %3559 = vmatpush1.msra.mxu0 0.0
    %3560 = vmatprep.subr.mxu0 0.0
    %3561 = vmatpush1.msra.mxu0 0.0
    %3562 = vmatprep.subr.mxu0 0.0
    %3563 = vmatpush1.msra.mxu0 0.0
    %3564 = vmatprep.subr.mxu0 0.0
    %3565 = vmatpush1.msra.mxu0 0.0
    %3566 = vmatprep.subr.mxu0 0.0
    %3567 = vmatpush1.msra.mxu0 0.0
    %3568 = vmatprep.subr.mxu0 0.0
    %3569 = vmatpush1.msra.mxu0 0.0
    %3570 = vmatprep.subr.mxu0 0.0
    %3571 = vmatpush1.msra.mxu0 0.0
    %3572 = vmatprep.subr.mxu0 0.0
    %3573 = vmatpush1.msra.mxu0 0.0
    %3574 = vmatprep.subr.mxu0 0.0
    %3575 = vmatpush1.msra.mxu0 0.0
    %3576 = vmatprep.subr.mxu0 0.0
    %3577 = vmatpush1.msra.mxu0 0.0
    %3578 = vmatprep.subr.mxu0 0.0
    %3579 = vmatpush1.msra.mxu0 0.0
    %3580 = vmatprep.subr.mxu0 0.0
    %3581 = vmatpush1.msra.mxu0 0.0
    %3582 = vmatprep.subr.mxu0 0.0
    %3583 = vmatpush1.msra.mxu0 0.0
    %3584 = vmatprep.subr.mxu0 0.0
    %3585 = vmatpush1.msra.mxu0 0.0
    %3586 = vmatprep.subr.mxu0 0.0
    %3587 = vmatpush1.msra.mxu0 0.0
    %3588 = vmatprep.subr.mxu0 0.0
    %3589 = vmatpush1.msra.mxu0 0.0
    %3590 = vmatprep.subr.mxu0 0.0
    %3591 = vmatpush1.msra.mxu0 0.0
    %3592 = vmatprep.subr.mxu0 0.0
    %3593 = vmatpush1.msra.mxu0 0.0
    %3594 = vmatprep.subr.mxu0 0.0
    %3595 = vmatpush1.msra.mxu0 0.0
    %3596 = vmatprep.subr.mxu0 0.0
    %3597 = vmatpush1.msra.mxu0 0.0
    %3598 = vmatprep.subr.mxu0 0.0
    %3599 = vmatpush1.msra.mxu0 0.0
    %3600 = vmatprep.subr.mxu0 0.0
    %3601 = vmatpush1.msra.mxu0 0.0
    %3602 = vmatprep.subr.mxu0 0.0
    %3603 = vmatpush1.msra.mxu0 0.0
    %3604 = vmatprep.subr.mxu0 0.0
    %3605 = vmatpush1.msra.mxu0 0.0
    %3606 = vmatprep.subr.mxu0 0.0
    %3607 = vmatpush1.msra.mxu0 0.0
    %3608 = vmatprep.subr.mxu0 0.0
    %3609 = vmatpush1.msra.mxu0 0.0
    %3610 = vmatprep.subr.mxu0 0.0
    %3611 = vmatpush1.msra.mxu0 0.0
    %3612 = vmatprep.mubr.f32.mxu0 0.0
    %3613 = vmatmul.mubr.f32.gmra.mrb[0].mxu0 %v3546
    %v3614 = vpop.f32.mrb[0].mxu0
    %v3615 = vadd.f32 0.0, %v3614
    %v3616 = vpop.f32.mrb[0].mxu0
    %3617 = vdwg.mxu0
    %v3619 = vsel %vm2019, %v3096, 0
    %3621 = vmatprep.subr.mxu0 0.0
    %3622 = vmatpush1.msra.mxu0 %v3322
    %3623 = vmatprep.subr.mxu0 0.0
    %3624 = vmatpush1.msra.mxu0 0.0
    %3625 = vmatprep.subr.mxu0 0.0
    %3626 = vmatpush1.msra.mxu0 0.0
    %3627 = vmatprep.subr.mxu0 0.0
    %3628 = vmatpush1.msra.mxu0 0.0
    %3629 = vmatprep.subr.mxu0 0.0
    %3630 = vmatpush1.msra.mxu0 0.0
    %3631 = vmatprep.subr.mxu0 0.0
    %3632 = vmatpush1.msra.mxu0 0.0
    %3633 = vmatprep.subr.mxu0 0.0
    %3634 = vmatpush1.msra.mxu0 0.0
    %3635 = vmatprep.subr.mxu0 0.0
    %3636 = vmatpush1.msra.mxu0 0.0
    %3637 = vmatprep.subr.mxu0 0.0
    %3638 = vmatpush1.msra.mxu0 0.0
    %3639 = vmatprep.subr.mxu0 0.0
    %3640 = vmatpush1.msra.mxu0 0.0
    %3641 = vmatprep.subr.mxu0 0.0
    %3642 = vmatpush1.msra.mxu0 0.0
    %3643 = vmatprep.subr.mxu0 0.0
    %3644 = vmatpush1.msra.mxu0 0.0
    %3645 = vmatprep.subr.mxu0 0.0
    %3646 = vmatpush1.msra.mxu0 0.0
    %3647 = vmatprep.subr.mxu0 0.0
    %3648 = vmatpush1.msra.mxu0 0.0
    %3649 = vmatprep.subr.mxu0 0.0
    %3650 = vmatpush1.msra.mxu0 0.0
    %3651 = vmatprep.subr.mxu0 0.0
    %3652 = vmatpush1.msra.mxu0 0.0
    %3653 = vmatprep.subr.mxu0 0.0
    %3654 = vmatpush1.msra.mxu0 0.0
    %3655 = vmatprep.subr.mxu0 0.0
    %3656 = vmatpush1.msra.mxu0 0.0
    %3657 = vmatprep.subr.mxu0 0.0
    %3658 = vmatpush1.msra.mxu0 0.0
    %3659 = vmatprep.subr.mxu0 0.0
    %3660 = vmatpush1.msra.mxu0 0.0
    %3661 = vmatprep.subr.mxu0 0.0
    %3662 = vmatpush1.msra.mxu0 0.0
    %3663 = vmatprep.subr.mxu0 0.0
    %3664 = vmatpush1.msra.mxu0 0.0
    %3665 = vmatprep.subr.mxu0 0.0
    %3666 = vmatpush1.msra.mxu0 0.0
    %3667 = vmatprep.subr.mxu0 0.0
    %3668 = vmatpush1.msra.mxu0 0.0
    %3669 = vmatprep.subr.mxu0 0.0
    %3670 = vmatpush1.msra.mxu0 0.0
    %3671 = vmatprep.subr.mxu0 0.0
    %3672 = vmatpush1.msra.mxu0 0.0
    %3673 = vmatprep.subr.mxu0 0.0
    %3674 = vmatpush1.msra.mxu0 0.0
    %3675 = vmatprep.subr.mxu0 0.0
    %3676 = vmatpush1.msra.mxu0 0.0
    %3677 = vmatprep.subr.mxu0 0.0
    %3678 = vmatpush1.msra.mxu0 0.0
    %3679 = vmatprep.subr.mxu0 0.0
    %3680 = vmatpush1.msra.mxu0 0.0
    %3681 = vmatprep.subr.mxu0 0.0
    %3682 = vmatpush1.msra.mxu0 0.0
    %3683 = vmatprep.subr.mxu0 0.0
    %3684 = vmatpush1.msra.mxu0 0.0
    %3685 = vmatprep.mubr.f32.mxu0 0.0
    %3686 = vmatmul.mubr.f32.gmra.mrb[0].mxu0 %v3619
    %v3687 = vpop.f32.mrb[0].mxu0
    %v3688 = vadd.f32 0.0, %v3687
    %v3689 = vpop.f32.mrb[0].mxu0
    %3690 = vdwg.mxu0
    %v3692 = vsel %vm2019, %v3169, 0
    %3694 = vmatprep.subr.mxu0 0.0
    %3695 = vmatpush1.msra.mxu0 %v3323
    %3696 = vmatprep.subr.mxu0 0.0
    %3697 = vmatpush1.msra.mxu0 0.0
    %3698 = vmatprep.subr.mxu0 0.0
    %3699 = vmatpush1.msra.mxu0 0.0
    %3700 = vmatprep.subr.mxu0 0.0
    %3701 = vmatpush1.msra.mxu0 0.0
    %3702 = vmatprep.subr.mxu0 0.0
    %3703 = vmatpush1.msra.mxu0 0.0
    %3704 = vmatprep.subr.mxu0 0.0
    %3705 = vmatpush1.msra.mxu0 0.0
    %3706 = vmatprep.subr.mxu0 0.0
    %3707 = vmatpush1.msra.mxu0 0.0
    %3708 = vmatprep.subr.mxu0 0.0
    %3709 = vmatpush1.msra.mxu0 0.0
    %3710 = vmatprep.subr.mxu0 0.0
    %3711 = vmatpush1.msra.mxu0 0.0
    %3712 = vmatprep.subr.mxu0 0.0
    %3713 = vmatpush1.msra.mxu0 0.0
    %3714 = vmatprep.subr.mxu0 0.0
    %3715 = vmatpush1.msra.mxu0 0.0
    %3716 = vmatprep.subr.mxu0 0.0
    %3717 = vmatpush1.msra.mxu0 0.0
    %3718 = vmatprep.subr.mxu0 0.0
    %3719 = vmatpush1.msra.mxu0 0.0
    %3720 = vmatprep.subr.mxu0 0.0
    %3721 = vmatpush1.msra.mxu0 0.0
    %3722 = vmatprep.subr.mxu0 0.0
    %3723 = vmatpush1.msra.mxu0 0.0
    %3724 = vmatprep.subr.mxu0 0.0
    %3725 = vmatpush1.msra.mxu0 0.0
    %3726 = vmatprep.subr.mxu0 0.0
    %3727 = vmatpush1.msra.mxu0 0.0
    %3728 = vmatprep.subr.mxu0 0.0
    %3729 = vmatpush1.msra.mxu0 0.0
    %3730 = vmatprep.subr.mxu0 0.0
    %3731 = vmatpush1.msra.mxu0 0.0
    %3732 = vmatprep.subr.mxu0 0.0
    %3733 = vmatpush1.msra.mxu0 0.0
    %3734 = vmatprep.subr.mxu0 0.0
    %3735 = vmatpush1.msra.mxu0 0.0
    %3736 = vmatprep.subr.mxu0 0.0
    %3737 = vmatpush1.msra.mxu0 0.0
    %3738 = vmatprep.subr.mxu0 0.0
    %3739 = vmatpush1.msra.mxu0 0.0
    %3740 = vmatprep.subr.mxu0 0.0
    %3741 = vmatpush1.msra.mxu0 0.0
    %3742 = vmatprep.subr.mxu0 0.0
    %3743 = vmatpush1.msra.mxu0 0.0
    %3744 = vmatprep.subr.mxu0 0.0
    %3745 = vmatpush1.msra.mxu0 0.0
    %3746 = vmatprep.subr.mxu0 0.0
    %3747 = vmatpush1.msra.mxu0 0.0
    %3748 = vmatprep.subr.mxu0 0.0
    %3749 = vmatpush1.msra.mxu0 0.0
    %3750 = vmatprep.subr.mxu0 0.0
    %3751 = vmatpush1.msra.mxu0 0.0
    %3752 = vmatprep.subr.mxu0 0.0
    %3753 = vmatpush1.msra.mxu0 0.0
    %3754 = vmatprep.subr.mxu0 0.0
    %3755 = vmatpush1.msra.mxu0 0.0
    %3756 = vmatprep.subr.mxu0 0.0
    %3757 = vmatpush1.msra.mxu0 0.0
    %3758 = vmatprep.mubr.f32.mxu0 0.0
    %3759 = vmatmul.mubr.f32.gmra.mrb[0].mxu0 %v3692
    %v3760 = vpop.f32.mrb[0].mxu0
    %v3761 = vadd.f32 0.0, %v3760
    %v3762 = vpop.f32.mrb[0].mxu0
    %3763 = vdwg.mxu0
    %v3765 = vsel %vm2019, %v3242, 0
    %3767 = vmatprep.subr.mxu0 0.0
    %3768 = vmatpush1.msra.mxu0 %v3324
    %3769 = vmatprep.subr.mxu0 0.0
    %3770 = vmatpush1.msra.mxu0 0.0
    %3771 = vmatprep.subr.mxu0 0.0
    %3772 = vmatpush1.msra.mxu0 0.0
    %3773 = vmatprep.subr.mxu0 0.0
    %3774 = vmatpush1.msra.mxu0 0.0
    %3775 = vmatprep.subr.mxu0 0.0
    %3776 = vmatpush1.msra.mxu0 0.0
    %3777 = vmatprep.subr.mxu0 0.0
    %3778 = vmatpush1.msra.mxu0 0.0
    %3779 = vmatprep.subr.mxu0 0.0
    %3780 = vmatpush1.msra.mxu0 0.0
    %3781 = vmatprep.subr.mxu0 0.0
    %3782 = vmatpush1.msra.mxu0 0.0
    %3783 = vmatprep.subr.mxu0 0.0
    %3784 = vmatpush1.msra.mxu0 0.0
    %3785 = vmatprep.subr.mxu0 0.0
    %3786 = vmatpush1.msra.mxu0 0.0
    %3787 = vmatprep.subr.mxu0 0.0
    %3788 = vmatpush1.msra.mxu0 0.0
    %3789 = vmatprep.subr.mxu0 0.0
    %3790 = vmatpush1.msra.mxu0 0.0
    %3791 = vmatprep.subr.mxu0 0.0
    %3792 = vmatpush1.msra.mxu0 0.0
    %3793 = vmatprep.subr.mxu0 0.0
    %3794 = vmatpush1.msra.mxu0 0.0
    %3795 = vmatprep.subr.mxu0 0.0
    %3796 = vmatpush1.msra.mxu0 0.0
    %3797 = vmatprep.subr.mxu0 0.0
    %3798 = vmatpush1.msra.mxu0 0.0
    %3799 = vmatprep.subr.mxu0 0.0
    %3800 = vmatpush1.msra.mxu0 0.0
    %3801 = vmatprep.subr.mxu0 0.0
    %3802 = vmatpush1.msra.mxu0 0.0
    %3803 = vmatprep.subr.mxu0 0.0
    %3804 = vmatpush1.msra.mxu0 0.0
    %3805 = vmatprep.subr.mxu0 0.0
    %3806 = vmatpush1.msra.mxu0 0.0
    %3807 = vmatprep.subr.mxu0 0.0
    %3808 = vmatpush1.msra.mxu0 0.0
    %3809 = vmatprep.subr.mxu0 0.0
    %3810 = vmatpush1.msra.mxu0 0.0
    %3811 = vmatprep.subr.mxu0 0.0
    %3812 = vmatpush1.msra.mxu0 0.0
    %3813 = vmatprep.subr.mxu0 0.0
    %3814 = vmatpush1.msra.mxu0 0.0
    %3815 = vmatprep.subr.mxu0 0.0
    %3816 = vmatpush1.msra.mxu0 0.0
    %3817 = vmatprep.subr.mxu0 0.0
    %3818 = vmatpush1.msra.mxu0 0.0
    %3819 = vmatprep.subr.mxu0 0.0
    %3820 = vmatpush1.msra.mxu0 0.0
    %3821 = vmatprep.subr.mxu0 0.0
    %3822 = vmatpush1.msra.mxu0 0.0
    %3823 = vmatprep.subr.mxu0 0.0
    %3824 = vmatpush1.msra.mxu0 0.0
    %3825 = vmatprep.subr.mxu0 0.0
    %3826 = vmatpush1.msra.mxu0 0.0
    %3827 = vmatprep.subr.mxu0 0.0
    %3828 = vmatpush1.msra.mxu0 0.0
    %3829 = vmatprep.subr.mxu0 0.0
    %3830 = vmatpush1.msra.mxu0 0.0
    %3831 = vmatprep.mubr.f32.mxu0 0.0
    %3832 = vmatmul.mubr.f32.gmra.mrb[0].mxu0 %v3765
    %v3833 = vpop.f32.mrb[0].mxu0
    %v3834 = vadd.f32 0.0, %v3833
    %v3835 = vpop.f32.mrb[0].mxu0
    %3836 = vdwg.mxu0
    %v3838 = vsel %vm2019, %v3315, 0
    %3840 = vmatprep.subr.mxu0 0.0
    %3841 = vmatpush1.msra.mxu0 %v3325
    %3842 = vmatprep.subr.mxu0 0.0
    %3843 = vmatpush1.msra.mxu0 0.0
    %3844 = vmatprep.subr.mxu0 0.0
    %3845 = vmatpush1.msra.mxu0 0.0
    %3846 = vmatprep.subr.mxu0 0.0
    %3847 = vmatpush1.msra.mxu0 0.0
    %3848 = vmatprep.subr.mxu0 0.0
    %3849 = vmatpush1.msra.mxu0 0.0
    %3850 = vmatprep.subr.mxu0 0.0
    %3851 = vmatpush1.msra.mxu0 0.0
    %3852 = vmatprep.subr.mxu0 0.0
    %3853 = vmatpush1.msra.mxu0 0.0
    %3854 = vmatprep.subr.mxu0 0.0
    %3855 = vmatpush1.msra.mxu0 0.0
    %3856 = vmatprep.subr.mxu0 0.0
    %3857 = vmatpush1.msra.mxu0 0.0
    %3858 = vmatprep.subr.mxu0 0.0
    %3859 = vmatpush1.msra.mxu0 0.0
    %3860 = vmatprep.subr.mxu0 0.0
    %3861 = vmatpush1.msra.mxu0 0.0
    %3862 = vmatprep.subr.mxu0 0.0
    %3863 = vmatpush1.msra.mxu0 0.0
    %3864 = vmatprep.subr.mxu0 0.0
    %3865 = vmatpush1.msra.mxu0 0.0
    %3866 = vmatprep.subr.mxu0 0.0
    %3867 = vmatpush1.msra.mxu0 0.0
    %3868 = vmatprep.subr.mxu0 0.0
    %3869 = vmatpush1.msra.mxu0 0.0
    %3870 = vmatprep.subr.mxu0 0.0
    %3871 = vmatpush1.msra.mxu0 0.0
    %3872 = vmatprep.subr.mxu0 0.0
    %3873 = vmatpush1.msra.mxu0 0.0
    %3874 = vmatprep.subr.mxu0 0.0
    %3875 = vmatpush1.msra.mxu0 0.0
    %3876 = vmatprep.subr.mxu0 0.0
    %3877 = vmatpush1.msra.mxu0 0.0
    %3878 = vmatprep.subr.mxu0 0.0
    %3879 = vmatpush1.msra.mxu0 0.0
    %3880 = vmatprep.subr.mxu0 0.0
    %3881 = vmatpush1.msra.mxu0 0.0
    %3882 = vmatprep.subr.mxu0 0.0
    %3883 = vmatpush1.msra.mxu0 0.0
    %3884 = vmatprep.subr.mxu0 0.0
    %3885 = vmatpush1.msra.mxu0 0.0
    %3886 = vmatprep.subr.mxu0 0.0
    %3887 = vmatpush1.msra.mxu0 0.0
    %3888 = vmatprep.subr.mxu0 0.0
    %3889 = vmatpush1.msra.mxu0 0.0
    %3890 = vmatprep.subr.mxu0 0.0
    %3891 = vmatpush1.msra.mxu0 0.0
    %3892 = vmatprep.subr.mxu0 0.0
    %3893 = vmatpush1.msra.mxu0 0.0
    %3894 = vmatprep.subr.mxu0 0.0
    %3895 = vmatpush1.msra.mxu0 0.0
    %3896 = vmatprep.subr.mxu0 0.0
    %3897 = vmatpush1.msra.mxu0 0.0
    %3898 = vmatprep.subr.mxu0 0.0
    %3899 = vmatpush1.msra.mxu0 0.0
    %3900 = vmatprep.subr.mxu0 0.0
    %3901 = vmatpush1.msra.mxu0 0.0
    %3902 = vmatprep.subr.mxu0 0.0
    %3903 = vmatpush1.msra.mxu0 0.0
    %3904 = vmatprep.mubr.f32.mxu0 0.0
    %3905 = vmatmul.mubr.f32.gmra.mrb[0].mxu0 %v3838
    %v3906 = vpop.f32.mrb[0].mxu0
    %v3907 = vadd.f32 0.0, %v3906
    %v3908 = vpop.f32.mrb[0].mxu0
    %3909 = vdwg.mxu0
    %v3910 = vsel %vm156, %v3396, 0.0
    %v3911 = vsel %vm156, %v3542, 0.0
    %v3912 = vadd.f32 %v3910, %v3911
    %v3913 = vsel %vm156, %v3688, 0.0
    %v3914 = vadd.f32 %v3912, %v3913
    %v3915 = vsel %vm156, %v3834, 0.0
    %v3916 = vadd.f32 %v3914, %v3915
    %v3917 = vsel %vm156, %v3469, 0.0
    %v3918 = vsel %vm156, %v3615, 0.0
    %v3919 = vadd.f32 %v3917, %v3918
    %v3920 = vsel %vm156, %v3761, 0.0
    %v3921 = vadd.f32 %v3919, %v3920
    %v3922 = vsel %vm156, %v3907, 0.0
    %v3923 = vadd.f32 %v3921, %v3922
    %v3924 = vld [vmem:[%s8] sm:$0x1]
    %v3926 = vlaneseq
    %v3927 = vshrl.u32 %v3926, 7
    %v3928 = vsub.s32 0, %v3927
    %v3929 = vrot.slane %v3924, %v3928
    %v3931 = vadd.f32 %v3916, %v3929
    %v3932 = vadd.f32 %v3923, %v3929
    %v3933 = vadd.f32 %v66, %v3931
    %v3934 = vadd.f32 %v67, %v3932
    %v3935 = vld [vmem:[%s13] sm:$0x1]
    %v3936 = vld [vmem:[%s14] sm:$0x1]
    %v3937 = vsel %vm156, %v3933, 0.0
    %3938 = vadd.xlane.f32.xlu0 %v3937
    %v3939 = vpop.xlane.xlu0 %3938
    %v3940 = vsel %vm156, %v3934, 0.0
    %3941 = vadd.xlane.f32.xlu0 %v3940
    %v3942 = vpop.xlane.xlu0 %3941
    %v3943 = vrcp.pop 32.0
    %v3944 = vmul.f32 %v3939, %v3943
    %v3945 = vmul.f32 %v3942, %v3943
    %v3946 = vsub.f32 %v3933, %v3944
    %v3947 = vsub.f32 %v3934, %v3945
    %v3948 = vmul.f32 %v3946, %v3946
    %v3949 = vmul.f32 %v3947, %v3947
    %v3950 = vsel %vm156, %v3948, 0.0
    %3951 = vadd.xlane.f32.xlu0 %v3950
    %v3952 = vpop.xlane.xlu0 %3951
    %v3953 = vsel %vm156, %v3949, 0.0
    %3954 = vadd.xlane.f32.xlu0 %v3953
    %v3955 = vpop.xlane.xlu0 %3954
    %v3956 = vmul.f32 %v3952, %v3943
    %v3957 = vmul.f32 %v3955, %v3943
    %v3958 = vadd.f32 %v3956, 1e-05
    %v3959 = vadd.f32 %v3957, 1e-05
    %v3960 = vrsqrt.pop %v3958
    %v3961 = vrsqrt.pop %v3959
    %v3962 = vmul.f32 %v3946, %v3960
    %v3963 = vmul.f32 %v3947, %v3961
    %v3965 = vlaneseq
    %v3966 = vshrl.u32 %v3965, 7
    %v3967 = vsub.s32 0, %v3966
    %v3968 = vrot.slane %v3935, %v3967
    %v3970 = vmul.f32 %v3962, %v3968
    %v3971 = vmul.f32 %v3963, %v3968
    %v3973 = vlaneseq
    %v3974 = vshrl.u32 %v3973, 7
    %v3975 = vsub.s32 0, %v3974
    %v3976 = vrot.slane %v3936, %v3975
    %v3978 = vadd.f32 %v3970, %v3976
    %v3979 = vadd.f32 %v3971, %v3976
    %v3980 = vld [vmem:[%s9] sm:$0xff]
    %v3981 = vld [vmem:[%s9 + $0x8] sm:$0xff]
    %v3982 = vld [vmem:[%s9 + $0x10] sm:$0xff]
    %v3983 = vld [vmem:[%s9 + $0x18] sm:$0xff]
    %v3984 = vld [vmem:[%s10] sm:$0x1]
    %v3986 = vlaneseq
    %v3987 = vshrl.u32 %v3986, 7
    %v3988 = vsub.s32 0, %v3987
    %v3989 = vrot.slane %v3984, %v3988
    %v3992 = vsel %vm156, %v3978, 0
    %v3995 = vsel %vm156, %v3979, 0
    %3997 = vmatprep.subr.mxu0 0.0
    %3998 = vmatpush1.msra.mxu0 %v3980
    %3999 = vmatprep.subr.mxu0 0.0
    %4000 = vmatpush1.msra.mxu0 %v3981
    %4001 = vmatprep.subr.mxu0 0.0
    %4002 = vmatpush1.msra.mxu0 %v3982
    %4003 = vmatprep.subr.mxu0 0.0
    %4004 = vmatpush1.msra.mxu0 %v3983
    %4005 = vmatprep.subr.mxu0 0.0
    %4006 = vmatpush1.msra.mxu0 0.0
    %4007 = vmatprep.subr.mxu0 0.0
    %4008 = vmatpush1.msra.mxu0 0.0
    %4009 = vmatprep.subr.mxu0 0.0
    %4010 = vmatpush1.msra.mxu0 0.0
    %4011 = vmatprep.subr.mxu0 0.0
    %4012 = vmatpush1.msra.mxu0 0.0
    %4013 = vmatprep.subr.mxu0 0.0
    %4014 = vmatpush1.msra.mxu0 0.0
    %4015 = vmatprep.subr.mxu0 0.0
    %4016 = vmatpush1.msra.mxu0 0.0
    %4017 = vmatprep.subr.mxu0 0.0
    %4018 = vmatpush1.msra.mxu0 0.0
    %4019 = vmatprep.subr.mxu0 0.0
    %4020 = vmatpush1.msra.mxu0 0.0
    %4021 = vmatprep.subr.mxu0 0.0
    %4022 = vmatpush1.msra.mxu0 0.0
    %4023 = vmatprep.subr.mxu0 0.0
    %4024 = vmatpush1.msra.mxu0 0.0
    %4025 = vmatprep.subr.mxu0 0.0
    %4026 = vmatpush1.msra.mxu0 0.0
    %4027 = vmatprep.subr.mxu0 0.0
    %4028 = vmatpush1.msra.mxu0 0.0
    %4029 = vmatprep.subr.mxu0 0.0
    %4030 = vmatpush1.msra.mxu0 0.0
    %4031 = vmatprep.subr.mxu0 0.0
    %4032 = vmatpush1.msra.mxu0 0.0
    %4033 = vmatprep.subr.mxu0 0.0
    %4034 = vmatpush1.msra.mxu0 0.0
    %4035 = vmatprep.subr.mxu0 0.0
    %4036 = vmatpush1.msra.mxu0 0.0
    %4037 = vmatprep.subr.mxu0 0.0
    %4038 = vmatpush1.msra.mxu0 0.0
    %4039 = vmatprep.subr.mxu0 0.0
    %4040 = vmatpush1.msra.mxu0 0.0
    %4041 = vmatprep.subr.mxu0 0.0
    %4042 = vmatpush1.msra.mxu0 0.0
    %4043 = vmatprep.subr.mxu0 0.0
    %4044 = vmatpush1.msra.mxu0 0.0
    %4045 = vmatprep.subr.mxu0 0.0
    %4046 = vmatpush1.msra.mxu0 0.0
    %4047 = vmatprep.subr.mxu0 0.0
    %4048 = vmatpush1.msra.mxu0 0.0
    %4049 = vmatprep.subr.mxu0 0.0
    %4050 = vmatpush1.msra.mxu0 0.0
    %4051 = vmatprep.subr.mxu0 0.0
    %4052 = vmatpush1.msra.mxu0 0.0
    %4053 = vmatprep.subr.mxu0 0.0
    %4054 = vmatpush1.msra.mxu0 0.0
    %4055 = vmatprep.subr.mxu0 0.0
    %4056 = vmatpush1.msra.mxu0 0.0
    %4057 = vmatprep.subr.mxu0 0.0
    %4058 = vmatpush1.msra.mxu0 0.0
    %4059 = vmatprep.subr.mxu0 0.0
    %4060 = vmatpush1.msra.mxu0 0.0
    %4061 = vmatprep.mubr.f32.mxu0 0.0
    %4062 = vmatmul.mubr.f32.gmra.mrb[0].mxu0 %v3992
    %v4063 = vpop.f32.mrb[0].mxu0
    %v4064 = vadd.f32 %v3989, %v4063
    %v4065 = vpop.f32.mrb[0].mxu0
    %4066 = vmatprep.mubr.f32.mxu0 0.0
    %4067 = vmatmul.mubr.f32.gmra.mrb[0].mxu0 %v3995
    %v4068 = vpop.f32.mrb[0].mxu0
    %v4069 = vadd.f32 %v3989, %v4068
    %v4070 = vpop.f32.mrb[0].mxu0
    %4071 = vdwg.mxu0
    %v4072 = vmax.f32 %v4064, 0.0
    %v4073 = vmax.f32 %v4069, 0.0
    %v4074 = vld [vmem:[%s11] sm:$0xff]
    %v4075 = vld [vmem:[%s11 + $0x8] sm:$0xff]
    %v4076 = vld [vmem:[%s11 + $0x10] sm:$0xff]
    %v4077 = vld [vmem:[%s11 + $0x18] sm:$0xff]
    %v4078 = vld [vmem:[%s11 + $0x20] sm:$0xff]
    %v4079 = vld [vmem:[%s11 + $0x28] sm:$0xff]
    %v4080 = vld [vmem:[%s11 + $0x30] sm:$0xff]
    %v4081 = vld [vmem:[%s11 + $0x38] sm:$0xff]
    %v4082 = vld [vmem:[%s12] sm:$0x1]
    %v4084 = vlaneseq
    %v4085 = vshrl.u32 %v4084, 7
    %v4086 = vsub.s32 0, %v4085
    %v4087 = vrot.slane %v4082, %v4086
    %vm4089 = vcmask 523264
    %v4091 = vsel %vm4089, %v4072, 0
    %v4094 = vsel %vm4089, %v4073, 0
    %4096 = vmatprep.subr.mxu0 0.0
    %4097 = vmatpush1.msra.mxu0 %v4074
    %4098 = vmatprep.subr.mxu0 0.0
    %4099 = vmatpush1.msra.mxu0 %v4075
    %4100 = vmatprep.subr.mxu0 0.0
    %4101 = vmatpush1.msra.mxu0 %v4076
    %4102 = vmatprep.subr.mxu0 0.0
    %4103 = vmatpush1.msra.mxu0 %v4077
    %4104 = vmatprep.subr.mxu0 0.0
    %4105 = vmatpush1.msra.mxu0 %v4078
    %4106 = vmatprep.subr.mxu0 0.0
    %4107 = vmatpush1.msra.mxu0 %v4079
    %4108 = vmatprep.subr.mxu0 0.0
    %4109 = vmatpush1.msra.mxu0 %v4080
    %4110 = vmatprep.subr.mxu0 0.0
    %4111 = vmatpush1.msra.mxu0 %v4081
    %4112 = vmatprep.subr.mxu0 0.0
    %4113 = vmatpush1.msra.mxu0 0.0
    %4114 = vmatprep.subr.mxu0 0.0
    %4115 = vmatpush1.msra.mxu0 0.0
    %4116 = vmatprep.subr.mxu0 0.0
    %4117 = vmatpush1.msra.mxu0 0.0
    %4118 = vmatprep.subr.mxu0 0.0
    %4119 = vmatpush1.msra.mxu0 0.0
    %4120 = vmatprep.subr.mxu0 0.0
    %4121 = vmatpush1.msra.mxu0 0.0
    %4122 = vmatprep.subr.mxu0 0.0
    %4123 = vmatpush1.msra.mxu0 0.0
    %4124 = vmatprep.subr.mxu0 0.0
    %4125 = vmatpush1.msra.mxu0 0.0
    %4126 = vmatprep.subr.mxu0 0.0
    %4127 = vmatpush1.msra.mxu0 0.0
    %4128 = vmatprep.subr.mxu0 0.0
    %4129 = vmatpush1.msra.mxu0 0.0
    %4130 = vmatprep.subr.mxu0 0.0
    %4131 = vmatpush1.msra.mxu0 0.0
    %4132 = vmatprep.subr.mxu0 0.0
    %4133 = vmatpush1.msra.mxu0 0.0
    %4134 = vmatprep.subr.mxu0 0.0
    %4135 = vmatpush1.msra.mxu0 0.0
    %4136 = vmatprep.subr.mxu0 0.0
    %4137 = vmatpush1.msra.mxu0 0.0
    %4138 = vmatprep.subr.mxu0 0.0
    %4139 = vmatpush1.msra.mxu0 0.0
    %4140 = vmatprep.subr.mxu0 0.0
    %4141 = vmatpush1.msra.mxu0 0.0
    %4142 = vmatprep.subr.mxu0 0.0
    %4143 = vmatpush1.msra.mxu0 0.0
    %4144 = vmatprep.subr.mxu0 0.0
    %4145 = vmatpush1.msra.mxu0 0.0
    %4146 = vmatprep.subr.mxu0 0.0
    %4147 = vmatpush1.msra.mxu0 0.0
    %4148 = vmatprep.subr.mxu0 0.0
    %4149 = vmatpush1.msra.mxu0 0.0
    %4150 = vmatprep.subr.mxu0 0.0
    %4151 = vmatpush1.msra.mxu0 0.0
    %4152 = vmatprep.subr.mxu0 0.0
    %4153 = vmatpush1.msra.mxu0 0.0
    %4154 = vmatprep.subr.mxu0 0.0
    %4155 = vmatpush1.msra.mxu0 0.0
    %4156 = vmatprep.subr.mxu0 0.0
    %4157 = vmatpush1.msra.mxu0 0.0
    %4158 = vmatprep.subr.mxu0 0.0
    %4159 = vmatpush1.msra.mxu0 0.0
    %4160 = vmatprep.mubr.f32.mxu0 0.0
    %4161 = vmatmul.mubr.f32.gmra.mrb[0].mxu0 %v4091
    %v4162 = vpop.f32.mrb[0].mxu0
    %v4163 = vadd.f32 %v4087, %v4162
    %v4164 = vpop.f32.mrb[0].mxu0
    %4165 = vmatprep.mubr.f32.mxu0 0.0
    %4166 = vmatmul.mubr.f32.gmra.mrb[0].mxu0 %v4094
    %v4167 = vpop.f32.mrb[0].mxu0
    %v4168 = vadd.f32 %v4087, %v4167
    %v4169 = vpop.f32.mrb[0].mxu0
    %4170 = vdwg.mxu0
    %v4171 = vadd.f32 %v3978, %v4163
    %v4172 = vadd.f32 %v3979, %v4168
    %v4173 = vld [vmem:[%s15] sm:$0x1]
    %v4174 = vld [vmem:[%s16] sm:$0x1]
    %v4175 = vsel %vm156, %v4171, 0.0
    %4176 = vadd.xlane.f32.xlu0 %v4175
    %v4177 = vpop.xlane.xlu0 %4176
    %v4178 = vsel %vm156, %v4172, 0.0
    %4179 = vadd.xlane.f32.xlu0 %v4178
    %v4180 = vpop.xlane.xlu0 %4179
    %v4181 = vmul.f32 %v4177, %v3943
    %v4182 = vmul.f32 %v4180, %v3943
    %v4183 = vsub.f32 %v4171, %v4181
    %v4184 = vsub.f32 %v4172, %v4182
    %v4185 = vmul.f32 %v4183, %v4183
    %v4186 = vmul.f32 %v4184, %v4184
    %v4187 = vsel %vm156, %v4185, 0.0
    %4188 = vadd.xlane.f32.xlu0 %v4187
    %v4189 = vpop.xlane.xlu0 %4188
    %v4190 = vsel %vm156, %v4186, 0.0
    %4191 = vadd.xlane.f32.xlu0 %v4190
    %v4192 = vpop.xlane.xlu0 %4191
    %v4193 = vmul.f32 %v4189, %v3943
    %v4194 = vmul.f32 %v4192, %v3943
    %v4195 = vadd.f32 %v4193, 1e-05
    %v4196 = vadd.f32 %v4194, 1e-05
    %v4197 = vrsqrt.pop %v4195
    %v4198 = vrsqrt.pop %v4196
    %v4199 = vmul.f32 %v4183, %v4197
    %v4200 = vmul.f32 %v4184, %v4198
    %v4202 = vlaneseq
    %v4203 = vshrl.u32 %v4202, 7
    %v4204 = vsub.s32 0, %v4203
    %v4205 = vrot.slane %v4173, %v4204
    %v4207 = vmul.f32 %v4199, %v4205
    %v4208 = vmul.f32 %v4200, %v4205
    %v4210 = vlaneseq
    %v4211 = vshrl.u32 %v4210, 7
    %v4212 = vsub.s32 0, %v4211
    %v4213 = vrot.slane %v4174, %v4212
    %v4215 = vadd.f32 %v4207, %v4213
    %v4216 = vadd.f32 %v4208, %v4213
    %s4217 = scalar_lea.vmem %s1, 256
    %v4218 = vld [vmem:[%s4217] sm:$0xff]
    %v4219 = vld [vmem:[%s4217 + $0x8] sm:$0xff]
    %v4220 = vld [vmem:[%s4217 + $0x10] sm:$0xff]
    %v4221 = vld [vmem:[%s4217 + $0x18] sm:$0xff]
    %v4222 = vld [vmem:[%s4217 + $0x20] sm:$0xff]
    %v4223 = vld [vmem:[%s4217 + $0x28] sm:$0xff]
    %v4224 = vld [vmem:[%s4217 + $0x30] sm:$0xff]
    %v4225 = vld [vmem:[%s4217 + $0x38] sm:$0xff]
    %v4226 = vld [vmem:[%s4217 + $0x40] sm:$0xff]
    %v4227 = vld [vmem:[%s4217 + $0x48] sm:$0xff]
    %v4228 = vld [vmem:[%s4217 + $0x50] sm:$0xff]
    %v4229 = vld [vmem:[%s4217 + $0x58] sm:$0xff]
    %v4230 = vld [vmem:[%s4217 + $0x60] sm:$0xff]
    %v4231 = vld [vmem:[%s4217 + $0x68] sm:$0xff]
    %v4232 = vld [vmem:[%s4217 + $0x70] sm:$0xff]
    %v4233 = vld [vmem:[%s4217 + $0x78] sm:$0xff]
    %v4234 = vld [vmem:[%s4217 + $0x80] sm:$0xff]
    %v4235 = vld [vmem:[%s4217 + $0x88] sm:$0xff]
    %v4236 = vld [vmem:[%s4217 + $0x90] sm:$0xff]
    %v4237 = vld [vmem:[%s4217 + $0x98] sm:$0xff]
    %v4238 = vld [vmem:[%s4217 + $0xa0] sm:$0xff]
    %v4239 = vld [vmem:[%s4217 + $0xa8] sm:$0xff]
    %v4240 = vld [vmem:[%s4217 + $0xb0] sm:$0xff]
    %v4241 = vld [vmem:[%s4217 + $0xb8] sm:$0xff]
    %v4242 = vld [vmem:[%s4217 + $0xc0] sm:$0xff]
    %v4243 = vld [vmem:[%s4217 + $0xc8] sm:$0xff]
    %v4244 = vld [vmem:[%s4217 + $0xd0] sm:$0xff]
    %v4245 = vld [vmem:[%s4217 + $0xd8] sm:$0xff]
    %v4246 = vld [vmem:[%s4217 + $0xe0] sm:$0xff]
    %v4247 = vld [vmem:[%s4217 + $0xe8] sm:$0xff]
    %v4248 = vld [vmem:[%s4217 + $0xf0] sm:$0xff]
    %v4249 = vld [vmem:[%s4217 + $0xf8] sm:$0xff]
    %s4250 = scalar_lea.vmem %s4, 8
    %v4251 = vld [vmem:[%s4250] sm:$0x1]
    %v4252 = vld [vmem:[%s4250 + $0x1] sm:$0x1]
    %v4253 = vld [vmem:[%s4250 + $0x2] sm:$0x1]
    %v4254 = vld [vmem:[%s4250 + $0x3] sm:$0x1]
    %v4255 = vld [vmem:[%s4250 + $0x4] sm:$0x1]
    %v4256 = vld [vmem:[%s4250 + $0x5] sm:$0x1]
    %v4257 = vld [vmem:[%s4250 + $0x6] sm:$0x1]
    %v4258 = vld [vmem:[%s4250 + $0x7] sm:$0x1]
    %v4267 = vlaneseq
    %v4268 = vshrl.u32 %v4267, 7
    %v4269 = vsub.s32 0, %v4268
    %v4270 = vrot.slane %v4251, %v4269
    %v4271 = vlaneseq
    %v4272 = vshrl.u32 %v4271, 7
    %v4273 = vsub.s32 0, %v4272
    %v4274 = vrot.slane %v4252, %v4273
    %v4275 = vlaneseq
    %v4276 = vshrl.u32 %v4275, 7
    %v4277 = vsub.s32 0, %v4276
    %v4278 = vrot.slane %v4253, %v4277
    %v4279 = vlaneseq
    %v4280 = vshrl.u32 %v4279, 7
    %v4281 = vsub.s32 0, %v4280
    %v4282 = vrot.slane %v4254, %v4281
    %v4283 = vlaneseq
    %v4284 = vshrl.u32 %v4283, 7
    %v4285 = vsub.s32 0, %v4284
    %v4286 = vrot.slane %v4255, %v4285
    %v4287 = vlaneseq
    %v4288 = vshrl.u32 %v4287, 7
    %v4289 = vsub.s32 0, %v4288
    %v4290 = vrot.slane %v4256, %v4289
    %v4291 = vlaneseq
    %v4292 = vshrl.u32 %v4291, 7
    %v4293 = vsub.s32 0, %v4292
    %v4294 = vrot.slane %v4257, %v4293
    %v4295 = vlaneseq
    %v4296 = vshrl.u32 %v4295, 7
    %v4297 = vsub.s32 0, %v4296
    %v4298 = vrot.slane %v4258, %v4297
    %v4308 = vsel %vm156, %v4215, 0
    %4310 = vmatprep.subr.mxu0 0.0
    %4311 = vmatpush1.msra.mxu0 %v4218
    %4312 = vmatprep.subr.mxu0 0.0
    %4313 = vmatpush1.msra.mxu0 %v4219
    %4314 = vmatprep.subr.mxu0 0.0
    %4315 = vmatpush1.msra.mxu0 %v4220
    %4316 = vmatprep.subr.mxu0 0.0
    %4317 = vmatpush1.msra.mxu0 %v4221
    %4318 = vmatprep.subr.mxu0 0.0
    %4319 = vmatpush1.msra.mxu0 0.0
    %4320 = vmatprep.subr.mxu0 0.0
    %4321 = vmatpush1.msra.mxu0 0.0
    %4322 = vmatprep.subr.mxu0 0.0
    %4323 = vmatpush1.msra.mxu0 0.0
    %4324 = vmatprep.subr.mxu0 0.0
    %4325 = vmatpush1.msra.mxu0 0.0
    %4326 = vmatprep.subr.mxu0 0.0
    %4327 = vmatpush1.msra.mxu0 0.0
    %4328 = vmatprep.subr.mxu0 0.0
    %4329 = vmatpush1.msra.mxu0 0.0
    %4330 = vmatprep.subr.mxu0 0.0
    %4331 = vmatpush1.msra.mxu0 0.0
    %4332 = vmatprep.subr.mxu0 0.0
    %4333 = vmatpush1.msra.mxu0 0.0
    %4334 = vmatprep.subr.mxu0 0.0
    %4335 = vmatpush1.msra.mxu0 0.0
    %4336 = vmatprep.subr.mxu0 0.0
    %4337 = vmatpush1.msra.mxu0 0.0
    %4338 = vmatprep.subr.mxu0 0.0
    %4339 = vmatpush1.msra.mxu0 0.0
    %4340 = vmatprep.subr.mxu0 0.0
    %4341 = vmatpush1.msra.mxu0 0.0
    %4342 = vmatprep.subr.mxu0 0.0
    %4343 = vmatpush1.msra.mxu0 0.0
    %4344 = vmatprep.subr.mxu0 0.0
    %4345 = vmatpush1.msra.mxu0 0.0
    %4346 = vmatprep.subr.mxu0 0.0
    %4347 = vmatpush1.msra.mxu0 0.0
    %4348 = vmatprep.subr.mxu0 0.0
    %4349 = vmatpush1.msra.mxu0 0.0
    %4350 = vmatprep.subr.mxu0 0.0
    %4351 = vmatpush1.msra.mxu0 0.0
    %4352 = vmatprep.subr.mxu0 0.0
    %4353 = vmatpush1.msra.mxu0 0.0
    %4354 = vmatprep.subr.mxu0 0.0
    %4355 = vmatpush1.msra.mxu0 0.0
    %4356 = vmatprep.subr.mxu0 0.0
    %4357 = vmatpush1.msra.mxu0 0.0
    %4358 = vmatprep.subr.mxu0 0.0
    %4359 = vmatpush1.msra.mxu0 0.0
    %4360 = vmatprep.subr.mxu0 0.0
    %4361 = vmatpush1.msra.mxu0 0.0
    %4362 = vmatprep.subr.mxu0 0.0
    %4363 = vmatpush1.msra.mxu0 0.0
    %4364 = vmatprep.subr.mxu0 0.0
    %4365 = vmatpush1.msra.mxu0 0.0
    %4366 = vmatprep.subr.mxu0 0.0
    %4367 = vmatpush1.msra.mxu0 0.0
    %4368 = vmatprep.subr.mxu0 0.0
    %4369 = vmatpush1.msra.mxu0 0.0
    %4370 = vmatprep.subr.mxu0 0.0
    %4371 = vmatpush1.msra.mxu0 0.0
    %4372 = vmatprep.subr.mxu0 0.0
    %4373 = vmatpush1.msra.mxu0 0.0
    %4374 = vmatprep.mubr.f32.mxu0 0.0
    %4375 = vmatmul.mubr.f32.gmra.mrb[0].mxu0 %v4308
    %v4376 = vpop.f32.mrb[0].mxu0
    %v4377 = vadd.f32 %v4270, %v4376
    %v4378 = vpop.f32.mrb[0].mxu0
    %4379 = vdwg.mxu0
    %v4381 = vsel %vm156, %v4216, 0
    %4383 = vmatprep.subr.mxu0 0.0
    %4384 = vmatpush1.msra.mxu0 %v4222
    %4385 = vmatprep.subr.mxu0 0.0
    %4386 = vmatpush1.msra.mxu0 %v4223
    %4387 = vmatprep.subr.mxu0 0.0
    %4388 = vmatpush1.msra.mxu0 %v4224
    %4389 = vmatprep.subr.mxu0 0.0
    %4390 = vmatpush1.msra.mxu0 %v4225
    %4391 = vmatprep.subr.mxu0 0.0
    %4392 = vmatpush1.msra.mxu0 0.0
    %4393 = vmatprep.subr.mxu0 0.0
    %4394 = vmatpush1.msra.mxu0 0.0
    %4395 = vmatprep.subr.mxu0 0.0
    %4396 = vmatpush1.msra.mxu0 0.0
    %4397 = vmatprep.subr.mxu0 0.0
    %4398 = vmatpush1.msra.mxu0 0.0
    %4399 = vmatprep.subr.mxu0 0.0
    %4400 = vmatpush1.msra.mxu0 0.0
    %4401 = vmatprep.subr.mxu0 0.0
    %4402 = vmatpush1.msra.mxu0 0.0
    %4403 = vmatprep.subr.mxu0 0.0
    %4404 = vmatpush1.msra.mxu0 0.0
    %4405 = vmatprep.subr.mxu0 0.0
    %4406 = vmatpush1.msra.mxu0 0.0
    %4407 = vmatprep.subr.mxu0 0.0
    %4408 = vmatpush1.msra.mxu0 0.0
    %4409 = vmatprep.subr.mxu0 0.0
    %4410 = vmatpush1.msra.mxu0 0.0
    %4411 = vmatprep.subr.mxu0 0.0
    %4412 = vmatpush1.msra.mxu0 0.0
    %4413 = vmatprep.subr.mxu0 0.0
    %4414 = vmatpush1.msra.mxu0 0.0
    %4415 = vmatprep.subr.mxu0 0.0
    %4416 = vmatpush1.msra.mxu0 0.0
    %4417 = vmatprep.subr.mxu0 0.0
    %4418 = vmatpush1.msra.mxu0 0.0
    %4419 = vmatprep.subr.mxu0 0.0
    %4420 = vmatpush1.msra.mxu0 0.0
    %4421 = vmatprep.subr.mxu0 0.0
    %4422 = vmatpush1.msra.mxu0 0.0
    %4423 = vmatprep.subr.mxu0 0.0
    %4424 = vmatpush1.msra.mxu0 0.0
    %4425 = vmatprep.subr.mxu0 0.0
    %4426 = vmatpush1.msra.mxu0 0.0
    %4427 = vmatprep.subr.mxu0 0.0
    %4428 = vmatpush1.msra.mxu0 0.0
    %4429 = vmatprep.subr.mxu0 0.0
    %4430 = vmatpush1.msra.mxu0 0.0
    %4431 = vmatprep.subr.mxu0 0.0
    %4432 = vmatpush1.msra.mxu0 0.0
    %4433 = vmatprep.subr.mxu0 0.0
    %4434 = vmatpush1.msra.mxu0 0.0
    %4435 = vmatprep.subr.mxu0 0.0
    %4436 = vmatpush1.msra.mxu0 0.0
    %4437 = vmatprep.subr.mxu0 0.0
    %4438 = vmatpush1.msra.mxu0 0.0
    %4439 = vmatprep.subr.mxu0 0.0
    %4440 = vmatpush1.msra.mxu0 0.0
    %4441 = vmatprep.subr.mxu0 0.0
    %4442 = vmatpush1.msra.mxu0 0.0
    %4443 = vmatprep.subr.mxu0 0.0
    %4444 = vmatpush1.msra.mxu0 0.0
    %4445 = vmatprep.subr.mxu0 0.0
    %4446 = vmatpush1.msra.mxu0 0.0
    %4447 = vmatprep.mubr.f32.mxu0 0.0
    %4448 = vmatmul.mubr.f32.gmra.mrb[0].mxu0 %v4381
    %v4449 = vpop.f32.mrb[0].mxu0
    %v4450 = vadd.f32 %v4274, %v4449
    %v4451 = vpop.f32.mrb[0].mxu0
    %4452 = vdwg.mxu0
    %4453 = vmatprep.subr.mxu0 0.0
    %4454 = vmatpush1.msra.mxu0 %v4226
    %4455 = vmatprep.subr.mxu0 0.0
    %4456 = vmatpush1.msra.mxu0 %v4227
    %4457 = vmatprep.subr.mxu0 0.0
    %4458 = vmatpush1.msra.mxu0 %v4228
    %4459 = vmatprep.subr.mxu0 0.0
    %4460 = vmatpush1.msra.mxu0 %v4229
    %4461 = vmatprep.subr.mxu0 0.0
    %4462 = vmatpush1.msra.mxu0 0.0
    %4463 = vmatprep.subr.mxu0 0.0
    %4464 = vmatpush1.msra.mxu0 0.0
    %4465 = vmatprep.subr.mxu0 0.0
    %4466 = vmatpush1.msra.mxu0 0.0
    %4467 = vmatprep.subr.mxu0 0.0
    %4468 = vmatpush1.msra.mxu0 0.0
    %4469 = vmatprep.subr.mxu0 0.0
    %4470 = vmatpush1.msra.mxu0 0.0
    %4471 = vmatprep.subr.mxu0 0.0
    %4472 = vmatpush1.msra.mxu0 0.0
    %4473 = vmatprep.subr.mxu0 0.0
    %4474 = vmatpush1.msra.mxu0 0.0
    %4475 = vmatprep.subr.mxu0 0.0
    %4476 = vmatpush1.msra.mxu0 0.0
    %4477 = vmatprep.subr.mxu0 0.0
    %4478 = vmatpush1.msra.mxu0 0.0
    %4479 = vmatprep.subr.mxu0 0.0
    %4480 = vmatpush1.msra.mxu0 0.0
    %4481 = vmatprep.subr.mxu0 0.0
    %4482 = vmatpush1.msra.mxu0 0.0
    %4483 = vmatprep.subr.mxu0 0.0
    %4484 = vmatpush1.msra.mxu0 0.0
    %4485 = vmatprep.subr.mxu0 0.0
    %4486 = vmatpush1.msra.mxu0 0.0
    %4487 = vmatprep.subr.mxu0 0.0
    %4488 = vmatpush1.msra.mxu0 0.0
    %4489 = vmatprep.subr.mxu0 0.0
    %4490 = vmatpush1.msra.mxu0 0.0
    %4491 = vmatprep.subr.mxu0 0.0
    %4492 = vmatpush1.msra.mxu0 0.0
    %4493 = vmatprep.subr.mxu0 0.0
    %4494 = vmatpush1.msra.mxu0 0.0
    %4495 = vmatprep.subr.mxu0 0.0
    %4496 = vmatpush1.msra.mxu0 0.0
    %4497 = vmatprep.subr.mxu0 0.0
    %4498 = vmatpush1.msra.mxu0 0.0
    %4499 = vmatprep.subr.mxu0 0.0
    %4500 = vmatpush1.msra.mxu0 0.0
    %4501 = vmatprep.subr.mxu0 0.0
    %4502 = vmatpush1.msra.mxu0 0.0
    %4503 = vmatprep.subr.mxu0 0.0
    %4504 = vmatpush1.msra.mxu0 0.0
    %4505 = vmatprep.subr.mxu0 0.0
    %4506 = vmatpush1.msra.mxu0 0.0
    %4507 = vmatprep.subr.mxu0 0.0
    %4508 = vmatpush1.msra.mxu0 0.0
    %4509 = vmatprep.subr.mxu0 0.0
    %4510 = vmatpush1.msra.mxu0 0.0
    %4511 = vmatprep.subr.mxu0 0.0
    %4512 = vmatpush1.msra.mxu0 0.0
    %4513 = vmatprep.subr.mxu0 0.0
    %4514 = vmatpush1.msra.mxu0 0.0
    %4515 = vmatprep.subr.mxu0 0.0
    %4516 = vmatpush1.msra.mxu0 0.0
    %4517 = vmatprep.mubr.f32.mxu0 0.0
    %4518 = vmatmul.mubr.f32.gmra.mrb[0].mxu0 %v4308
    %v4519 = vpop.f32.mrb[0].mxu0
    %v4520 = vadd.f32 %v4278, %v4519
    %v4521 = vpop.f32.mrb[0].mxu0
    %4522 = vdwg.mxu0
    %4523 = vmatprep.subr.mxu0 0.0
    %4524 = vmatpush1.msra.mxu0 %v4230
    %4525 = vmatprep.subr.mxu0 0.0
    %4526 = vmatpush1.msra.mxu0 %v4231
    %4527 = vmatprep.subr.mxu0 0.0
    %4528 = vmatpush1.msra.mxu0 %v4232
    %4529 = vmatprep.subr.mxu0 0.0
    %4530 = vmatpush1.msra.mxu0 %v4233
    %4531 = vmatprep.subr.mxu0 0.0
    %4532 = vmatpush1.msra.mxu0 0.0
    %4533 = vmatprep.subr.mxu0 0.0
    %4534 = vmatpush1.msra.mxu0 0.0
    %4535 = vmatprep.subr.mxu0 0.0
    %4536 = vmatpush1.msra.mxu0 0.0
    %4537 = vmatprep.subr.mxu0 0.0
    %4538 = vmatpush1.msra.mxu0 0.0
    %4539 = vmatprep.subr.mxu0 0.0
    %4540 = vmatpush1.msra.mxu0 0.0
    %4541 = vmatprep.subr.mxu0 0.0
    %4542 = vmatpush1.msra.mxu0 0.0
    %4543 = vmatprep.subr.mxu0 0.0
    %4544 = vmatpush1.msra.mxu0 0.0
    %4545 = vmatprep.subr.mxu0 0.0
    %4546 = vmatpush1.msra.mxu0 0.0
    %4547 = vmatprep.subr.mxu0 0.0
    %4548 = vmatpush1.msra.mxu0 0.0
    %4549 = vmatprep.subr.mxu0 0.0
    %4550 = vmatpush1.msra.mxu0 0.0
    %4551 = vmatprep.subr.mxu0 0.0
    %4552 = vmatpush1.msra.mxu0 0.0
    %4553 = vmatprep.subr.mxu0 0.0
    %4554 = vmatpush1.msra.mxu0 0.0
    %4555 = vmatprep.subr.mxu0 0.0
    %4556 = vmatpush1.msra.mxu0 0.0
    %4557 = vmatprep.subr.mxu0 0.0
    %4558 = vmatpush1.msra.mxu0 0.0
    %4559 = vmatprep.subr.mxu0 0.0
    %4560 = vmatpush1.msra.mxu0 0.0
    %4561 = vmatprep.subr.mxu0 0.0
    %4562 = vmatpush1.msra.mxu0 0.0
    %4563 = vmatprep.subr.mxu0 0.0
    %4564 = vmatpush1.msra.mxu0 0.0
    %4565 = vmatprep.subr.mxu0 0.0
    %4566 = vmatpush1.msra.mxu0 0.0
    %4567 = vmatprep.subr.mxu0 0.0
    %4568 = vmatpush1.msra.mxu0 0.0
    %4569 = vmatprep.subr.mxu0 0.0
    %4570 = vmatpush1.msra.mxu0 0.0
    %4571 = vmatprep.subr.mxu0 0.0
    %4572 = vmatpush1.msra.mxu0 0.0
    %4573 = vmatprep.subr.mxu0 0.0
    %4574 = vmatpush1.msra.mxu0 0.0
    %4575 = vmatprep.subr.mxu0 0.0
    %4576 = vmatpush1.msra.mxu0 0.0
    %4577 = vmatprep.subr.mxu0 0.0
    %4578 = vmatpush1.msra.mxu0 0.0
    %4579 = vmatprep.subr.mxu0 0.0
    %4580 = vmatpush1.msra.mxu0 0.0
    %4581 = vmatprep.subr.mxu0 0.0
    %4582 = vmatpush1.msra.mxu0 0.0
    %4583 = vmatprep.subr.mxu0 0.0
    %4584 = vmatpush1.msra.mxu0 0.0
    %4585 = vmatprep.subr.mxu0 0.0
    %4586 = vmatpush1.msra.mxu0 0.0
    %4587 = vmatprep.mubr.f32.mxu0 0.0
    %4588 = vmatmul.mubr.f32.gmra.mrb[0].mxu0 %v4381
    %v4589 = vpop.f32.mrb[0].mxu0
    %v4590 = vadd.f32 %v4282, %v4589
    %v4591 = vpop.f32.mrb[0].mxu0
    %4592 = vdwg.mxu0
    %4593 = vmatprep.subr.mxu0 0.0
    %4594 = vmatpush1.msra.mxu0 %v4234
    %4595 = vmatprep.subr.mxu0 0.0
    %4596 = vmatpush1.msra.mxu0 %v4235
    %4597 = vmatprep.subr.mxu0 0.0
    %4598 = vmatpush1.msra.mxu0 %v4236
    %4599 = vmatprep.subr.mxu0 0.0
    %4600 = vmatpush1.msra.mxu0 %v4237
    %4601 = vmatprep.subr.mxu0 0.0
    %4602 = vmatpush1.msra.mxu0 0.0
    %4603 = vmatprep.subr.mxu0 0.0
    %4604 = vmatpush1.msra.mxu0 0.0
    %4605 = vmatprep.subr.mxu0 0.0
    %4606 = vmatpush1.msra.mxu0 0.0
    %4607 = vmatprep.subr.mxu0 0.0
    %4608 = vmatpush1.msra.mxu0 0.0
    %4609 = vmatprep.subr.mxu0 0.0
    %4610 = vmatpush1.msra.mxu0 0.0
    %4611 = vmatprep.subr.mxu0 0.0
    %4612 = vmatpush1.msra.mxu0 0.0
    %4613 = vmatprep.subr.mxu0 0.0
    %4614 = vmatpush1.msra.mxu0 0.0
    %4615 = vmatprep.subr.mxu0 0.0
    %4616 = vmatpush1.msra.mxu0 0.0
    %4617 = vmatprep.subr.mxu0 0.0
    %4618 = vmatpush1.msra.mxu0 0.0
    %4619 = vmatprep.subr.mxu0 0.0
    %4620 = vmatpush1.msra.mxu0 0.0
    %4621 = vmatprep.subr.mxu0 0.0
    %4622 = vmatpush1.msra.mxu0 0.0
    %4623 = vmatprep.subr.mxu0 0.0
    %4624 = vmatpush1.msra.mxu0 0.0
    %4625 = vmatprep.subr.mxu0 0.0
    %4626 = vmatpush1.msra.mxu0 0.0
    %4627 = vmatprep.subr.mxu0 0.0
    %4628 = vmatpush1.msra.mxu0 0.0
    %4629 = vmatprep.subr.mxu0 0.0
    %4630 = vmatpush1.msra.mxu0 0.0
    %4631 = vmatprep.subr.mxu0 0.0
    %4632 = vmatpush1.msra.mxu0 0.0
    %4633 = vmatprep.subr.mxu0 0.0
    %4634 = vmatpush1.msra.mxu0 0.0
    %4635 = vmatprep.subr.mxu0 0.0
    %4636 = vmatpush1.msra.mxu0 0.0
    %4637 = vmatprep.subr.mxu0 0.0
    %4638 = vmatpush1.msra.mxu0 0.0
    %4639 = vmatprep.subr.mxu0 0.0
    %4640 = vmatpush1.msra.mxu0 0.0
    %4641 = vmatprep.subr.mxu0 0.0
    %4642 = vmatpush1.msra.mxu0 0.0
    %4643 = vmatprep.subr.mxu0 0.0
    %4644 = vmatpush1.msra.mxu0 0.0
    %4645 = vmatprep.subr.mxu0 0.0
    %4646 = vmatpush1.msra.mxu0 0.0
    %4647 = vmatprep.subr.mxu0 0.0
    %4648 = vmatpush1.msra.mxu0 0.0
    %4649 = vmatprep.subr.mxu0 0.0
    %4650 = vmatpush1.msra.mxu0 0.0
    %4651 = vmatprep.subr.mxu0 0.0
    %4652 = vmatpush1.msra.mxu0 0.0
    %4653 = vmatprep.subr.mxu0 0.0
    %4654 = vmatpush1.msra.mxu0 0.0
    %4655 = vmatprep.subr.mxu0 0.0
    %4656 = vmatpush1.msra.mxu0 0.0
    %4657 = vmatprep.mubr.f32.mxu0 0.0
    %4658 = vmatmul.mubr.f32.gmra.mrb[0].mxu0 %v4308
    %v4659 = vpop.f32.mrb[0].mxu0
    %v4660 = vadd.f32 %v4286, %v4659
    %v4661 = vpop.f32.mrb[0].mxu0
    %4662 = vdwg.mxu0
    %4663 = vmatprep.subr.mxu0 0.0
    %4664 = vmatpush1.msra.mxu0 %v4238
    %4665 = vmatprep.subr.mxu0 0.0
    %4666 = vmatpush1.msra.mxu0 %v4239
    %4667 = vmatprep.subr.mxu0 0.0
    %4668 = vmatpush1.msra.mxu0 %v4240
    %4669 = vmatprep.subr.mxu0 0.0
    %4670 = vmatpush1.msra.mxu0 %v4241
    %4671 = vmatprep.subr.mxu0 0.0
    %4672 = vmatpush1.msra.mxu0 0.0
    %4673 = vmatprep.subr.mxu0 0.0
    %4674 = vmatpush1.msra.mxu0 0.0
    %4675 = vmatprep.subr.mxu0 0.0
    %4676 = vmatpush1.msra.mxu0 0.0
    %4677 = vmatprep.subr.mxu0 0.0
    %4678 = vmatpush1.msra.mxu0 0.0
    %4679 = vmatprep.subr.mxu0 0.0
    %4680 = vmatpush1.msra.mxu0 0.0
    %4681 = vmatprep.subr.mxu0 0.0
    %4682 = vmatpush1.msra.mxu0 0.0
    %4683 = vmatprep.subr.mxu0 0.0
    %4684 = vmatpush1.msra.mxu0 0.0
    %4685 = vmatprep.subr.mxu0 0.0
    %4686 = vmatpush1.msra.mxu0 0.0
    %4687 = vmatprep.subr.mxu0 0.0
    %4688 = vmatpush1.msra.mxu0 0.0
    %4689 = vmatprep.subr.mxu0 0.0
    %4690 = vmatpush1.msra.mxu0 0.0
    %4691 = vmatprep.subr.mxu0 0.0
    %4692 = vmatpush1.msra.mxu0 0.0
    %4693 = vmatprep.subr.mxu0 0.0
    %4694 = vmatpush1.msra.mxu0 0.0
    %4695 = vmatprep.subr.mxu0 0.0
    %4696 = vmatpush1.msra.mxu0 0.0
    %4697 = vmatprep.subr.mxu0 0.0
    %4698 = vmatpush1.msra.mxu0 0.0
    %4699 = vmatprep.subr.mxu0 0.0
    %4700 = vmatpush1.msra.mxu0 0.0
    %4701 = vmatprep.subr.mxu0 0.0
    %4702 = vmatpush1.msra.mxu0 0.0
    %4703 = vmatprep.subr.mxu0 0.0
    %4704 = vmatpush1.msra.mxu0 0.0
    %4705 = vmatprep.subr.mxu0 0.0
    %4706 = vmatpush1.msra.mxu0 0.0
    %4707 = vmatprep.subr.mxu0 0.0
    %4708 = vmatpush1.msra.mxu0 0.0
    %4709 = vmatprep.subr.mxu0 0.0
    %4710 = vmatpush1.msra.mxu0 0.0
    %4711 = vmatprep.subr.mxu0 0.0
    %4712 = vmatpush1.msra.mxu0 0.0
    %4713 = vmatprep.subr.mxu0 0.0
    %4714 = vmatpush1.msra.mxu0 0.0
    %4715 = vmatprep.subr.mxu0 0.0
    %4716 = vmatpush1.msra.mxu0 0.0
    %4717 = vmatprep.subr.mxu0 0.0
    %4718 = vmatpush1.msra.mxu0 0.0
    %4719 = vmatprep.subr.mxu0 0.0
    %4720 = vmatpush1.msra.mxu0 0.0
    %4721 = vmatprep.subr.mxu0 0.0
    %4722 = vmatpush1.msra.mxu0 0.0
    %4723 = vmatprep.subr.mxu0 0.0
    %4724 = vmatpush1.msra.mxu0 0.0
    %4725 = vmatprep.subr.mxu0 0.0
    %4726 = vmatpush1.msra.mxu0 0.0
    %4727 = vmatprep.mubr.f32.mxu0 0.0
    %4728 = vmatmul.mubr.f32.gmra.mrb[0].mxu0 %v4381
    %v4729 = vpop.f32.mrb[0].mxu0
    %v4730 = vadd.f32 %v4290, %v4729
    %v4731 = vpop.f32.mrb[0].mxu0
    %4732 = vdwg.mxu0
    %4733 = vmatprep.subr.mxu0 0.0
    %4734 = vmatpush1.msra.mxu0 %v4242
    %4735 = vmatprep.subr.mxu0 0.0
    %4736 = vmatpush1.msra.mxu0 %v4243
    %4737 = vmatprep.subr.mxu0 0.0
    %4738 = vmatpush1.msra.mxu0 %v4244
    %4739 = vmatprep.subr.mxu0 0.0
    %4740 = vmatpush1.msra.mxu0 %v4245
    %4741 = vmatprep.subr.mxu0 0.0
    %4742 = vmatpush1.msra.mxu0 0.0
    %4743 = vmatprep.subr.mxu0 0.0
    %4744 = vmatpush1.msra.mxu0 0.0
    %4745 = vmatprep.subr.mxu0 0.0
    %4746 = vmatpush1.msra.mxu0 0.0
    %4747 = vmatprep.subr.mxu0 0.0
    %4748 = vmatpush1.msra.mxu0 0.0
    %4749 = vmatprep.subr.mxu0 0.0
    %4750 = vmatpush1.msra.mxu0 0.0
    %4751 = vmatprep.subr.mxu0 0.0
    %4752 = vmatpush1.msra.mxu0 0.0
    %4753 = vmatprep.subr.mxu0 0.0
    %4754 = vmatpush1.msra.mxu0 0.0
    %4755 = vmatprep.subr.mxu0 0.0
    %4756 = vmatpush1.msra.mxu0 0.0
    %4757 = vmatprep.subr.mxu0 0.0
    %4758 = vmatpush1.msra.mxu0 0.0
    %4759 = vmatprep.subr.mxu0 0.0
    %4760 = vmatpush1.msra.mxu0 0.0
    %4761 = vmatprep.subr.mxu0 0.0
    %4762 = vmatpush1.msra.mxu0 0.0
    %4763 = vmatprep.subr.mxu0 0.0
    %4764 = vmatpush1.msra.mxu0 0.0
    %4765 = vmatprep.subr.mxu0 0.0
    %4766 = vmatpush1.msra.mxu0 0.0
    %4767 = vmatprep.subr.mxu0 0.0
    %4768 = vmatpush1.msra.mxu0 0.0
    %4769 = vmatprep.subr.mxu0 0.0
    %4770 = vmatpush1.msra.mxu0 0.0
    %4771 = vmatprep.subr.mxu0 0.0
    %4772 = vmatpush1.msra.mxu0 0.0
    %4773 = vmatprep.subr.mxu0 0.0
    %4774 = vmatpush1.msra.mxu0 0.0
    %4775 = vmatprep.subr.mxu0 0.0
    %4776 = vmatpush1.msra.mxu0 0.0
    %4777 = vmatprep.subr.mxu0 0.0
    %4778 = vmatpush1.msra.mxu0 0.0
    %4779 = vmatprep.subr.mxu0 0.0
    %4780 = vmatpush1.msra.mxu0 0.0
    %4781 = vmatprep.subr.mxu0 0.0
    %4782 = vmatpush1.msra.mxu0 0.0
    %4783 = vmatprep.subr.mxu0 0.0
    %4784 = vmatpush1.msra.mxu0 0.0
    %4785 = vmatprep.subr.mxu0 0.0
    %4786 = vmatpush1.msra.mxu0 0.0
    %4787 = vmatprep.subr.mxu0 0.0
    %4788 = vmatpush1.msra.mxu0 0.0
    %4789 = vmatprep.subr.mxu0 0.0
    %4790 = vmatpush1.msra.mxu0 0.0
    %4791 = vmatprep.subr.mxu0 0.0
    %4792 = vmatpush1.msra.mxu0 0.0
    %4793 = vmatprep.subr.mxu0 0.0
    %4794 = vmatpush1.msra.mxu0 0.0
    %4795 = vmatprep.subr.mxu0 0.0
    %4796 = vmatpush1.msra.mxu0 0.0
    %4797 = vmatprep.mubr.f32.mxu0 0.0
    %4798 = vmatmul.mubr.f32.gmra.mrb[0].mxu0 %v4308
    %v4799 = vpop.f32.mrb[0].mxu0
    %v4800 = vadd.f32 %v4294, %v4799
    %v4801 = vpop.f32.mrb[0].mxu0
    %4802 = vdwg.mxu0
    %4803 = vmatprep.subr.mxu0 0.0
    %4804 = vmatpush1.msra.mxu0 %v4246
    %4805 = vmatprep.subr.mxu0 0.0
    %4806 = vmatpush1.msra.mxu0 %v4247
    %4807 = vmatprep.subr.mxu0 0.0
    %4808 = vmatpush1.msra.mxu0 %v4248
    %4809 = vmatprep.subr.mxu0 0.0
    %4810 = vmatpush1.msra.mxu0 %v4249
    %4811 = vmatprep.subr.mxu0 0.0
    %4812 = vmatpush1.msra.mxu0 0.0
    %4813 = vmatprep.subr.mxu0 0.0
    %4814 = vmatpush1.msra.mxu0 0.0
    %4815 = vmatprep.subr.mxu0 0.0
    %4816 = vmatpush1.msra.mxu0 0.0
    %4817 = vmatprep.subr.mxu0 0.0
    %4818 = vmatpush1.msra.mxu0 0.0
    %4819 = vmatprep.subr.mxu0 0.0
    %4820 = vmatpush1.msra.mxu0 0.0
    %4821 = vmatprep.subr.mxu0 0.0
    %4822 = vmatpush1.msra.mxu0 0.0
    %4823 = vmatprep.subr.mxu0 0.0
    %4824 = vmatpush1.msra.mxu0 0.0
    %4825 = vmatprep.subr.mxu0 0.0
    %4826 = vmatpush1.msra.mxu0 0.0
    %4827 = vmatprep.subr.mxu0 0.0
    %4828 = vmatpush1.msra.mxu0 0.0
    %4829 = vmatprep.subr.mxu0 0.0
    %4830 = vmatpush1.msra.mxu0 0.0
    %4831 = vmatprep.subr.mxu0 0.0
    %4832 = vmatpush1.msra.mxu0 0.0
    %4833 = vmatprep.subr.mxu0 0.0
    %4834 = vmatpush1.msra.mxu0 0.0
    %4835 = vmatprep.subr.mxu0 0.0
    %4836 = vmatpush1.msra.mxu0 0.0
    %4837 = vmatprep.subr.mxu0 0.0
    %4838 = vmatpush1.msra.mxu0 0.0
    %4839 = vmatprep.subr.mxu0 0.0
    %4840 = vmatpush1.msra.mxu0 0.0
    %4841 = vmatprep.subr.mxu0 0.0
    %4842 = vmatpush1.msra.mxu0 0.0
    %4843 = vmatprep.subr.mxu0 0.0
    %4844 = vmatpush1.msra.mxu0 0.0
    %4845 = vmatprep.subr.mxu0 0.0
    %4846 = vmatpush1.msra.mxu0 0.0
    %4847 = vmatprep.subr.mxu0 0.0
    %4848 = vmatpush1.msra.mxu0 0.0
    %4849 = vmatprep.subr.mxu0 0.0
    %4850 = vmatpush1.msra.mxu0 0.0
    %4851 = vmatprep.subr.mxu0 0.0
    %4852 = vmatpush1.msra.mxu0 0.0
    %4853 = vmatprep.subr.mxu0 0.0
    %4854 = vmatpush1.msra.mxu0 0.0
    %4855 = vmatprep.subr.mxu0 0.0
    %4856 = vmatpush1.msra.mxu0 0.0
    %4857 = vmatprep.subr.mxu0 0.0
    %4858 = vmatpush1.msra.mxu0 0.0
    %4859 = vmatprep.subr.mxu0 0.0
    %4860 = vmatpush1.msra.mxu0 0.0
    %4861 = vmatprep.subr.mxu0 0.0
    %4862 = vmatpush1.msra.mxu0 0.0
    %4863 = vmatprep.subr.mxu0 0.0
    %4864 = vmatpush1.msra.mxu0 0.0
    %4865 = vmatprep.subr.mxu0 0.0
    %4866 = vmatpush1.msra.mxu0 0.0
    %4867 = vmatprep.mubr.f32.mxu0 0.0
    %4868 = vmatmul.mubr.f32.gmra.mrb[0].mxu0 %v4381
    %v4869 = vpop.f32.mrb[0].mxu0
    %v4870 = vadd.f32 %v4298, %v4869
    %v4871 = vpop.f32.mrb[0].mxu0
    %4872 = vdwg.mxu0
    %s4873 = scalar_lea.vmem %s2, 256
    %v4874 = vld [vmem:[%s4873] sm:$0xff]
    %v4875 = vld [vmem:[%s4873 + $0x8] sm:$0xff]
    %v4876 = vld [vmem:[%s4873 + $0x10] sm:$0xff]
    %v4877 = vld [vmem:[%s4873 + $0x18] sm:$0xff]
    %v4878 = vld [vmem:[%s4873 + $0x20] sm:$0xff]
    %v4879 = vld [vmem:[%s4873 + $0x28] sm:$0xff]
    %v4880 = vld [vmem:[%s4873 + $0x30] sm:$0xff]
    %v4881 = vld [vmem:[%s4873 + $0x38] sm:$0xff]
    %v4882 = vld [vmem:[%s4873 + $0x40] sm:$0xff]
    %v4883 = vld [vmem:[%s4873 + $0x48] sm:$0xff]
    %v4884 = vld [vmem:[%s4873 + $0x50] sm:$0xff]
    %v4885 = vld [vmem:[%s4873 + $0x58] sm:$0xff]
    %v4886 = vld [vmem:[%s4873 + $0x60] sm:$0xff]
    %v4887 = vld [vmem:[%s4873 + $0x68] sm:$0xff]
    %v4888 = vld [vmem:[%s4873 + $0x70] sm:$0xff]
    %v4889 = vld [vmem:[%s4873 + $0x78] sm:$0xff]
    %v4890 = vld [vmem:[%s4873 + $0x80] sm:$0xff]
    %v4891 = vld [vmem:[%s4873 + $0x88] sm:$0xff]
    %v4892 = vld [vmem:[%s4873 + $0x90] sm:$0xff]
    %v4893 = vld [vmem:[%s4873 + $0x98] sm:$0xff]
    %v4894 = vld [vmem:[%s4873 + $0xa0] sm:$0xff]
    %v4895 = vld [vmem:[%s4873 + $0xa8] sm:$0xff]
    %v4896 = vld [vmem:[%s4873 + $0xb0] sm:$0xff]
    %v4897 = vld [vmem:[%s4873 + $0xb8] sm:$0xff]
    %v4898 = vld [vmem:[%s4873 + $0xc0] sm:$0xff]
    %v4899 = vld [vmem:[%s4873 + $0xc8] sm:$0xff]
    %v4900 = vld [vmem:[%s4873 + $0xd0] sm:$0xff]
    %v4901 = vld [vmem:[%s4873 + $0xd8] sm:$0xff]
    %v4902 = vld [vmem:[%s4873 + $0xe0] sm:$0xff]
    %v4903 = vld [vmem:[%s4873 + $0xe8] sm:$0xff]
    %v4904 = vld [vmem:[%s4873 + $0xf0] sm:$0xff]
    %v4905 = vld [vmem:[%s4873 + $0xf8] sm:$0xff]
    %s4906 = scalar_lea.vmem %s5, 8
    %v4907 = vld [vmem:[%s4906] sm:$0x1]
    %v4908 = vld [vmem:[%s4906 + $0x1] sm:$0x1]
    %v4909 = vld [vmem:[%s4906 + $0x2] sm:$0x1]
    %v4910 = vld [vmem:[%s4906 + $0x3] sm:$0x1]
    %v4911 = vld [vmem:[%s4906 + $0x4] sm:$0x1]
    %v4912 = vld [vmem:[%s4906 + $0x5] sm:$0x1]
    %v4913 = vld [vmem:[%s4906 + $0x6] sm:$0x1]
    %v4914 = vld [vmem:[%s4906 + $0x7] sm:$0x1]
    %v4923 = vlaneseq
    %v4924 = vshrl.u32 %v4923, 7
    %v4925 = vsub.s32 0, %v4924
    %v4926 = vrot.slane %v4907, %v4925
    %v4927 = vlaneseq
    %v4928 = vshrl.u32 %v4927, 7
    %v4929 = vsub.s32 0, %v4928
    %v4930 = vrot.slane %v4908, %v4929
    %v4931 = vlaneseq
    %v4932 = vshrl.u32 %v4931, 7
    %v4933 = vsub.s32 0, %v4932
    %v4934 = vrot.slane %v4909, %v4933
    %v4935 = vlaneseq
    %v4936 = vshrl.u32 %v4935, 7
    %v4937 = vsub.s32 0, %v4936
    %v4938 = vrot.slane %v4910, %v4937
    %v4939 = vlaneseq
    %v4940 = vshrl.u32 %v4939, 7
    %v4941 = vsub.s32 0, %v4940
    %v4942 = vrot.slane %v4911, %v4941
    %v4943 = vlaneseq
    %v4944 = vshrl.u32 %v4943, 7
    %v4945 = vsub.s32 0, %v4944
    %v4946 = vrot.slane %v4912, %v4945
    %v4947 = vlaneseq
    %v4948 = vshrl.u32 %v4947, 7
    %v4949 = vsub.s32 0, %v4948
    %v4950 = vrot.slane %v4913, %v4949
    %v4951 = vlaneseq
    %v4952 = vshrl.u32 %v4951, 7
    %v4953 = vsub.s32 0, %v4952
    %v4954 = vrot.slane %v4914, %v4953
    %4963 = vmatprep.subr.mxu0 0.0
    %4964 = vmatpush1.msra.mxu0 %v4874
    %4965 = vmatprep.subr.mxu0 0.0
    %4966 = vmatpush1.msra.mxu0 %v4875
    %4967 = vmatprep.subr.mxu0 0.0
    %4968 = vmatpush1.msra.mxu0 %v4876
    %4969 = vmatprep.subr.mxu0 0.0
    %4970 = vmatpush1.msra.mxu0 %v4877
    %4971 = vmatprep.subr.mxu0 0.0
    %4972 = vmatpush1.msra.mxu0 0.0
    %4973 = vmatprep.subr.mxu0 0.0
    %4974 = vmatpush1.msra.mxu0 0.0
    %4975 = vmatprep.subr.mxu0 0.0
    %4976 = vmatpush1.msra.mxu0 0.0
    %4977 = vmatprep.subr.mxu0 0.0
    %4978 = vmatpush1.msra.mxu0 0.0
    %4979 = vmatprep.subr.mxu0 0.0
    %4980 = vmatpush1.msra.mxu0 0.0
    %4981 = vmatprep.subr.mxu0 0.0
    %4982 = vmatpush1.msra.mxu0 0.0
    %4983 = vmatprep.subr.mxu0 0.0
    %4984 = vmatpush1.msra.mxu0 0.0
    %4985 = vmatprep.subr.mxu0 0.0
    %4986 = vmatpush1.msra.mxu0 0.0
    %4987 = vmatprep.subr.mxu0 0.0
    %4988 = vmatpush1.msra.mxu0 0.0
    %4989 = vmatprep.subr.mxu0 0.0
    %4990 = vmatpush1.msra.mxu0 0.0
    %4991 = vmatprep.subr.mxu0 0.0
    %4992 = vmatpush1.msra.mxu0 0.0
    %4993 = vmatprep.subr.mxu0 0.0
    %4994 = vmatpush1.msra.mxu0 0.0
    %4995 = vmatprep.subr.mxu0 0.0
    %4996 = vmatpush1.msra.mxu0 0.0
    %4997 = vmatprep.subr.mxu0 0.0
    %4998 = vmatpush1.msra.mxu0 0.0
    %4999 = vmatprep.subr.mxu0 0.0
    %5000 = vmatpush1.msra.mxu0 0.0
    %5001 = vmatprep.subr.mxu0 0.0
    %5002 = vmatpush1.msra.mxu0 0.0
    %5003 = vmatprep.subr.mxu0 0.0
    %5004 = vmatpush1.msra.mxu0 0.0
    %5005 = vmatprep.subr.mxu0 0.0
    %5006 = vmatpush1.msra.mxu0 0.0
    %5007 = vmatprep.subr.mxu0 0.0
    %5008 = vmatpush1.msra.mxu0 0.0
    %5009 = vmatprep.subr.mxu0 0.0
    %5010 = vmatpush1.msra.mxu0 0.0
    %5011 = vmatprep.subr.mxu0 0.0
    %5012 = vmatpush1.msra.mxu0 0.0
    %5013 = vmatprep.subr.mxu0 0.0
    %5014 = vmatpush1.msra.mxu0 0.0
    %5015 = vmatprep.subr.mxu0 0.0
    %5016 = vmatpush1.msra.mxu0 0.0
    %5017 = vmatprep.subr.mxu0 0.0
    %5018 = vmatpush1.msra.mxu0 0.0
    %5019 = vmatprep.subr.mxu0 0.0
    %5020 = vmatpush1.msra.mxu0 0.0
    %5021 = vmatprep.subr.mxu0 0.0
    %5022 = vmatpush1.msra.mxu0 0.0
    %5023 = vmatprep.subr.mxu0 0.0
    %5024 = vmatpush1.msra.mxu0 0.0
    %5025 = vmatprep.subr.mxu0 0.0
    %5026 = vmatpush1.msra.mxu0 0.0
    %5027 = vmatprep.mubr.f32.mxu0 0.0
    %5028 = vmatmul.mubr.f32.gmra.mrb[0].mxu0 %v4308
    %v5029 = vpop.f32.mrb[0].mxu0
    %v5030 = vadd.f32 %v4926, %v5029
    %v5031 = vpop.f32.mrb[0].mxu0
    %5032 = vdwg.mxu0
    %5033 = vmatprep.subr.mxu0 0.0
    %5034 = vmatpush1.msra.mxu0 %v4878
    %5035 = vmatprep.subr.mxu0 0.0
    %5036 = vmatpush1.msra.mxu0 %v4879
    %5037 = vmatprep.subr.mxu0 0.0
    %5038 = vmatpush1.msra.mxu0 %v4880
    %5039 = vmatprep.subr.mxu0 0.0
    %5040 = vmatpush1.msra.mxu0 %v4881
    %5041 = vmatprep.subr.mxu0 0.0
    %5042 = vmatpush1.msra.mxu0 0.0
    %5043 = vmatprep.subr.mxu0 0.0
    %5044 = vmatpush1.msra.mxu0 0.0
    %5045 = vmatprep.subr.mxu0 0.0
    %5046 = vmatpush1.msra.mxu0 0.0
    %5047 = vmatprep.subr.mxu0 0.0
    %5048 = vmatpush1.msra.mxu0 0.0
    %5049 = vmatprep.subr.mxu0 0.0
    %5050 = vmatpush1.msra.mxu0 0.0
    %5051 = vmatprep.subr.mxu0 0.0
    %5052 = vmatpush1.msra.mxu0 0.0
    %5053 = vmatprep.subr.mxu0 0.0
    %5054 = vmatpush1.msra.mxu0 0.0
    %5055 = vmatprep.subr.mxu0 0.0
    %5056 = vmatpush1.msra.mxu0 0.0
    %5057 = vmatprep.subr.mxu0 0.0
    %5058 = vmatpush1.msra.mxu0 0.0
    %5059 = vmatprep.subr.mxu0 0.0
    %5060 = vmatpush1.msra.mxu0 0.0
    %5061 = vmatprep.subr.mxu0 0.0
    %5062 = vmatpush1.msra.mxu0 0.0
    %5063 = vmatprep.subr.mxu0 0.0
    %5064 = vmatpush1.msra.mxu0 0.0
    %5065 = vmatprep.subr.mxu0 0.0
    %5066 = vmatpush1.msra.mxu0 0.0
    %5067 = vmatprep.subr.mxu0 0.0
    %5068 = vmatpush1.msra.mxu0 0.0
    %5069 = vmatprep.subr.mxu0 0.0
    %5070 = vmatpush1.msra.mxu0 0.0
    %5071 = vmatprep.subr.mxu0 0.0
    %5072 = vmatpush1.msra.mxu0 0.0
    %5073 = vmatprep.subr.mxu0 0.0
    %5074 = vmatpush1.msra.mxu0 0.0
    %5075 = vmatprep.subr.mxu0 0.0
    %5076 = vmatpush1.msra.mxu0 0.0
    %5077 = vmatprep.subr.mxu0 0.0
    %5078 = vmatpush1.msra.mxu0 0.0
    %5079 = vmatprep.subr.mxu0 0.0
    %5080 = vmatpush1.msra.mxu0 0.0
    %5081 = vmatprep.subr.mxu0 0.0
    %5082 = vmatpush1.msra.mxu0 0.0
    %5083 = vmatprep.subr.mxu0 0.0
    %5084 = vmatpush1.msra.mxu0 0.0
    %5085 = vmatprep.subr.mxu0 0.0
    %5086 = vmatpush1.msra.mxu0 0.0
    %5087 = vmatprep.subr.mxu0 0.0
    %5088 = vmatpush1.msra.mxu0 0.0
    %5089 = vmatprep.subr.mxu0 0.0
    %5090 = vmatpush1.msra.mxu0 0.0
    %5091 = vmatprep.subr.mxu0 0.0
    %5092 = vmatpush1.msra.mxu0 0.0
    %5093 = vmatprep.subr.mxu0 0.0
    %5094 = vmatpush1.msra.mxu0 0.0
    %5095 = vmatprep.subr.mxu0 0.0
    %5096 = vmatpush1.msra.mxu0 0.0
    %5097 = vmatprep.mubr.f32.mxu0 0.0
    %5098 = vmatmul.mubr.f32.gmra.mrb[0].mxu0 %v4381
    %v5099 = vpop.f32.mrb[0].mxu0
    %v5100 = vadd.f32 %v4930, %v5099
    %v5101 = vpop.f32.mrb[0].mxu0
    %5102 = vdwg.mxu0
    %5103 = vmatprep.subr.mxu0 0.0
    %5104 = vmatpush1.msra.mxu0 %v4882
    %5105 = vmatprep.subr.mxu0 0.0
    %5106 = vmatpush1.msra.mxu0 %v4883
    %5107 = vmatprep.subr.mxu0 0.0
    %5108 = vmatpush1.msra.mxu0 %v4884
    %5109 = vmatprep.subr.mxu0 0.0
    %5110 = vmatpush1.msra.mxu0 %v4885
    %5111 = vmatprep.subr.mxu0 0.0
    %5112 = vmatpush1.msra.mxu0 0.0
    %5113 = vmatprep.subr.mxu0 0.0
    %5114 = vmatpush1.msra.mxu0 0.0
    %5115 = vmatprep.subr.mxu0 0.0
    %5116 = vmatpush1.msra.mxu0 0.0
    %5117 = vmatprep.subr.mxu0 0.0
    %5118 = vmatpush1.msra.mxu0 0.0
    %5119 = vmatprep.subr.mxu0 0.0
    %5120 = vmatpush1.msra.mxu0 0.0
    %5121 = vmatprep.subr.mxu0 0.0
    %5122 = vmatpush1.msra.mxu0 0.0
    %5123 = vmatprep.subr.mxu0 0.0
    %5124 = vmatpush1.msra.mxu0 0.0
    %5125 = vmatprep.subr.mxu0 0.0
    %5126 = vmatpush1.msra.mxu0 0.0
    %5127 = vmatprep.subr.mxu0 0.0
    %5128 = vmatpush1.msra.mxu0 0.0
    %5129 = vmatprep.subr.mxu0 0.0
    %5130 = vmatpush1.msra.mxu0 0.0
    %5131 = vmatprep.subr.mxu0 0.0
    %5132 = vmatpush1.msra.mxu0 0.0
    %5133 = vmatprep.subr.mxu0 0.0
    %5134 = vmatpush1.msra.mxu0 0.0
    %5135 = vmatprep.subr.mxu0 0.0
    %5136 = vmatpush1.msra.mxu0 0.0
    %5137 = vmatprep.subr.mxu0 0.0
    %5138 = vmatpush1.msra.mxu0 0.0
    %5139 = vmatprep.subr.mxu0 0.0
    %5140 = vmatpush1.msra.mxu0 0.0
    %5141 = vmatprep.subr.mxu0 0.0
    %5142 = vmatpush1.msra.mxu0 0.0
    %5143 = vmatprep.subr.mxu0 0.0
    %5144 = vmatpush1.msra.mxu0 0.0
    %5145 = vmatprep.subr.mxu0 0.0
    %5146 = vmatpush1.msra.mxu0 0.0
    %5147 = vmatprep.subr.mxu0 0.0
    %5148 = vmatpush1.msra.mxu0 0.0
    %5149 = vmatprep.subr.mxu0 0.0
    %5150 = vmatpush1.msra.mxu0 0.0
    %5151 = vmatprep.subr.mxu0 0.0
    %5152 = vmatpush1.msra.mxu0 0.0
    %5153 = vmatprep.subr.mxu0 0.0
    %5154 = vmatpush1.msra.mxu0 0.0
    %5155 = vmatprep.subr.mxu0 0.0
    %5156 = vmatpush1.msra.mxu0 0.0
    %5157 = vmatprep.subr.mxu0 0.0
    %5158 = vmatpush1.msra.mxu0 0.0
    %5159 = vmatprep.subr.mxu0 0.0
    %5160 = vmatpush1.msra.mxu0 0.0
    %5161 = vmatprep.subr.mxu0 0.0
    %5162 = vmatpush1.msra.mxu0 0.0
    %5163 = vmatprep.subr.mxu0 0.0
    %5164 = vmatpush1.msra.mxu0 0.0
    %5165 = vmatprep.subr.mxu0 0.0
    %5166 = vmatpush1.msra.mxu0 0.0
    %5167 = vmatprep.mubr.f32.mxu0 0.0
    %5168 = vmatmul.mubr.f32.gmra.mrb[0].mxu0 %v4308
    %v5169 = vpop.f32.mrb[0].mxu0
    %v5170 = vadd.f32 %v4934, %v5169
    %v5171 = vpop.f32.mrb[0].mxu0
    %5172 = vdwg.mxu0
    %5173 = vmatprep.subr.mxu0 0.0
    %5174 = vmatpush1.msra.mxu0 %v4886
    %5175 = vmatprep.subr.mxu0 0.0
    %5176 = vmatpush1.msra.mxu0 %v4887
    %5177 = vmatprep.subr.mxu0 0.0
    %5178 = vmatpush1.msra.mxu0 %v4888
    %5179 = vmatprep.subr.mxu0 0.0
    %5180 = vmatpush1.msra.mxu0 %v4889
    %5181 = vmatprep.subr.mxu0 0.0
    %5182 = vmatpush1.msra.mxu0 0.0
    %5183 = vmatprep.subr.mxu0 0.0
    %5184 = vmatpush1.msra.mxu0 0.0
    %5185 = vmatprep.subr.mxu0 0.0
    %5186 = vmatpush1.msra.mxu0 0.0
    %5187 = vmatprep.subr.mxu0 0.0
    %5188 = vmatpush1.msra.mxu0 0.0
    %5189 = vmatprep.subr.mxu0 0.0
    %5190 = vmatpush1.msra.mxu0 0.0
    %5191 = vmatprep.subr.mxu0 0.0
    %5192 = vmatpush1.msra.mxu0 0.0
    %5193 = vmatprep.subr.mxu0 0.0
    %5194 = vmatpush1.msra.mxu0 0.0
    %5195 = vmatprep.subr.mxu0 0.0
    %5196 = vmatpush1.msra.mxu0 0.0
    %5197 = vmatprep.subr.mxu0 0.0
    %5198 = vmatpush1.msra.mxu0 0.0
    %5199 = vmatprep.subr.mxu0 0.0
    %5200 = vmatpush1.msra.mxu0 0.0
    %5201 = vmatprep.subr.mxu0 0.0
    %5202 = vmatpush1.msra.mxu0 0.0
    %5203 = vmatprep.subr.mxu0 0.0
    %5204 = vmatpush1.msra.mxu0 0.0
    %5205 = vmatprep.subr.mxu0 0.0
    %5206 = vmatpush1.msra.mxu0 0.0
    %5207 = vmatprep.subr.mxu0 0.0
    %5208 = vmatpush1.msra.mxu0 0.0
    %5209 = vmatprep.subr.mxu0 0.0
    %5210 = vmatpush1.msra.mxu0 0.0
    %5211 = vmatprep.subr.mxu0 0.0
    %5212 = vmatpush1.msra.mxu0 0.0
    %5213 = vmatprep.subr.mxu0 0.0
    %5214 = vmatpush1.msra.mxu0 0.0
    %5215 = vmatprep.subr.mxu0 0.0
    %5216 = vmatpush1.msra.mxu0 0.0
    %5217 = vmatprep.subr.mxu0 0.0
    %5218 = vmatpush1.msra.mxu0 0.0
    %5219 = vmatprep.subr.mxu0 0.0
    %5220 = vmatpush1.msra.mxu0 0.0
    %5221 = vmatprep.subr.mxu0 0.0
    %5222 = vmatpush1.msra.mxu0 0.0
    %5223 = vmatprep.subr.mxu0 0.0
    %5224 = vmatpush1.msra.mxu0 0.0
    %5225 = vmatprep.subr.mxu0 0.0
    %5226 = vmatpush1.msra.mxu0 0.0
    %5227 = vmatprep.subr.mxu0 0.0
    %5228 = vmatpush1.msra.mxu0 0.0
    %5229 = vmatprep.subr.mxu0 0.0
    %5230 = vmatpush1.msra.mxu0 0.0
    %5231 = vmatprep.subr.mxu0 0.0
    %5232 = vmatpush1.msra.mxu0 0.0
    %5233 = vmatprep.subr.mxu0 0.0
    %5234 = vmatpush1.msra.mxu0 0.0
    %5235 = vmatprep.subr.mxu0 0.0
    %5236 = vmatpush1.msra.mxu0 0.0
    %5237 = vmatprep.mubr.f32.mxu0 0.0
    %5238 = vmatmul.mubr.f32.gmra.mrb[0].mxu0 %v4381
    %v5239 = vpop.f32.mrb[0].mxu0
    %v5240 = vadd.f32 %v4938, %v5239
    %v5241 = vpop.f32.mrb[0].mxu0
    %5242 = vdwg.mxu0
    %5243 = vmatprep.subr.mxu0 0.0
    %5244 = vmatpush1.msra.mxu0 %v4890
    %5245 = vmatprep.subr.mxu0 0.0
    %5246 = vmatpush1.msra.mxu0 %v4891
    %5247 = vmatprep.subr.mxu0 0.0
    %5248 = vmatpush1.msra.mxu0 %v4892
    %5249 = vmatprep.subr.mxu0 0.0
    %5250 = vmatpush1.msra.mxu0 %v4893
    %5251 = vmatprep.subr.mxu0 0.0
    %5252 = vmatpush1.msra.mxu0 0.0
    %5253 = vmatprep.subr.mxu0 0.0
    %5254 = vmatpush1.msra.mxu0 0.0
    %5255 = vmatprep.subr.mxu0 0.0
    %5256 = vmatpush1.msra.mxu0 0.0
    %5257 = vmatprep.subr.mxu0 0.0
    %5258 = vmatpush1.msra.mxu0 0.0
    %5259 = vmatprep.subr.mxu0 0.0
    %5260 = vmatpush1.msra.mxu0 0.0
    %5261 = vmatprep.subr.mxu0 0.0
    %5262 = vmatpush1.msra.mxu0 0.0
    %5263 = vmatprep.subr.mxu0 0.0
    %5264 = vmatpush1.msra.mxu0 0.0
    %5265 = vmatprep.subr.mxu0 0.0
    %5266 = vmatpush1.msra.mxu0 0.0
    %5267 = vmatprep.subr.mxu0 0.0
    %5268 = vmatpush1.msra.mxu0 0.0
    %5269 = vmatprep.subr.mxu0 0.0
    %5270 = vmatpush1.msra.mxu0 0.0
    %5271 = vmatprep.subr.mxu0 0.0
    %5272 = vmatpush1.msra.mxu0 0.0
    %5273 = vmatprep.subr.mxu0 0.0
    %5274 = vmatpush1.msra.mxu0 0.0
    %5275 = vmatprep.subr.mxu0 0.0
    %5276 = vmatpush1.msra.mxu0 0.0
    %5277 = vmatprep.subr.mxu0 0.0
    %5278 = vmatpush1.msra.mxu0 0.0
    %5279 = vmatprep.subr.mxu0 0.0
    %5280 = vmatpush1.msra.mxu0 0.0
    %5281 = vmatprep.subr.mxu0 0.0
    %5282 = vmatpush1.msra.mxu0 0.0
    %5283 = vmatprep.subr.mxu0 0.0
    %5284 = vmatpush1.msra.mxu0 0.0
    %5285 = vmatprep.subr.mxu0 0.0
    %5286 = vmatpush1.msra.mxu0 0.0
    %5287 = vmatprep.subr.mxu0 0.0
    %5288 = vmatpush1.msra.mxu0 0.0
    %5289 = vmatprep.subr.mxu0 0.0
    %5290 = vmatpush1.msra.mxu0 0.0
    %5291 = vmatprep.subr.mxu0 0.0
    %5292 = vmatpush1.msra.mxu0 0.0
    %5293 = vmatprep.subr.mxu0 0.0
    %5294 = vmatpush1.msra.mxu0 0.0
    %5295 = vmatprep.subr.mxu0 0.0
    %5296 = vmatpush1.msra.mxu0 0.0
    %5297 = vmatprep.subr.mxu0 0.0
    %5298 = vmatpush1.msra.mxu0 0.0
    %5299 = vmatprep.subr.mxu0 0.0
    %5300 = vmatpush1.msra.mxu0 0.0
    %5301 = vmatprep.subr.mxu0 0.0
    %5302 = vmatpush1.msra.mxu0 0.0
    %5303 = vmatprep.subr.mxu0 0.0
    %5304 = vmatpush1.msra.mxu0 0.0
    %5305 = vmatprep.subr.mxu0 0.0
    %5306 = vmatpush1.msra.mxu0 0.0
    %5307 = vmatprep.mubr.f32.mxu0 0.0
    %5308 = vmatmul.mubr.f32.gmra.mrb[0].mxu0 %v4308
    %v5309 = vpop.f32.mrb[0].mxu0
    %v5310 = vadd.f32 %v4942, %v5309
    %v5311 = vpop.f32.mrb[0].mxu0
    %5312 = vdwg.mxu0
    %5313 = vmatprep.subr.mxu0 0.0
    %5314 = vmatpush1.msra.mxu0 %v4894
    %5315 = vmatprep.subr.mxu0 0.0
    %5316 = vmatpush1.msra.mxu0 %v4895
    %5317 = vmatprep.subr.mxu0 0.0
    %5318 = vmatpush1.msra.mxu0 %v4896
    %5319 = vmatprep.subr.mxu0 0.0
    %5320 = vmatpush1.msra.mxu0 %v4897
    %5321 = vmatprep.subr.mxu0 0.0
    %5322 = vmatpush1.msra.mxu0 0.0
    %5323 = vmatprep.subr.mxu0 0.0
    %5324 = vmatpush1.msra.mxu0 0.0
    %5325 = vmatprep.subr.mxu0 0.0
    %5326 = vmatpush1.msra.mxu0 0.0
    %5327 = vmatprep.subr.mxu0 0.0
    %5328 = vmatpush1.msra.mxu0 0.0
    %5329 = vmatprep.subr.mxu0 0.0
    %5330 = vmatpush1.msra.mxu0 0.0
    %5331 = vmatprep.subr.mxu0 0.0
    %5332 = vmatpush1.msra.mxu0 0.0
    %5333 = vmatprep.subr.mxu0 0.0
    %5334 = vmatpush1.msra.mxu0 0.0
    %5335 = vmatprep.subr.mxu0 0.0
    %5336 = vmatpush1.msra.mxu0 0.0
    %5337 = vmatprep.subr.mxu0 0.0
    %5338 = vmatpush1.msra.mxu0 0.0
    %5339 = vmatprep.subr.mxu0 0.0
    %5340 = vmatpush1.msra.mxu0 0.0
    %5341 = vmatprep.subr.mxu0 0.0
    %5342 = vmatpush1.msra.mxu0 0.0
    %5343 = vmatprep.subr.mxu0 0.0
    %5344 = vmatpush1.msra.mxu0 0.0
    %5345 = vmatprep.subr.mxu0 0.0
    %5346 = vmatpush1.msra.mxu0 0.0
    %5347 = vmatprep.subr.mxu0 0.0
    %5348 = vmatpush1.msra.mxu0 0.0
    %5349 = vmatprep.subr.mxu0 0.0
    %5350 = vmatpush1.msra.mxu0 0.0
    %5351 = vmatprep.subr.mxu0 0.0
    %5352 = vmatpush1.msra.mxu0 0.0
    %5353 = vmatprep.subr.mxu0 0.0
    %5354 = vmatpush1.msra.mxu0 0.0
    %5355 = vmatprep.subr.mxu0 0.0
    %5356 = vmatpush1.msra.mxu0 0.0
    %5357 = vmatprep.subr.mxu0 0.0
    %5358 = vmatpush1.msra.mxu0 0.0
    %5359 = vmatprep.subr.mxu0 0.0
    %5360 = vmatpush1.msra.mxu0 0.0
    %5361 = vmatprep.subr.mxu0 0.0
    %5362 = vmatpush1.msra.mxu0 0.0
    %5363 = vmatprep.subr.mxu0 0.0
    %5364 = vmatpush1.msra.mxu0 0.0
    %5365 = vmatprep.subr.mxu0 0.0
    %5366 = vmatpush1.msra.mxu0 0.0
    %5367 = vmatprep.subr.mxu0 0.0
    %5368 = vmatpush1.msra.mxu0 0.0
    %5369 = vmatprep.subr.mxu0 0.0
    %5370 = vmatpush1.msra.mxu0 0.0
    %5371 = vmatprep.subr.mxu0 0.0
    %5372 = vmatpush1.msra.mxu0 0.0
    %5373 = vmatprep.subr.mxu0 0.0
    %5374 = vmatpush1.msra.mxu0 0.0
    %5375 = vmatprep.subr.mxu0 0.0
    %5376 = vmatpush1.msra.mxu0 0.0
    %5377 = vmatprep.mubr.f32.mxu0 0.0
    %5378 = vmatmul.mubr.f32.gmra.mrb[0].mxu0 %v4381
    %v5379 = vpop.f32.mrb[0].mxu0
    %v5380 = vadd.f32 %v4946, %v5379
    %v5381 = vpop.f32.mrb[0].mxu0
    %5382 = vdwg.mxu0
    %5383 = vmatprep.subr.mxu0 0.0
    %5384 = vmatpush1.msra.mxu0 %v4898
    %5385 = vmatprep.subr.mxu0 0.0
    %5386 = vmatpush1.msra.mxu0 %v4899
    %5387 = vmatprep.subr.mxu0 0.0
    %5388 = vmatpush1.msra.mxu0 %v4900
    %5389 = vmatprep.subr.mxu0 0.0
    %5390 = vmatpush1.msra.mxu0 %v4901
    %5391 = vmatprep.subr.mxu0 0.0
    %5392 = vmatpush1.msra.mxu0 0.0
    %5393 = vmatprep.subr.mxu0 0.0
    %5394 = vmatpush1.msra.mxu0 0.0
    %5395 = vmatprep.subr.mxu0 0.0
    %5396 = vmatpush1.msra.mxu0 0.0
    %5397 = vmatprep.subr.mxu0 0.0
    %5398 = vmatpush1.msra.mxu0 0.0
    %5399 = vmatprep.subr.mxu0 0.0
    %5400 = vmatpush1.msra.mxu0 0.0
    %5401 = vmatprep.subr.mxu0 0.0
    %5402 = vmatpush1.msra.mxu0 0.0
    %5403 = vmatprep.subr.mxu0 0.0
    %5404 = vmatpush1.msra.mxu0 0.0
    %5405 = vmatprep.subr.mxu0 0.0
    %5406 = vmatpush1.msra.mxu0 0.0
    %5407 = vmatprep.subr.mxu0 0.0
    %5408 = vmatpush1.msra.mxu0 0.0
    %5409 = vmatprep.subr.mxu0 0.0
    %5410 = vmatpush1.msra.mxu0 0.0
    %5411 = vmatprep.subr.mxu0 0.0
    %5412 = vmatpush1.msra.mxu0 0.0
    %5413 = vmatprep.subr.mxu0 0.0
    %5414 = vmatpush1.msra.mxu0 0.0
    %5415 = vmatprep.subr.mxu0 0.0
    %5416 = vmatpush1.msra.mxu0 0.0
    %5417 = vmatprep.subr.mxu0 0.0
    %5418 = vmatpush1.msra.mxu0 0.0
    %5419 = vmatprep.subr.mxu0 0.0
    %5420 = vmatpush1.msra.mxu0 0.0
    %5421 = vmatprep.subr.mxu0 0.0
    %5422 = vmatpush1.msra.mxu0 0.0
    %5423 = vmatprep.subr.mxu0 0.0
    %5424 = vmatpush1.msra.mxu0 0.0
    %5425 = vmatprep.subr.mxu0 0.0
    %5426 = vmatpush1.msra.mxu0 0.0
    %5427 = vmatprep.subr.mxu0 0.0
    %5428 = vmatpush1.msra.mxu0 0.0
    %5429 = vmatprep.subr.mxu0 0.0
    %5430 = vmatpush1.msra.mxu0 0.0
    %5431 = vmatprep.subr.mxu0 0.0
    %5432 = vmatpush1.msra.mxu0 0.0
    %5433 = vmatprep.subr.mxu0 0.0
    %5434 = vmatpush1.msra.mxu0 0.0
    %5435 = vmatprep.subr.mxu0 0.0
    %5436 = vmatpush1.msra.mxu0 0.0
    %5437 = vmatprep.subr.mxu0 0.0
    %5438 = vmatpush1.msra.mxu0 0.0
    %5439 = vmatprep.subr.mxu0 0.0
    %5440 = vmatpush1.msra.mxu0 0.0
    %5441 = vmatprep.subr.mxu0 0.0
    %5442 = vmatpush1.msra.mxu0 0.0
    %5443 = vmatprep.subr.mxu0 0.0
    %5444 = vmatpush1.msra.mxu0 0.0
    %5445 = vmatprep.subr.mxu0 0.0
    %5446 = vmatpush1.msra.mxu0 0.0
    %5447 = vmatprep.mubr.f32.mxu0 0.0
    %5448 = vmatmul.mubr.f32.gmra.mrb[0].mxu0 %v4308
    %v5449 = vpop.f32.mrb[0].mxu0
    %v5450 = vadd.f32 %v4950, %v5449
    %v5451 = vpop.f32.mrb[0].mxu0
    %5452 = vdwg.mxu0
    %5453 = vmatprep.subr.mxu0 0.0
    %5454 = vmatpush1.msra.mxu0 %v4902
    %5455 = vmatprep.subr.mxu0 0.0
    %5456 = vmatpush1.msra.mxu0 %v4903
    %5457 = vmatprep.subr.mxu0 0.0
    %5458 = vmatpush1.msra.mxu0 %v4904
    %5459 = vmatprep.subr.mxu0 0.0
    %5460 = vmatpush1.msra.mxu0 %v4905
    %5461 = vmatprep.subr.mxu0 0.0
    %5462 = vmatpush1.msra.mxu0 0.0
    %5463 = vmatprep.subr.mxu0 0.0
    %5464 = vmatpush1.msra.mxu0 0.0
    %5465 = vmatprep.subr.mxu0 0.0
    %5466 = vmatpush1.msra.mxu0 0.0
    %5467 = vmatprep.subr.mxu0 0.0
    %5468 = vmatpush1.msra.mxu0 0.0
    %5469 = vmatprep.subr.mxu0 0.0
    %5470 = vmatpush1.msra.mxu0 0.0
    %5471 = vmatprep.subr.mxu0 0.0
    %5472 = vmatpush1.msra.mxu0 0.0
    %5473 = vmatprep.subr.mxu0 0.0
    %5474 = vmatpush1.msra.mxu0 0.0
    %5475 = vmatprep.subr.mxu0 0.0
    %5476 = vmatpush1.msra.mxu0 0.0
    %5477 = vmatprep.subr.mxu0 0.0
    %5478 = vmatpush1.msra.mxu0 0.0
    %5479 = vmatprep.subr.mxu0 0.0
    %5480 = vmatpush1.msra.mxu0 0.0
    %5481 = vmatprep.subr.mxu0 0.0
    %5482 = vmatpush1.msra.mxu0 0.0
    %5483 = vmatprep.subr.mxu0 0.0
    %5484 = vmatpush1.msra.mxu0 0.0
    %5485 = vmatprep.subr.mxu0 0.0
    %5486 = vmatpush1.msra.mxu0 0.0
    %5487 = vmatprep.subr.mxu0 0.0
    %5488 = vmatpush1.msra.mxu0 0.0
    %5489 = vmatprep.subr.mxu0 0.0
    %5490 = vmatpush1.msra.mxu0 0.0
    %5491 = vmatprep.subr.mxu0 0.0
    %5492 = vmatpush1.msra.mxu0 0.0
    %5493 = vmatprep.subr.mxu0 0.0
    %5494 = vmatpush1.msra.mxu0 0.0
    %5495 = vmatprep.subr.mxu0 0.0
    %5496 = vmatpush1.msra.mxu0 0.0
    %5497 = vmatprep.subr.mxu0 0.0
    %5498 = vmatpush1.msra.mxu0 0.0
    %5499 = vmatprep.subr.mxu0 0.0
    %5500 = vmatpush1.msra.mxu0 0.0
    %5501 = vmatprep.subr.mxu0 0.0
    %5502 = vmatpush1.msra.mxu0 0.0
    %5503 = vmatprep.subr.mxu0 0.0
    %5504 = vmatpush1.msra.mxu0 0.0
    %5505 = vmatprep.subr.mxu0 0.0
    %5506 = vmatpush1.msra.mxu0 0.0
    %5507 = vmatprep.subr.mxu0 0.0
    %5508 = vmatpush1.msra.mxu0 0.0
    %5509 = vmatprep.subr.mxu0 0.0
    %5510 = vmatpush1.msra.mxu0 0.0
    %5511 = vmatprep.subr.mxu0 0.0
    %5512 = vmatpush1.msra.mxu0 0.0
    %5513 = vmatprep.subr.mxu0 0.0
    %5514 = vmatpush1.msra.mxu0 0.0
    %5515 = vmatprep.subr.mxu0 0.0
    %5516 = vmatpush1.msra.mxu0 0.0
    %5517 = vmatprep.mubr.f32.mxu0 0.0
    %5518 = vmatmul.mubr.f32.gmra.mrb[0].mxu0 %v4381
    %v5519 = vpop.f32.mrb[0].mxu0
    %v5520 = vadd.f32 %v4954, %v5519
    %v5521 = vpop.f32.mrb[0].mxu0
    %5522 = vdwg.mxu0
    %s5523 = scalar_lea.vmem %s3, 256
    %v5524 = vld [vmem:[%s5523] sm:$0xff]
    %v5525 = vld [vmem:[%s5523 + $0x8] sm:$0xff]
    %v5526 = vld [vmem:[%s5523 + $0x10] sm:$0xff]
    %v5527 = vld [vmem:[%s5523 + $0x18] sm:$0xff]
    %v5528 = vld [vmem:[%s5523 + $0x20] sm:$0xff]
    %v5529 = vld [vmem:[%s5523 + $0x28] sm:$0xff]
    %v5530 = vld [vmem:[%s5523 + $0x30] sm:$0xff]
    %v5531 = vld [vmem:[%s5523 + $0x38] sm:$0xff]
    %v5532 = vld [vmem:[%s5523 + $0x40] sm:$0xff]
    %v5533 = vld [vmem:[%s5523 + $0x48] sm:$0xff]
    %v5534 = vld [vmem:[%s5523 + $0x50] sm:$0xff]
    %v5535 = vld [vmem:[%s5523 + $0x58] sm:$0xff]
    %v5536 = vld [vmem:[%s5523 + $0x60] sm:$0xff]
    %v5537 = vld [vmem:[%s5523 + $0x68] sm:$0xff]
    %v5538 = vld [vmem:[%s5523 + $0x70] sm:$0xff]
    %v5539 = vld [vmem:[%s5523 + $0x78] sm:$0xff]
    %v5540 = vld [vmem:[%s5523 + $0x80] sm:$0xff]
    %v5541 = vld [vmem:[%s5523 + $0x88] sm:$0xff]
    %v5542 = vld [vmem:[%s5523 + $0x90] sm:$0xff]
    %v5543 = vld [vmem:[%s5523 + $0x98] sm:$0xff]
    %v5544 = vld [vmem:[%s5523 + $0xa0] sm:$0xff]
    %v5545 = vld [vmem:[%s5523 + $0xa8] sm:$0xff]
    %v5546 = vld [vmem:[%s5523 + $0xb0] sm:$0xff]
    %v5547 = vld [vmem:[%s5523 + $0xb8] sm:$0xff]
    %v5548 = vld [vmem:[%s5523 + $0xc0] sm:$0xff]
    %v5549 = vld [vmem:[%s5523 + $0xc8] sm:$0xff]
    %v5550 = vld [vmem:[%s5523 + $0xd0] sm:$0xff]
    %v5551 = vld [vmem:[%s5523 + $0xd8] sm:$0xff]
    %v5552 = vld [vmem:[%s5523 + $0xe0] sm:$0xff]
    %v5553 = vld [vmem:[%s5523 + $0xe8] sm:$0xff]
    %v5554 = vld [vmem:[%s5523 + $0xf0] sm:$0xff]
    %v5555 = vld [vmem:[%s5523 + $0xf8] sm:$0xff]
    %s5556 = scalar_lea.vmem %s6, 8
    %v5557 = vld [vmem:[%s5556] sm:$0x1]
    %v5558 = vld [vmem:[%s5556 + $0x1] sm:$0x1]
    %v5559 = vld [vmem:[%s5556 + $0x2] sm:$0x1]
    %v5560 = vld [vmem:[%s5556 + $0x3] sm:$0x1]
    %v5561 = vld [vmem:[%s5556 + $0x4] sm:$0x1]
    %v5562 = vld [vmem:[%s5556 + $0x5] sm:$0x1]
    %v5563 = vld [vmem:[%s5556 + $0x6] sm:$0x1]
    %v5564 = vld [vmem:[%s5556 + $0x7] sm:$0x1]
    %v5573 = vlaneseq
    %v5574 = vshrl.u32 %v5573, 7
    %v5575 = vsub.s32 0, %v5574
    %v5576 = vrot.slane %v5557, %v5575
    %v5577 = vlaneseq
    %v5578 = vshrl.u32 %v5577, 7
    %v5579 = vsub.s32 0, %v5578
    %v5580 = vrot.slane %v5558, %v5579
    %v5581 = vlaneseq
    %v5582 = vshrl.u32 %v5581, 7
    %v5583 = vsub.s32 0, %v5582
    %v5584 = vrot.slane %v5559, %v5583
    %v5585 = vlaneseq
    %v5586 = vshrl.u32 %v5585, 7
    %v5587 = vsub.s32 0, %v5586
    %v5588 = vrot.slane %v5560, %v5587
    %v5589 = vlaneseq
    %v5590 = vshrl.u32 %v5589, 7
    %v5591 = vsub.s32 0, %v5590
    %v5592 = vrot.slane %v5561, %v5591
    %v5593 = vlaneseq
    %v5594 = vshrl.u32 %v5593, 7
    %v5595 = vsub.s32 0, %v5594
    %v5596 = vrot.slane %v5562, %v5595
    %v5597 = vlaneseq
    %v5598 = vshrl.u32 %v5597, 7
    %v5599 = vsub.s32 0, %v5598
    %v5600 = vrot.slane %v5563, %v5599
    %v5601 = vlaneseq
    %v5602 = vshrl.u32 %v5601, 7
    %v5603 = vsub.s32 0, %v5602
    %v5604 = vrot.slane %v5564, %v5603
    %5613 = vmatprep.subr.mxu0 0.0
    %5614 = vmatpush1.msra.mxu0 %v5524
    %5615 = vmatprep.subr.mxu0 0.0
    %5616 = vmatpush1.msra.mxu0 %v5525
    %5617 = vmatprep.subr.mxu0 0.0
    %5618 = vmatpush1.msra.mxu0 %v5526
    %5619 = vmatprep.subr.mxu0 0.0
    %5620 = vmatpush1.msra.mxu0 %v5527
    %5621 = vmatprep.subr.mxu0 0.0
    %5622 = vmatpush1.msra.mxu0 0.0
    %5623 = vmatprep.subr.mxu0 0.0
    %5624 = vmatpush1.msra.mxu0 0.0
    %5625 = vmatprep.subr.mxu0 0.0
    %5626 = vmatpush1.msra.mxu0 0.0
    %5627 = vmatprep.subr.mxu0 0.0
    %5628 = vmatpush1.msra.mxu0 0.0
    %5629 = vmatprep.subr.mxu0 0.0
    %5630 = vmatpush1.msra.mxu0 0.0
    %5631 = vmatprep.subr.mxu0 0.0
    %5632 = vmatpush1.msra.mxu0 0.0
    %5633 = vmatprep.subr.mxu0 0.0
    %5634 = vmatpush1.msra.mxu0 0.0
    %5635 = vmatprep.subr.mxu0 0.0
    %5636 = vmatpush1.msra.mxu0 0.0
    %5637 = vmatprep.subr.mxu0 0.0
    %5638 = vmatpush1.msra.mxu0 0.0
    %5639 = vmatprep.subr.mxu0 0.0
    %5640 = vmatpush1.msra.mxu0 0.0
    %5641 = vmatprep.subr.mxu0 0.0
    %5642 = vmatpush1.msra.mxu0 0.0
    %5643 = vmatprep.subr.mxu0 0.0
    %5644 = vmatpush1.msra.mxu0 0.0
    %5645 = vmatprep.subr.mxu0 0.0
    %5646 = vmatpush1.msra.mxu0 0.0
    %5647 = vmatprep.subr.mxu0 0.0
    %5648 = vmatpush1.msra.mxu0 0.0
    %5649 = vmatprep.subr.mxu0 0.0
    %5650 = vmatpush1.msra.mxu0 0.0
    %5651 = vmatprep.subr.mxu0 0.0
    %5652 = vmatpush1.msra.mxu0 0.0
    %5653 = vmatprep.subr.mxu0 0.0
    %5654 = vmatpush1.msra.mxu0 0.0
    %5655 = vmatprep.subr.mxu0 0.0
    %5656 = vmatpush1.msra.mxu0 0.0
    %5657 = vmatprep.subr.mxu0 0.0
    %5658 = vmatpush1.msra.mxu0 0.0
    %5659 = vmatprep.subr.mxu0 0.0
    %5660 = vmatpush1.msra.mxu0 0.0
    %5661 = vmatprep.subr.mxu0 0.0
    %5662 = vmatpush1.msra.mxu0 0.0
    %5663 = vmatprep.subr.mxu0 0.0
    %5664 = vmatpush1.msra.mxu0 0.0
    %5665 = vmatprep.subr.mxu0 0.0
    %5666 = vmatpush1.msra.mxu0 0.0
    %5667 = vmatprep.subr.mxu0 0.0
    %5668 = vmatpush1.msra.mxu0 0.0
    %5669 = vmatprep.subr.mxu0 0.0
    %5670 = vmatpush1.msra.mxu0 0.0
    %5671 = vmatprep.subr.mxu0 0.0
    %5672 = vmatpush1.msra.mxu0 0.0
    %5673 = vmatprep.subr.mxu0 0.0
    %5674 = vmatpush1.msra.mxu0 0.0
    %5675 = vmatprep.subr.mxu0 0.0
    %5676 = vmatpush1.msra.mxu0 0.0
    %5677 = vmatprep.mubr.f32.mxu0 0.0
    %5678 = vmatmul.mubr.f32.gmra.mrb[0].mxu0 %v4308
    %v5679 = vpop.f32.mrb[0].mxu0
    %v5680 = vadd.f32 %v5576, %v5679
    %v5681 = vpop.f32.mrb[0].mxu0
    %5682 = vdwg.mxu0
    %5683 = vmatprep.subr.mxu0 0.0
    %5684 = vmatpush1.msra.mxu0 %v5528
    %5685 = vmatprep.subr.mxu0 0.0
    %5686 = vmatpush1.msra.mxu0 %v5529
    %5687 = vmatprep.subr.mxu0 0.0
    %5688 = vmatpush1.msra.mxu0 %v5530
    %5689 = vmatprep.subr.mxu0 0.0
    %5690 = vmatpush1.msra.mxu0 %v5531
    %5691 = vmatprep.subr.mxu0 0.0
    %5692 = vmatpush1.msra.mxu0 0.0
    %5693 = vmatprep.subr.mxu0 0.0
    %5694 = vmatpush1.msra.mxu0 0.0
    %5695 = vmatprep.subr.mxu0 0.0
    %5696 = vmatpush1.msra.mxu0 0.0
    %5697 = vmatprep.subr.mxu0 0.0
    %5698 = vmatpush1.msra.mxu0 0.0
    %5699 = vmatprep.subr.mxu0 0.0
    %5700 = vmatpush1.msra.mxu0 0.0
    %5701 = vmatprep.subr.mxu0 0.0
    %5702 = vmatpush1.msra.mxu0 0.0
    %5703 = vmatprep.subr.mxu0 0.0
    %5704 = vmatpush1.msra.mxu0 0.0
    %5705 = vmatprep.subr.mxu0 0.0
    %5706 = vmatpush1.msra.mxu0 0.0
    %5707 = vmatprep.subr.mxu0 0.0
    %5708 = vmatpush1.msra.mxu0 0.0
    %5709 = vmatprep.subr.mxu0 0.0
    %5710 = vmatpush1.msra.mxu0 0.0
    %5711 = vmatprep.subr.mxu0 0.0
    %5712 = vmatpush1.msra.mxu0 0.0
    %5713 = vmatprep.subr.mxu0 0.0
    %5714 = vmatpush1.msra.mxu0 0.0
    %5715 = vmatprep.subr.mxu0 0.0
    %5716 = vmatpush1.msra.mxu0 0.0
    %5717 = vmatprep.subr.mxu0 0.0
    %5718 = vmatpush1.msra.mxu0 0.0
    %5719 = vmatprep.subr.mxu0 0.0
    %5720 = vmatpush1.msra.mxu0 0.0
    %5721 = vmatprep.subr.mxu0 0.0
    %5722 = vmatpush1.msra.mxu0 0.0
    %5723 = vmatprep.subr.mxu0 0.0
    %5724 = vmatpush1.msra.mxu0 0.0
    %5725 = vmatprep.subr.mxu0 0.0
    %5726 = vmatpush1.msra.mxu0 0.0
    %5727 = vmatprep.subr.mxu0 0.0
    %5728 = vmatpush1.msra.mxu0 0.0
    %5729 = vmatprep.subr.mxu0 0.0
    %5730 = vmatpush1.msra.mxu0 0.0
    %5731 = vmatprep.subr.mxu0 0.0
    %5732 = vmatpush1.msra.mxu0 0.0
    %5733 = vmatprep.subr.mxu0 0.0
    %5734 = vmatpush1.msra.mxu0 0.0
    %5735 = vmatprep.subr.mxu0 0.0
    %5736 = vmatpush1.msra.mxu0 0.0
    %5737 = vmatprep.subr.mxu0 0.0
    %5738 = vmatpush1.msra.mxu0 0.0
    %5739 = vmatprep.subr.mxu0 0.0
    %5740 = vmatpush1.msra.mxu0 0.0
    %5741 = vmatprep.subr.mxu0 0.0
    %5742 = vmatpush1.msra.mxu0 0.0
    %5743 = vmatprep.subr.mxu0 0.0
    %5744 = vmatpush1.msra.mxu0 0.0
    %5745 = vmatprep.subr.mxu0 0.0
    %5746 = vmatpush1.msra.mxu0 0.0
    %5747 = vmatprep.mubr.f32.mxu0 0.0
    %5748 = vmatmul.mubr.f32.gmra.mrb[0].mxu0 %v4381
    %v5749 = vpop.f32.mrb[0].mxu0
    %v5750 = vadd.f32 %v5580, %v5749
    %v5751 = vpop.f32.mrb[0].mxu0
    %5752 = vdwg.mxu0
    %5753 = vmatprep.subr.mxu0 0.0
    %5754 = vmatpush1.msra.mxu0 %v5532
    %5755 = vmatprep.subr.mxu0 0.0
    %5756 = vmatpush1.msra.mxu0 %v5533
    %5757 = vmatprep.subr.mxu0 0.0
    %5758 = vmatpush1.msra.mxu0 %v5534
    %5759 = vmatprep.subr.mxu0 0.0
    %5760 = vmatpush1.msra.mxu0 %v5535
    %5761 = vmatprep.subr.mxu0 0.0
    %5762 = vmatpush1.msra.mxu0 0.0
    %5763 = vmatprep.subr.mxu0 0.0
    %5764 = vmatpush1.msra.mxu0 0.0
    %5765 = vmatprep.subr.mxu0 0.0
    %5766 = vmatpush1.msra.mxu0 0.0
    %5767 = vmatprep.subr.mxu0 0.0
    %5768 = vmatpush1.msra.mxu0 0.0
    %5769 = vmatprep.subr.mxu0 0.0
    %5770 = vmatpush1.msra.mxu0 0.0
    %5771 = vmatprep.subr.mxu0 0.0
    %5772 = vmatpush1.msra.mxu0 0.0
    %5773 = vmatprep.subr.mxu0 0.0
    %5774 = vmatpush1.msra.mxu0 0.0
    %5775 = vmatprep.subr.mxu0 0.0
    %5776 = vmatpush1.msra.mxu0 0.0
    %5777 = vmatprep.subr.mxu0 0.0
    %5778 = vmatpush1.msra.mxu0 0.0
    %5779 = vmatprep.subr.mxu0 0.0
    %5780 = vmatpush1.msra.mxu0 0.0
    %5781 = vmatprep.subr.mxu0 0.0
    %5782 = vmatpush1.msra.mxu0 0.0
    %5783 = vmatprep.subr.mxu0 0.0
    %5784 = vmatpush1.msra.mxu0 0.0
    %5785 = vmatprep.subr.mxu0 0.0
    %5786 = vmatpush1.msra.mxu0 0.0
    %5787 = vmatprep.subr.mxu0 0.0
    %5788 = vmatpush1.msra.mxu0 0.0
    %5789 = vmatprep.subr.mxu0 0.0
    %5790 = vmatpush1.msra.mxu0 0.0
    %5791 = vmatprep.subr.mxu0 0.0
    %5792 = vmatpush1.msra.mxu0 0.0
    %5793 = vmatprep.subr.mxu0 0.0
    %5794 = vmatpush1.msra.mxu0 0.0
    %5795 = vmatprep.subr.mxu0 0.0
    %5796 = vmatpush1.msra.mxu0 0.0
    %5797 = vmatprep.subr.mxu0 0.0
    %5798 = vmatpush1.msra.mxu0 0.0
    %5799 = vmatprep.subr.mxu0 0.0
    %5800 = vmatpush1.msra.mxu0 0.0
    %5801 = vmatprep.subr.mxu0 0.0
    %5802 = vmatpush1.msra.mxu0 0.0
    %5803 = vmatprep.subr.mxu0 0.0
    %5804 = vmatpush1.msra.mxu0 0.0
    %5805 = vmatprep.subr.mxu0 0.0
    %5806 = vmatpush1.msra.mxu0 0.0
    %5807 = vmatprep.subr.mxu0 0.0
    %5808 = vmatpush1.msra.mxu0 0.0
    %5809 = vmatprep.subr.mxu0 0.0
    %5810 = vmatpush1.msra.mxu0 0.0
    %5811 = vmatprep.subr.mxu0 0.0
    %5812 = vmatpush1.msra.mxu0 0.0
    %5813 = vmatprep.subr.mxu0 0.0
    %5814 = vmatpush1.msra.mxu0 0.0
    %5815 = vmatprep.subr.mxu0 0.0
    %5816 = vmatpush1.msra.mxu0 0.0
    %5817 = vmatprep.mubr.f32.mxu0 0.0
    %5818 = vmatmul.mubr.f32.gmra.mrb[0].mxu0 %v4308
    %v5819 = vpop.f32.mrb[0].mxu0
    %v5820 = vadd.f32 %v5584, %v5819
    %v5821 = vpop.f32.mrb[0].mxu0
    %5822 = vdwg.mxu0
    %5823 = vmatprep.subr.mxu0 0.0
    %5824 = vmatpush1.msra.mxu0 %v5536
    %5825 = vmatprep.subr.mxu0 0.0
    %5826 = vmatpush1.msra.mxu0 %v5537
    %5827 = vmatprep.subr.mxu0 0.0
    %5828 = vmatpush1.msra.mxu0 %v5538
    %5829 = vmatprep.subr.mxu0 0.0
    %5830 = vmatpush1.msra.mxu0 %v5539
    %5831 = vmatprep.subr.mxu0 0.0
    %5832 = vmatpush1.msra.mxu0 0.0
    %5833 = vmatprep.subr.mxu0 0.0
    %5834 = vmatpush1.msra.mxu0 0.0
    %5835 = vmatprep.subr.mxu0 0.0
    %5836 = vmatpush1.msra.mxu0 0.0
    %5837 = vmatprep.subr.mxu0 0.0
    %5838 = vmatpush1.msra.mxu0 0.0
    %5839 = vmatprep.subr.mxu0 0.0
    %5840 = vmatpush1.msra.mxu0 0.0
    %5841 = vmatprep.subr.mxu0 0.0
    %5842 = vmatpush1.msra.mxu0 0.0
    %5843 = vmatprep.subr.mxu0 0.0
    %5844 = vmatpush1.msra.mxu0 0.0
    %5845 = vmatprep.subr.mxu0 0.0
    %5846 = vmatpush1.msra.mxu0 0.0
    %5847 = vmatprep.subr.mxu0 0.0
    %5848 = vmatpush1.msra.mxu0 0.0
    %5849 = vmatprep.subr.mxu0 0.0
    %5850 = vmatpush1.msra.mxu0 0.0
    %5851 = vmatprep.subr.mxu0 0.0
    %5852 = vmatpush1.msra.mxu0 0.0
    %5853 = vmatprep.subr.mxu0 0.0
    %5854 = vmatpush1.msra.mxu0 0.0
    %5855 = vmatprep.subr.mxu0 0.0
    %5856 = vmatpush1.msra.mxu0 0.0
    %5857 = vmatprep.subr.mxu0 0.0
    %5858 = vmatpush1.msra.mxu0 0.0
    %5859 = vmatprep.subr.mxu0 0.0
    %5860 = vmatpush1.msra.mxu0 0.0
    %5861 = vmatprep.subr.mxu0 0.0
    %5862 = vmatpush1.msra.mxu0 0.0
    %5863 = vmatprep.subr.mxu0 0.0
    %5864 = vmatpush1.msra.mxu0 0.0
    %5865 = vmatprep.subr.mxu0 0.0
    %5866 = vmatpush1.msra.mxu0 0.0
    %5867 = vmatprep.subr.mxu0 0.0
    %5868 = vmatpush1.msra.mxu0 0.0
    %5869 = vmatprep.subr.mxu0 0.0
    %5870 = vmatpush1.msra.mxu0 0.0
    %5871 = vmatprep.subr.mxu0 0.0
    %5872 = vmatpush1.msra.mxu0 0.0
    %5873 = vmatprep.subr.mxu0 0.0
    %5874 = vmatpush1.msra.mxu0 0.0
    %5875 = vmatprep.subr.mxu0 0.0
    %5876 = vmatpush1.msra.mxu0 0.0
    %5877 = vmatprep.subr.mxu0 0.0
    %5878 = vmatpush1.msra.mxu0 0.0
    %5879 = vmatprep.subr.mxu0 0.0
    %5880 = vmatpush1.msra.mxu0 0.0
    %5881 = vmatprep.subr.mxu0 0.0
    %5882 = vmatpush1.msra.mxu0 0.0
    %5883 = vmatprep.subr.mxu0 0.0
    %5884 = vmatpush1.msra.mxu0 0.0
    %5885 = vmatprep.subr.mxu0 0.0
    %5886 = vmatpush1.msra.mxu0 0.0
    %5887 = vmatprep.mubr.f32.mxu0 0.0
    %5888 = vmatmul.mubr.f32.gmra.mrb[0].mxu0 %v4381
    %v5889 = vpop.f32.mrb[0].mxu0
    %v5890 = vadd.f32 %v5588, %v5889
    %v5891 = vpop.f32.mrb[0].mxu0
    %5892 = vdwg.mxu0
    %5893 = vmatprep.subr.mxu0 0.0
    %5894 = vmatpush1.msra.mxu0 %v5540
    %5895 = vmatprep.subr.mxu0 0.0
    %5896 = vmatpush1.msra.mxu0 %v5541
    %5897 = vmatprep.subr.mxu0 0.0
    %5898 = vmatpush1.msra.mxu0 %v5542
    %5899 = vmatprep.subr.mxu0 0.0
    %5900 = vmatpush1.msra.mxu0 %v5543
    %5901 = vmatprep.subr.mxu0 0.0
    %5902 = vmatpush1.msra.mxu0 0.0
    %5903 = vmatprep.subr.mxu0 0.0
    %5904 = vmatpush1.msra.mxu0 0.0
    %5905 = vmatprep.subr.mxu0 0.0
    %5906 = vmatpush1.msra.mxu0 0.0
    %5907 = vmatprep.subr.mxu0 0.0
    %5908 = vmatpush1.msra.mxu0 0.0
    %5909 = vmatprep.subr.mxu0 0.0
    %5910 = vmatpush1.msra.mxu0 0.0
    %5911 = vmatprep.subr.mxu0 0.0
    %5912 = vmatpush1.msra.mxu0 0.0
    %5913 = vmatprep.subr.mxu0 0.0
    %5914 = vmatpush1.msra.mxu0 0.0
    %5915 = vmatprep.subr.mxu0 0.0
    %5916 = vmatpush1.msra.mxu0 0.0
    %5917 = vmatprep.subr.mxu0 0.0
    %5918 = vmatpush1.msra.mxu0 0.0
    %5919 = vmatprep.subr.mxu0 0.0
    %5920 = vmatpush1.msra.mxu0 0.0
    %5921 = vmatprep.subr.mxu0 0.0
    %5922 = vmatpush1.msra.mxu0 0.0
    %5923 = vmatprep.subr.mxu0 0.0
    %5924 = vmatpush1.msra.mxu0 0.0
    %5925 = vmatprep.subr.mxu0 0.0
    %5926 = vmatpush1.msra.mxu0 0.0
    %5927 = vmatprep.subr.mxu0 0.0
    %5928 = vmatpush1.msra.mxu0 0.0
    %5929 = vmatprep.subr.mxu0 0.0
    %5930 = vmatpush1.msra.mxu0 0.0
    %5931 = vmatprep.subr.mxu0 0.0
    %5932 = vmatpush1.msra.mxu0 0.0
    %5933 = vmatprep.subr.mxu0 0.0
    %5934 = vmatpush1.msra.mxu0 0.0
    %5935 = vmatprep.subr.mxu0 0.0
    %5936 = vmatpush1.msra.mxu0 0.0
    %5937 = vmatprep.subr.mxu0 0.0
    %5938 = vmatpush1.msra.mxu0 0.0
    %5939 = vmatprep.subr.mxu0 0.0
    %5940 = vmatpush1.msra.mxu0 0.0
    %5941 = vmatprep.subr.mxu0 0.0
    %5942 = vmatpush1.msra.mxu0 0.0
    %5943 = vmatprep.subr.mxu0 0.0
    %5944 = vmatpush1.msra.mxu0 0.0
    %5945 = vmatprep.subr.mxu0 0.0
    %5946 = vmatpush1.msra.mxu0 0.0
    %5947 = vmatprep.subr.mxu0 0.0
    %5948 = vmatpush1.msra.mxu0 0.0
    %5949 = vmatprep.subr.mxu0 0.0
    %5950 = vmatpush1.msra.mxu0 0.0
    %5951 = vmatprep.subr.mxu0 0.0
    %5952 = vmatpush1.msra.mxu0 0.0
    %5953 = vmatprep.subr.mxu0 0.0
    %5954 = vmatpush1.msra.mxu0 0.0
    %5955 = vmatprep.subr.mxu0 0.0
    %5956 = vmatpush1.msra.mxu0 0.0
    %5957 = vmatprep.mubr.f32.mxu0 0.0
    %5958 = vmatmul.mubr.f32.gmra.mrb[0].mxu0 %v4308
    %v5959 = vpop.f32.mrb[0].mxu0
    %v5960 = vadd.f32 %v5592, %v5959
    %v5961 = vpop.f32.mrb[0].mxu0
    %5962 = vdwg.mxu0
    %5963 = vmatprep.subr.mxu0 0.0
    %5964 = vmatpush1.msra.mxu0 %v5544
    %5965 = vmatprep.subr.mxu0 0.0
    %5966 = vmatpush1.msra.mxu0 %v5545
    %5967 = vmatprep.subr.mxu0 0.0
    %5968 = vmatpush1.msra.mxu0 %v5546
    %5969 = vmatprep.subr.mxu0 0.0
    %5970 = vmatpush1.msra.mxu0 %v5547
    %5971 = vmatprep.subr.mxu0 0.0
    %5972 = vmatpush1.msra.mxu0 0.0
    %5973 = vmatprep.subr.mxu0 0.0
    %5974 = vmatpush1.msra.mxu0 0.0
    %5975 = vmatprep.subr.mxu0 0.0
    %5976 = vmatpush1.msra.mxu0 0.0
    %5977 = vmatprep.subr.mxu0 0.0
    %5978 = vmatpush1.msra.mxu0 0.0
    %5979 = vmatprep.subr.mxu0 0.0
    %5980 = vmatpush1.msra.mxu0 0.0
    %5981 = vmatprep.subr.mxu0 0.0
    %5982 = vmatpush1.msra.mxu0 0.0
    %5983 = vmatprep.subr.mxu0 0.0
    %5984 = vmatpush1.msra.mxu0 0.0
    %5985 = vmatprep.subr.mxu0 0.0
    %5986 = vmatpush1.msra.mxu0 0.0
    %5987 = vmatprep.subr.mxu0 0.0
    %5988 = vmatpush1.msra.mxu0 0.0
    %5989 = vmatprep.subr.mxu0 0.0
    %5990 = vmatpush1.msra.mxu0 0.0
    %5991 = vmatprep.subr.mxu0 0.0
    %5992 = vmatpush1.msra.mxu0 0.0
    %5993 = vmatprep.subr.mxu0 0.0
    %5994 = vmatpush1.msra.mxu0 0.0
    %5995 = vmatprep.subr.mxu0 0.0
    %5996 = vmatpush1.msra.mxu0 0.0
    %5997 = vmatprep.subr.mxu0 0.0
    %5998 = vmatpush1.msra.mxu0 0.0
    %5999 = vmatprep.subr.mxu0 0.0
    %6000 = vmatpush1.msra.mxu0 0.0
    %6001 = vmatprep.subr.mxu0 0.0
    %6002 = vmatpush1.msra.mxu0 0.0
    %6003 = vmatprep.subr.mxu0 0.0
    %6004 = vmatpush1.msra.mxu0 0.0
    %6005 = vmatprep.subr.mxu0 0.0
    %6006 = vmatpush1.msra.mxu0 0.0
    %6007 = vmatprep.subr.mxu0 0.0
    %6008 = vmatpush1.msra.mxu0 0.0
    %6009 = vmatprep.subr.mxu0 0.0
    %6010 = vmatpush1.msra.mxu0 0.0
    %6011 = vmatprep.subr.mxu0 0.0
    %6012 = vmatpush1.msra.mxu0 0.0
    %6013 = vmatprep.subr.mxu0 0.0
    %6014 = vmatpush1.msra.mxu0 0.0
    %6015 = vmatprep.subr.mxu0 0.0
    %6016 = vmatpush1.msra.mxu0 0.0
    %6017 = vmatprep.subr.mxu0 0.0
    %6018 = vmatpush1.msra.mxu0 0.0
    %6019 = vmatprep.subr.mxu0 0.0
    %6020 = vmatpush1.msra.mxu0 0.0
    %6021 = vmatprep.subr.mxu0 0.0
    %6022 = vmatpush1.msra.mxu0 0.0
    %6023 = vmatprep.subr.mxu0 0.0
    %6024 = vmatpush1.msra.mxu0 0.0
    %6025 = vmatprep.subr.mxu0 0.0
    %6026 = vmatpush1.msra.mxu0 0.0
    %6027 = vmatprep.mubr.f32.mxu0 0.0
    %6028 = vmatmul.mubr.f32.gmra.mrb[0].mxu0 %v4381
    %v6029 = vpop.f32.mrb[0].mxu0
    %v6030 = vadd.f32 %v5596, %v6029
    %v6031 = vpop.f32.mrb[0].mxu0
    %6032 = vdwg.mxu0
    %6033 = vmatprep.subr.mxu0 0.0
    %6034 = vmatpush1.msra.mxu0 %v5548
    %6035 = vmatprep.subr.mxu0 0.0
    %6036 = vmatpush1.msra.mxu0 %v5549
    %6037 = vmatprep.subr.mxu0 0.0
    %6038 = vmatpush1.msra.mxu0 %v5550
    %6039 = vmatprep.subr.mxu0 0.0
    %6040 = vmatpush1.msra.mxu0 %v5551
    %6041 = vmatprep.subr.mxu0 0.0
    %6042 = vmatpush1.msra.mxu0 0.0
    %6043 = vmatprep.subr.mxu0 0.0
    %6044 = vmatpush1.msra.mxu0 0.0
    %6045 = vmatprep.subr.mxu0 0.0
    %6046 = vmatpush1.msra.mxu0 0.0
    %6047 = vmatprep.subr.mxu0 0.0
    %6048 = vmatpush1.msra.mxu0 0.0
    %6049 = vmatprep.subr.mxu0 0.0
    %6050 = vmatpush1.msra.mxu0 0.0
    %6051 = vmatprep.subr.mxu0 0.0
    %6052 = vmatpush1.msra.mxu0 0.0
    %6053 = vmatprep.subr.mxu0 0.0
    %6054 = vmatpush1.msra.mxu0 0.0
    %6055 = vmatprep.subr.mxu0 0.0
    %6056 = vmatpush1.msra.mxu0 0.0
    %6057 = vmatprep.subr.mxu0 0.0
    %6058 = vmatpush1.msra.mxu0 0.0
    %6059 = vmatprep.subr.mxu0 0.0
    %6060 = vmatpush1.msra.mxu0 0.0
    %6061 = vmatprep.subr.mxu0 0.0
    %6062 = vmatpush1.msra.mxu0 0.0
    %6063 = vmatprep.subr.mxu0 0.0
    %6064 = vmatpush1.msra.mxu0 0.0
    %6065 = vmatprep.subr.mxu0 0.0
    %6066 = vmatpush1.msra.mxu0 0.0
    %6067 = vmatprep.subr.mxu0 0.0
    %6068 = vmatpush1.msra.mxu0 0.0
    %6069 = vmatprep.subr.mxu0 0.0
    %6070 = vmatpush1.msra.mxu0 0.0
    %6071 = vmatprep.subr.mxu0 0.0
    %6072 = vmatpush1.msra.mxu0 0.0
    %6073 = vmatprep.subr.mxu0 0.0
    %6074 = vmatpush1.msra.mxu0 0.0
    %6075 = vmatprep.subr.mxu0 0.0
    %6076 = vmatpush1.msra.mxu0 0.0
    %6077 = vmatprep.subr.mxu0 0.0
    %6078 = vmatpush1.msra.mxu0 0.0
    %6079 = vmatprep.subr.mxu0 0.0
    %6080 = vmatpush1.msra.mxu0 0.0
    %6081 = vmatprep.subr.mxu0 0.0
    %6082 = vmatpush1.msra.mxu0 0.0
    %6083 = vmatprep.subr.mxu0 0.0
    %6084 = vmatpush1.msra.mxu0 0.0
    %6085 = vmatprep.subr.mxu0 0.0
    %6086 = vmatpush1.msra.mxu0 0.0
    %6087 = vmatprep.subr.mxu0 0.0
    %6088 = vmatpush1.msra.mxu0 0.0
    %6089 = vmatprep.subr.mxu0 0.0
    %6090 = vmatpush1.msra.mxu0 0.0
    %6091 = vmatprep.subr.mxu0 0.0
    %6092 = vmatpush1.msra.mxu0 0.0
    %6093 = vmatprep.subr.mxu0 0.0
    %6094 = vmatpush1.msra.mxu0 0.0
    %6095 = vmatprep.subr.mxu0 0.0
    %6096 = vmatpush1.msra.mxu0 0.0
    %6097 = vmatprep.mubr.f32.mxu0 0.0
    %6098 = vmatmul.mubr.f32.gmra.mrb[0].mxu0 %v4308
    %v6099 = vpop.f32.mrb[0].mxu0
    %v6100 = vadd.f32 %v5600, %v6099
    %v6101 = vpop.f32.mrb[0].mxu0
    %6102 = vdwg.mxu0
    %6103 = vmatprep.subr.mxu0 0.0
    %6104 = vmatpush1.msra.mxu0 %v5552
    %6105 = vmatprep.subr.mxu0 0.0
    %6106 = vmatpush1.msra.mxu0 %v5553
    %6107 = vmatprep.subr.mxu0 0.0
    %6108 = vmatpush1.msra.mxu0 %v5554
    %6109 = vmatprep.subr.mxu0 0.0
    %6110 = vmatpush1.msra.mxu0 %v5555
    %6111 = vmatprep.subr.mxu0 0.0
    %6112 = vmatpush1.msra.mxu0 0.0
    %6113 = vmatprep.subr.mxu0 0.0
    %6114 = vmatpush1.msra.mxu0 0.0
    %6115 = vmatprep.subr.mxu0 0.0
    %6116 = vmatpush1.msra.mxu0 0.0
    %6117 = vmatprep.subr.mxu0 0.0
    %6118 = vmatpush1.msra.mxu0 0.0
    %6119 = vmatprep.subr.mxu0 0.0
    %6120 = vmatpush1.msra.mxu0 0.0
    %6121 = vmatprep.subr.mxu0 0.0
    %6122 = vmatpush1.msra.mxu0 0.0
    %6123 = vmatprep.subr.mxu0 0.0
    %6124 = vmatpush1.msra.mxu0 0.0
    %6125 = vmatprep.subr.mxu0 0.0
    %6126 = vmatpush1.msra.mxu0 0.0
    %6127 = vmatprep.subr.mxu0 0.0
    %6128 = vmatpush1.msra.mxu0 0.0
    %6129 = vmatprep.subr.mxu0 0.0
    %6130 = vmatpush1.msra.mxu0 0.0
    %6131 = vmatprep.subr.mxu0 0.0
    %6132 = vmatpush1.msra.mxu0 0.0
    %6133 = vmatprep.subr.mxu0 0.0
    %6134 = vmatpush1.msra.mxu0 0.0
    %6135 = vmatprep.subr.mxu0 0.0
    %6136 = vmatpush1.msra.mxu0 0.0
    %6137 = vmatprep.subr.mxu0 0.0
    %6138 = vmatpush1.msra.mxu0 0.0
    %6139 = vmatprep.subr.mxu0 0.0
    %6140 = vmatpush1.msra.mxu0 0.0
    %6141 = vmatprep.subr.mxu0 0.0
    %6142 = vmatpush1.msra.mxu0 0.0
    %6143 = vmatprep.subr.mxu0 0.0
    %6144 = vmatpush1.msra.mxu0 0.0
    %6145 = vmatprep.subr.mxu0 0.0
    %6146 = vmatpush1.msra.mxu0 0.0
    %6147 = vmatprep.subr.mxu0 0.0
    %6148 = vmatpush1.msra.mxu0 0.0
    %6149 = vmatprep.subr.mxu0 0.0
    %6150 = vmatpush1.msra.mxu0 0.0
    %6151 = vmatprep.subr.mxu0 0.0
    %6152 = vmatpush1.msra.mxu0 0.0
    %6153 = vmatprep.subr.mxu0 0.0
    %6154 = vmatpush1.msra.mxu0 0.0
    %6155 = vmatprep.subr.mxu0 0.0
    %6156 = vmatpush1.msra.mxu0 0.0
    %6157 = vmatprep.subr.mxu0 0.0
    %6158 = vmatpush1.msra.mxu0 0.0
    %6159 = vmatprep.subr.mxu0 0.0
    %6160 = vmatpush1.msra.mxu0 0.0
    %6161 = vmatprep.subr.mxu0 0.0
    %6162 = vmatpush1.msra.mxu0 0.0
    %6163 = vmatprep.subr.mxu0 0.0
    %6164 = vmatpush1.msra.mxu0 0.0
    %6165 = vmatprep.subr.mxu0 0.0
    %6166 = vmatpush1.msra.mxu0 0.0
    %6167 = vmatprep.mubr.f32.mxu0 0.0
    %6168 = vmatmul.mubr.f32.gmra.mrb[0].mxu0 %v4381
    %v6169 = vpop.f32.mrb[0].mxu0
    %v6170 = vadd.f32 %v5604, %v6169
    %v6171 = vpop.f32.mrb[0].mxu0
    %6172 = vdwg.mxu0
    %v6174 = vsel %vm2019, %v4377, 0
    %v6177 = vsel %vm2019, %v5030, 0
    %6179 = vmatprep.subr.mxu0 0.0
    %6180 = vmatpush1.xpose.msra.mxu0 %v6177
    %6181 = vmatprep.subr.mxu0 0.0
    %6182 = vmatpush1.xpose.msra.mxu0 0.0
    %6183 = vmatprep.subr.mxu0 0.0
    %6184 = vmatpush1.xpose.msra.mxu0 0.0
    %6185 = vmatprep.subr.mxu0 0.0
    %6186 = vmatpush1.xpose.msra.mxu0 0.0
    %6187 = vmatprep.subr.mxu0 0.0
    %6188 = vmatpush1.xpose.msra.mxu0 0.0
    %6189 = vmatprep.subr.mxu0 0.0
    %6190 = vmatpush1.xpose.msra.mxu0 0.0
    %6191 = vmatprep.subr.mxu0 0.0
    %6192 = vmatpush1.xpose.msra.mxu0 0.0
    %6193 = vmatprep.subr.mxu0 0.0
    %6194 = vmatpush1.xpose.msra.mxu0 0.0
    %6195 = vmatprep.subr.mxu0 0.0
    %6196 = vmatpush1.xpose.msra.mxu0 0.0
    %6197 = vmatprep.subr.mxu0 0.0
    %6198 = vmatpush1.xpose.msra.mxu0 0.0
    %6199 = vmatprep.subr.mxu0 0.0
    %6200 = vmatpush1.xpose.msra.mxu0 0.0
    %6201 = vmatprep.subr.mxu0 0.0
    %6202 = vmatpush1.xpose.msra.mxu0 0.0
    %6203 = vmatprep.subr.mxu0 0.0
    %6204 = vmatpush1.xpose.msra.mxu0 0.0
    %6205 = vmatprep.subr.mxu0 0.0
    %6206 = vmatpush1.xpose.msra.mxu0 0.0
    %6207 = vmatprep.subr.mxu0 0.0
    %6208 = vmatpush1.xpose.msra.mxu0 0.0
    %6209 = vmatprep.subr.mxu0 0.0
    %6210 = vmatpush1.xpose.msra.mxu0 0.0
    %6211 = vmatprep.subr.mxu0 0.0
    %6212 = vmatpush1.xpose.msra.mxu0 0.0
    %6213 = vmatprep.subr.mxu0 0.0
    %6214 = vmatpush1.xpose.msra.mxu0 0.0
    %6215 = vmatprep.subr.mxu0 0.0
    %6216 = vmatpush1.xpose.msra.mxu0 0.0
    %6217 = vmatprep.subr.mxu0 0.0
    %6218 = vmatpush1.xpose.msra.mxu0 0.0
    %6219 = vmatprep.subr.mxu0 0.0
    %6220 = vmatpush1.xpose.msra.mxu0 0.0
    %6221 = vmatprep.subr.mxu0 0.0
    %6222 = vmatpush1.xpose.msra.mxu0 0.0
    %6223 = vmatprep.subr.mxu0 0.0
    %6224 = vmatpush1.xpose.msra.mxu0 0.0
    %6225 = vmatprep.subr.mxu0 0.0
    %6226 = vmatpush1.xpose.msra.mxu0 0.0
    %6227 = vmatprep.subr.mxu0 0.0
    %6228 = vmatpush1.xpose.msra.mxu0 0.0
    %6229 = vmatprep.subr.mxu0 0.0
    %6230 = vmatpush1.xpose.msra.mxu0 0.0
    %6231 = vmatprep.subr.mxu0 0.0
    %6232 = vmatpush1.xpose.msra.mxu0 0.0
    %6233 = vmatprep.subr.mxu0 0.0
    %6234 = vmatpush1.xpose.msra.mxu0 0.0
    %6235 = vmatprep.subr.mxu0 0.0
    %6236 = vmatpush1.xpose.msra.mxu0 0.0
    %6237 = vmatprep.subr.mxu0 0.0
    %6238 = vmatpush1.xpose.msra.mxu0 0.0
    %6239 = vmatprep.subr.mxu0 0.0
    %6240 = vmatpush1.xpose.msra.mxu0 0.0
    %6241 = vmatprep.subr.mxu0 0.0
    %6242 = vmatpush1.xpose.msra.mxu0 0.0
    %6243 = vmatprep.mubr.f32.mxu0 0.0
    %6244 = vmatmul.mubr.f32.gmra.mrb[0].mxu0 %v6174
    %v6245 = vpop.f32.mrb[0].mxu0
    %v6246 = vadd.f32 0.0, %v6245
    %v6247 = vpop.f32.mrb[0].mxu0
    %6248 = vdwg.mxu0
    %v6250 = vsel %vm2019, %v4450, 0
    %v6253 = vsel %vm2019, %v5100, 0
    %6255 = vmatprep.subr.mxu0 0.0
    %6256 = vmatpush1.xpose.msra.mxu0 %v6253
    %6257 = vmatprep.subr.mxu0 0.0
    %6258 = vmatpush1.xpose.msra.mxu0 0.0
    %6259 = vmatprep.subr.mxu0 0.0
    %6260 = vmatpush1.xpose.msra.mxu0 0.0
    %6261 = vmatprep.subr.mxu0 0.0
    %6262 = vmatpush1.xpose.msra.mxu0 0.0
    %6263 = vmatprep.subr.mxu0 0.0
    %6264 = vmatpush1.xpose.msra.mxu0 0.0
    %6265 = vmatprep.subr.mxu0 0.0
    %6266 = vmatpush1.xpose.msra.mxu0 0.0
    %6267 = vmatprep.subr.mxu0 0.0
    %6268 = vmatpush1.xpose.msra.mxu0 0.0
    %6269 = vmatprep.subr.mxu0 0.0
    %6270 = vmatpush1.xpose.msra.mxu0 0.0
    %6271 = vmatprep.subr.mxu0 0.0
    %6272 = vmatpush1.xpose.msra.mxu0 0.0
    %6273 = vmatprep.subr.mxu0 0.0
    %6274 = vmatpush1.xpose.msra.mxu0 0.0
    %6275 = vmatprep.subr.mxu0 0.0
    %6276 = vmatpush1.xpose.msra.mxu0 0.0
    %6277 = vmatprep.subr.mxu0 0.0
    %6278 = vmatpush1.xpose.msra.mxu0 0.0
    %6279 = vmatprep.subr.mxu0 0.0
    %6280 = vmatpush1.xpose.msra.mxu0 0.0
    %6281 = vmatprep.subr.mxu0 0.0
    %6282 = vmatpush1.xpose.msra.mxu0 0.0
    %6283 = vmatprep.subr.mxu0 0.0
    %6284 = vmatpush1.xpose.msra.mxu0 0.0
    %6285 = vmatprep.subr.mxu0 0.0
    %6286 = vmatpush1.xpose.msra.mxu0 0.0
    %6287 = vmatprep.subr.mxu0 0.0
    %6288 = vmatpush1.xpose.msra.mxu0 0.0
    %6289 = vmatprep.subr.mxu0 0.0
    %6290 = vmatpush1.xpose.msra.mxu0 0.0
    %6291 = vmatprep.subr.mxu0 0.0
    %6292 = vmatpush1.xpose.msra.mxu0 0.0
    %6293 = vmatprep.subr.mxu0 0.0
    %6294 = vmatpush1.xpose.msra.mxu0 0.0
    %6295 = vmatprep.subr.mxu0 0.0
    %6296 = vmatpush1.xpose.msra.mxu0 0.0
    %6297 = vmatprep.subr.mxu0 0.0
    %6298 = vmatpush1.xpose.msra.mxu0 0.0
    %6299 = vmatprep.subr.mxu0 0.0
    %6300 = vmatpush1.xpose.msra.mxu0 0.0
    %6301 = vmatprep.subr.mxu0 0.0
    %6302 = vmatpush1.xpose.msra.mxu0 0.0
    %6303 = vmatprep.subr.mxu0 0.0
    %6304 = vmatpush1.xpose.msra.mxu0 0.0
    %6305 = vmatprep.subr.mxu0 0.0
    %6306 = vmatpush1.xpose.msra.mxu0 0.0
    %6307 = vmatprep.subr.mxu0 0.0
    %6308 = vmatpush1.xpose.msra.mxu0 0.0
    %6309 = vmatprep.subr.mxu0 0.0
    %6310 = vmatpush1.xpose.msra.mxu0 0.0
    %6311 = vmatprep.subr.mxu0 0.0
    %6312 = vmatpush1.xpose.msra.mxu0 0.0
    %6313 = vmatprep.subr.mxu0 0.0
    %6314 = vmatpush1.xpose.msra.mxu0 0.0
    %6315 = vmatprep.subr.mxu0 0.0
    %6316 = vmatpush1.xpose.msra.mxu0 0.0
    %6317 = vmatprep.subr.mxu0 0.0
    %6318 = vmatpush1.xpose.msra.mxu0 0.0
    %6319 = vmatprep.mubr.f32.mxu0 0.0
    %6320 = vmatmul.mubr.f32.gmra.mrb[0].mxu0 %v6250
    %v6321 = vpop.f32.mrb[0].mxu0
    %v6322 = vadd.f32 0.0, %v6321
    %v6323 = vpop.f32.mrb[0].mxu0
    %6324 = vdwg.mxu0
    %v6326 = vsel %vm2019, %v4520, 0
    %v6329 = vsel %vm2019, %v5170, 0
    %6331 = vmatprep.subr.mxu0 0.0
    %6332 = vmatpush1.xpose.msra.mxu0 %v6329
    %6333 = vmatprep.subr.mxu0 0.0
    %6334 = vmatpush1.xpose.msra.mxu0 0.0
    %6335 = vmatprep.subr.mxu0 0.0
    %6336 = vmatpush1.xpose.msra.mxu0 0.0
    %6337 = vmatprep.subr.mxu0 0.0
    %6338 = vmatpush1.xpose.msra.mxu0 0.0
    %6339 = vmatprep.subr.mxu0 0.0
    %6340 = vmatpush1.xpose.msra.mxu0 0.0
    %6341 = vmatprep.subr.mxu0 0.0
    %6342 = vmatpush1.xpose.msra.mxu0 0.0
    %6343 = vmatprep.subr.mxu0 0.0
    %6344 = vmatpush1.xpose.msra.mxu0 0.0
    %6345 = vmatprep.subr.mxu0 0.0
    %6346 = vmatpush1.xpose.msra.mxu0 0.0
    %6347 = vmatprep.subr.mxu0 0.0
    %6348 = vmatpush1.xpose.msra.mxu0 0.0
    %6349 = vmatprep.subr.mxu0 0.0
    %6350 = vmatpush1.xpose.msra.mxu0 0.0
    %6351 = vmatprep.subr.mxu0 0.0
    %6352 = vmatpush1.xpose.msra.mxu0 0.0
    %6353 = vmatprep.subr.mxu0 0.0
    %6354 = vmatpush1.xpose.msra.mxu0 0.0
    %6355 = vmatprep.subr.mxu0 0.0
    %6356 = vmatpush1.xpose.msra.mxu0 0.0
    %6357 = vmatprep.subr.mxu0 0.0
    %6358 = vmatpush1.xpose.msra.mxu0 0.0
    %6359 = vmatprep.subr.mxu0 0.0
    %6360 = vmatpush1.xpose.msra.mxu0 0.0
    %6361 = vmatprep.subr.mxu0 0.0
    %6362 = vmatpush1.xpose.msra.mxu0 0.0
    %6363 = vmatprep.subr.mxu0 0.0
    %6364 = vmatpush1.xpose.msra.mxu0 0.0
    %6365 = vmatprep.subr.mxu0 0.0
    %6366 = vmatpush1.xpose.msra.mxu0 0.0
    %6367 = vmatprep.subr.mxu0 0.0
    %6368 = vmatpush1.xpose.msra.mxu0 0.0
    %6369 = vmatprep.subr.mxu0 0.0
    %6370 = vmatpush1.xpose.msra.mxu0 0.0
    %6371 = vmatprep.subr.mxu0 0.0
    %6372 = vmatpush1.xpose.msra.mxu0 0.0
    %6373 = vmatprep.subr.mxu0 0.0
    %6374 = vmatpush1.xpose.msra.mxu0 0.0
    %6375 = vmatprep.subr.mxu0 0.0
    %6376 = vmatpush1.xpose.msra.mxu0 0.0
    %6377 = vmatprep.subr.mxu0 0.0
    %6378 = vmatpush1.xpose.msra.mxu0 0.0
    %6379 = vmatprep.subr.mxu0 0.0
    %6380 = vmatpush1.xpose.msra.mxu0 0.0
    %6381 = vmatprep.subr.mxu0 0.0
    %6382 = vmatpush1.xpose.msra.mxu0 0.0
    %6383 = vmatprep.subr.mxu0 0.0
    %6384 = vmatpush1.xpose.msra.mxu0 0.0
    %6385 = vmatprep.subr.mxu0 0.0
    %6386 = vmatpush1.xpose.msra.mxu0 0.0
    %6387 = vmatprep.subr.mxu0 0.0
    %6388 = vmatpush1.xpose.msra.mxu0 0.0
    %6389 = vmatprep.subr.mxu0 0.0
    %6390 = vmatpush1.xpose.msra.mxu0 0.0
    %6391 = vmatprep.subr.mxu0 0.0
    %6392 = vmatpush1.xpose.msra.mxu0 0.0
    %6393 = vmatprep.subr.mxu0 0.0
    %6394 = vmatpush1.xpose.msra.mxu0 0.0
    %6395 = vmatprep.mubr.f32.mxu0 0.0
    %6396 = vmatmul.mubr.f32.gmra.mrb[0].mxu0 %v6326
    %v6397 = vpop.f32.mrb[0].mxu0
    %v6398 = vadd.f32 0.0, %v6397
    %v6399 = vpop.f32.mrb[0].mxu0
    %6400 = vdwg.mxu0
    %v6402 = vsel %vm2019, %v4590, 0
    %v6405 = vsel %vm2019, %v5240, 0
    %6407 = vmatprep.subr.mxu0 0.0
    %6408 = vmatpush1.xpose.msra.mxu0 %v6405
    %6409 = vmatprep.subr.mxu0 0.0
    %6410 = vmatpush1.xpose.msra.mxu0 0.0
    %6411 = vmatprep.subr.mxu0 0.0
    %6412 = vmatpush1.xpose.msra.mxu0 0.0
    %6413 = vmatprep.subr.mxu0 0.0
    %6414 = vmatpush1.xpose.msra.mxu0 0.0
    %6415 = vmatprep.subr.mxu0 0.0
    %6416 = vmatpush1.xpose.msra.mxu0 0.0
    %6417 = vmatprep.subr.mxu0 0.0
    %6418 = vmatpush1.xpose.msra.mxu0 0.0
    %6419 = vmatprep.subr.mxu0 0.0
    %6420 = vmatpush1.xpose.msra.mxu0 0.0
    %6421 = vmatprep.subr.mxu0 0.0
    %6422 = vmatpush1.xpose.msra.mxu0 0.0
    %6423 = vmatprep.subr.mxu0 0.0
    %6424 = vmatpush1.xpose.msra.mxu0 0.0
    %6425 = vmatprep.subr.mxu0 0.0
    %6426 = vmatpush1.xpose.msra.mxu0 0.0
    %6427 = vmatprep.subr.mxu0 0.0
    %6428 = vmatpush1.xpose.msra.mxu0 0.0
    %6429 = vmatprep.subr.mxu0 0.0
    %6430 = vmatpush1.xpose.msra.mxu0 0.0
    %6431 = vmatprep.subr.mxu0 0.0
    %6432 = vmatpush1.xpose.msra.mxu0 0.0
    %6433 = vmatprep.subr.mxu0 0.0
    %6434 = vmatpush1.xpose.msra.mxu0 0.0
    %6435 = vmatprep.subr.mxu0 0.0
    %6436 = vmatpush1.xpose.msra.mxu0 0.0
    %6437 = vmatprep.subr.mxu0 0.0
    %6438 = vmatpush1.xpose.msra.mxu0 0.0
    %6439 = vmatprep.subr.mxu0 0.0
    %6440 = vmatpush1.xpose.msra.mxu0 0.0
    %6441 = vmatprep.subr.mxu0 0.0
    %6442 = vmatpush1.xpose.msra.mxu0 0.0
    %6443 = vmatprep.subr.mxu0 0.0
    %6444 = vmatpush1.xpose.msra.mxu0 0.0
    %6445 = vmatprep.subr.mxu0 0.0
    %6446 = vmatpush1.xpose.msra.mxu0 0.0
    %6447 = vmatprep.subr.mxu0 0.0
    %6448 = vmatpush1.xpose.msra.mxu0 0.0
    %6449 = vmatprep.subr.mxu0 0.0
    %6450 = vmatpush1.xpose.msra.mxu0 0.0
    %6451 = vmatprep.subr.mxu0 0.0
    %6452 = vmatpush1.xpose.msra.mxu0 0.0
    %6453 = vmatprep.subr.mxu0 0.0
    %6454 = vmatpush1.xpose.msra.mxu0 0.0
    %6455 = vmatprep.subr.mxu0 0.0
    %6456 = vmatpush1.xpose.msra.mxu0 0.0
    %6457 = vmatprep.subr.mxu0 0.0
    %6458 = vmatpush1.xpose.msra.mxu0 0.0
    %6459 = vmatprep.subr.mxu0 0.0
    %6460 = vmatpush1.xpose.msra.mxu0 0.0
    %6461 = vmatprep.subr.mxu0 0.0
    %6462 = vmatpush1.xpose.msra.mxu0 0.0
    %6463 = vmatprep.subr.mxu0 0.0
    %6464 = vmatpush1.xpose.msra.mxu0 0.0
    %6465 = vmatprep.subr.mxu0 0.0
    %6466 = vmatpush1.xpose.msra.mxu0 0.0
    %6467 = vmatprep.subr.mxu0 0.0
    %6468 = vmatpush1.xpose.msra.mxu0 0.0
    %6469 = vmatprep.subr.mxu0 0.0
    %6470 = vmatpush1.xpose.msra.mxu0 0.0
    %6471 = vmatprep.mubr.f32.mxu0 0.0
    %6472 = vmatmul.mubr.f32.gmra.mrb[0].mxu0 %v6402
    %v6473 = vpop.f32.mrb[0].mxu0
    %v6474 = vadd.f32 0.0, %v6473
    %v6475 = vpop.f32.mrb[0].mxu0
    %6476 = vdwg.mxu0
    %v6478 = vsel %vm2019, %v4660, 0
    %v6481 = vsel %vm2019, %v5310, 0
    %6483 = vmatprep.subr.mxu0 0.0
    %6484 = vmatpush1.xpose.msra.mxu0 %v6481
    %6485 = vmatprep.subr.mxu0 0.0
    %6486 = vmatpush1.xpose.msra.mxu0 0.0
    %6487 = vmatprep.subr.mxu0 0.0
    %6488 = vmatpush1.xpose.msra.mxu0 0.0
    %6489 = vmatprep.subr.mxu0 0.0
    %6490 = vmatpush1.xpose.msra.mxu0 0.0
    %6491 = vmatprep.subr.mxu0 0.0
    %6492 = vmatpush1.xpose.msra.mxu0 0.0
    %6493 = vmatprep.subr.mxu0 0.0
    %6494 = vmatpush1.xpose.msra.mxu0 0.0
    %6495 = vmatprep.subr.mxu0 0.0
    %6496 = vmatpush1.xpose.msra.mxu0 0.0
    %6497 = vmatprep.subr.mxu0 0.0
    %6498 = vmatpush1.xpose.msra.mxu0 0.0
    %6499 = vmatprep.subr.mxu0 0.0
    %6500 = vmatpush1.xpose.msra.mxu0 0.0
    %6501 = vmatprep.subr.mxu0 0.0
    %6502 = vmatpush1.xpose.msra.mxu0 0.0
    %6503 = vmatprep.subr.mxu0 0.0
    %6504 = vmatpush1.xpose.msra.mxu0 0.0
    %6505 = vmatprep.subr.mxu0 0.0
    %6506 = vmatpush1.xpose.msra.mxu0 0.0
    %6507 = vmatprep.subr.mxu0 0.0
    %6508 = vmatpush1.xpose.msra.mxu0 0.0
    %6509 = vmatprep.subr.mxu0 0.0
    %6510 = vmatpush1.xpose.msra.mxu0 0.0
    %6511 = vmatprep.subr.mxu0 0.0
    %6512 = vmatpush1.xpose.msra.mxu0 0.0
    %6513 = vmatprep.subr.mxu0 0.0
    %6514 = vmatpush1.xpose.msra.mxu0 0.0
    %6515 = vmatprep.subr.mxu0 0.0
    %6516 = vmatpush1.xpose.msra.mxu0 0.0
    %6517 = vmatprep.subr.mxu0 0.0
    %6518 = vmatpush1.xpose.msra.mxu0 0.0
    %6519 = vmatprep.subr.mxu0 0.0
    %6520 = vmatpush1.xpose.msra.mxu0 0.0
    %6521 = vmatprep.subr.mxu0 0.0
    %6522 = vmatpush1.xpose.msra.mxu0 0.0
    %6523 = vmatprep.subr.mxu0 0.0
    %6524 = vmatpush1.xpose.msra.mxu0 0.0
    %6525 = vmatprep.subr.mxu0 0.0
    %6526 = vmatpush1.xpose.msra.mxu0 0.0
    %6527 = vmatprep.subr.mxu0 0.0
    %6528 = vmatpush1.xpose.msra.mxu0 0.0
    %6529 = vmatprep.subr.mxu0 0.0
    %6530 = vmatpush1.xpose.msra.mxu0 0.0
    %6531 = vmatprep.subr.mxu0 0.0
    %6532 = vmatpush1.xpose.msra.mxu0 0.0
    %6533 = vmatprep.subr.mxu0 0.0
    %6534 = vmatpush1.xpose.msra.mxu0 0.0
    %6535 = vmatprep.subr.mxu0 0.0
    %6536 = vmatpush1.xpose.msra.mxu0 0.0
    %6537 = vmatprep.subr.mxu0 0.0
    %6538 = vmatpush1.xpose.msra.mxu0 0.0
    %6539 = vmatprep.subr.mxu0 0.0
    %6540 = vmatpush1.xpose.msra.mxu0 0.0
    %6541 = vmatprep.subr.mxu0 0.0
    %6542 = vmatpush1.xpose.msra.mxu0 0.0
    %6543 = vmatprep.subr.mxu0 0.0
    %6544 = vmatpush1.xpose.msra.mxu0 0.0
    %6545 = vmatprep.subr.mxu0 0.0
    %6546 = vmatpush1.xpose.msra.mxu0 0.0
    %6547 = vmatprep.mubr.f32.mxu0 0.0
    %6548 = vmatmul.mubr.f32.gmra.mrb[0].mxu0 %v6478
    %v6549 = vpop.f32.mrb[0].mxu0
    %v6550 = vadd.f32 0.0, %v6549
    %v6551 = vpop.f32.mrb[0].mxu0
    %6552 = vdwg.mxu0
    %v6554 = vsel %vm2019, %v4730, 0
    %v6557 = vsel %vm2019, %v5380, 0
    %6559 = vmatprep.subr.mxu0 0.0
    %6560 = vmatpush1.xpose.msra.mxu0 %v6557
    %6561 = vmatprep.subr.mxu0 0.0
    %6562 = vmatpush1.xpose.msra.mxu0 0.0
    %6563 = vmatprep.subr.mxu0 0.0
    %6564 = vmatpush1.xpose.msra.mxu0 0.0
    %6565 = vmatprep.subr.mxu0 0.0
    %6566 = vmatpush1.xpose.msra.mxu0 0.0
    %6567 = vmatprep.subr.mxu0 0.0
    %6568 = vmatpush1.xpose.msra.mxu0 0.0
    %6569 = vmatprep.subr.mxu0 0.0
    %6570 = vmatpush1.xpose.msra.mxu0 0.0
    %6571 = vmatprep.subr.mxu0 0.0
    %6572 = vmatpush1.xpose.msra.mxu0 0.0
    %6573 = vmatprep.subr.mxu0 0.0
    %6574 = vmatpush1.xpose.msra.mxu0 0.0
    %6575 = vmatprep.subr.mxu0 0.0
    %6576 = vmatpush1.xpose.msra.mxu0 0.0
    %6577 = vmatprep.subr.mxu0 0.0
    %6578 = vmatpush1.xpose.msra.mxu0 0.0
    %6579 = vmatprep.subr.mxu0 0.0
    %6580 = vmatpush1.xpose.msra.mxu0 0.0
    %6581 = vmatprep.subr.mxu0 0.0
    %6582 = vmatpush1.xpose.msra.mxu0 0.0
    %6583 = vmatprep.subr.mxu0 0.0
    %6584 = vmatpush1.xpose.msra.mxu0 0.0
    %6585 = vmatprep.subr.mxu0 0.0
    %6586 = vmatpush1.xpose.msra.mxu0 0.0
    %6587 = vmatprep.subr.mxu0 0.0
    %6588 = vmatpush1.xpose.msra.mxu0 0.0
    %6589 = vmatprep.subr.mxu0 0.0
    %6590 = vmatpush1.xpose.msra.mxu0 0.0
    %6591 = vmatprep.subr.mxu0 0.0
    %6592 = vmatpush1.xpose.msra.mxu0 0.0
    %6593 = vmatprep.subr.mxu0 0.0
    %6594 = vmatpush1.xpose.msra.mxu0 0.0
    %6595 = vmatprep.subr.mxu0 0.0
    %6596 = vmatpush1.xpose.msra.mxu0 0.0
    %6597 = vmatprep.subr.mxu0 0.0
    %6598 = vmatpush1.xpose.msra.mxu0 0.0
    %6599 = vmatprep.subr.mxu0 0.0
    %6600 = vmatpush1.xpose.msra.mxu0 0.0
    %6601 = vmatprep.subr.mxu0 0.0
    %6602 = vmatpush1.xpose.msra.mxu0 0.0
    %6603 = vmatprep.subr.mxu0 0.0
    %6604 = vmatpush1.xpose.msra.mxu0 0.0
    %6605 = vmatprep.subr.mxu0 0.0
    %6606 = vmatpush1.xpose.msra.mxu0 0.0
    %6607 = vmatprep.subr.mxu0 0.0
    %6608 = vmatpush1.xpose.msra.mxu0 0.0
    %6609 = vmatprep.subr.mxu0 0.0
    %6610 = vmatpush1.xpose.msra.mxu0 0.0
    %6611 = vmatprep.subr.mxu0 0.0
    %6612 = vmatpush1.xpose.msra.mxu0 0.0
    %6613 = vmatprep.subr.mxu0 0.0
    %6614 = vmatpush1.xpose.msra.mxu0 0.0
    %6615 = vmatprep.subr.mxu0 0.0
    %6616 = vmatpush1.xpose.msra.mxu0 0.0
    %6617 = vmatprep.subr.mxu0 0.0
    %6618 = vmatpush1.xpose.msra.mxu0 0.0
    %6619 = vmatprep.subr.mxu0 0.0
    %6620 = vmatpush1.xpose.msra.mxu0 0.0
    %6621 = vmatprep.subr.mxu0 0.0
    %6622 = vmatpush1.xpose.msra.mxu0 0.0
    %6623 = vmatprep.mubr.f32.mxu0 0.0
    %6624 = vmatmul.mubr.f32.gmra.mrb[0].mxu0 %v6554
    %v6625 = vpop.f32.mrb[0].mxu0
    %v6626 = vadd.f32 0.0, %v6625
    %v6627 = vpop.f32.mrb[0].mxu0
    %6628 = vdwg.mxu0
    %v6630 = vsel %vm2019, %v4800, 0
    %v6633 = vsel %vm2019, %v5450, 0
    %6635 = vmatprep.subr.mxu0 0.0
    %6636 = vmatpush1.xpose.msra.mxu0 %v6633
    %6637 = vmatprep.subr.mxu0 0.0
    %6638 = vmatpush1.xpose.msra.mxu0 0.0
    %6639 = vmatprep.subr.mxu0 0.0
    %6640 = vmatpush1.xpose.msra.mxu0 0.0
    %6641 = vmatprep.subr.mxu0 0.0
    %6642 = vmatpush1.xpose.msra.mxu0 0.0
    %6643 = vmatprep.subr.mxu0 0.0
    %6644 = vmatpush1.xpose.msra.mxu0 0.0
    %6645 = vmatprep.subr.mxu0 0.0
    %6646 = vmatpush1.xpose.msra.mxu0 0.0
    %6647 = vmatprep.subr.mxu0 0.0
    %6648 = vmatpush1.xpose.msra.mxu0 0.0
    %6649 = vmatprep.subr.mxu0 0.0
    %6650 = vmatpush1.xpose.msra.mxu0 0.0
    %6651 = vmatprep.subr.mxu0 0.0
    %6652 = vmatpush1.xpose.msra.mxu0 0.0
    %6653 = vmatprep.subr.mxu0 0.0
    %6654 = vmatpush1.xpose.msra.mxu0 0.0
    %6655 = vmatprep.subr.mxu0 0.0
    %6656 = vmatpush1.xpose.msra.mxu0 0.0
    %6657 = vmatprep.subr.mxu0 0.0
    %6658 = vmatpush1.xpose.msra.mxu0 0.0
    %6659 = vmatprep.subr.mxu0 0.0
    %6660 = vmatpush1.xpose.msra.mxu0 0.0
    %6661 = vmatprep.subr.mxu0 0.0
    %6662 = vmatpush1.xpose.msra.mxu0 0.0
    %6663 = vmatprep.subr.mxu0 0.0
    %6664 = vmatpush1.xpose.msra.mxu0 0.0
    %6665 = vmatprep.subr.mxu0 0.0
    %6666 = vmatpush1.xpose.msra.mxu0 0.0
    %6667 = vmatprep.subr.mxu0 0.0
    %6668 = vmatpush1.xpose.msra.mxu0 0.0
    %6669 = vmatprep.subr.mxu0 0.0
    %6670 = vmatpush1.xpose.msra.mxu0 0.0
    %6671 = vmatprep.subr.mxu0 0.0
    %6672 = vmatpush1.xpose.msra.mxu0 0.0
    %6673 = vmatprep.subr.mxu0 0.0
    %6674 = vmatpush1.xpose.msra.mxu0 0.0
    %6675 = vmatprep.subr.mxu0 0.0
    %6676 = vmatpush1.xpose.msra.mxu0 0.0
    %6677 = vmatprep.subr.mxu0 0.0
    %6678 = vmatpush1.xpose.msra.mxu0 0.0
    %6679 = vmatprep.subr.mxu0 0.0
    %6680 = vmatpush1.xpose.msra.mxu0 0.0
    %6681 = vmatprep.subr.mxu0 0.0
    %6682 = vmatpush1.xpose.msra.mxu0 0.0
    %6683 = vmatprep.subr.mxu0 0.0
    %6684 = vmatpush1.xpose.msra.mxu0 0.0
    %6685 = vmatprep.subr.mxu0 0.0
    %6686 = vmatpush1.xpose.msra.mxu0 0.0
    %6687 = vmatprep.subr.mxu0 0.0
    %6688 = vmatpush1.xpose.msra.mxu0 0.0
    %6689 = vmatprep.subr.mxu0 0.0
    %6690 = vmatpush1.xpose.msra.mxu0 0.0
    %6691 = vmatprep.subr.mxu0 0.0
    %6692 = vmatpush1.xpose.msra.mxu0 0.0
    %6693 = vmatprep.subr.mxu0 0.0
    %6694 = vmatpush1.xpose.msra.mxu0 0.0
    %6695 = vmatprep.subr.mxu0 0.0
    %6696 = vmatpush1.xpose.msra.mxu0 0.0
    %6697 = vmatprep.subr.mxu0 0.0
    %6698 = vmatpush1.xpose.msra.mxu0 0.0
    %6699 = vmatprep.mubr.f32.mxu0 0.0
    %6700 = vmatmul.mubr.f32.gmra.mrb[0].mxu0 %v6630
    %v6701 = vpop.f32.mrb[0].mxu0
    %v6702 = vadd.f32 0.0, %v6701
    %v6703 = vpop.f32.mrb[0].mxu0
    %6704 = vdwg.mxu0
    %v6706 = vsel %vm2019, %v4870, 0
    %v6709 = vsel %vm2019, %v5520, 0
    %6711 = vmatprep.subr.mxu0 0.0
    %6712 = vmatpush1.xpose.msra.mxu0 %v6709
    %6713 = vmatprep.subr.mxu0 0.0
    %6714 = vmatpush1.xpose.msra.mxu0 0.0
    %6715 = vmatprep.subr.mxu0 0.0
    %6716 = vmatpush1.xpose.msra.mxu0 0.0
    %6717 = vmatprep.subr.mxu0 0.0
    %6718 = vmatpush1.xpose.msra.mxu0 0.0
    %6719 = vmatprep.subr.mxu0 0.0
    %6720 = vmatpush1.xpose.msra.mxu0 0.0
    %6721 = vmatprep.subr.mxu0 0.0
    %6722 = vmatpush1.xpose.msra.mxu0 0.0
    %6723 = vmatprep.subr.mxu0 0.0
    %6724 = vmatpush1.xpose.msra.mxu0 0.0
    %6725 = vmatprep.subr.mxu0 0.0
    %6726 = vmatpush1.xpose.msra.mxu0 0.0
    %6727 = vmatprep.subr.mxu0 0.0
    %6728 = vmatpush1.xpose.msra.mxu0 0.0
    %6729 = vmatprep.subr.mxu0 0.0
    %6730 = vmatpush1.xpose.msra.mxu0 0.0
    %6731 = vmatprep.subr.mxu0 0.0
    %6732 = vmatpush1.xpose.msra.mxu0 0.0
    %6733 = vmatprep.subr.mxu0 0.0
    %6734 = vmatpush1.xpose.msra.mxu0 0.0
    %6735 = vmatprep.subr.mxu0 0.0
    %6736 = vmatpush1.xpose.msra.mxu0 0.0
    %6737 = vmatprep.subr.mxu0 0.0
    %6738 = vmatpush1.xpose.msra.mxu0 0.0
    %6739 = vmatprep.subr.mxu0 0.0
    %6740 = vmatpush1.xpose.msra.mxu0 0.0
    %6741 = vmatprep.subr.mxu0 0.0
    %6742 = vmatpush1.xpose.msra.mxu0 0.0
    %6743 = vmatprep.subr.mxu0 0.0
    %6744 = vmatpush1.xpose.msra.mxu0 0.0
    %6745 = vmatprep.subr.mxu0 0.0
    %6746 = vmatpush1.xpose.msra.mxu0 0.0
    %6747 = vmatprep.subr.mxu0 0.0
    %6748 = vmatpush1.xpose.msra.mxu0 0.0
    %6749 = vmatprep.subr.mxu0 0.0
    %6750 = vmatpush1.xpose.msra.mxu0 0.0
    %6751 = vmatprep.subr.mxu0 0.0
    %6752 = vmatpush1.xpose.msra.mxu0 0.0
    %6753 = vmatprep.subr.mxu0 0.0
    %6754 = vmatpush1.xpose.msra.mxu0 0.0
    %6755 = vmatprep.subr.mxu0 0.0
    %6756 = vmatpush1.xpose.msra.mxu0 0.0
    %6757 = vmatprep.subr.mxu0 0.0
    %6758 = vmatpush1.xpose.msra.mxu0 0.0
    %6759 = vmatprep.subr.mxu0 0.0
    %6760 = vmatpush1.xpose.msra.mxu0 0.0
    %6761 = vmatprep.subr.mxu0 0.0
    %6762 = vmatpush1.xpose.msra.mxu0 0.0
    %6763 = vmatprep.subr.mxu0 0.0
    %6764 = vmatpush1.xpose.msra.mxu0 0.0
    %6765 = vmatprep.subr.mxu0 0.0
    %6766 = vmatpush1.xpose.msra.mxu0 0.0
    %6767 = vmatprep.subr.mxu0 0.0
    %6768 = vmatpush1.xpose.msra.mxu0 0.0
    %6769 = vmatprep.subr.mxu0 0.0
    %6770 = vmatpush1.xpose.msra.mxu0 0.0
    %6771 = vmatprep.subr.mxu0 0.0
    %6772 = vmatpush1.xpose.msra.mxu0 0.0
    %6773 = vmatprep.subr.mxu0 0.0
    %6774 = vmatpush1.xpose.msra.mxu0 0.0
    %6775 = vmatprep.mubr.f32.mxu0 0.0
    %6776 = vmatmul.mubr.f32.gmra.mrb[0].mxu0 %v6706
    %v6777 = vpop.f32.mrb[0].mxu0
    %v6778 = vadd.f32 0.0, %v6777
    %v6779 = vpop.f32.mrb[0].mxu0
    %6780 = vdwg.mxu0
    %v6781 = vsel %vm2019, %v6246, -inf
    %6782 = vmax.xlane.f32.xlu0 %v6781
    %v6783 = vpop.xlane.xlu0 %6782
    %v6784 = vsel %vm2019, %v6322, -inf
    %6785 = vmax.xlane.f32.xlu0 %v6784
    %v6786 = vpop.xlane.xlu0 %6785
    %v6787 = vsel %vm2019, %v6398, -inf
    %6788 = vmax.xlane.f32.xlu0 %v6787
    %v6789 = vpop.xlane.xlu0 %6788
    %v6790 = vsel %vm2019, %v6474, -inf
    %6791 = vmax.xlane.f32.xlu0 %v6790
    %v6792 = vpop.xlane.xlu0 %6791
    %v6793 = vsel %vm2019, %v6550, -inf
    %6794 = vmax.xlane.f32.xlu0 %v6793
    %v6795 = vpop.xlane.xlu0 %6794
    %v6796 = vsel %vm2019, %v6626, -inf
    %6797 = vmax.xlane.f32.xlu0 %v6796
    %v6798 = vpop.xlane.xlu0 %6797
    %v6799 = vsel %vm2019, %v6702, -inf
    %6800 = vmax.xlane.f32.xlu0 %v6799
    %v6801 = vpop.xlane.xlu0 %6800
    %v6802 = vsel %vm2019, %v6778, -inf
    %6803 = vmax.xlane.f32.xlu0 %v6802
    %v6804 = vpop.xlane.xlu0 %6803
    %v6805 = vsub.f32 %v6246, %v6783
    %v6806 = vsub.f32 %v6322, %v6786
    %v6807 = vsub.f32 %v6398, %v6789
    %v6808 = vsub.f32 %v6474, %v6792
    %v6809 = vsub.f32 %v6550, %v6795
    %v6810 = vsub.f32 %v6626, %v6798
    %v6811 = vsub.f32 %v6702, %v6801
    %v6812 = vsub.f32 %v6778, %v6804
    %v6813 = vmul.f32 %v6805, 1.442695
    %v6814 = vpow.pop %v6813
    %v6815 = vmul.f32 %v6806, 1.442695
    %v6816 = vpow.pop %v6815
    %v6817 = vmul.f32 %v6807, 1.442695
    %v6818 = vpow.pop %v6817
    %v6819 = vmul.f32 %v6808, 1.442695
    %v6820 = vpow.pop %v6819
    %v6821 = vmul.f32 %v6809, 1.442695
    %v6822 = vpow.pop %v6821
    %v6823 = vmul.f32 %v6810, 1.442695
    %v6824 = vpow.pop %v6823
    %v6825 = vmul.f32 %v6811, 1.442695
    %v6826 = vpow.pop %v6825
    %v6827 = vmul.f32 %v6812, 1.442695
    %v6828 = vpow.pop %v6827
    %v6829 = vsel %vm2019, %v6814, 0.0
    %6830 = vadd.xlane.f32.xlu0 %v6829
    %v6831 = vpop.xlane.xlu0 %6830
    %v6832 = vsel %vm2019, %v6816, 0.0
    %6833 = vadd.xlane.f32.xlu0 %v6832
    %v6834 = vpop.xlane.xlu0 %6833
    %v6835 = vsel %vm2019, %v6818, 0.0
    %6836 = vadd.xlane.f32.xlu0 %v6835
    %v6837 = vpop.xlane.xlu0 %6836
    %v6838 = vsel %vm2019, %v6820, 0.0
    %6839 = vadd.xlane.f32.xlu0 %v6838
    %v6840 = vpop.xlane.xlu0 %6839
    %v6841 = vsel %vm2019, %v6822, 0.0
    %6842 = vadd.xlane.f32.xlu0 %v6841
    %v6843 = vpop.xlane.xlu0 %6842
    %v6844 = vsel %vm2019, %v6824, 0.0
    %6845 = vadd.xlane.f32.xlu0 %v6844
    %v6846 = vpop.xlane.xlu0 %6845
    %v6847 = vsel %vm2019, %v6826, 0.0
    %6848 = vadd.xlane.f32.xlu0 %v6847
    %v6849 = vpop.xlane.xlu0 %6848
    %v6850 = vsel %vm2019, %v6828, 0.0
    %6851 = vadd.xlane.f32.xlu0 %v6850
    %v6852 = vpop.xlane.xlu0 %6851
    %v6853 = vrcp.pop %v6831
    %v6854 = vrcp.pop %v6834
    %v6855 = vrcp.pop %v6837
    %v6856 = vrcp.pop %v6840
    %v6857 = vrcp.pop %v6843
    %v6858 = vrcp.pop %v6846
    %v6859 = vrcp.pop %v6849
    %v6860 = vrcp.pop %v6852
    %v6861 = vmul.f32 %v6814, %v6853
    %v6862 = vmul.f32 %v6816, %v6854
    %v6863 = vmul.f32 %v6818, %v6855
    %v6864 = vmul.f32 %v6820, %v6856
    %v6865 = vmul.f32 %v6822, %v6857
    %v6866 = vmul.f32 %v6824, %v6858
    %v6867 = vmul.f32 %v6826, %v6859
    %v6868 = vmul.f32 %v6828, %v6860
    %v6869 = vsel %vm2019, %v6861, 0.0
    %v6870 = vsel %vm2019, %v6863, 0.0
    %v6871 = vadd.f32 %v6869, %v6870
    %v6872 = vsel %vm2019, %v6865, 0.0
    %v6873 = vadd.f32 %v6871, %v6872
    %v6874 = vsel %vm2019, %v6867, 0.0
    %v6875 = vadd.f32 %v6873, %v6874
    %v6876 = vsel %vm2019, %v6862, 0.0
    %v6877 = vsel %vm2019, %v6864, 0.0
    %v6878 = vadd.f32 %v6876, %v6877
    %v6879 = vsel %vm2019, %v6866, 0.0
    %v6880 = vadd.f32 %v6878, %v6879
    %v6881 = vsel %vm2019, %v6868, 0.0
    %v6882 = vadd.f32 %v6880, %v6881
    %v6883 = vmul.f32 %v6875, 0.25
    %v6884 = vmul.f32 %v6882, 0.25
    %s6885 = scalar_lea.vmem [#allocation4], 16
    %6886 = vst.msk [vmem:[%s6885] sm:$0xff] %vm2019, %v6883
    %6887 = vst.msk [vmem:[%s6885 + $0x8] sm:$0xff] %vm2019, %v6884
    %v6889 = vsel %vm2019, %v6861, 0
    %6891 = vmatprep.subr.mxu0 0.0
    %6892 = vmatpush1.msra.mxu0 %v5680
    %6893 = vmatprep.subr.mxu0 0.0
    %6894 = vmatpush1.msra.mxu0 0.0
    %6895 = vmatprep.subr.mxu0 0.0
    %6896 = vmatpush1.msra.mxu0 0.0
    %6897 = vmatprep.subr.mxu0 0.0
    %6898 = vmatpush1.msra.mxu0 0.0
    %6899 = vmatprep.subr.mxu0 0.0
    %6900 = vmatpush1.msra.mxu0 0.0
    %6901 = vmatprep.subr.mxu0 0.0
    %6902 = vmatpush1.msra.mxu0 0.0
    %6903 = vmatprep.subr.mxu0 0.0
    %6904 = vmatpush1.msra.mxu0 0.0
    %6905 = vmatprep.subr.mxu0 0.0
    %6906 = vmatpush1.msra.mxu0 0.0
    %6907 = vmatprep.subr.mxu0 0.0
    %6908 = vmatpush1.msra.mxu0 0.0
    %6909 = vmatprep.subr.mxu0 0.0
    %6910 = vmatpush1.msra.mxu0 0.0
    %6911 = vmatprep.subr.mxu0 0.0
    %6912 = vmatpush1.msra.mxu0 0.0
    %6913 = vmatprep.subr.mxu0 0.0
    %6914 = vmatpush1.msra.mxu0 0.0
    %6915 = vmatprep.subr.mxu0 0.0
    %6916 = vmatpush1.msra.mxu0 0.0
    %6917 = vmatprep.subr.mxu0 0.0
    %6918 = vmatpush1.msra.mxu0 0.0
    %6919 = vmatprep.subr.mxu0 0.0
    %6920 = vmatpush1.msra.mxu0 0.0
    %6921 = vmatprep.subr.mxu0 0.0
    %6922 = vmatpush1.msra.mxu0 0.0
    %6923 = vmatprep.subr.mxu0 0.0
    %6924 = vmatpush1.msra.mxu0 0.0
    %6925 = vmatprep.subr.mxu0 0.0
    %6926 = vmatpush1.msra.mxu0 0.0
    %6927 = vmatprep.subr.mxu0 0.0
    %6928 = vmatpush1.msra.mxu0 0.0
    %6929 = vmatprep.subr.mxu0 0.0
    %6930 = vmatpush1.msra.mxu0 0.0
    %6931 = vmatprep.subr.mxu0 0.0
    %6932 = vmatpush1.msra.mxu0 0.0
    %6933 = vmatprep.subr.mxu0 0.0
    %6934 = vmatpush1.msra.mxu0 0.0
    %6935 = vmatprep.subr.mxu0 0.0
    %6936 = vmatpush1.msra.mxu0 0.0
    %6937 = vmatprep.subr.mxu0 0.0
    %6938 = vmatpush1.msra.mxu0 0.0
    %6939 = vmatprep.subr.mxu0 0.0
    %6940 = vmatpush1.msra.mxu0 0.0
    %6941 = vmatprep.subr.mxu0 0.0
    %6942 = vmatpush1.msra.mxu0 0.0
    %6943 = vmatprep.subr.mxu0 0.0
    %6944 = vmatpush1.msra.mxu0 0.0
    %6945 = vmatprep.subr.mxu0 0.0
    %6946 = vmatpush1.msra.mxu0 0.0
    %6947 = vmatprep.subr.mxu0 0.0
    %6948 = vmatpush1.msra.mxu0 0.0
    %6949 = vmatprep.subr.mxu0 0.0
    %6950 = vmatpush1.msra.mxu0 0.0
    %6951 = vmatprep.subr.mxu0 0.0
    %6952 = vmatpush1.msra.mxu0 0.0
    %6953 = vmatprep.subr.mxu0 0.0
    %6954 = vmatpush1.msra.mxu0 0.0
    %6955 = vmatprep.mubr.f32.mxu0 0.0
    %6956 = vmatmul.mubr.f32.gmra.mrb[0].mxu0 %v6889
    %v6957 = vpop.f32.mrb[0].mxu0
    %v6958 = vadd.f32 0.0, %v6957
    %v6959 = vpop.f32.mrb[0].mxu0
    %6960 = vdwg.mxu0
    %v6962 = vsel %vm2019, %v6862, 0
    %6964 = vmatprep.subr.mxu0 0.0
    %6965 = vmatpush1.msra.mxu0 %v5750
    %6966 = vmatprep.subr.mxu0 0.0
    %6967 = vmatpush1.msra.mxu0 0.0
    %6968 = vmatprep.subr.mxu0 0.0
    %6969 = vmatpush1.msra.mxu0 0.0
    %6970 = vmatprep.subr.mxu0 0.0
    %6971 = vmatpush1.msra.mxu0 0.0
    %6972 = vmatprep.subr.mxu0 0.0
    %6973 = vmatpush1.msra.mxu0 0.0
    %6974 = vmatprep.subr.mxu0 0.0
    %6975 = vmatpush1.msra.mxu0 0.0
    %6976 = vmatprep.subr.mxu0 0.0
    %6977 = vmatpush1.msra.mxu0 0.0
    %6978 = vmatprep.subr.mxu0 0.0
    %6979 = vmatpush1.msra.mxu0 0.0
    %6980 = vmatprep.subr.mxu0 0.0
    %6981 = vmatpush1.msra.mxu0 0.0
    %6982 = vmatprep.subr.mxu0 0.0
    %6983 = vmatpush1.msra.mxu0 0.0
    %6984 = vmatprep.subr.mxu0 0.0
    %6985 = vmatpush1.msra.mxu0 0.0
    %6986 = vmatprep.subr.mxu0 0.0
    %6987 = vmatpush1.msra.mxu0 0.0
    %6988 = vmatprep.subr.mxu0 0.0
    %6989 = vmatpush1.msra.mxu0 0.0
    %6990 = vmatprep.subr.mxu0 0.0
    %6991 = vmatpush1.msra.mxu0 0.0
    %6992 = vmatprep.subr.mxu0 0.0
    %6993 = vmatpush1.msra.mxu0 0.0
    %6994 = vmatprep.subr.mxu0 0.0
    %6995 = vmatpush1.msra.mxu0 0.0
    %6996 = vmatprep.subr.mxu0 0.0
    %6997 = vmatpush1.msra.mxu0 0.0
    %6998 = vmatprep.subr.mxu0 0.0
    %6999 = vmatpush1.msra.mxu0 0.0
    %7000 = vmatprep.subr.mxu0 0.0
    %7001 = vmatpush1.msra.mxu0 0.0
    %7002 = vmatprep.subr.mxu0 0.0
    %7003 = vmatpush1.msra.mxu0 0.0
    %7004 = vmatprep.subr.mxu0 0.0
    %7005 = vmatpush1.msra.mxu0 0.0
    %7006 = vmatprep.subr.mxu0 0.0
    %7007 = vmatpush1.msra.mxu0 0.0
    %7008 = vmatprep.subr.mxu0 0.0
    %7009 = vmatpush1.msra.mxu0 0.0
    %7010 = vmatprep.subr.mxu0 0.0
    %7011 = vmatpush1.msra.mxu0 0.0
    %7012 = vmatprep.subr.mxu0 0.0
    %7013 = vmatpush1.msra.mxu0 0.0
    %7014 = vmatprep.subr.mxu0 0.0
    %7015 = vmatpush1.msra.mxu0 0.0
    %7016 = vmatprep.subr.mxu0 0.0
    %7017 = vmatpush1.msra.mxu0 0.0
    %7018 = vmatprep.subr.mxu0 0.0
    %7019 = vmatpush1.msra.mxu0 0.0
    %7020 = vmatprep.subr.mxu0 0.0
    %7021 = vmatpush1.msra.mxu0 0.0
    %7022 = vmatprep.subr.mxu0 0.0
    %7023 = vmatpush1.msra.mxu0 0.0
    %7024 = vmatprep.subr.mxu0 0.0
    %7025 = vmatpush1.msra.mxu0 0.0
    %7026 = vmatprep.subr.mxu0 0.0
    %7027 = vmatpush1.msra.mxu0 0.0
    %7028 = vmatprep.mubr.f32.mxu0 0.0
    %7029 = vmatmul.mubr.f32.gmra.mrb[0].mxu0 %v6962
    %v7030 = vpop.f32.mrb[0].mxu0
    %v7031 = vadd.f32 0.0, %v7030
    %v7032 = vpop.f32.mrb[0].mxu0
    %7033 = vdwg.mxu0
    %v7035 = vsel %vm2019, %v6863, 0
    %7037 = vmatprep.subr.mxu0 0.0
    %7038 = vmatpush1.msra.mxu0 %v5820
    %7039 = vmatprep.subr.mxu0 0.0
    %7040 = vmatpush1.msra.mxu0 0.0
    %7041 = vmatprep.subr.mxu0 0.0
    %7042 = vmatpush1.msra.mxu0 0.0
    %7043 = vmatprep.subr.mxu0 0.0
    %7044 = vmatpush1.msra.mxu0 0.0
    %7045 = vmatprep.subr.mxu0 0.0
    %7046 = vmatpush1.msra.mxu0 0.0
    %7047 = vmatprep.subr.mxu0 0.0
    %7048 = vmatpush1.msra.mxu0 0.0
    %7049 = vmatprep.subr.mxu0 0.0
    %7050 = vmatpush1.msra.mxu0 0.0
    %7051 = vmatprep.subr.mxu0 0.0
    %7052 = vmatpush1.msra.mxu0 0.0
    %7053 = vmatprep.subr.mxu0 0.0
    %7054 = vmatpush1.msra.mxu0 0.0
    %7055 = vmatprep.subr.mxu0 0.0
    %7056 = vmatpush1.msra.mxu0 0.0
    %7057 = vmatprep.subr.mxu0 0.0
    %7058 = vmatpush1.msra.mxu0 0.0
    %7059 = vmatprep.subr.mxu0 0.0
    %7060 = vmatpush1.msra.mxu0 0.0
    %7061 = vmatprep.subr.mxu0 0.0
    %7062 = vmatpush1.msra.mxu0 0.0
    %7063 = vmatprep.subr.mxu0 0.0
    %7064 = vmatpush1.msra.mxu0 0.0
    %7065 = vmatprep.subr.mxu0 0.0
    %7066 = vmatpush1.msra.mxu0 0.0
    %7067 = vmatprep.subr.mxu0 0.0
    %7068 = vmatpush1.msra.mxu0 0.0
    %7069 = vmatprep.subr.mxu0 0.0
    %7070 = vmatpush1.msra.mxu0 0.0
    %7071 = vmatprep.subr.mxu0 0.0
    %7072 = vmatpush1.msra.mxu0 0.0
    %7073 = vmatprep.subr.mxu0 0.0
    %7074 = vmatpush1.msra.mxu0 0.0
    %7075 = vmatprep.subr.mxu0 0.0
    %7076 = vmatpush1.msra.mxu0 0.0
    %7077 = vmatprep.subr.mxu0 0.0
    %7078 = vmatpush1.msra.mxu0 0.0
    %7079 = vmatprep.subr.mxu0 0.0
    %7080 = vmatpush1.msra.mxu0 0.0
    %7081 = vmatprep.subr.mxu0 0.0
    %7082 = vmatpush1.msra.mxu0 0.0
    %7083 = vmatprep.subr.mxu0 0.0
    %7084 = vmatpush1.msra.mxu0 0.0
    %7085 = vmatprep.subr.mxu0 0.0
    %7086 = vmatpush1.msra.mxu0 0.0
    %7087 = vmatprep.subr.mxu0 0.0
    %7088 = vmatpush1.msra.mxu0 0.0
    %7089 = vmatprep.subr.mxu0 0.0
    %7090 = vmatpush1.msra.mxu0 0.0
    %7091 = vmatprep.subr.mxu0 0.0
    %7092 = vmatpush1.msra.mxu0 0.0
    %7093 = vmatprep.subr.mxu0 0.0
    %7094 = vmatpush1.msra.mxu0 0.0
    %7095 = vmatprep.subr.mxu0 0.0
    %7096 = vmatpush1.msra.mxu0 0.0
    %7097 = vmatprep.subr.mxu0 0.0
    %7098 = vmatpush1.msra.mxu0 0.0
    %7099 = vmatprep.subr.mxu0 0.0
    %7100 = vmatpush1.msra.mxu0 0.0
    %7101 = vmatprep.mubr.f32.mxu0 0.0
    %7102 = vmatmul.mubr.f32.gmra.mrb[0].mxu0 %v7035
    %v7103 = vpop.f32.mrb[0].mxu0
    %v7104 = vadd.f32 0.0, %v7103
    %v7105 = vpop.f32.mrb[0].mxu0
    %7106 = vdwg.mxu0
    %v7108 = vsel %vm2019, %v6864, 0
    %7110 = vmatprep.subr.mxu0 0.0
    %7111 = vmatpush1.msra.mxu0 %v5890
    %7112 = vmatprep.subr.mxu0 0.0
    %7113 = vmatpush1.msra.mxu0 0.0
    %7114 = vmatprep.subr.mxu0 0.0
    %7115 = vmatpush1.msra.mxu0 0.0
    %7116 = vmatprep.subr.mxu0 0.0
    %7117 = vmatpush1.msra.mxu0 0.0
    %7118 = vmatprep.subr.mxu0 0.0
    %7119 = vmatpush1.msra.mxu0 0.0
    %7120 = vmatprep.subr.mxu0 0.0
    %7121 = vmatpush1.msra.mxu0 0.0
    %7122 = vmatprep.subr.mxu0 0.0
    %7123 = vmatpush1.msra.mxu0 0.0
    %7124 = vmatprep.subr.mxu0 0.0
    %7125 = vmatpush1.msra.mxu0 0.0
    %7126 = vmatprep.subr.mxu0 0.0
    %7127 = vmatpush1.msra.mxu0 0.0
    %7128 = vmatprep.subr.mxu0 0.0
    %7129 = vmatpush1.msra.mxu0 0.0
    %7130 = vmatprep.subr.mxu0 0.0
    %7131 = vmatpush1.msra.mxu0 0.0
    %7132 = vmatprep.subr.mxu0 0.0
    %7133 = vmatpush1.msra.mxu0 0.0
    %7134 = vmatprep.subr.mxu0 0.0
    %7135 = vmatpush1.msra.mxu0 0.0
    %7136 = vmatprep.subr.mxu0 0.0
    %7137 = vmatpush1.msra.mxu0 0.0
    %7138 = vmatprep.subr.mxu0 0.0
    %7139 = vmatpush1.msra.mxu0 0.0
    %7140 = vmatprep.subr.mxu0 0.0
    %7141 = vmatpush1.msra.mxu0 0.0
    %7142 = vmatprep.subr.mxu0 0.0
    %7143 = vmatpush1.msra.mxu0 0.0
    %7144 = vmatprep.subr.mxu0 0.0
    %7145 = vmatpush1.msra.mxu0 0.0
    %7146 = vmatprep.subr.mxu0 0.0
    %7147 = vmatpush1.msra.mxu0 0.0
    %7148 = vmatprep.subr.mxu0 0.0
    %7149 = vmatpush1.msra.mxu0 0.0
    %7150 = vmatprep.subr.mxu0 0.0
    %7151 = vmatpush1.msra.mxu0 0.0
    %7152 = vmatprep.subr.mxu0 0.0
    %7153 = vmatpush1.msra.mxu0 0.0
    %7154 = vmatprep.subr.mxu0 0.0
    %7155 = vmatpush1.msra.mxu0 0.0
    %7156 = vmatprep.subr.mxu0 0.0
    %7157 = vmatpush1.msra.mxu0 0.0
    %7158 = vmatprep.subr.mxu0 0.0
    %7159 = vmatpush1.msra.mxu0 0.0
    %7160 = vmatprep.subr.mxu0 0.0
    %7161 = vmatpush1.msra.mxu0 0.0
    %7162 = vmatprep.subr.mxu0 0.0
    %7163 = vmatpush1.msra.mxu0 0.0
    %7164 = vmatprep.subr.mxu0 0.0
    %7165 = vmatpush1.msra.mxu0 0.0
    %7166 = vmatprep.subr.mxu0 0.0
    %7167 = vmatpush1.msra.mxu0 0.0
    %7168 = vmatprep.subr.mxu0 0.0
    %7169 = vmatpush1.msra.mxu0 0.0
    %7170 = vmatprep.subr.mxu0 0.0
    %7171 = vmatpush1.msra.mxu0 0.0
    %7172 = vmatprep.subr.mxu0 0.0
    %7173 = vmatpush1.msra.mxu0 0.0
    %7174 = vmatprep.mubr.f32.mxu0 0.0
    %7175 = vmatmul.mubr.f32.gmra.mrb[0].mxu0 %v7108
    %v7176 = vpop.f32.mrb[0].mxu0
    %v7177 = vadd.f32 0.0, %v7176
    %v7178 = vpop.f32.mrb[0].mxu0
    %7179 = vdwg.mxu0
    %v7181 = vsel %vm2019, %v6865, 0
    %7183 = vmatprep.subr.mxu0 0.0
    %7184 = vmatpush1.msra.mxu0 %v5960
    %7185 = vmatprep.subr.mxu0 0.0
    %7186 = vmatpush1.msra.mxu0 0.0
    %7187 = vmatprep.subr.mxu0 0.0
    %7188 = vmatpush1.msra.mxu0 0.0
    %7189 = vmatprep.subr.mxu0 0.0
    %7190 = vmatpush1.msra.mxu0 0.0
    %7191 = vmatprep.subr.mxu0 0.0
    %7192 = vmatpush1.msra.mxu0 0.0
    %7193 = vmatprep.subr.mxu0 0.0
    %7194 = vmatpush1.msra.mxu0 0.0
    %7195 = vmatprep.subr.mxu0 0.0
    %7196 = vmatpush1.msra.mxu0 0.0
    %7197 = vmatprep.subr.mxu0 0.0
    %7198 = vmatpush1.msra.mxu0 0.0
    %7199 = vmatprep.subr.mxu0 0.0
    %7200 = vmatpush1.msra.mxu0 0.0
    %7201 = vmatprep.subr.mxu0 0.0
    %7202 = vmatpush1.msra.mxu0 0.0
    %7203 = vmatprep.subr.mxu0 0.0
    %7204 = vmatpush1.msra.mxu0 0.0
    %7205 = vmatprep.subr.mxu0 0.0
    %7206 = vmatpush1.msra.mxu0 0.0
    %7207 = vmatprep.subr.mxu0 0.0
    %7208 = vmatpush1.msra.mxu0 0.0
    %7209 = vmatprep.subr.mxu0 0.0
    %7210 = vmatpush1.msra.mxu0 0.0
    %7211 = vmatprep.subr.mxu0 0.0
    %7212 = vmatpush1.msra.mxu0 0.0
    %7213 = vmatprep.subr.mxu0 0.0
    %7214 = vmatpush1.msra.mxu0 0.0
    %7215 = vmatprep.subr.mxu0 0.0
    %7216 = vmatpush1.msra.mxu0 0.0
    %7217 = vmatprep.subr.mxu0 0.0
    %7218 = vmatpush1.msra.mxu0 0.0
    %7219 = vmatprep.subr.mxu0 0.0
    %7220 = vmatpush1.msra.mxu0 0.0
    %7221 = vmatprep.subr.mxu0 0.0
    %7222 = vmatpush1.msra.mxu0 0.0
    %7223 = vmatprep.subr.mxu0 0.0
    %7224 = vmatpush1.msra.mxu0 0.0
    %7225 = vmatprep.subr.mxu0 0.0
    %7226 = vmatpush1.msra.mxu0 0.0
    %7227 = vmatprep.subr.mxu0 0.0
    %7228 = vmatpush1.msra.mxu0 0.0
    %7229 = vmatprep.subr.mxu0 0.0
    %7230 = vmatpush1.msra.mxu0 0.0
    %7231 = vmatprep.subr.mxu0 0.0
    %7232 = vmatpush1.msra.mxu0 0.0
    %7233 = vmatprep.subr.mxu0 0.0
    %7234 = vmatpush1.msra.mxu0 0.0
    %7235 = vmatprep.subr.mxu0 0.0
    %7236 = vmatpush1.msra.mxu0 0.0
    %7237 = vmatprep.subr.mxu0 0.0
    %7238 = vmatpush1.msra.mxu0 0.0
    %7239 = vmatprep.subr.mxu0 0.0
    %7240 = vmatpush1.msra.mxu0 0.0
    %7241 = vmatprep.subr.mxu0 0.0
    %7242 = vmatpush1.msra.mxu0 0.0
    %7243 = vmatprep.subr.mxu0 0.0
    %7244 = vmatpush1.msra.mxu0 0.0
    %7245 = vmatprep.subr.mxu0 0.0
    %7246 = vmatpush1.msra.mxu0 0.0
    %7247 = vmatprep.mubr.f32.mxu0 0.0
    %7248 = vmatmul.mubr.f32.gmra.mrb[0].mxu0 %v7181
    %v7249 = vpop.f32.mrb[0].mxu0
    %v7250 = vadd.f32 0.0, %v7249
    %v7251 = vpop.f32.mrb[0].mxu0
    %7252 = vdwg.mxu0
    %v7254 = vsel %vm2019, %v6866, 0
    %7256 = vmatprep.subr.mxu0 0.0
    %7257 = vmatpush1.msra.mxu0 %v6030
    %7258 = vmatprep.subr.mxu0 0.0
    %7259 = vmatpush1.msra.mxu0 0.0
    %7260 = vmatprep.subr.mxu0 0.0
    %7261 = vmatpush1.msra.mxu0 0.0
    %7262 = vmatprep.subr.mxu0 0.0
    %7263 = vmatpush1.msra.mxu0 0.0
    %7264 = vmatprep.subr.mxu0 0.0
    %7265 = vmatpush1.msra.mxu0 0.0
    %7266 = vmatprep.subr.mxu0 0.0
    %7267 = vmatpush1.msra.mxu0 0.0
    %7268 = vmatprep.subr.mxu0 0.0
    %7269 = vmatpush1.msra.mxu0 0.0
    %7270 = vmatprep.subr.mxu0 0.0
    %7271 = vmatpush1.msra.mxu0 0.0
    %7272 = vmatprep.subr.mxu0 0.0
    %7273 = vmatpush1.msra.mxu0 0.0
    %7274 = vmatprep.subr.mxu0 0.0
    %7275 = vmatpush1.msra.mxu0 0.0
    %7276 = vmatprep.subr.mxu0 0.0
    %7277 = vmatpush1.msra.mxu0 0.0
    %7278 = vmatprep.subr.mxu0 0.0
    %7279 = vmatpush1.msra.mxu0 0.0
    %7280 = vmatprep.subr.mxu0 0.0
    %7281 = vmatpush1.msra.mxu0 0.0
    %7282 = vmatprep.subr.mxu0 0.0
    %7283 = vmatpush1.msra.mxu0 0.0
    %7284 = vmatprep.subr.mxu0 0.0
    %7285 = vmatpush1.msra.mxu0 0.0
    %7286 = vmatprep.subr.mxu0 0.0
    %7287 = vmatpush1.msra.mxu0 0.0
    %7288 = vmatprep.subr.mxu0 0.0
    %7289 = vmatpush1.msra.mxu0 0.0
    %7290 = vmatprep.subr.mxu0 0.0
    %7291 = vmatpush1.msra.mxu0 0.0
    %7292 = vmatprep.subr.mxu0 0.0
    %7293 = vmatpush1.msra.mxu0 0.0
    %7294 = vmatprep.subr.mxu0 0.0
    %7295 = vmatpush1.msra.mxu0 0.0
    %7296 = vmatprep.subr.mxu0 0.0
    %7297 = vmatpush1.msra.mxu0 0.0
    %7298 = vmatprep.subr.mxu0 0.0
    %7299 = vmatpush1.msra.mxu0 0.0
    %7300 = vmatprep.subr.mxu0 0.0
    %7301 = vmatpush1.msra.mxu0 0.0
    %7302 = vmatprep.subr.mxu0 0.0
    %7303 = vmatpush1.msra.mxu0 0.0
    %7304 = vmatprep.subr.mxu0 0.0
    %7305 = vmatpush1.msra.mxu0 0.0
    %7306 = vmatprep.subr.mxu0 0.0
    %7307 = vmatpush1.msra.mxu0 0.0
    %7308 = vmatprep.subr.mxu0 0.0
    %7309 = vmatpush1.msra.mxu0 0.0
    %7310 = vmatprep.subr.mxu0 0.0
    %7311 = vmatpush1.msra.mxu0 0.0
    %7312 = vmatprep.subr.mxu0 0.0
    %7313 = vmatpush1.msra.mxu0 0.0
    %7314 = vmatprep.subr.mxu0 0.0
    %7315 = vmatpush1.msra.mxu0 0.0
    %7316 = vmatprep.subr.mxu0 0.0
    %7317 = vmatpush1.msra.mxu0 0.0
    %7318 = vmatprep.subr.mxu0 0.0
    %7319 = vmatpush1.msra.mxu0 0.0
    %7320 = vmatprep.mubr.f32.mxu0 0.0
    %7321 = vmatmul.mubr.f32.gmra.mrb[0].mxu0 %v7254
    %v7322 = vpop.f32.mrb[0].mxu0
    %v7323 = vadd.f32 0.0, %v7322
    %v7324 = vpop.f32.mrb[0].mxu0
    %7325 = vdwg.mxu0
    %v7327 = vsel %vm2019, %v6867, 0
    %7329 = vmatprep.subr.mxu0 0.0
    %7330 = vmatpush1.msra.mxu0 %v6100
    %7331 = vmatprep.subr.mxu0 0.0
    %7332 = vmatpush1.msra.mxu0 0.0
    %7333 = vmatprep.subr.mxu0 0.0
    %7334 = vmatpush1.msra.mxu0 0.0
    %7335 = vmatprep.subr.mxu0 0.0
    %7336 = vmatpush1.msra.mxu0 0.0
    %7337 = vmatprep.subr.mxu0 0.0
    %7338 = vmatpush1.msra.mxu0 0.0
    %7339 = vmatprep.subr.mxu0 0.0
    %7340 = vmatpush1.msra.mxu0 0.0
    %7341 = vmatprep.subr.mxu0 0.0
    %7342 = vmatpush1.msra.mxu0 0.0
    %7343 = vmatprep.subr.mxu0 0.0
    %7344 = vmatpush1.msra.mxu0 0.0
    %7345 = vmatprep.subr.mxu0 0.0
    %7346 = vmatpush1.msra.mxu0 0.0
    %7347 = vmatprep.subr.mxu0 0.0
    %7348 = vmatpush1.msra.mxu0 0.0
    %7349 = vmatprep.subr.mxu0 0.0
    %7350 = vmatpush1.msra.mxu0 0.0
    %7351 = vmatprep.subr.mxu0 0.0
    %7352 = vmatpush1.msra.mxu0 0.0
    %7353 = vmatprep.subr.mxu0 0.0
    %7354 = vmatpush1.msra.mxu0 0.0
    %7355 = vmatprep.subr.mxu0 0.0
    %7356 = vmatpush1.msra.mxu0 0.0
    %7357 = vmatprep.subr.mxu0 0.0
    %7358 = vmatpush1.msra.mxu0 0.0
    %7359 = vmatprep.subr.mxu0 0.0
    %7360 = vmatpush1.msra.mxu0 0.0
    %7361 = vmatprep.subr.mxu0 0.0
    %7362 = vmatpush1.msra.mxu0 0.0
    %7363 = vmatprep.subr.mxu0 0.0
    %7364 = vmatpush1.msra.mxu0 0.0
    %7365 = vmatprep.subr.mxu0 0.0
    %7366 = vmatpush1.msra.mxu0 0.0
    %7367 = vmatprep.subr.mxu0 0.0
    %7368 = vmatpush1.msra.mxu0 0.0
    %7369 = vmatprep.subr.mxu0 0.0
    %7370 = vmatpush1.msra.mxu0 0.0
    %7371 = vmatprep.subr.mxu0 0.0
    %7372 = vmatpush1.msra.mxu0 0.0
    %7373 = vmatprep.subr.mxu0 0.0
    %7374 = vmatpush1.msra.mxu0 0.0
    %7375 = vmatprep.subr.mxu0 0.0
    %7376 = vmatpush1.msra.mxu0 0.0
    %7377 = vmatprep.subr.mxu0 0.0
    %7378 = vmatpush1.msra.mxu0 0.0
    %7379 = vmatprep.subr.mxu0 0.0
    %7380 = vmatpush1.msra.mxu0 0.0
    %7381 = vmatprep.subr.mxu0 0.0
    %7382 = vmatpush1.msra.mxu0 0.0
    %7383 = vmatprep.subr.mxu0 0.0
    %7384 = vmatpush1.msra.mxu0 0.0
    %7385 = vmatprep.subr.mxu0 0.0
    %7386 = vmatpush1.msra.mxu0 0.0
    %7387 = vmatprep.subr.mxu0 0.0
    %7388 = vmatpush1.msra.mxu0 0.0
    %7389 = vmatprep.subr.mxu0 0.0
    %7390 = vmatpush1.msra.mxu0 0.0
    %7391 = vmatprep.subr.mxu0 0.0
    %7392 = vmatpush1.msra.mxu0 0.0
    %7393 = vmatprep.mubr.f32.mxu0 0.0
    %7394 = vmatmul.mubr.f32.gmra.mrb[0].mxu0 %v7327
    %v7395 = vpop.f32.mrb[0].mxu0
    %v7396 = vadd.f32 0.0, %v7395
    %v7397 = vpop.f32.mrb[0].mxu0
    %7398 = vdwg.mxu0
    %v7400 = vsel %vm2019, %v6868, 0
    %7402 = vmatprep.subr.mxu0 0.0
    %7403 = vmatpush1.msra.mxu0 %v6170
    %7404 = vmatprep.subr.mxu0 0.0
    %7405 = vmatpush1.msra.mxu0 0.0
    %7406 = vmatprep.subr.mxu0 0.0
    %7407 = vmatpush1.msra.mxu0 0.0
    %7408 = vmatprep.subr.mxu0 0.0
    %7409 = vmatpush1.msra.mxu0 0.0
    %7410 = vmatprep.subr.mxu0 0.0
    %7411 = vmatpush1.msra.mxu0 0.0
    %7412 = vmatprep.subr.mxu0 0.0
    %7413 = vmatpush1.msra.mxu0 0.0
    %7414 = vmatprep.subr.mxu0 0.0
    %7415 = vmatpush1.msra.mxu0 0.0
    %7416 = vmatprep.subr.mxu0 0.0
    %7417 = vmatpush1.msra.mxu0 0.0
    %7418 = vmatprep.subr.mxu0 0.0
    %7419 = vmatpush1.msra.mxu0 0.0
    %7420 = vmatprep.subr.mxu0 0.0
    %7421 = vmatpush1.msra.mxu0 0.0
    %7422 = vmatprep.subr.mxu0 0.0
    %7423 = vmatpush1.msra.mxu0 0.0
    %7424 = vmatprep.subr.mxu0 0.0
    %7425 = vmatpush1.msra.mxu0 0.0
    %7426 = vmatprep.subr.mxu0 0.0
    %7427 = vmatpush1.msra.mxu0 0.0
    %7428 = vmatprep.subr.mxu0 0.0
    %7429 = vmatpush1.msra.mxu0 0.0
    %7430 = vmatprep.subr.mxu0 0.0
    %7431 = vmatpush1.msra.mxu0 0.0
    %7432 = vmatprep.subr.mxu0 0.0
    %7433 = vmatpush1.msra.mxu0 0.0
    %7434 = vmatprep.subr.mxu0 0.0
    %7435 = vmatpush1.msra.mxu0 0.0
    %7436 = vmatprep.subr.mxu0 0.0
    %7437 = vmatpush1.msra.mxu0 0.0
    %7438 = vmatprep.subr.mxu0 0.0
    %7439 = vmatpush1.msra.mxu0 0.0
    %7440 = vmatprep.subr.mxu0 0.0
    %7441 = vmatpush1.msra.mxu0 0.0
    %7442 = vmatprep.subr.mxu0 0.0
    %7443 = vmatpush1.msra.mxu0 0.0
    %7444 = vmatprep.subr.mxu0 0.0
    %7445 = vmatpush1.msra.mxu0 0.0
    %7446 = vmatprep.subr.mxu0 0.0
    %7447 = vmatpush1.msra.mxu0 0.0
    %7448 = vmatprep.subr.mxu0 0.0
    %7449 = vmatpush1.msra.mxu0 0.0
    %7450 = vmatprep.subr.mxu0 0.0
    %7451 = vmatpush1.msra.mxu0 0.0
    %7452 = vmatprep.subr.mxu0 0.0
    %7453 = vmatpush1.msra.mxu0 0.0
    %7454 = vmatprep.subr.mxu0 0.0
    %7455 = vmatpush1.msra.mxu0 0.0
    %7456 = vmatprep.subr.mxu0 0.0
    %7457 = vmatpush1.msra.mxu0 0.0
    %7458 = vmatprep.subr.mxu0 0.0
    %7459 = vmatpush1.msra.mxu0 0.0
    %7460 = vmatprep.subr.mxu0 0.0
    %7461 = vmatpush1.msra.mxu0 0.0
    %7462 = vmatprep.subr.mxu0 0.0
    %7463 = vmatpush1.msra.mxu0 0.0
    %7464 = vmatprep.subr.mxu0 0.0
    %7465 = vmatpush1.msra.mxu0 0.0
    %7466 = vmatprep.mubr.f32.mxu0 0.0
    %7467 = vmatmul.mubr.f32.gmra.mrb[0].mxu0 %v7400
    %v7468 = vpop.f32.mrb[0].mxu0
    %v7469 = vadd.f32 0.0, %v7468
    %v7470 = vpop.f32.mrb[0].mxu0
    %7471 = vdwg.mxu0
    %s7472 = scalar_lea.vmem %s7, 64
    %v7473 = vld [vmem:[%s7472] sm:$0xff]
    %v7474 = vld [vmem:[%s7472 + $0x8] sm:$0xff]
    %v7475 = vld [vmem:[%s7472 + $0x10] sm:$0xff]
    %v7476 = vld [vmem:[%s7472 + $0x18] sm:$0xff]
    %v7477 = vld [vmem:[%s7472 + $0x20] sm:$0xff]
    %v7478 = vld [vmem:[%s7472 + $0x28] sm:$0xff]
    %v7479 = vld [vmem:[%s7472 + $0x30] sm:$0xff]
    %v7480 = vld [vmem:[%s7472 + $0x38] sm:$0xff]
    %v7482 = vsel %vm2019, %v6958, 0
    %7484 = vmatprep.subr.mxu0 0.0
    %7485 = vmatpush1.msra.mxu0 %v7473
    %7486 = vmatprep.subr.mxu0 0.0
    %7487 = vmatpush1.msra.mxu0 0.0
    %7488 = vmatprep.subr.mxu0 0.0
    %7489 = vmatpush1.msra.mxu0 0.0
    %7490 = vmatprep.subr.mxu0 0.0
    %7491 = vmatpush1.msra.mxu0 0.0
    %7492 = vmatprep.subr.mxu0 0.0
    %7493 = vmatpush1.msra.mxu0 0.0
    %7494 = vmatprep.subr.mxu0 0.0
    %7495 = vmatpush1.msra.mxu0 0.0
    %7496 = vmatprep.subr.mxu0 0.0
    %7497 = vmatpush1.msra.mxu0 0.0
    %7498 = vmatprep.subr.mxu0 0.0
    %7499 = vmatpush1.msra.mxu0 0.0
    %7500 = vmatprep.subr.mxu0 0.0
    %7501 = vmatpush1.msra.mxu0 0.0
    %7502 = vmatprep.subr.mxu0 0.0
    %7503 = vmatpush1.msra.mxu0 0.0
    %7504 = vmatprep.subr.mxu0 0.0
    %7505 = vmatpush1.msra.mxu0 0.0
    %7506 = vmatprep.subr.mxu0 0.0
    %7507 = vmatpush1.msra.mxu0 0.0
    %7508 = vmatprep.subr.mxu0 0.0
    %7509 = vmatpush1.msra.mxu0 0.0
    %7510 = vmatprep.subr.mxu0 0.0
    %7511 = vmatpush1.msra.mxu0 0.0
    %7512 = vmatprep.subr.mxu0 0.0
    %7513 = vmatpush1.msra.mxu0 0.0
    %7514 = vmatprep.subr.mxu0 0.0
    %7515 = vmatpush1.msra.mxu0 0.0
    %7516 = vmatprep.subr.mxu0 0.0
    %7517 = vmatpush1.msra.mxu0 0.0
    %7518 = vmatprep.subr.mxu0 0.0
    %7519 = vmatpush1.msra.mxu0 0.0
    %7520 = vmatprep.subr.mxu0 0.0
    %7521 = vmatpush1.msra.mxu0 0.0
    %7522 = vmatprep.subr.mxu0 0.0
    %7523 = vmatpush1.msra.mxu0 0.0
    %7524 = vmatprep.subr.mxu0 0.0
    %7525 = vmatpush1.msra.mxu0 0.0
    %7526 = vmatprep.subr.mxu0 0.0
    %7527 = vmatpush1.msra.mxu0 0.0
    %7528 = vmatprep.subr.mxu0 0.0
    %7529 = vmatpush1.msra.mxu0 0.0
    %7530 = vmatprep.subr.mxu0 0.0
    %7531 = vmatpush1.msra.mxu0 0.0
    %7532 = vmatprep.subr.mxu0 0.0
    %7533 = vmatpush1.msra.mxu0 0.0
    %7534 = vmatprep.subr.mxu0 0.0
    %7535 = vmatpush1.msra.mxu0 0.0
    %7536 = vmatprep.subr.mxu0 0.0
    %7537 = vmatpush1.msra.mxu0 0.0
    %7538 = vmatprep.subr.mxu0 0.0
    %7539 = vmatpush1.msra.mxu0 0.0
    %7540 = vmatprep.subr.mxu0 0.0
    %7541 = vmatpush1.msra.mxu0 0.0
    %7542 = vmatprep.subr.mxu0 0.0
    %7543 = vmatpush1.msra.mxu0 0.0
    %7544 = vmatprep.subr.mxu0 0.0
    %7545 = vmatpush1.msra.mxu0 0.0
    %7546 = vmatprep.subr.mxu0 0.0
    %7547 = vmatpush1.msra.mxu0 0.0
    %7548 = vmatprep.mubr.f32.mxu0 0.0
    %7549 = vmatmul.mubr.f32.gmra.mrb[0].mxu0 %v7482
    %v7550 = vpop.f32.mrb[0].mxu0
    %v7551 = vadd.f32 0.0, %v7550
    %v7552 = vpop.f32.mrb[0].mxu0
    %7553 = vdwg.mxu0
    %v7555 = vsel %vm2019, %v7031, 0
    %7557 = vmatprep.subr.mxu0 0.0
    %7558 = vmatpush1.msra.mxu0 %v7474
    %7559 = vmatprep.subr.mxu0 0.0
    %7560 = vmatpush1.msra.mxu0 0.0
    %7561 = vmatprep.subr.mxu0 0.0
    %7562 = vmatpush1.msra.mxu0 0.0
    %7563 = vmatprep.subr.mxu0 0.0
    %7564 = vmatpush1.msra.mxu0 0.0
    %7565 = vmatprep.subr.mxu0 0.0
    %7566 = vmatpush1.msra.mxu0 0.0
    %7567 = vmatprep.subr.mxu0 0.0
    %7568 = vmatpush1.msra.mxu0 0.0
    %7569 = vmatprep.subr.mxu0 0.0
    %7570 = vmatpush1.msra.mxu0 0.0
    %7571 = vmatprep.subr.mxu0 0.0
    %7572 = vmatpush1.msra.mxu0 0.0
    %7573 = vmatprep.subr.mxu0 0.0
    %7574 = vmatpush1.msra.mxu0 0.0
    %7575 = vmatprep.subr.mxu0 0.0
    %7576 = vmatpush1.msra.mxu0 0.0
    %7577 = vmatprep.subr.mxu0 0.0
    %7578 = vmatpush1.msra.mxu0 0.0
    %7579 = vmatprep.subr.mxu0 0.0
    %7580 = vmatpush1.msra.mxu0 0.0
    %7581 = vmatprep.subr.mxu0 0.0
    %7582 = vmatpush1.msra.mxu0 0.0
    %7583 = vmatprep.subr.mxu0 0.0
    %7584 = vmatpush1.msra.mxu0 0.0
    %7585 = vmatprep.subr.mxu0 0.0
    %7586 = vmatpush1.msra.mxu0 0.0
    %7587 = vmatprep.subr.mxu0 0.0
    %7588 = vmatpush1.msra.mxu0 0.0
    %7589 = vmatprep.subr.mxu0 0.0
    %7590 = vmatpush1.msra.mxu0 0.0
    %7591 = vmatprep.subr.mxu0 0.0
    %7592 = vmatpush1.msra.mxu0 0.0
    %7593 = vmatprep.subr.mxu0 0.0
    %7594 = vmatpush1.msra.mxu0 0.0
    %7595 = vmatprep.subr.mxu0 0.0
    %7596 = vmatpush1.msra.mxu0 0.0
    %7597 = vmatprep.subr.mxu0 0.0
    %7598 = vmatpush1.msra.mxu0 0.0
    %7599 = vmatprep.subr.mxu0 0.0
    %7600 = vmatpush1.msra.mxu0 0.0
    %7601 = vmatprep.subr.mxu0 0.0
    %7602 = vmatpush1.msra.mxu0 0.0
    %7603 = vmatprep.subr.mxu0 0.0
    %7604 = vmatpush1.msra.mxu0 0.0
    %7605 = vmatprep.subr.mxu0 0.0
    %7606 = vmatpush1.msra.mxu0 0.0
    %7607 = vmatprep.subr.mxu0 0.0
    %7608 = vmatpush1.msra.mxu0 0.0
    %7609 = vmatprep.subr.mxu0 0.0
    %7610 = vmatpush1.msra.mxu0 0.0
    %7611 = vmatprep.subr.mxu0 0.0
    %7612 = vmatpush1.msra.mxu0 0.0
    %7613 = vmatprep.subr.mxu0 0.0
    %7614 = vmatpush1.msra.mxu0 0.0
    %7615 = vmatprep.subr.mxu0 0.0
    %7616 = vmatpush1.msra.mxu0 0.0
    %7617 = vmatprep.subr.mxu0 0.0
    %7618 = vmatpush1.msra.mxu0 0.0
    %7619 = vmatprep.subr.mxu0 0.0
    %7620 = vmatpush1.msra.mxu0 0.0
    %7621 = vmatprep.mubr.f32.mxu0 0.0
    %7622 = vmatmul.mubr.f32.gmra.mrb[0].mxu0 %v7555
    %v7623 = vpop.f32.mrb[0].mxu0
    %v7624 = vadd.f32 0.0, %v7623
    %v7625 = vpop.f32.mrb[0].mxu0
    %7626 = vdwg.mxu0
    %v7628 = vsel %vm2019, %v7104, 0
    %7630 = vmatprep.subr.mxu0 0.0
    %7631 = vmatpush1.msra.mxu0 %v7475
    %7632 = vmatprep.subr.mxu0 0.0
    %7633 = vmatpush1.msra.mxu0 0.0
    %7634 = vmatprep.subr.mxu0 0.0
    %7635 = vmatpush1.msra.mxu0 0.0
    %7636 = vmatprep.subr.mxu0 0.0
    %7637 = vmatpush1.msra.mxu0 0.0
    %7638 = vmatprep.subr.mxu0 0.0
    %7639 = vmatpush1.msra.mxu0 0.0
    %7640 = vmatprep.subr.mxu0 0.0
    %7641 = vmatpush1.msra.mxu0 0.0
    %7642 = vmatprep.subr.mxu0 0.0
    %7643 = vmatpush1.msra.mxu0 0.0
    %7644 = vmatprep.subr.mxu0 0.0
    %7645 = vmatpush1.msra.mxu0 0.0
    %7646 = vmatprep.subr.mxu0 0.0
    %7647 = vmatpush1.msra.mxu0 0.0
    %7648 = vmatprep.subr.mxu0 0.0
    %7649 = vmatpush1.msra.mxu0 0.0
    %7650 = vmatprep.subr.mxu0 0.0
    %7651 = vmatpush1.msra.mxu0 0.0
    %7652 = vmatprep.subr.mxu0 0.0
    %7653 = vmatpush1.msra.mxu0 0.0
    %7654 = vmatprep.subr.mxu0 0.0
    %7655 = vmatpush1.msra.mxu0 0.0
    %7656 = vmatprep.subr.mxu0 0.0
    %7657 = vmatpush1.msra.mxu0 0.0
    %7658 = vmatprep.subr.mxu0 0.0
    %7659 = vmatpush1.msra.mxu0 0.0
    %7660 = vmatprep.subr.mxu0 0.0
    %7661 = vmatpush1.msra.mxu0 0.0
    %7662 = vmatprep.subr.mxu0 0.0
    %7663 = vmatpush1.msra.mxu0 0.0
    %7664 = vmatprep.subr.mxu0 0.0
    %7665 = vmatpush1.msra.mxu0 0.0
    %7666 = vmatprep.subr.mxu0 0.0
    %7667 = vmatpush1.msra.mxu0 0.0
    %7668 = vmatprep.subr.mxu0 0.0
    %7669 = vmatpush1.msra.mxu0 0.0
    %7670 = vmatprep.subr.mxu0 0.0
    %7671 = vmatpush1.msra.mxu0 0.0
    %7672 = vmatprep.subr.mxu0 0.0
    %7673 = vmatpush1.msra.mxu0 0.0
    %7674 = vmatprep.subr.mxu0 0.0
    %7675 = vmatpush1.msra.mxu0 0.0
    %7676 = vmatprep.subr.mxu0 0.0
    %7677 = vmatpush1.msra.mxu0 0.0
    %7678 = vmatprep.subr.mxu0 0.0
    %7679 = vmatpush1.msra.mxu0 0.0
    %7680 = vmatprep.subr.mxu0 0.0
    %7681 = vmatpush1.msra.mxu0 0.0
    %7682 = vmatprep.subr.mxu0 0.0
    %7683 = vmatpush1.msra.mxu0 0.0
    %7684 = vmatprep.subr.mxu0 0.0
    %7685 = vmatpush1.msra.mxu0 0.0
    %7686 = vmatprep.subr.mxu0 0.0
    %7687 = vmatpush1.msra.mxu0 0.0
    %7688 = vmatprep.subr.mxu0 0.0
    %7689 = vmatpush1.msra.mxu0 0.0
    %7690 = vmatprep.subr.mxu0 0.0
    %7691 = vmatpush1.msra.mxu0 0.0
    %7692 = vmatprep.subr.mxu0 0.0
    %7693 = vmatpush1.msra.mxu0 0.0
    %7694 = vmatprep.mubr.f32.mxu0 0.0
    %7695 = vmatmul.mubr.f32.gmra.mrb[0].mxu0 %v7628
    %v7696 = vpop.f32.mrb[0].mxu0
    %v7697 = vadd.f32 0.0, %v7696
    %v7698 = vpop.f32.mrb[0].mxu0
    %7699 = vdwg.mxu0
    %v7701 = vsel %vm2019, %v7177, 0
    %7703 = vmatprep.subr.mxu0 0.0
    %7704 = vmatpush1.msra.mxu0 %v7476
    %7705 = vmatprep.subr.mxu0 0.0
    %7706 = vmatpush1.msra.mxu0 0.0
    %7707 = vmatprep.subr.mxu0 0.0
    %7708 = vmatpush1.msra.mxu0 0.0
    %7709 = vmatprep.subr.mxu0 0.0
    %7710 = vmatpush1.msra.mxu0 0.0
    %7711 = vmatprep.subr.mxu0 0.0
    %7712 = vmatpush1.msra.mxu0 0.0
    %7713 = vmatprep.subr.mxu0 0.0
    %7714 = vmatpush1.msra.mxu0 0.0
    %7715 = vmatprep.subr.mxu0 0.0
    %7716 = vmatpush1.msra.mxu0 0.0
    %7717 = vmatprep.subr.mxu0 0.0
    %7718 = vmatpush1.msra.mxu0 0.0
    %7719 = vmatprep.subr.mxu0 0.0
    %7720 = vmatpush1.msra.mxu0 0.0
    %7721 = vmatprep.subr.mxu0 0.0
    %7722 = vmatpush1.msra.mxu0 0.0
    %7723 = vmatprep.subr.mxu0 0.0
    %7724 = vmatpush1.msra.mxu0 0.0
    %7725 = vmatprep.subr.mxu0 0.0
    %7726 = vmatpush1.msra.mxu0 0.0
    %7727 = vmatprep.subr.mxu0 0.0
    %7728 = vmatpush1.msra.mxu0 0.0
    %7729 = vmatprep.subr.mxu0 0.0
    %7730 = vmatpush1.msra.mxu0 0.0
    %7731 = vmatprep.subr.mxu0 0.0
    %7732 = vmatpush1.msra.mxu0 0.0
    %7733 = vmatprep.subr.mxu0 0.0
    %7734 = vmatpush1.msra.mxu0 0.0
    %7735 = vmatprep.subr.mxu0 0.0
    %7736 = vmatpush1.msra.mxu0 0.0
    %7737 = vmatprep.subr.mxu0 0.0
    %7738 = vmatpush1.msra.mxu0 0.0
    %7739 = vmatprep.subr.mxu0 0.0
    %7740 = vmatpush1.msra.mxu0 0.0
    %7741 = vmatprep.subr.mxu0 0.0
    %7742 = vmatpush1.msra.mxu0 0.0
    %7743 = vmatprep.subr.mxu0 0.0
    %7744 = vmatpush1.msra.mxu0 0.0
    %7745 = vmatprep.subr.mxu0 0.0
    %7746 = vmatpush1.msra.mxu0 0.0
    %7747 = vmatprep.subr.mxu0 0.0
    %7748 = vmatpush1.msra.mxu0 0.0
    %7749 = vmatprep.subr.mxu0 0.0
    %7750 = vmatpush1.msra.mxu0 0.0
    %7751 = vmatprep.subr.mxu0 0.0
    %7752 = vmatpush1.msra.mxu0 0.0
    %7753 = vmatprep.subr.mxu0 0.0
    %7754 = vmatpush1.msra.mxu0 0.0
    %7755 = vmatprep.subr.mxu0 0.0
    %7756 = vmatpush1.msra.mxu0 0.0
    %7757 = vmatprep.subr.mxu0 0.0
    %7758 = vmatpush1.msra.mxu0 0.0
    %7759 = vmatprep.subr.mxu0 0.0
    %7760 = vmatpush1.msra.mxu0 0.0
    %7761 = vmatprep.subr.mxu0 0.0
    %7762 = vmatpush1.msra.mxu0 0.0
    %7763 = vmatprep.subr.mxu0 0.0
    %7764 = vmatpush1.msra.mxu0 0.0
    %7765 = vmatprep.subr.mxu0 0.0
    %7766 = vmatpush1.msra.mxu0 0.0
    %7767 = vmatprep.mubr.f32.mxu0 0.0
    %7768 = vmatmul.mubr.f32.gmra.mrb[0].mxu0 %v7701
    %v7769 = vpop.f32.mrb[0].mxu0
    %v7770 = vadd.f32 0.0, %v7769
    %v7771 = vpop.f32.mrb[0].mxu0
    %7772 = vdwg.mxu0
    %v7774 = vsel %vm2019, %v7250, 0
    %7776 = vmatprep.subr.mxu0 0.0
    %7777 = vmatpush1.msra.mxu0 %v7477
    %7778 = vmatprep.subr.mxu0 0.0
    %7779 = vmatpush1.msra.mxu0 0.0
    %7780 = vmatprep.subr.mxu0 0.0
    %7781 = vmatpush1.msra.mxu0 0.0
    %7782 = vmatprep.subr.mxu0 0.0
    %7783 = vmatpush1.msra.mxu0 0.0
    %7784 = vmatprep.subr.mxu0 0.0
    %7785 = vmatpush1.msra.mxu0 0.0
    %7786 = vmatprep.subr.mxu0 0.0
    %7787 = vmatpush1.msra.mxu0 0.0
    %7788 = vmatprep.subr.mxu0 0.0
    %7789 = vmatpush1.msra.mxu0 0.0
    %7790 = vmatprep.subr.mxu0 0.0
    %7791 = vmatpush1.msra.mxu0 0.0
    %7792 = vmatprep.subr.mxu0 0.0
    %7793 = vmatpush1.msra.mxu0 0.0
    %7794 = vmatprep.subr.mxu0 0.0
    %7795 = vmatpush1.msra.mxu0 0.0
    %7796 = vmatprep.subr.mxu0 0.0
    %7797 = vmatpush1.msra.mxu0 0.0
    %7798 = vmatprep.subr.mxu0 0.0
    %7799 = vmatpush1.msra.mxu0 0.0
    %7800 = vmatprep.subr.mxu0 0.0
    %7801 = vmatpush1.msra.mxu0 0.0
    %7802 = vmatprep.subr.mxu0 0.0
    %7803 = vmatpush1.msra.mxu0 0.0
    %7804 = vmatprep.subr.mxu0 0.0
    %7805 = vmatpush1.msra.mxu0 0.0
    %7806 = vmatprep.subr.mxu0 0.0
    %7807 = vmatpush1.msra.mxu0 0.0
    %7808 = vmatprep.subr.mxu0 0.0
    %7809 = vmatpush1.msra.mxu0 0.0
    %7810 = vmatprep.subr.mxu0 0.0
    %7811 = vmatpush1.msra.mxu0 0.0
    %7812 = vmatprep.subr.mxu0 0.0
    %7813 = vmatpush1.msra.mxu0 0.0
    %7814 = vmatprep.subr.mxu0 0.0
    %7815 = vmatpush1.msra.mxu0 0.0
    %7816 = vmatprep.subr.mxu0 0.0
    %7817 = vmatpush1.msra.mxu0 0.0
    %7818 = vmatprep.subr.mxu0 0.0
    %7819 = vmatpush1.msra.mxu0 0.0
    %7820 = vmatprep.subr.mxu0 0.0
    %7821 = vmatpush1.msra.mxu0 0.0
    %7822 = vmatprep.subr.mxu0 0.0
    %7823 = vmatpush1.msra.mxu0 0.0
    %7824 = vmatprep.subr.mxu0 0.0
    %7825 = vmatpush1.msra.mxu0 0.0
    %7826 = vmatprep.subr.mxu0 0.0
    %7827 = vmatpush1.msra.mxu0 0.0
    %7828 = vmatprep.subr.mxu0 0.0
    %7829 = vmatpush1.msra.mxu0 0.0
    %7830 = vmatprep.subr.mxu0 0.0
    %7831 = vmatpush1.msra.mxu0 0.0
    %7832 = vmatprep.subr.mxu0 0.0
    %7833 = vmatpush1.msra.mxu0 0.0
    %7834 = vmatprep.subr.mxu0 0.0
    %7835 = vmatpush1.msra.mxu0 0.0
    %7836 = vmatprep.subr.mxu0 0.0
    %7837 = vmatpush1.msra.mxu0 0.0
    %7838 = vmatprep.subr.mxu0 0.0
    %7839 = vmatpush1.msra.mxu0 0.0
    %7840 = vmatprep.mubr.f32.mxu0 0.0
    %7841 = vmatmul.mubr.f32.gmra.mrb[0].mxu0 %v7774
    %v7842 = vpop.f32.mrb[0].mxu0
    %v7843 = vadd.f32 0.0, %v7842
    %v7844 = vpop.f32.mrb[0].mxu0
    %7845 = vdwg.mxu0
    %v7847 = vsel %vm2019, %v7323, 0
    %7849 = vmatprep.subr.mxu0 0.0
    %7850 = vmatpush1.msra.mxu0 %v7478
    %7851 = vmatprep.subr.mxu0 0.0
    %7852 = vmatpush1.msra.mxu0 0.0
    %7853 = vmatprep.subr.mxu0 0.0
    %7854 = vmatpush1.msra.mxu0 0.0
    %7855 = vmatprep.subr.mxu0 0.0
    %7856 = vmatpush1.msra.mxu0 0.0
    %7857 = vmatprep.subr.mxu0 0.0
    %7858 = vmatpush1.msra.mxu0 0.0
    %7859 = vmatprep.subr.mxu0 0.0
    %7860 = vmatpush1.msra.mxu0 0.0
    %7861 = vmatprep.subr.mxu0 0.0
    %7862 = vmatpush1.msra.mxu0 0.0
    %7863 = vmatprep.subr.mxu0 0.0
    %7864 = vmatpush1.msra.mxu0 0.0
    %7865 = vmatprep.subr.mxu0 0.0
    %7866 = vmatpush1.msra.mxu0 0.0
    %7867 = vmatprep.subr.mxu0 0.0
    %7868 = vmatpush1.msra.mxu0 0.0
    %7869 = vmatprep.subr.mxu0 0.0
    %7870 = vmatpush1.msra.mxu0 0.0
    %7871 = vmatprep.subr.mxu0 0.0
    %7872 = vmatpush1.msra.mxu0 0.0
    %7873 = vmatprep.subr.mxu0 0.0
    %7874 = vmatpush1.msra.mxu0 0.0
    %7875 = vmatprep.subr.mxu0 0.0
    %7876 = vmatpush1.msra.mxu0 0.0
    %7877 = vmatprep.subr.mxu0 0.0
    %7878 = vmatpush1.msra.mxu0 0.0
    %7879 = vmatprep.subr.mxu0 0.0
    %7880 = vmatpush1.msra.mxu0 0.0
    %7881 = vmatprep.subr.mxu0 0.0
    %7882 = vmatpush1.msra.mxu0 0.0
    %7883 = vmatprep.subr.mxu0 0.0
    %7884 = vmatpush1.msra.mxu0 0.0
    %7885 = vmatprep.subr.mxu0 0.0
    %7886 = vmatpush1.msra.mxu0 0.0
    %7887 = vmatprep.subr.mxu0 0.0
    %7888 = vmatpush1.msra.mxu0 0.0
    %7889 = vmatprep.subr.mxu0 0.0
    %7890 = vmatpush1.msra.mxu0 0.0
    %7891 = vmatprep.subr.mxu0 0.0
    %7892 = vmatpush1.msra.mxu0 0.0
    %7893 = vmatprep.subr.mxu0 0.0
    %7894 = vmatpush1.msra.mxu0 0.0
    %7895 = vmatprep.subr.mxu0 0.0
    %7896 = vmatpush1.msra.mxu0 0.0
    %7897 = vmatprep.subr.mxu0 0.0
    %7898 = vmatpush1.msra.mxu0 0.0
    %7899 = vmatprep.subr.mxu0 0.0
    %7900 = vmatpush1.msra.mxu0 0.0
    %7901 = vmatprep.subr.mxu0 0.0
    %7902 = vmatpush1.msra.mxu0 0.0
    %7903 = vmatprep.subr.mxu0 0.0
    %7904 = vmatpush1.msra.mxu0 0.0
    %7905 = vmatprep.subr.mxu0 0.0
    %7906 = vmatpush1.msra.mxu0 0.0
    %7907 = vmatprep.subr.mxu0 0.0
    %7908 = vmatpush1.msra.mxu0 0.0
    %7909 = vmatprep.subr.mxu0 0.0
    %7910 = vmatpush1.msra.mxu0 0.0
    %7911 = vmatprep.subr.mxu0 0.0
    %7912 = vmatpush1.msra.mxu0 0.0
    %7913 = vmatprep.mubr.f32.mxu0 0.0
    %7914 = vmatmul.mubr.f32.gmra.mrb[0].mxu0 %v7847
    %v7915 = vpop.f32.mrb[0].mxu0
    %v7916 = vadd.f32 0.0, %v7915
    %v7917 = vpop.f32.mrb[0].mxu0
    %7918 = vdwg.mxu0
    %v7920 = vsel %vm2019, %v7396, 0
    %7922 = vmatprep.subr.mxu0 0.0
    %7923 = vmatpush1.msra.mxu0 %v7479
    %7924 = vmatprep.subr.mxu0 0.0
    %7925 = vmatpush1.msra.mxu0 0.0
    %7926 = vmatprep.subr.mxu0 0.0
    %7927 = vmatpush1.msra.mxu0 0.0
    %7928 = vmatprep.subr.mxu0 0.0
    %7929 = vmatpush1.msra.mxu0 0.0
    %7930 = vmatprep.subr.mxu0 0.0
    %7931 = vmatpush1.msra.mxu0 0.0
    %7932 = vmatprep.subr.mxu0 0.0
    %7933 = vmatpush1.msra.mxu0 0.0
    %7934 = vmatprep.subr.mxu0 0.0
    %7935 = vmatpush1.msra.mxu0 0.0
    %7936 = vmatprep.subr.mxu0 0.0
    %7937 = vmatpush1.msra.mxu0 0.0
    %7938 = vmatprep.subr.mxu0 0.0
    %7939 = vmatpush1.msra.mxu0 0.0
    %7940 = vmatprep.subr.mxu0 0.0
    %7941 = vmatpush1.msra.mxu0 0.0
    %7942 = vmatprep.subr.mxu0 0.0
    %7943 = vmatpush1.msra.mxu0 0.0
    %7944 = vmatprep.subr.mxu0 0.0
    %7945 = vmatpush1.msra.mxu0 0.0
    %7946 = vmatprep.subr.mxu0 0.0
    %7947 = vmatpush1.msra.mxu0 0.0
    %7948 = vmatprep.subr.mxu0 0.0
    %7949 = vmatpush1.msra.mxu0 0.0
    %7950 = vmatprep.subr.mxu0 0.0
    %7951 = vmatpush1.msra.mxu0 0.0
    %7952 = vmatprep.subr.mxu0 0.0
    %7953 = vmatpush1.msra.mxu0 0.0
    %7954 = vmatprep.subr.mxu0 0.0
    %7955 = vmatpush1.msra.mxu0 0.0
    %7956 = vmatprep.subr.mxu0 0.0
    %7957 = vmatpush1.msra.mxu0 0.0
    %7958 = vmatprep.subr.mxu0 0.0
    %7959 = vmatpush1.msra.mxu0 0.0
    %7960 = vmatprep.subr.mxu0 0.0
    %7961 = vmatpush1.msra.mxu0 0.0
    %7962 = vmatprep.subr.mxu0 0.0
    %7963 = vmatpush1.msra.mxu0 0.0
    %7964 = vmatprep.subr.mxu0 0.0
    %7965 = vmatpush1.msra.mxu0 0.0
    %7966 = vmatprep.subr.mxu0 0.0
    %7967 = vmatpush1.msra.mxu0 0.0
    %7968 = vmatprep.subr.mxu0 0.0
    %7969 = vmatpush1.msra.mxu0 0.0
    %7970 = vmatprep.subr.mxu0 0.0
    %7971 = vmatpush1.msra.mxu0 0.0
    %7972 = vmatprep.subr.mxu0 0.0
    %7973 = vmatpush1.msra.mxu0 0.0
    %7974 = vmatprep.subr.mxu0 0.0
    %7975 = vmatpush1.msra.mxu0 0.0
    %7976 = vmatprep.subr.mxu0 0.0
    %7977 = vmatpush1.msra.mxu0 0.0
    %7978 = vmatprep.subr.mxu0 0.0
    %7979 = vmatpush1.msra.mxu0 0.0
    %7980 = vmatprep.subr.mxu0 0.0
    %7981 = vmatpush1.msra.mxu0 0.0
    %7982 = vmatprep.subr.mxu0 0.0
    %7983 = vmatpush1.msra.mxu0 0.0
    %7984 = vmatprep.subr.mxu0 0.0
    %7985 = vmatpush1.msra.mxu0 0.0
    %7986 = vmatprep.mubr.f32.mxu0 0.0
    %7987 = vmatmul.mubr.f32.gmra.mrb[0].mxu0 %v7920
    %v7988 = vpop.f32.mrb[0].mxu0
    %v7989 = vadd.f32 0.0, %v7988
    %v7990 = vpop.f32.mrb[0].mxu0
    %7991 = vdwg.mxu0
    %v7993 = vsel %vm2019, %v7469, 0
    %7995 = vmatprep.subr.mxu0 0.0
    %7996 = vmatpush1.msra.mxu0 %v7480
    %7997 = vmatprep.subr.mxu0 0.0
    %7998 = vmatpush1.msra.mxu0 0.0
    %7999 = vmatprep.subr.mxu0 0.0
    %8000 = vmatpush1.msra.mxu0 0.0
    %8001 = vmatprep.subr.mxu0 0.0
    %8002 = vmatpush1.msra.mxu0 0.0
    %8003 = vmatprep.subr.mxu0 0.0
    %8004 = vmatpush1.msra.mxu0 0.0
    %8005 = vmatprep.subr.mxu0 0.0
    %8006 = vmatpush1.msra.mxu0 0.0
    %8007 = vmatprep.subr.mxu0 0.0
    %8008 = vmatpush1.msra.mxu0 0.0
    %8009 = vmatprep.subr.mxu0 0.0
    %8010 = vmatpush1.msra.mxu0 0.0
    %8011 = vmatprep.subr.mxu0 0.0
    %8012 = vmatpush1.msra.mxu0 0.0
    %8013 = vmatprep.subr.mxu0 0.0
    %8014 = vmatpush1.msra.mxu0 0.0
    %8015 = vmatprep.subr.mxu0 0.0
    %8016 = vmatpush1.msra.mxu0 0.0
    %8017 = vmatprep.subr.mxu0 0.0
    %8018 = vmatpush1.msra.mxu0 0.0
    %8019 = vmatprep.subr.mxu0 0.0
    %8020 = vmatpush1.msra.mxu0 0.0
    %8021 = vmatprep.subr.mxu0 0.0
    %8022 = vmatpush1.msra.mxu0 0.0
    %8023 = vmatprep.subr.mxu0 0.0
    %8024 = vmatpush1.msra.mxu0 0.0
    %8025 = vmatprep.subr.mxu0 0.0
    %8026 = vmatpush1.msra.mxu0 0.0
    %8027 = vmatprep.subr.mxu0 0.0
    %8028 = vmatpush1.msra.mxu0 0.0
    %8029 = vmatprep.subr.mxu0 0.0
    %8030 = vmatpush1.msra.mxu0 0.0
    %8031 = vmatprep.subr.mxu0 0.0
    %8032 = vmatpush1.msra.mxu0 0.0
    %8033 = vmatprep.subr.mxu0 0.0
    %8034 = vmatpush1.msra.mxu0 0.0
    %8035 = vmatprep.subr.mxu0 0.0
    %8036 = vmatpush1.msra.mxu0 0.0
    %8037 = vmatprep.subr.mxu0 0.0
    %8038 = vmatpush1.msra.mxu0 0.0
    %8039 = vmatprep.subr.mxu0 0.0
    %8040 = vmatpush1.msra.mxu0 0.0
    %8041 = vmatprep.subr.mxu0 0.0
    %8042 = vmatpush1.msra.mxu0 0.0
    %8043 = vmatprep.subr.mxu0 0.0
    %8044 = vmatpush1.msra.mxu0 0.0
    %8045 = vmatprep.subr.mxu0 0.0
    %8046 = vmatpush1.msra.mxu0 0.0
    %8047 = vmatprep.subr.mxu0 0.0
    %8048 = vmatpush1.msra.mxu0 0.0
    %8049 = vmatprep.subr.mxu0 0.0
    %8050 = vmatpush1.msra.mxu0 0.0
    %8051 = vmatprep.subr.mxu0 0.0
    %8052 = vmatpush1.msra.mxu0 0.0
    %8053 = vmatprep.subr.mxu0 0.0
    %8054 = vmatpush1.msra.mxu0 0.0
    %8055 = vmatprep.subr.mxu0 0.0
    %8056 = vmatpush1.msra.mxu0 0.0
    %8057 = vmatprep.subr.mxu0 0.0
    %8058 = vmatpush1.msra.mxu0 0.0
    %8059 = vmatprep.mubr.f32.mxu0 0.0
    %8060 = vmatmul.mubr.f32.gmra.mrb[0].mxu0 %v7993
    %v8061 = vpop.f32.mrb[0].mxu0
    %v8062 = vadd.f32 0.0, %v8061
    %v8063 = vpop.f32.mrb[0].mxu0
    %8064 = vdwg.mxu0
    %v8065 = vsel %vm156, %v7551, 0.0
    %v8066 = vsel %vm156, %v7697, 0.0
    %v8067 = vadd.f32 %v8065, %v8066
    %v8068 = vsel %vm156, %v7843, 0.0
    %v8069 = vadd.f32 %v8067, %v8068
    %v8070 = vsel %vm156, %v7989, 0.0
    %v8071 = vadd.f32 %v8069, %v8070
    %v8072 = vsel %vm156, %v7624, 0.0
    %v8073 = vsel %vm156, %v7770, 0.0
    %v8074 = vadd.f32 %v8072, %v8073
    %v8075 = vsel %vm156, %v7916, 0.0
    %v8076 = vadd.f32 %v8074, %v8075
    %v8077 = vsel %vm156, %v8062, 0.0
    %v8078 = vadd.f32 %v8076, %v8077
    %s8079 = scalar_lea.vmem %s8, 1
    %v8080 = vld [vmem:[%s8079] sm:$0x1]
    %v8082 = vlaneseq
    %v8083 = vshrl.u32 %v8082, 7
    %v8084 = vsub.s32 0, %v8083
    %v8085 = vrot.slane %v8080, %v8084
    %v8087 = vadd.f32 %v8071, %v8085
    %v8088 = vadd.f32 %v8078, %v8085
    %v8089 = vadd.f32 %v4215, %v8087
    %v8090 = vadd.f32 %v4216, %v8088
    %s8091 = scalar_lea.vmem %s13, 1
    %v8092 = vld [vmem:[%s8091] sm:$0x1]
    %s8093 = scalar_lea.vmem %s14, 1
    %v8094 = vld [vmem:[%s8093] sm:$0x1]
    %v8095 = vsel %vm156, %v8089, 0.0
    %8096 = vadd.xlane.f32.xlu0 %v8095
    %v8097 = vpop.xlane.xlu0 %8096
    %v8098 = vsel %vm156, %v8090, 0.0
    %8099 = vadd.xlane.f32.xlu0 %v8098
    %v8100 = vpop.xlane.xlu0 %8099
    %v8101 = vmul.f32 %v8097, %v3943
    %v8102 = vmul.f32 %v8100, %v3943
    %v8103 = vsub.f32 %v8089, %v8101
    %v8104 = vsub.f32 %v8090, %v8102
    %v8105 = vmul.f32 %v8103, %v8103
    %v8106 = vmul.f32 %v8104, %v8104
    %v8107 = vsel %vm156, %v8105, 0.0
    %8108 = vadd.xlane.f32.xlu0 %v8107
    %v8109 = vpop.xlane.xlu0 %8108
    %v8110 = vsel %vm156, %v8106, 0.0
    %8111 = vadd.xlane.f32.xlu0 %v8110
    %v8112 = vpop.xlane.xlu0 %8111
    %v8113 = vmul.f32 %v8109, %v3943
    %v8114 = vmul.f32 %v8112, %v3943
    %v8115 = vadd.f32 %v8113, 1e-05
    %v8116 = vadd.f32 %v8114, 1e-05
    %v8117 = vrsqrt.pop %v8115
    %v8118 = vrsqrt.pop %v8116
    %v8119 = vmul.f32 %v8103, %v8117
    %v8120 = vmul.f32 %v8104, %v8118
    %v8122 = vlaneseq
    %v8123 = vshrl.u32 %v8122, 7
    %v8124 = vsub.s32 0, %v8123
    %v8125 = vrot.slane %v8092, %v8124
    %v8127 = vmul.f32 %v8119, %v8125
    %v8128 = vmul.f32 %v8120, %v8125
    %v8130 = vlaneseq
    %v8131 = vshrl.u32 %v8130, 7
    %v8132 = vsub.s32 0, %v8131
    %v8133 = vrot.slane %v8094, %v8132
    %v8135 = vadd.f32 %v8127, %v8133
    %v8136 = vadd.f32 %v8128, %v8133
    %s8137 = scalar_lea.vmem %s9, 32
    %v8138 = vld [vmem:[%s8137] sm:$0xff]
    %v8139 = vld [vmem:[%s8137 + $0x8] sm:$0xff]
    %v8140 = vld [vmem:[%s8137 + $0x10] sm:$0xff]
    %v8141 = vld [vmem:[%s8137 + $0x18] sm:$0xff]
    %s8142 = scalar_lea.vmem %s10, 1
    %v8143 = vld [vmem:[%s8142] sm:$0x1]
    %v8145 = vlaneseq
    %v8146 = vshrl.u32 %v8145, 7
    %v8147 = vsub.s32 0, %v8146
    %v8148 = vrot.slane %v8143, %v8147
    %v8151 = vsel %vm156, %v8135, 0
    %v8154 = vsel %vm156, %v8136, 0
    %8156 = vmatprep.subr.mxu0 0.0
    %8157 = vmatpush1.msra.mxu0 %v8138
    %8158 = vmatprep.subr.mxu0 0.0
    %8159 = vmatpush1.msra.mxu0 %v8139
    %8160 = vmatprep.subr.mxu0 0.0
    %8161 = vmatpush1.msra.mxu0 %v8140
    %8162 = vmatprep.subr.mxu0 0.0
    %8163 = vmatpush1.msra.mxu0 %v8141
    %8164 = vmatprep.subr.mxu0 0.0
    %8165 = vmatpush1.msra.mxu0 0.0
    %8166 = vmatprep.subr.mxu0 0.0
    %8167 = vmatpush1.msra.mxu0 0.0
    %8168 = vmatprep.subr.mxu0 0.0
    %8169 = vmatpush1.msra.mxu0 0.0
    %8170 = vmatprep.subr.mxu0 0.0
    %8171 = vmatpush1.msra.mxu0 0.0
    %8172 = vmatprep.subr.mxu0 0.0
    %8173 = vmatpush1.msra.mxu0 0.0
    %8174 = vmatprep.subr.mxu0 0.0
    %8175 = vmatpush1.msra.mxu0 0.0
    %8176 = vmatprep.subr.mxu0 0.0
    %8177 = vmatpush1.msra.mxu0 0.0
    %8178 = vmatprep.subr.mxu0 0.0
    %8179 = vmatpush1.msra.mxu0 0.0
    %8180 = vmatprep.subr.mxu0 0.0
    %8181 = vmatpush1.msra.mxu0 0.0
    %8182 = vmatprep.subr.mxu0 0.0
    %8183 = vmatpush1.msra.mxu0 0.0
    %8184 = vmatprep.subr.mxu0 0.0
    %8185 = vmatpush1.msra.mxu0 0.0
    %8186 = vmatprep.subr.mxu0 0.0
    %8187 = vmatpush1.msra.mxu0 0.0
    %8188 = vmatprep.subr.mxu0 0.0
    %8189 = vmatpush1.msra.mxu0 0.0
    %8190 = vmatprep.subr.mxu0 0.0
    %8191 = vmatpush1.msra.mxu0 0.0
    %8192 = vmatprep.subr.mxu0 0.0
    %8193 = vmatpush1.msra.mxu0 0.0
    %8194 = vmatprep.subr.mxu0 0.0
    %8195 = vmatpush1.msra.mxu0 0.0
    %8196 = vmatprep.subr.mxu0 0.0
    %8197 = vmatpush1.msra.mxu0 0.0
    %8198 = vmatprep.subr.mxu0 0.0
    %8199 = vmatpush1.msra.mxu0 0.0
    %8200 = vmatprep.subr.mxu0 0.0
    %8201 = vmatpush1.msra.mxu0 0.0
    %8202 = vmatprep.subr.mxu0 0.0
    %8203 = vmatpush1.msra.mxu0 0.0
    %8204 = vmatprep.subr.mxu0 0.0
    %8205 = vmatpush1.msra.mxu0 0.0
    %8206 = vmatprep.subr.mxu0 0.0
    %8207 = vmatpush1.msra.mxu0 0.0
    %8208 = vmatprep.subr.mxu0 0.0
    %8209 = vmatpush1.msra.mxu0 0.0
    %8210 = vmatprep.subr.mxu0 0.0
    %8211 = vmatpush1.msra.mxu0 0.0
    %8212 = vmatprep.subr.mxu0 0.0
    %8213 = vmatpush1.msra.mxu0 0.0
    %8214 = vmatprep.subr.mxu0 0.0
    %8215 = vmatpush1.msra.mxu0 0.0
    %8216 = vmatprep.subr.mxu0 0.0
    %8217 = vmatpush1.msra.mxu0 0.0
    %8218 = vmatprep.subr.mxu0 0.0
    %8219 = vmatpush1.msra.mxu0 0.0
    %8220 = vmatprep.mubr.f32.mxu0 0.0
    %8221 = vmatmul.mubr.f32.gmra.mrb[0].mxu0 %v8151
    %v8222 = vpop.f32.mrb[0].mxu0
    %v8223 = vadd.f32 %v8148, %v8222
    %v8224 = vpop.f32.mrb[0].mxu0
    %8225 = vmatprep.mubr.f32.mxu0 0.0
    %8226 = vmatmul.mubr.f32.gmra.mrb[0].mxu0 %v8154
    %v8227 = vpop.f32.mrb[0].mxu0
    %v8228 = vadd.f32 %v8148, %v8227
    %v8229 = vpop.f32.mrb[0].mxu0
    %8230 = vdwg.mxu0
    %v8231 = vmax.f32 %v8223, 0.0
    %v8232 = vmax.f32 %v8228, 0.0
    %s8233 = scalar_lea.vmem %s11, 64
    %v8234 = vld [vmem:[%s8233] sm:$0xff]
    %v8235 = vld [vmem:[%s8233 + $0x8] sm:$0xff]
    %v8236 = vld [vmem:[%s8233 + $0x10] sm:$0xff]
    %v8237 = vld [vmem:[%s8233 + $0x18] sm:$0xff]
    %v8238 = vld [vmem:[%s8233 + $0x20] sm:$0xff]
    %v8239 = vld [vmem:[%s8233 + $0x28] sm:$0xff]
    %v8240 = vld [vmem:[%s8233 + $0x30] sm:$0xff]
    %v8241 = vld [vmem:[%s8233 + $0x38] sm:$0xff]
    %s8242 = scalar_lea.vmem %s12, 1
    %v8243 = vld [vmem:[%s8242] sm:$0x1]
    %v8245 = vlaneseq
    %v8246 = vshrl.u32 %v8245, 7
    %v8247 = vsub.s32 0, %v8246
    %v8248 = vrot.slane %v8243, %v8247
    %v8251 = vsel %vm4089, %v8231, 0
    %v8254 = vsel %vm4089, %v8232, 0
    %8256 = vmatprep.subr.mxu0 0.0
    %8257 = vmatpush1.msra.mxu0 %v8234
    %8258 = vmatprep.subr.mxu0 0.0
    %8259 = vmatpush1.msra.mxu0 %v8235
    %8260 = vmatprep.subr.mxu0 0.0
    %8261 = vmatpush1.msra.mxu0 %v8236
    %8262 = vmatprep.subr.mxu0 0.0
    %8263 = vmatpush1.msra.mxu0 %v8237
    %8264 = vmatprep.subr.mxu0 0.0
    %8265 = vmatpush1.msra.mxu0 %v8238
    %8266 = vmatprep.subr.mxu0 0.0
    %8267 = vmatpush1.msra.mxu0 %v8239
    %8268 = vmatprep.subr.mxu0 0.0
    %8269 = vmatpush1.msra.mxu0 %v8240
    %8270 = vmatprep.subr.mxu0 0.0
    %8271 = vmatpush1.msra.mxu0 %v8241
    %8272 = vmatprep.subr.mxu0 0.0
    %8273 = vmatpush1.msra.mxu0 0.0
    %8274 = vmatprep.subr.mxu0 0.0
    %8275 = vmatpush1.msra.mxu0 0.0
    %8276 = vmatprep.subr.mxu0 0.0
    %8277 = vmatpush1.msra.mxu0 0.0
    %8278 = vmatprep.subr.mxu0 0.0
    %8279 = vmatpush1.msra.mxu0 0.0
    %8280 = vmatprep.subr.mxu0 0.0
    %8281 = vmatpush1.msra.mxu0 0.0
    %8282 = vmatprep.subr.mxu0 0.0
    %8283 = vmatpush1.msra.mxu0 0.0
    %8284 = vmatprep.subr.mxu0 0.0
    %8285 = vmatpush1.msra.mxu0 0.0
    %8286 = vmatprep.subr.mxu0 0.0
    %8287 = vmatpush1.msra.mxu0 0.0
    %8288 = vmatprep.subr.mxu0 0.0
    %8289 = vmatpush1.msra.mxu0 0.0
    %8290 = vmatprep.subr.mxu0 0.0
    %8291 = vmatpush1.msra.mxu0 0.0
    %8292 = vmatprep.subr.mxu0 0.0
    %8293 = vmatpush1.msra.mxu0 0.0
    %8294 = vmatprep.subr.mxu0 0.0
    %8295 = vmatpush1.msra.mxu0 0.0
    %8296 = vmatprep.subr.mxu0 0.0
    %8297 = vmatpush1.msra.mxu0 0.0
    %8298 = vmatprep.subr.mxu0 0.0
    %8299 = vmatpush1.msra.mxu0 0.0
    %8300 = vmatprep.subr.mxu0 0.0
    %8301 = vmatpush1.msra.mxu0 0.0
    %8302 = vmatprep.subr.mxu0 0.0
    %8303 = vmatpush1.msra.mxu0 0.0
    %8304 = vmatprep.subr.mxu0 0.0
    %8305 = vmatpush1.msra.mxu0 0.0
    %8306 = vmatprep.subr.mxu0 0.0
    %8307 = vmatpush1.msra.mxu0 0.0
    %8308 = vmatprep.subr.mxu0 0.0
    %8309 = vmatpush1.msra.mxu0 0.0
    %8310 = vmatprep.subr.mxu0 0.0
    %8311 = vmatpush1.msra.mxu0 0.0
    %8312 = vmatprep.subr.mxu0 0.0
    %8313 = vmatpush1.msra.mxu0 0.0
    %8314 = vmatprep.subr.mxu0 0.0
    %8315 = vmatpush1.msra.mxu0 0.0
    %8316 = vmatprep.subr.mxu0 0.0
    %8317 = vmatpush1.msra.mxu0 0.0
    %8318 = vmatprep.subr.mxu0 0.0
    %8319 = vmatpush1.msra.mxu0 0.0
    %8320 = vmatprep.mubr.f32.mxu0 0.0
    %8321 = vmatmul.mubr.f32.gmra.mrb[0].mxu0 %v8251
    %v8322 = vpop.f32.mrb[0].mxu0
    %v8323 = vadd.f32 %v8248, %v8322
    %v8324 = vpop.f32.mrb[0].mxu0
    %8325 = vmatprep.mubr.f32.mxu0 0.0
    %8326 = vmatmul.mubr.f32.gmra.mrb[0].mxu0 %v8254
    %v8327 = vpop.f32.mrb[0].mxu0
    %v8328 = vadd.f32 %v8248, %v8327
    %v8329 = vpop.f32.mrb[0].mxu0
    %8330 = vdwg.mxu0
    %v8331 = vadd.f32 %v8135, %v8323
    %v8332 = vadd.f32 %v8136, %v8328
    %s8333 = scalar_lea.vmem %s15, 1
    %v8334 = vld [vmem:[%s8333] sm:$0x1]
    %s8335 = scalar_lea.vmem %s16, 1
    %v8336 = vld [vmem:[%s8335] sm:$0x1]
    %v8337 = vsel %vm156, %v8331, 0.0
    %8338 = vadd.xlane.f32.xlu0 %v8337
    %v8339 = vpop.xlane.xlu0 %8338
    %v8340 = vsel %vm156, %v8332, 0.0
    %8341 = vadd.xlane.f32.xlu0 %v8340
    %v8342 = vpop.xlane.xlu0 %8341
    %v8343 = vmul.f32 %v8339, %v3943
    %v8344 = vmul.f32 %v8342, %v3943
    %v8345 = vsub.f32 %v8331, %v8343
    %v8346 = vsub.f32 %v8332, %v8344
    %v8347 = vmul.f32 %v8345, %v8345
    %v8348 = vmul.f32 %v8346, %v8346
    %v8349 = vsel %vm156, %v8347, 0.0
    %8350 = vadd.xlane.f32.xlu0 %v8349
    %v8351 = vpop.xlane.xlu0 %8350
    %v8352 = vsel %vm156, %v8348, 0.0
    %8353 = vadd.xlane.f32.xlu0 %v8352
    %v8354 = vpop.xlane.xlu0 %8353
    %v8355 = vmul.f32 %v8351, %v3943
    %v8356 = vmul.f32 %v8354, %v3943
    %v8357 = vadd.f32 %v8355, 1e-05
    %v8358 = vadd.f32 %v8356, 1e-05
    %v8359 = vrsqrt.pop %v8357
    %v8360 = vrsqrt.pop %v8358
    %v8361 = vmul.f32 %v8345, %v8359
    %v8362 = vmul.f32 %v8346, %v8360
    %v8364 = vlaneseq
    %v8365 = vshrl.u32 %v8364, 7
    %v8366 = vsub.s32 0, %v8365
    %v8367 = vrot.slane %v8334, %v8366
    %v8369 = vmul.f32 %v8361, %v8367
    %v8370 = vmul.f32 %v8362, %v8367
    %v8372 = vlaneseq
    %v8373 = vshrl.u32 %v8372, 7
    %v8374 = vsub.s32 0, %v8373
    %v8375 = vrot.slane %v8336, %v8374
    %v8377 = vadd.f32 %v8369, %v8375
    %v8378 = vadd.f32 %v8370, %v8375
    %v8379 = vld [vmem:[%s17] sm:$0x1]
    %v8380 = vld [vmem:[%s18] sm:$0x1]
    %v8381 = vsel %vm156, %v8377, 0.0
    %8382 = vadd.xlane.f32.xlu0 %v8381
    %v8383 = vpop.xlane.xlu0 %8382
    %v8384 = vsel %vm156, %v8378, 0.0
    %8385 = vadd.xlane.f32.xlu0 %v8384
    %v8386 = vpop.xlane.xlu0 %8385
    %v8387 = vmul.f32 %v8383, %v3943
    %v8388 = vmul.f32 %v8386, %v3943
    %v8389 = vsub.f32 %v8377, %v8387
    %v8390 = vsub.f32 %v8378, %v8388
    %v8391 = vmul.f32 %v8389, %v8389
    %v8392 = vmul.f32 %v8390, %v8390
    %v8393 = vsel %vm156, %v8391, 0.0
    %8394 = vadd.xlane.f32.xlu0 %v8393
    %v8395 = vpop.xlane.xlu0 %8394
    %v8396 = vsel %vm156, %v8392, 0.0
    %8397 = vadd.xlane.f32.xlu0 %v8396
    %v8398 = vpop.xlane.xlu0 %8397
    %v8399 = vmul.f32 %v8395, %v3943
    %v8400 = vmul.f32 %v8398, %v3943
    %v8401 = vadd.f32 %v8399, 1e-05
    %v8402 = vadd.f32 %v8400, 1e-05
    %v8403 = vrsqrt.pop %v8401
    %v8404 = vrsqrt.pop %v8402
    %v8405 = vmul.f32 %v8389, %v8403
    %v8406 = vmul.f32 %v8390, %v8404
    %v8408 = vlaneseq
    %v8409 = vshrl.u32 %v8408, 7
    %v8410 = vsub.s32 0, %v8409
    %v8411 = vrot.slane %v8379, %v8410
    %v8413 = vmul.f32 %v8405, %v8411
    %v8414 = vmul.f32 %v8406, %v8411
    %v8416 = vlaneseq
    %v8417 = vshrl.u32 %v8416, 7
    %v8418 = vsub.s32 0, %v8417
    %v8419 = vrot.slane %v8380, %v8418
    %v8421 = vadd.f32 %v8413, %v8419
    %v8422 = vadd.f32 %v8414, %v8419
    %8423 = vst.msk [vmem:[#allocation2] sm:$0xff] %vm156, %v8421
    %8424 = vst.msk [vmem:[#allocation2 + $0x8] sm:$0xff] %vm156, %v8422
    // Predicated region
    $region78: #{tpu_custom_call.1} parent=1 // pred_check
      _
    $region79: #{tpu_custom_call.1} parent=1 // pred_check_branch
      %8426 = sbr.rel (0) target = $region81
    $region80: #{tpu_custom_call.1} parent=1 // pred_region
      %s8428 = ssub.s32 256, 256
      %8429 = vsyncadd [#allocation3], %s8428
      %s8430 = sshll.u32 [#allocation2], 4
      %s8431 = int_to_ptr.vmem [resolvable:$true] %s8430
      %8436 = dma.vmem_to_hbm [thread:$0]  %s8431, 256, %s19, [#allocation3], 128, 128, 8
    $region81: #{tpu_custom_call.1} parent=1 // pred_fallthru
      _
    // Predicated region
    $region82: #{tpu_custom_call.1} parent=1 // pred_check
      _
    $region83: #{tpu_custom_call.1} parent=1 // pred_check_branch
      %8438 = sbr.rel (0) target = $region85
    $region84: #{tpu_custom_call.1} parent=1 // pred_region
      %s8440 = ssub.s32 512, 512
      %8441 = vsyncadd [#allocation5], %s8440
      %s8442 = sshll.u32 [#allocation4], 4
      %s8443 = int_to_ptr.vmem [resolvable:$true] %s8442
      %8448 = dma.vmem_to_hbm [thread:$0]  %s8443, 512, %s20, [#allocation5], 128, 128, 8
    $region85: #{tpu_custom_call.1} parent=1 // pred_fallthru
      _
    // Predicated region
    $region86: #{tpu_custom_call.1} parent=1 // pred_check
      _
    $region87: #{tpu_custom_call.1} parent=1 // pred_check_branch
      %8450 = sbr.rel (0) target = $region89
    $region88: #{tpu_custom_call.1} parent=1 // pred_region
      %8451 = dma.done [#allocation3], 256
    $region89: #{tpu_custom_call.1} parent=1 // pred_fallthru
      _
    // Predicated region
    $region90: #{tpu_custom_call.1} parent=1 // pred_check
      _
    $region91: #{tpu_custom_call.1} parent=1 // pred_check_branch
      %8453 = sbr.rel (0) target = $region93
    $region92: #{tpu_custom_call.1} parent=1 // pred_region
      %8454 = dma.done [#allocation5], 512
    $region93: #{tpu_custom_call.1} parent=1 // pred_fallthru
      _
    %8455 = vsyncpa [#allocation3], 1
    %8456 = vsyncpa [#allocation5], 1

</llo_original>
